<compile_context>
chip_gen: v7x
topology: tpu7x:2x2x1
jax: 0.10.0
libtpu: 0.0.40
codegen_flags: <defaults>
</compile_context>

<pallas_src>
import jax
import jax.numpy as jnp
from jax.experimental import pallas as pl
from jax.experimental.pallas import tpu as pltpu

# ---------------- configuration (small, consistent with the module) ----------
N_AGENTS = 4
N_ENEMIES = 3
N_GROUPS = 3
EMBED_DIM = 8          # mixing_embed_dim
RNN_HIDDEN_DIM = 16
HYPERNET_EMBED = 16
ALLY_FEATS = 6         # last 3 entries are the one-hot group type
ENEMY_FEATS = 4
LAST_ACTIONS_DIM = 8
OBS_DIM = 10
STATE_DIM = N_AGENTS * ALLY_FEATS + N_ENEMIES * ENEMY_FEATS + LAST_ACTIONS_DIM
B, T = 2, 3

# group hypernet packing geometry (all offsets multiples of 8 lanes)
GROUP_HID = 3 * HYPERNET_EMBED + EMBED_DIM                 # 56 hidden cols / group
GROUP_OUT_RAW = N_AGENTS * EMBED_DIM + 2 * EMBED_DIM + 1   # 49 generated values
GROUP_OUT_PAD = ((GROUP_OUT_RAW + 7) // 8) * 8             # 56 (lane-aligned blocks)

_PAIRS = ((0, 0), (1, 1), (2, 2), (0, 1), (0, 2), (1, 2))  # intra(3) + inter(3)


# ---------------- small helpers usable inside kernels ------------------------
def _elu(x):
    return jnp.where(x > 0, x, jnp.exp(x) - 1.0)


def _sigmoid(x):
    return 1.0 / (1.0 + jnp.exp(-x))


def _vmem_spec():
    return pl.BlockSpec(memory_space=pltpu.MemorySpace.VMEM)


def _smem_spec():
    return pl.BlockSpec(memory_space=pltpu.MemorySpace.SMEM)


# ---------------- kernel 1: fused 8-head state hypernetwork ------------------
def hyper_s_kernel(x_ref, w1_ref, b1_ref, w2_ref, b2_ref, o_ref):
    h = jnp.maximum(
        jnp.dot(x_ref[...], w1_ref[...], preferred_element_type=jnp.float32) + b1_ref[...],
        0.0)                                                   # ReLU
    o_ref[...] = jnp.dot(h, w2_ref[...], preferred_element_type=jnp.float32) + b2_ref[...]


def hyper_s(s, W1, b1, W2, b2):
    N = s.shape[0]
    Dout = W2.shape[1]
    return pl.pallas_call(
        hyper_s_kernel,
        out_shape=jax.ShapeDtypeStruct((N, Dout), jnp.float32),
        in_specs=[_vmem_spec()] * 5,
        out_specs=_vmem_spec(),
    )(s, W1, b1, W2, b2)


# ---------------- kernel 2: embedding -> GRU -> stats -> group hypernets -----
# ----------------           -> group mixing -> top-level hyper mixing --------
def fused_mix_kernel(obs_ref, ew1_ref, eb1_ref, ew2_ref, eb2_ref, h0_ref,
                     wi_ref, wh_ref, bi_ref, bh_ref, masks_ref,
                     s_ref, gw1s_ref, gw1m_ref, gb1_ref, gw2_ref, gb2_ref,
                     qrep_ref, maskrep_ref, hyp_ref,
                     qtot_ref, loss_ref, hid_ref):
    H = RNN_HIDDEN_DIM
    E = EMBED_DIM
    A = N_AGENTS
    G = N_GROUPS
    eps = 1e-8
    Nn = obs_ref.shape[0]

    # ---- agent embedding 1: elu(obs @ w1 + b1)                      (N, A, E)
    x1 = _elu(jnp.einsum('nad,nde->nae', obs_ref[...], ew1_ref[...],
                         preferred_element_type=jnp.float32) + eb1_ref[...])

    # ---- GRUCell with packed r|z|n gates: 2 batched matmuls + lane slices ---
    h0 = h0_ref[...]                                                   # (N, A, H)
    gi = jnp.einsum('nae,nef->naf', x1, wi_ref[...],
                    preferred_element_type=jnp.float32) + bi_ref[...]  # (N, A, 3H)
    gh = jnp.einsum('nah,nhf->naf', h0, wh_ref[...],
                    preferred_element_type=jnp.float32) + bh_ref[...]  # (N, A, 3H)
    r = _sigmoid(gi[..., 0:H] + gh[..., 0:H])
    z = _sigmoid(gi[..., H:2 * H] + gh[..., H:2 * H])
    nn_ = jnp.tanh(gi[..., 2 * H:3 * H] + r * gh[..., 2 * H:3 * H])
    h_new = (1.0 - z) * nn_ + z * h0
    hid_ref[...] = h_new

    # ---- agent embedding 2: elu(h @ w2 + b2)                        (N, A, E)
    emb = _elu(jnp.einsum('nah,nhe->nae', h_new, ew2_ref[...],
                          preferred_element_type=jnp.float32) + eb2_ref[...])

    # ---- masked group embeddings + group means ------------------------------
    ges, means = [], []
    for g in range(G):
        m = masks_ref[g]                                               # (N, A)
        ge = emb * m[:, :, None]                                       # (N, A, E)
        ges.append(ge)
        msum = jnp.sum(m, axis=-1, keepdims=True)                      # (N, 1)
        means.append(jnp.sum(ge, axis=1) / (msum + eps))               # (N, E)

    # ---- cosine-similarity group loss: ONE batched contraction over 6 pairs -
    lhs = jnp.concatenate([ges[i] for i, _ in _PAIRS], axis=0)         # (6N, A, E)
    rhs = jnp.concatenate([ges[j] for _, j in _PAIRS], axis=0)         # (6N, A, E)
    lhsn = lhs / jnp.maximum(jnp.sqrt(jnp.sum(lhs * lhs, axis=-1, keepdims=True)), eps)
    rhsn = rhs / jnp.maximum(jnp.sqrt(jnp.sum(rhs * rhs, axis=-1, keepdims=True)), eps)
    cos = jnp.einsum('kae,kbe->kab', lhsn, rhsn,
                     preferred_element_type=jnp.float32)               # (6N, A, A)
    # NOTE: like the PyTorch reference, no guard on count==0 (empty group -> NaN).
    loss = jnp.float32(0.0)
    for g in range(G):
        ci = cos[g * Nn:(g + 1) * Nn]
        ce = cos[(G + g) * Nn:(G + g + 1) * Nn]
        intra = jnp.sum(ci) / jnp.sum((ci != 0.0).astype(jnp.float32))
        inter = jnp.sum(ce) / jnp.sum((ce != 0.0).astype(jnp.float32))
        loss = loss + (-intra + inter)
    loss_ref[0] = loss

    # ---- all 12 group hypernet heads: block-structured packed 2-layer MLP ---
    hpre = (jnp.dot(s_ref[...], gw1s_ref[...], preferred_element_type=jnp.float32)
            + gb1_ref[...])                                            # (N, 168)
    for g in range(G):
        hpre = hpre + jnp.dot(means[g], gw1m_ref[g],
                              preferred_element_type=jnp.float32)
    hg = jnp.maximum(hpre, 0.0)                                        # ReLU
    slab = (jnp.dot(hg, gw2_ref[...], preferred_element_type=jnp.float32)
            + gb2_ref[...])                                            # (N, 168)

    # ---- per-group monotonic mixing (VPU multiplies + aligned lane slices) --
    qrep = qrep_ref[...]                                               # (N, A*E)
    group_q = []
    for g in range(G):
        base = g * GROUP_OUT_PAD
        w1a = jnp.abs(slab[:, base:base + A * E])                      # (N, A*E)
        b1g = slab[:, base + A * E:base + A * E + E]                   # (N, E)
        w2a = jnp.abs(slab[:, base + A * E + E:base + A * E + 2 * E])  # (N, E)
        b2g = slab[:, base + A * E + 2 * E:base + A * E + 2 * E + 1]   # (N, 1)
        prod = w1a * (qrep * maskrep_ref[g])                           # (N, A*E)
        hp = b1g
        for a in range(A):
            hp = hp + prod[:, a * E:(a + 1) * E]                       # sum over agents
        hmix = _elu(hp)                                                # (N, E)
        group_q.append(jnp.sum(hmix * w2a, axis=-1, keepdims=True) + b2g)   # (N, 1)

    # ---- top-level hyper mixing ---------------------------------------------
    hyp = hyp_ref[...]                                                 # (N, 41)
    hw1a = jnp.abs(hyp[:, 0:G * E])                                    # (N, G*E)
    hb1 = hyp[:, G * E:G * E + E]                                      # (N, E)
    hw2a = jnp.abs(hyp[:, G * E + E:G * E + 2 * E])                    # (N, E)
    hb2 = hyp[:, G * E + 2 * E:G * E + 2 * E + 1]                      # (N, 1)
    hp = hb1
    for g in range(G):
        hp = hp + group_q[g] * hw1a[:, g * E:(g + 1) * E]
    hmix = _elu(hp)
    qtot_ref[...] = jnp.sum(hmix * hw2a, axis=-1, keepdims=True) + hb2  # (N, 1)


def fused_mix(obs_r, ew1, eb1, ew2, eb2, h0, Wi_b, Wh_b, bi, bh, masks,
              s, GW1s, GW1m, Gb1, GW2, Gb2, q_rep, mask_rep, hyp_slab):
    N, A, _ = obs_r.shape
    H = h0.shape[-1]
    return pl.pallas_call(
        fused_mix_kernel,
        out_shape=(jax.ShapeDtypeStruct((N, 1), jnp.float32),      # qtot
                   jax.ShapeDtypeStruct((1,), jnp.float32),        # group loss
                   jax.ShapeDtypeStruct((N, A, H), jnp.float32)),  # new hidden
        in_specs=[_vmem_spec()] * 20,
        out_specs=(_vmem_spec(), _smem_spec(), _vmem_spec()),
    )(obs_r, ew1, eb1, ew2, eb2, h0, Wi_b, Wh_b, bi, bh, masks,
      s, GW1s, GW1m, Gb1, GW2, Gb2, q_rep, mask_rep, hyp_slab)


# ---------------- one-time parameter packing (plain JAX, outside jit) --------
def _pack_mlp2_heads(heads):
    """heads: list of (W1, b1, W2, b2) all reading the same input.
    Returns fused (W1c, b1c, W2c_blockdiag, b2c)."""
    W1c = jnp.concatenate([h[0] for h in heads], axis=1)
    b1c = jnp.concatenate([h[1] for h in heads], axis=1)
    hsz = [h[0].shape[1] for h in heads]
    osz = [h[2].shape[1] for h in heads]
    W2c = jnp.zeros((sum(hsz), sum(osz)), jnp.float32)
    r = c = 0
    for (W1, b1, W2, b2), hh, oo in zip(heads, hsz, osz):
        W2c = W2c.at[r:r + hh, c:c + oo].set(W2)
        r += hh
        c += oo
    b2c = jnp.concatenate([h[3] for h in heads], axis=1)
    return W1c, b1c, W2c, b2c


def _pack_group_heads(groups_params):
    """Pack the 3x4 group heads.  First layer split into a shared state block
    (44 rows) and per-group mean blocks (8 rows each, zero outside the group's
    hidden columns).  Second-layer outputs are padded to 8-lane-aligned
    per-group blocks so all in-kernel slices are lane-aligned."""
    Hcols = N_GROUPS * GROUP_HID
    Ocols = N_GROUPS * GROUP_OUT_PAD
    W1s = jnp.zeros((STATE_DIM, Hcols), jnp.float32)
    W1m = jnp.zeros((N_GROUPS, EMBED_DIM, Hcols), jnp.float32)
    b1 = jnp.zeros((1, Hcols), jnp.float32)
    W2 = jnp.zeros((Hcols, Ocols), jnp.float32)
    b2 = jnp.zeros((1, Ocols), jnp.float32)
    for g in range(N_GROUPS):
        gp = groups_params[g]
        heads = [gp['w1'], gp['b1'], gp['w2'], gp['b2']]
        hoff = g * GROUP_HID
        ooff = g * GROUP_OUT_PAD
        for (W1h, b1h, W2h, b2h) in heads:
            hs = W1h.shape[1]
            osz = W2h.shape[1]
            W1s = W1s.at[:, hoff:hoff + hs].set(W1h[:STATE_DIM])
            W1m = W1m.at[g, :, hoff:hoff + hs].set(W1h[STATE_DIM:])
            b1 = b1.at[:, hoff:hoff + hs].set(b1h)
            W2 = W2.at[hoff:hoff + hs, ooff:ooff + osz].set(W2h)
            b2 = b2.at[:, ooff:ooff + osz].set(b2h)
            hoff += hs
            ooff += osz
    return W1s, W1m, b1, W2, b2


def pack_params(params):
    """Static packing done ONCE (outside jit)."""
    heads_s = [params['emb_w1'], params['emb_b1'], params['emb_w2'], params['emb_b2'],
               params['hyper']['w1'], params['hyper']['b1'],
               params['hyper']['w2'], params['hyper']['b2']]
    W1s, b1s, W2s, b2s = _pack_mlp2_heads(heads_s)
    GW1s, GW1m, Gb1, GW2, Gb2 = _pack_group_heads(params['groups'])
    Wir, Wiz, Win, Whr, Whz, Whn, bir, biz, bin_, bhr, bhz, bhn = params['gru']
    Wi = jnp.concatenate([Wir, Wiz, Win], axis=1)                      # (E, 3H)
    Wh = jnp.concatenate([Whr, Whz, Whn], axis=1)                      # (H, 3H)
    bi = jnp.concatenate([bir, biz, bin_], axis=1).reshape(1, 1, 3 * RNN_HIDDEN_DIM)
    bh = jnp.concatenate([bhr, bhz, bhn], axis=1).reshape(1, 1, 3 * RNN_HIDDEN_DIM)
    return dict(W1s=W1s, b1s=b1s, W2s=W2s, b2s=b2s,
                GW1s=GW1s, GW1m=GW1m, Gb1=Gb1, GW2=GW2, Gb2=Gb2,
                Wi=Wi, Wh=Wh, bi=bi, bh=bh)


# ---------------- full forward pass (glue around the 2 kernels) ---------------
def ghypermixer_forward(packed, qvals, states, obs, hidden_states):
    b, t, A = qvals.shape
    N = b * t
    E, G, H = EMBED_DIM, N_GROUPS, RNN_HIDDEN_DIM

    # get_masks: one-hot agent-type features (t=0) broadcast over time
    ally_states = states[:, :, :N_AGENTS * ALLY_FEATS].reshape(b, t, N_AGENTS, ALLY_FEATS)
    type_mat = ally_states[:, 0, :, -G:]                               # (b, A, G)
    m_bAg = (type_mat == 1.0).astype(jnp.float32)                      # exact == 1 like torch
    masks = jnp.transpose(m_bAg, (2, 0, 1))                            # (G, b, A)
    masks = jnp.broadcast_to(masks[:, :, None, :], (G, b, t, A)).reshape(G, N, A)

    s = states.reshape(N, STATE_DIM)

    # ---- kernel 1: all 8 state hypernet heads -> one lane-dense slab --------
    slab_s = hyper_s(s, packed['W1s'], packed['b1s'], packed['W2s'], packed['b2s'])
    o1 = OBS_DIM * E
    o2 = o1 + A * E
    o3 = o2 + H * E
    o4 = o3 + A * E
    ew1 = slab_s[:, 0:o1].reshape(N, OBS_DIM, E)
    eb1 = slab_s[:, o1:o2].reshape(N, A, E)
    ew2 = slab_s[:, o2:o3].reshape(N, H, E)
    eb2 = slab_s[:, o3:o4].reshape(N, A, E)
    hyp_slab = slab_s[:, o4:]                                          # (N, G*E+2E+1)

    # shared GRU weights broadcast for batched einsum (tiny; proven-good path)
    Wi_b = jnp.broadcast_to(packed['Wi'][None], (N, E, 3 * H))
    Wh_b = jnp.broadcast_to(packed['Wh'][None], (N, H, 3 * H))

    obs_r = obs.reshape(N, A, OBS_DIM)
    h0 = hidden_states.reshape(N, A, H)
    # lane-aligned replication of q and masks so the mixing needs no reshapes
    q_rep = jnp.repeat(qvals.reshape(N, A), E, axis=1)                 # (N, A*E)
    mask_rep = jnp.repeat(masks, E, axis=-1)                           # (G, N, A*E)

    # ---- kernel 2: everything else in one fused call ------------------------
    qtot, loss, hidden = fused_mix(
        obs_r, ew1, eb1, ew2, eb2, h0, Wi_b, Wh_b, packed['bi'], packed['bh'],
        masks, s, packed['GW1s'], packed['GW1m'], packed['Gb1'], packed['GW2'],
        packed['Gb2'], q_rep, mask_rep, hyp_slab)

    return qtot.reshape(b, t, 1), loss[0], hidden.reshape(b, t, A, H)


# ---------------- deterministic parameter construction ------------------------
def _linear(key, din, dout, scale=0.1):
    kw, kb = jax.random.split(key)
    return (jax.random.normal(kw, (din, dout), jnp.float32) * scale,
            jax.random.normal(kb, (1, dout), jnp.float32) * scale)


def _mlp2_params(key, din, dh, dout):
    k1, k2 = jax.random.split(key)
    W1, b1 = _linear(k1, din, dh)
    W2, b2 = _linear(k2, dh, dout)
    return (W1, b1, W2, b2)


def init_params(key):
    ks = iter(jax.random.split(key, 32))
    E, H, Hy, A = EMBED_DIM, RNN_HIDDEN_DIM, HYPERNET_EMBED, N_AGENTS
    params = {
        'emb_w1': _mlp2_params(next(ks), STATE_DIM, Hy, OBS_DIM * E),
        'emb_b1': _mlp2_params(next(ks), STATE_DIM, Hy, A * E),
        'emb_w2': _mlp2_params(next(ks), STATE_DIM, Hy, H * E),
        'emb_b2': _mlp2_params(next(ks), STATE_DIM, Hy, A * E),
        'hyper': {
            'w1': _mlp2_params(next(ks), STATE_DIM, Hy, N_GROUPS * E),
            'b1': _mlp2_params(next(ks), STATE_DIM, Hy, E),
            'w2': _mlp2_params(next(ks), STATE_DIM, Hy, E),
            'b2': _mlp2_params(next(ks), STATE_DIM, E, 1),
        },
        'groups': [],
    }
    gin = STATE_DIM + E
    for _ in range(N_GROUPS):
        params['groups'].append({
            'w1': _mlp2_params(next(ks), gin, Hy, A * E),
            'b1': _mlp2_params(next(ks), gin, Hy, E),
            'w2': _mlp2_params(next(ks), gin, Hy, E),
            'b2': _mlp2_params(next(ks), gin, E, 1),
        })
    # GRUCell(E, H): separate r/z/n gate weights (same math as torch's packed layout)
    gk = jax.random.split(next(ks), 12)
    gru = []
    for i in range(3):
        gru.append(jax.random.normal(gk[i], (E, H), jnp.float32) * 0.1)       # W_i{r,z,n}
    for i in range(3):
        gru.append(jax.random.normal(gk[3 + i], (H, H), jnp.float32) * 0.1)   # W_h{r,z,n}
    for i in range(6):
        gru.append(jax.random.normal(gk[6 + i], (1, H), jnp.float32) * 0.1)   # b_i{r,z,n}, b_h{r,z,n}
    params['gru'] = tuple(gru)
    return params


# ---------------- demo ---------------------------------------------------------
if __name__ == "__main__":
    key = jax.random.PRNGKey(0)
    kp, k1, k2, k3, k4 = jax.random.split(key, 5)
    params = init_params(kp)
    packed = pack_params(params)          # one-time static packing, outside jit

    A, H = N_AGENTS, RNN_HIDDEN_DIM
    # ally features with one-hot group type in the last 3 slots (agent a -> group a % 3)
    ally_base = jax.random.normal(k1, (B, T, A, ALLY_FEATS - N_GROUPS), jnp.float32) * 0.5
    group_ids = jnp.arange(A) % N_GROUPS
    onehot = jax.nn.one_hot(group_ids, N_GROUPS, dtype=jnp.float32)            # (A, 3)
    ally_states = jnp.concatenate(
        [ally_base, jnp.broadcast_to(onehot, (B, T, A, N_GROUPS))], axis=-1)
    rest = jax.random.normal(
        k2, (B, T, N_ENEMIES * ENEMY_FEATS + LAST_ACTIONS_DIM), jnp.float32) * 0.5
    states = jnp.concatenate([ally_states.reshape(B, T, -1), rest], axis=-1)   # (B, T, STATE_DIM)
    qvals = jax.random.normal(k3, (B, T, A), jnp.float32)
    obs = jax.random.normal(k4, (B, T, A, OBS_DIM), jnp.float32) * 0.5
    hidden0 = jnp.zeros((B, T, A, H), jnp.float32)                             # init_hidden(B*T)

    fwd = jax.jit(ghypermixer_forward)
    qtot, group_loss, new_hidden = fwd(packed, qvals, states, obs, hidden0)
    jax.block_until_ready((qtot, group_loss, new_hidden))

    assert qtot.shape == (B, T, 1)
    assert new_hidden.shape == (B, T, A, H)
    assert bool(jnp.isfinite(group_loss))
    print("KERNEL_OK")
</pallas_src>

<mosaic_0001>
module attributes {stable_mosaic.version = 11 : i64} {
  func.func @hyper_s_kernel(%arg0: memref<6x44xf32, #tpu.memory_space<vmem>>, %arg1: memref<44x120xf32, #tpu.memory_space<vmem>>, %arg2: memref<1x120xf32, #tpu.memory_space<vmem>>, %arg3: memref<120x313xf32, #tpu.memory_space<vmem>>, %arg4: memref<1x313xf32, #tpu.memory_space<vmem>>, %arg5: memref<6x313xf32, #tpu.memory_space<vmem>>) attributes {dimension_semantics = [], scalar_prefetch = 0 : i64, scratch_operands = 0 : i64, tpu.core_type = #tpu.core_type<tc>} {
    %c0 = arith.constant 0 : index
    %c0_0 = arith.constant 0 : index
    %0 = vector.load %arg0[%c0, %c0_0] : memref<6x44xf32, #tpu.memory_space<vmem>>, vector<6x44xf32>
    %c0_1 = arith.constant 0 : index
    %c0_2 = arith.constant 0 : index
    %1 = vector.load %arg1[%c0_1, %c0_2] : memref<44x120xf32, #tpu.memory_space<vmem>>, vector<44x120xf32>
    %cst = arith.constant dense<0.000000e+00> : vector<6x120xf32>
    %2 = tpu.matmul %0, %1, %cst {dimension_numbers = #tpu.dot_dimension_numbers<[1], [0], [0], [1], [0, 0, 1, 1], [], []>} : vector<6x44xf32>, vector<44x120xf32>, vector<6x120xf32> -> vector<6x120xf32>
    %c0_3 = arith.constant 0 : index
    %c0_4 = arith.constant 0 : index
    %3 = vector.load %arg2[%c0_3, %c0_4] : memref<1x120xf32, #tpu.memory_space<vmem>>, vector<1x120xf32>
    %4 = vector.broadcast %3 : vector<1x120xf32> to vector<6x120xf32>
    %5 = arith.addf %2, %4 : vector<6x120xf32>
    %cst_5 = arith.constant 0.000000e+00 : f32
    %6 = vector.broadcast %cst_5 : f32 to vector<6x120xf32>
    %7 = arith.maximumf %5, %6 : vector<6x120xf32>
    %c0_6 = arith.constant 0 : index
    %c0_7 = arith.constant 0 : index
    %8 = vector.load %arg3[%c0_6, %c0_7] : memref<120x313xf32, #tpu.memory_space<vmem>>, vector<120x313xf32>
    %cst_8 = arith.constant dense<0.000000e+00> : vector<6x313xf32>
    %9 = tpu.matmul %7, %8, %cst_8 {dimension_numbers = #tpu.dot_dimension_numbers<[1], [0], [0], [1], [0, 0, 1, 1], [], []>} : vector<6x120xf32>, vector<120x313xf32>, vector<6x313xf32> -> vector<6x313xf32>
    %c0_9 = arith.constant 0 : index
    %c0_10 = arith.constant 0 : index
    %10 = vector.load %arg4[%c0_9, %c0_10] : memref<1x313xf32, #tpu.memory_space<vmem>>, vector<1x313xf32>
    %11 = vector.broadcast %10 : vector<1x313xf32> to vector<6x313xf32>
    %12 = arith.addf %9, %11 : vector<6x313xf32>
    %c0_11 = arith.constant 0 : index
    %c0_12 = arith.constant 0 : index
    %13 = vector.load %arg5[%c0_11, %c0_12] : memref<6x313xf32, #tpu.memory_space<vmem>>, vector<6x313xf32>
    tpu.vector_store %arg5[%c0_11, %c0_12], %12 {strides = array<i32>} : memref<6x313xf32, #tpu.memory_space<vmem>>, vector<6x313xf32>,
    return
  }
}

module attributes {stable_mosaic.version = 11 : i64} {
  func.func @fused_mix_kernel(%arg0: memref<6x4x10xf32, #tpu.memory_space<vmem>>, %arg1: memref<6x10x8xf32, #tpu.memory_space<vmem>>, %arg2: memref<6x4x8xf32, #tpu.memory_space<vmem>>, %arg3: memref<6x16x8xf32, #tpu.memory_space<vmem>>, %arg4: memref<6x4x8xf32, #tpu.memory_space<vmem>>, %arg5: memref<6x4x16xf32, #tpu.memory_space<vmem>>, %arg6: memref<6x8x48xf32, #tpu.memory_space<vmem>>, %arg7: memref<6x16x48xf32, #tpu.memory_space<vmem>>, %arg8: memref<1x1x48xf32, #tpu.memory_space<vmem>>, %arg9: memref<1x1x48xf32, #tpu.memory_space<vmem>>, %arg10: memref<3x6x4xf32, #tpu.memory_space<vmem>>, %arg11: memref<6x44xf32, #tpu.memory_space<vmem>>, %arg12: memref<44x168xf32, #tpu.memory_space<vmem>>, %arg13: memref<3x8x168xf32, #tpu.memory_space<vmem>>, %arg14: memref<1x168xf32, #tpu.memory_space<vmem>>, %arg15: memref<168x168xf32, #tpu.memory_space<vmem>>, %arg16: memref<1x168xf32, #tpu.memory_space<vmem>>, %arg17: memref<6x32xf32, #tpu.memory_space<vmem>>, %arg18: memref<3x6x32xf32, #tpu.memory_space<vmem>>, %arg19: memref<6x41xf32, #tpu.memory_space<vmem>>, %arg20: memref<6x1xf32, #tpu.memory_space<vmem>>, %arg21: memref<1xf32, #tpu.memory_space<smem>>, %arg22: memref<6x4x16xf32, #tpu.memory_space<vmem>>) attributes {dimension_semantics = [], scalar_prefetch = 0 : i64, scratch_operands = 0 : i64, tpu.core_type = #tpu.core_type<tc>} {
    %c0 = arith.constant 0 : index
    %c0_0 = arith.constant 0 : index
    %c0_1 = arith.constant 0 : index
    %0 = vector.load %arg0[%c0, %c0_0, %c0_1] : memref<6x4x10xf32, #tpu.memory_space<vmem>>, vector<6x4x10xf32>
    %c0_2 = arith.constant 0 : index
    %c0_3 = arith.constant 0 : index
    %c0_4 = arith.constant 0 : index
    %1 = vector.load %arg1[%c0_2, %c0_3, %c0_4] : memref<6x10x8xf32, #tpu.memory_space<vmem>>, vector<6x10x8xf32>
    "tpu.trace_start"() <{level = 10 : i32, message = "nad,nde->nae"}> : () -> ()
    %cst = arith.constant dense<0.000000e+00> : vector<6x4x8xf32>
    %2 = tpu.matmul %0, %1, %cst {dimension_numbers = #tpu.dot_dimension_numbers<[2], [1], [1], [2], [0, 0, 0, 1, 1, 2], [0], [0]>} : vector<6x4x10xf32>, vector<6x10x8xf32>, vector<6x4x8xf32> -> vector<6x4x8xf32>
    "tpu.trace_stop"() : () -> ()
    %c0_5 = arith.constant 0 : index
    %c0_6 = arith.constant 0 : index
    %c0_7 = arith.constant 0 : index
    %3 = vector.load %arg2[%c0_5, %c0_6, %c0_7] : memref<6x4x8xf32, #tpu.memory_space<vmem>>, vector<6x4x8xf32>
    %4 = arith.addf %2, %3 : vector<6x4x8xf32>
    %cst_8 = arith.constant 0.000000e+00 : f32
    %5 = vector.broadcast %cst_8 : f32 to vector<6x4x8xf32>
    %6 = arith.cmpf ogt, %4, %5 : vector<6x4x8xf32>
    %7 = math.exp %4 : vector<6x4x8xf32>
    %cst_9 = arith.constant 1.000000e+00 : f32
    %8 = vector.broadcast %cst_9 : f32 to vector<6x4x8xf32>
    %9 = arith.subf %7, %8 : vector<6x4x8xf32>
    %10 = arith.select %6, %4, %9 : vector<6x4x8xi1>, vector<6x4x8xf32>
    %c0_10 = arith.constant 0 : index
    %c0_11 = arith.constant 0 : index
    %c0_12 = arith.constant 0 : index
    %11 = vector.load %arg5[%c0_10, %c0_11, %c0_12] : memref<6x4x16xf32, #tpu.memory_space<vmem>>, vector<6x4x16xf32>
    %c0_13 = arith.constant 0 : index
    %c0_14 = arith.constant 0 : index
    %c0_15 = arith.constant 0 : index
    %12 = vector.load %arg6[%c0_13, %c0_14, %c0_15] : memref<6x8x48xf32, #tpu.memory_space<vmem>>, vector<6x8x48xf32>
    "tpu.trace_start"() <{level = 10 : i32, message = "nae,nef->naf"}> : () -> ()
    %cst_16 = arith.constant dense<0.000000e+00> : vector<6x4x48xf32>
    %13 = tpu.matmul %10, %12, %cst_16 {dimension_numbers = #tpu.dot_dimension_numbers<[2], [1], [1], [2], [0, 0, 0, 1, 1, 2], [0], [0]>} : vector<6x4x8xf32>, vector<6x8x48xf32>, vector<6x4x48xf32> -> vector<6x4x48xf32>
    "tpu.trace_stop"() : () -> ()
    %c0_17 = arith.constant 0 : index
    %c0_18 = arith.constant 0 : index
    %c0_19 = arith.constant 0 : index
    %14 = vector.load %arg8[%c0_17, %c0_18, %c0_19] : memref<1x1x48xf32, #tpu.memory_space<vmem>>, vector<1x1x48xf32>
    %15 = vector.broadcast %14 : vector<1x1x48xf32> to vector<6x4x48xf32>
    %16 = arith.addf %13, %15 : vector<6x4x48xf32>
    %c0_20 = arith.constant 0 : index
    %c0_21 = arith.constant 0 : index
    %c0_22 = arith.constant 0 : index
    %17 = vector.load %arg7[%c0_20, %c0_21, %c0_22] : memref<6x16x48xf32, #tpu.memory_space<vmem>>, vector<6x16x48xf32>
    "tpu.trace_start"() <{level = 10 : i32, message = "nah,nhf->naf"}> : () -> ()
    %cst_23 = arith.constant dense<0.000000e+00> : vector<6x4x48xf32>
    %18 = tpu.matmul %11, %17, %cst_23 {dimension_numbers = #tpu.dot_dimension_numbers<[2], [1], [1], [2], [0, 0, 0, 1, 1, 2], [0], [0]>} : vector<6x4x16xf32>, vector<6x16x48xf32>, vector<6x4x48xf32> -> vector<6x4x48xf32>
    "tpu.trace_stop"() : () -> ()
    %c0_24 = arith.constant 0 : index
    %c0_25 = arith.constant 0 : index
    %c0_26 = arith.constant 0 : index
    %19 = vector.load %arg9[%c0_24, %c0_25, %c0_26] : memref<1x1x48xf32, #tpu.memory_space<vmem>>, vector<1x1x48xf32>
    %20 = vector.broadcast %19 : vector<1x1x48xf32> to vector<6x4x48xf32>
    %21 = arith.addf %18, %20 : vector<6x4x48xf32>
    %22 = vector.extract_strided_slice %16 {offsets = [0, 0, 0], sizes = [6, 4, 16], strides = [1, 1, 1]} : vector<6x4x48xf32> to vector<6x4x16xf32>
    %23 = vector.extract_strided_slice %21 {offsets = [0, 0, 0], sizes = [6, 4, 16], strides = [1, 1, 1]} : vector<6x4x48xf32> to vector<6x4x16xf32>
    %24 = arith.addf %22, %23 : vector<6x4x16xf32>
    %cst_27 = arith.constant 0.000000e+00 : f32
    %25 = vector.broadcast %cst_27 : f32 to vector<6x4x16xf32>
    %26 = arith.subf %25, %24 : vector<6x4x16xf32>
    %27 = math.exp %26 : vector<6x4x16xf32>
    %cst_28 = arith.constant 1.000000e+00 : f32
    %28 = vector.broadcast %cst_28 : f32 to vector<6x4x16xf32>
    %29 = arith.addf %28, %27 : vector<6x4x16xf32>
    %cst_29 = arith.constant 1.000000e+00 : f32
    %30 = vector.broadcast %cst_29 : f32 to vector<6x4x16xf32>
    %31 = arith.divf %30, %29 : vector<6x4x16xf32>
    %32 = vector.extract_strided_slice %16 {offsets = [0, 0, 16], sizes = [6, 4, 16], strides = [1, 1, 1]} : vector<6x4x48xf32> to vector<6x4x16xf32>
    %33 = vector.extract_strided_slice %21 {offsets = [0, 0, 16], sizes = [6, 4, 16], strides = [1, 1, 1]} : vector<6x4x48xf32> to vector<6x4x16xf32>
    %34 = arith.addf %32, %33 : vector<6x4x16xf32>
    %cst_30 = arith.constant 0.000000e+00 : f32
    %35 = vector.broadcast %cst_30 : f32 to vector<6x4x16xf32>
    %36 = arith.subf %35, %34 : vector<6x4x16xf32>
    %37 = math.exp %36 : vector<6x4x16xf32>
    %cst_31 = arith.constant 1.000000e+00 : f32
    %38 = vector.broadcast %cst_31 : f32 to vector<6x4x16xf32>
    %39 = arith.addf %38, %37 : vector<6x4x16xf32>
    %cst_32 = arith.constant 1.000000e+00 : f32
    %40 = vector.broadcast %cst_32 : f32 to vector<6x4x16xf32>
    %41 = arith.divf %40, %39 : vector<6x4x16xf32>
    %42 = vector.extract_strided_slice %16 {offsets = [0, 0, 32], sizes = [6, 4, 16], strides = [1, 1, 1]} : vector<6x4x48xf32> to vector<6x4x16xf32>
    %43 = vector.extract_strided_slice %21 {offsets = [0, 0, 32], sizes = [6, 4, 16], strides = [1, 1, 1]} : vector<6x4x48xf32> to vector<6x4x16xf32>
    %44 = arith.mulf %31, %43 : vector<6x4x16xf32>
    %45 = arith.addf %42, %44 : vector<6x4x16xf32>
    %46 = math.tanh %45 : vector<6x4x16xf32>
    %cst_33 = arith.constant 1.000000e+00 : f32
    %47 = vector.broadcast %cst_33 : f32 to vector<6x4x16xf32>
    %48 = arith.subf %47, %41 : vector<6x4x16xf32>
    %49 = arith.mulf %48, %46 : vector<6x4x16xf32>
    %50 = arith.mulf %41, %11 : vector<6x4x16xf32>
    %51 = arith.addf %49, %50 : vector<6x4x16xf32>
    %c0_34 = arith.constant 0 : index
    %c0_35 = arith.constant 0 : index
    %c0_36 = arith.constant 0 : index
    %52 = vector.load %arg22[%c0_34, %c0_35, %c0_36] : memref<6x4x16xf32, #tpu.memory_space<vmem>>, vector<6x4x16xf32>
    tpu.vector_store %arg22[%c0_34, %c0_35, %c0_36], %51 {strides = array<i32>} : memref<6x4x16xf32, #tpu.memory_space<vmem>>, vector<6x4x16xf32>,
    %c0_37 = arith.constant 0 : index
    %c0_38 = arith.constant 0 : index
    %c0_39 = arith.constant 0 : index
    %53 = vector.load %arg3[%c0_37, %c0_38, %c0_39] : memref<6x16x8xf32, #tpu.memory_space<vmem>>, vector<6x16x8xf32>
    "tpu.trace_start"() <{level = 10 : i32, message = "nah,nhe->nae"}> : () -> ()
    %cst_40 = arith.constant dense<0.000000e+00> : vector<6x4x8xf32>
    %54 = tpu.matmul %51, %53, %cst_40 {dimension_numbers = #tpu.dot_dimension_numbers<[2], [1], [1], [2], [0, 0, 0, 1, 1, 2], [0], [0]>} : vector<6x4x16xf32>, vector<6x16x8xf32>, vector<6x4x8xf32> -> vector<6x4x8xf32>
    "tpu.trace_stop"() : () -> ()
    %c0_41 = arith.constant 0 : index
    %c0_42 = arith.constant 0 : index
    %c0_43 = arith.constant 0 : index
    %55 = vector.load %arg4[%c0_41, %c0_42, %c0_43] : memref<6x4x8xf32, #tpu.memory_space<vmem>>, vector<6x4x8xf32>
    %56 = arith.addf %54, %55 : vector<6x4x8xf32>
    %cst_44 = arith.constant 0.000000e+00 : f32
    %57 = vector.broadcast %cst_44 : f32 to vector<6x4x8xf32>
    %58 = arith.cmpf ogt, %56, %57 : vector<6x4x8xf32>
    %59 = math.exp %56 : vector<6x4x8xf32>
    %cst_45 = arith.constant 1.000000e+00 : f32
    %60 = vector.broadcast %cst_45 : f32 to vector<6x4x8xf32>
    %61 = arith.subf %59, %60 : vector<6x4x8xf32>
    %62 = arith.select %58, %56, %61 : vector<6x4x8xi1>, vector<6x4x8xf32>
    %c0_46 = arith.constant 0 : index
    %c0_47 = arith.constant 0 : index
    %c0_48 = arith.constant 0 : index
    %63 = vector.load %arg10[%c0_46, %c0_47, %c0_48] : memref<3x6x4xf32, #tpu.memory_space<vmem>>, vector<1x6x4xf32>
    %64 = vector.shape_cast %63 : vector<1x6x4xf32> to vector<6x4xf32>
    %65 = vector.shape_cast %64 : vector<6x4xf32> to vector<6x4x1xf32>
    %66 = vector.broadcast %65 : vector<6x4x1xf32> to vector<6x4x8xf32>
    %67 = arith.mulf %62, %66 : vector<6x4x8xf32>
    %cst_49 = arith.constant dense<0.000000e+00> : vector<6xf32>
    %68 = vector.multi_reduction <add>, %64, %cst_49 [1] : vector<6x4xf32> to vector<6xf32>
    %69 = vector.shape_cast %68 : vector<6xf32> to vector<6x1xf32>
    %cst_50 = arith.constant dense<0.000000e+00> : vector<6x8xf32>
    %70 = vector.multi_reduction <add>, %67, %cst_50 [1] : vector<6x4x8xf32> to vector<6x8xf32>
    %cst_51 = arith.constant 9.99999993E-9 : f32
    %71 = vector.broadcast %cst_51 : f32 to vector<6x1xf32>
    %72 = arith.addf %69, %71 : vector<6x1xf32>
    %73 = vector.broadcast %72 : vector<6x1xf32> to vector<6x8xf32>
    %74 = arith.divf %70, %73 : vector<6x8xf32>
    %c1 = arith.constant 1 : index
    %c0_52 = arith.constant 0 : index
    %c0_53 = arith.constant 0 : index
    %75 = vector.load %arg10[%c1, %c0_52, %c0_53] : memref<3x6x4xf32, #tpu.memory_space<vmem>>, vector<1x6x4xf32>
    %76 = vector.shape_cast %75 : vector<1x6x4xf32> to vector<6x4xf32>
    %77 = vector.shape_cast %76 : vector<6x4xf32> to vector<6x4x1xf32>
    %78 = vector.broadcast %77 : vector<6x4x1xf32> to vector<6x4x8xf32>
    %79 = arith.mulf %62, %78 : vector<6x4x8xf32>
    %cst_54 = arith.constant dense<0.000000e+00> : vector<6xf32>
    %80 = vector.multi_reduction <add>, %76, %cst_54 [1] : vector<6x4xf32> to vector<6xf32>
    %81 = vector.shape_cast %80 : vector<6xf32> to vector<6x1xf32>
    %cst_55 = arith.constant dense<0.000000e+00> : vector<6x8xf32>
    %82 = vector.multi_reduction <add>, %79, %cst_55 [1] : vector<6x4x8xf32> to vector<6x8xf32>
    %cst_56 = arith.constant 9.99999993E-9 : f32
    %83 = vector.broadcast %cst_56 : f32 to vector<6x1xf32>
    %84 = arith.addf %81, %83 : vector<6x1xf32>
    %85 = vector.broadcast %84 : vector<6x1xf32> to vector<6x8xf32>
    %86 = arith.divf %82, %85 : vector<6x8xf32>
    %c2 = arith.constant 2 : index
    %c0_57 = arith.constant 0 : index
    %c0_58 = arith.constant 0 : index
    %87 = vector.load %arg10[%c2, %c0_57, %c0_58] : memref<3x6x4xf32, #tpu.memory_space<vmem>>, vector<1x6x4xf32>
    %88 = vector.shape_cast %87 : vector<1x6x4xf32> to vector<6x4xf32>
    %89 = vector.shape_cast %88 : vector<6x4xf32> to vector<6x4x1xf32>
    %90 = vector.broadcast %89 : vector<6x4x1xf32> to vector<6x4x8xf32>
    %91 = arith.mulf %62, %90 : vector<6x4x8xf32>
    %cst_59 = arith.constant dense<0.000000e+00> : vector<6xf32>
    %92 = vector.multi_reduction <add>, %88, %cst_59 [1] : vector<6x4xf32> to vector<6xf32>
    %93 = vector.shape_cast %92 : vector<6xf32> to vector<6x1xf32>
    %cst_60 = arith.constant dense<0.000000e+00> : vector<6x8xf32>
    %94 = vector.multi_reduction <add>, %91, %cst_60 [1] : vector<6x4x8xf32> to vector<6x8xf32>
    %cst_61 = arith.constant 9.99999993E-9 : f32
    %95 = vector.broadcast %cst_61 : f32 to vector<6x1xf32>
    %96 = arith.addf %93, %95 : vector<6x1xf32>
    %97 = vector.broadcast %96 : vector<6x1xf32> to vector<6x8xf32>
    %98 = arith.divf %94, %97 : vector<6x8xf32>
    %99 = tpu.concatenate %67, %79, %91, %67, %67, %79 in 0 : vector<6x4x8xf32>, vector<6x4x8xf32>, vector<6x4x8xf32>, vector<6x4x8xf32>, vector<6x4x8xf32>, vector<6x4x8xf32> -> vector<36x4x8xf32>
    %100 = tpu.concatenate %67, %79, %91, %79, %91, %91 in 0 : vector<6x4x8xf32>, vector<6x4x8xf32>, vector<6x4x8xf32>, vector<6x4x8xf32>, vector<6x4x8xf32>, vector<6x4x8xf32> -> vector<36x4x8xf32>
    %101 = arith.mulf %99, %99 : vector<36x4x8xf32>
    %cst_62 = arith.constant dense<0.000000e+00> : vector<36x4xf32>
    %102 = vector.multi_reduction <add>, %101, %cst_62 [2] : vector<36x4x8xf32> to vector<36x4xf32>
    %103 = vector.shape_cast %102 : vector<36x4xf32> to vector<36x4x1xf32>
    %104 = math.sqrt %103 : vector<36x4x1xf32>
    %cst_63 = arith.constant 9.99999993E-9 : f32
    %105 = vector.broadcast %cst_63 : f32 to vector<36x4x1xf32>
    %106 = arith.maximumf %104, %105 : vector<36x4x1xf32>
    %107 = vector.broadcast %106 : vector<36x4x1xf32> to vector<36x4x8xf32>
    %108 = arith.divf %99, %107 : vector<36x4x8xf32>
    %109 = arith.mulf %100, %100 : vector<36x4x8xf32>
    %cst_64 = arith.constant dense<0.000000e+00> : vector<36x4xf32>
    %110 = vector.multi_reduction <add>, %109, %cst_64 [2] : vector<36x4x8xf32> to vector<36x4xf32>
    %111 = vector.shape_cast %110 : vector<36x4xf32> to vector<36x4x1xf32>
    %112 = math.sqrt %111 : vector<36x4x1xf32>
    %cst_65 = arith.constant 9.99999993E-9 : f32
    %113 = vector.broadcast %cst_65 : f32 to vector<36x4x1xf32>
    %114 = arith.maximumf %112, %113 : vector<36x4x1xf32>
    %115 = vector.broadcast %114 : vector<36x4x1xf32> to vector<36x4x8xf32>
    %116 = arith.divf %100, %115 : vector<36x4x8xf32>
    "tpu.trace_start"() <{level = 10 : i32, message = "kae,kbe->kab"}> : () -> ()
    %cst_66 = arith.constant dense<0.000000e+00> : vector<36x4x4xf32>
    %117 = tpu.matmul %108, %116, %cst_66 {dimension_numbers = #tpu.dot_dimension_numbers<[2], [2], [1], [1], [0, 0, 0, 1, 1, 1], [0], [0]>} : vector<36x4x8xf32>, vector<36x4x8xf32>, vector<36x4x4xf32> -> vector<36x4x4xf32>
    "tpu.trace_stop"() : () -> ()
    %118 = vector.extract_strided_slice %117 {offsets = [0, 0, 0], sizes = [6, 4, 4], strides = [1, 1, 1]} : vector<36x4x4xf32> to vector<6x4x4xf32>
    %119 = vector.extract_strided_slice %117 {offsets = [18, 0, 0], sizes = [6, 4, 4], strides = [1, 1, 1]} : vector<36x4x4xf32> to vector<6x4x4xf32>
    %120 = vector.shape_cast %118 : vector<6x4x4xf32> to vector<1x6x4x4xf32>
    %cst_67 = arith.constant dense<0.000000e+00> : vector<1xf32>
    %121 = vector.multi_reduction <add>, %120, %cst_67 [1, 2, 3] : vector<1x6x4x4xf32> to vector<1xf32>
    %122 = vector.shape_cast %121 : vector<1xf32> to vector<1x1x1x1xf32>
    %123 = vector.extract %122[0, 0, 0, 0] : f32 from vector<1x1x1x1xf32>
    %cst_68 = arith.constant 0.000000e+00 : f32
    %124 = vector.broadcast %cst_68 : f32 to vector<6x4x4xf32>
    %125 = arith.cmpf one, %118, %124 : vector<6x4x4xf32>
    %126 = arith.extui %125 : vector<6x4x4xi1> to vector<6x4x4xi32>
    %127 = arith.sitofp %126 : vector<6x4x4xi32> to vector<6x4x4xf32>
    %128 = vector.shape_cast %127 : vector<6x4x4xf32> to vector<1x6x4x4xf32>
    %cst_69 = arith.constant dense<0.000000e+00> : vector<1xf32>
    %129 = vector.multi_reduction <add>, %128, %cst_69 [1, 2, 3] : vector<1x6x4x4xf32> to vector<1xf32>
    %130 = vector.shape_cast %129 : vector<1xf32> to vector<1x1x1x1xf32>
    %131 = vector.extract %130[0, 0, 0, 0] : f32 from vector<1x1x1x1xf32>
    %132 = arith.divf %123, %131 : f32
    %133 = vector.shape_cast %119 : vector<6x4x4xf32> to vector<1x6x4x4xf32>
    %cst_70 = arith.constant dense<0.000000e+00> : vector<1xf32>
    %134 = vector.multi_reduction <add>, %133, %cst_70 [1, 2, 3] : vector<1x6x4x4xf32> to vector<1xf32>
    %135 = vector.shape_cast %134 : vector<1xf32> to vector<1x1x1x1xf32>
    %136 = vector.extract %135[0, 0, 0, 0] : f32 from vector<1x1x1x1xf32>
    %cst_71 = arith.constant 0.000000e+00 : f32
    %137 = vector.broadcast %cst_71 : f32 to vector<6x4x4xf32>
    %138 = arith.cmpf one, %119, %137 : vector<6x4x4xf32>
    %139 = arith.extui %138 : vector<6x4x4xi1> to vector<6x4x4xi32>
    %140 = arith.sitofp %139 : vector<6x4x4xi32> to vector<6x4x4xf32>
    %141 = vector.shape_cast %140 : vector<6x4x4xf32> to vector<1x6x4x4xf32>
    %cst_72 = arith.constant dense<0.000000e+00> : vector<1xf32>
    %142 = vector.multi_reduction <add>, %141, %cst_72 [1, 2, 3] : vector<1x6x4x4xf32> to vector<1xf32>
    %143 = vector.shape_cast %142 : vector<1xf32> to vector<1x1x1x1xf32>
    %144 = vector.extract %143[0, 0, 0, 0] : f32 from vector<1x1x1x1xf32>
    %145 = arith.divf %136, %144 : f32
    %cst_73 = arith.constant 0.000000e+00 : f32
    %146 = arith.subf %cst_73, %132 : f32
    %147 = arith.addf %146, %145 : f32
    %cst_74 = arith.constant 0.000000e+00 : f32
    %148 = arith.addf %cst_74, %147 : f32
    %149 = vector.extract_strided_slice %117 {offsets = [6, 0, 0], sizes = [6, 4, 4], strides = [1, 1, 1]} : vector<36x4x4xf32> to vector<6x4x4xf32>
    %150 = vector.extract_strided_slice %117 {offsets = [24, 0, 0], sizes = [6, 4, 4], strides = [1, 1, 1]} : vector<36x4x4xf32> to vector<6x4x4xf32>
    %151 = vector.shape_cast %149 : vector<6x4x4xf32> to vector<1x6x4x4xf32>
    %cst_75 = arith.constant dense<0.000000e+00> : vector<1xf32>
    %152 = vector.multi_reduction <add>, %151, %cst_75 [1, 2, 3] : vector<1x6x4x4xf32> to vector<1xf32>
    %153 = vector.shape_cast %152 : vector<1xf32> to vector<1x1x1x1xf32>
    %154 = vector.extract %153[0, 0, 0, 0] : f32 from vector<1x1x1x1xf32>
    %cst_76 = arith.constant 0.000000e+00 : f32
    %155 = vector.broadcast %cst_76 : f32 to vector<6x4x4xf32>
    %156 = arith.cmpf one, %149, %155 : vector<6x4x4xf32>
    %157 = arith.extui %156 : vector<6x4x4xi1> to vector<6x4x4xi32>
    %158 = arith.sitofp %157 : vector<6x4x4xi32> to vector<6x4x4xf32>
    %159 = vector.shape_cast %158 : vector<6x4x4xf32> to vector<1x6x4x4xf32>
    %cst_77 = arith.constant dense<0.000000e+00> : vector<1xf32>
    %160 = vector.multi_reduction <add>, %159, %cst_77 [1, 2, 3] : vector<1x6x4x4xf32> to vector<1xf32>
    %161 = vector.shape_cast %160 : vector<1xf32> to vector<1x1x1x1xf32>
    %162 = vector.extract %161[0, 0, 0, 0] : f32 from vector<1x1x1x1xf32>
    %163 = arith.divf %154, %162 : f32
    %164 = vector.shape_cast %150 : vector<6x4x4xf32> to vector<1x6x4x4xf32>
    %cst_78 = arith.constant dense<0.000000e+00> : vector<1xf32>
    %165 = vector.multi_reduction <add>, %164, %cst_78 [1, 2, 3] : vector<1x6x4x4xf32> to vector<1xf32>
    %166 = vector.shape_cast %165 : vector<1xf32> to vector<1x1x1x1xf32>
    %167 = vector.extract %166[0, 0, 0, 0] : f32 from vector<1x1x1x1xf32>
    %cst_79 = arith.constant 0.000000e+00 : f32
    %168 = vector.broadcast %cst_79 : f32 to vector<6x4x4xf32>
    %169 = arith.cmpf one, %150, %168 : vector<6x4x4xf32>
    %170 = arith.extui %169 : vector<6x4x4xi1> to vector<6x4x4xi32>
    %171 = arith.sitofp %170 : vector<6x4x4xi32> to vector<6x4x4xf32>
    %172 = vector.shape_cast %171 : vector<6x4x4xf32> to vector<1x6x4x4xf32>
    %cst_80 = arith.constant dense<0.000000e+00> : vector<1xf32>
    %173 = vector.multi_reduction <add>, %172, %cst_80 [1, 2, 3] : vector<1x6x4x4xf32> to vector<1xf32>
    %174 = vector.shape_cast %173 : vector<1xf32> to vector<1x1x1x1xf32>
    %175 = vector.extract %174[0, 0, 0, 0] : f32 from vector<1x1x1x1xf32>
    %176 = arith.divf %167, %175 : f32
    %cst_81 = arith.constant 0.000000e+00 : f32
    %177 = arith.subf %cst_81, %163 : f32
    %178 = arith.addf %177, %176 : f32
    %179 = arith.addf %148, %178 : f32
    %180 = vector.extract_strided_slice %117 {offsets = [12, 0, 0], sizes = [6, 4, 4], strides = [1, 1, 1]} : vector<36x4x4xf32> to vector<6x4x4xf32>
    %181 = vector.extract_strided_slice %117 {offsets = [30, 0, 0], sizes = [6, 4, 4], strides = [1, 1, 1]} : vector<36x4x4xf32> to vector<6x4x4xf32>
    %182 = vector.shape_cast %180 : vector<6x4x4xf32> to vector<1x6x4x4xf32>
    %cst_82 = arith.constant dense<0.000000e+00> : vector<1xf32>
    %183 = vector.multi_reduction <add>, %182, %cst_82 [1, 2, 3] : vector<1x6x4x4xf32> to vector<1xf32>
    %184 = vector.shape_cast %183 : vector<1xf32> to vector<1x1x1x1xf32>
    %185 = vector.extract %184[0, 0, 0, 0] : f32 from vector<1x1x1x1xf32>
    %cst_83 = arith.constant 0.000000e+00 : f32
    %186 = vector.broadcast %cst_83 : f32 to vector<6x4x4xf32>
    %187 = arith.cmpf one, %180, %186 : vector<6x4x4xf32>
    %188 = arith.extui %187 : vector<6x4x4xi1> to vector<6x4x4xi32>
    %189 = arith.sitofp %188 : vector<6x4x4xi32> to vector<6x4x4xf32>
    %190 = vector.shape_cast %189 : vector<6x4x4xf32> to vector<1x6x4x4xf32>
    %cst_84 = arith.constant dense<0.000000e+00> : vector<1xf32>
    %191 = vector.multi_reduction <add>, %190, %cst_84 [1, 2, 3] : vector<1x6x4x4xf32> to vector<1xf32>
    %192 = vector.shape_cast %191 : vector<1xf32> to vector<1x1x1x1xf32>
    %193 = vector.extract %192[0, 0, 0, 0] : f32 from vector<1x1x1x1xf32>
    %194 = arith.divf %185, %193 : f32
    %195 = vector.shape_cast %181 : vector<6x4x4xf32> to vector<1x6x4x4xf32>
    %cst_85 = arith.constant dense<0.000000e+00> : vector<1xf32>
    %196 = vector.multi_reduction <add>, %195, %cst_85 [1, 2, 3] : vector<1x6x4x4xf32> to vector<1xf32>
    %197 = vector.shape_cast %196 : vector<1xf32> to vector<1x1x1x1xf32>
    %198 = vector.extract %197[0, 0, 0, 0] : f32 from vector<1x1x1x1xf32>
    %cst_86 = arith.constant 0.000000e+00 : f32
    %199 = vector.broadcast %cst_86 : f32 to vector<6x4x4xf32>
    %200 = arith.cmpf one, %181, %199 : vector<6x4x4xf32>
    %201 = arith.extui %200 : vector<6x4x4xi1> to vector<6x4x4xi32>
    %202 = arith.sitofp %201 : vector<6x4x4xi32> to vector<6x4x4xf32>
    %203 = vector.shape_cast %202 : vector<6x4x4xf32> to vector<1x6x4x4xf32>
    %cst_87 = arith.constant dense<0.000000e+00> : vector<1xf32>
    %204 = vector.multi_reduction <add>, %203, %cst_87 [1, 2, 3] : vector<1x6x4x4xf32> to vector<1xf32>
    %205 = vector.shape_cast %204 : vector<1xf32> to vector<1x1x1x1xf32>
    %206 = vector.extract %205[0, 0, 0, 0] : f32 from vector<1x1x1x1xf32>
    %207 = arith.divf %198, %206 : f32
    %cst_88 = arith.constant 0.000000e+00 : f32
    %208 = arith.subf %cst_88, %194 : f32
    %209 = arith.addf %208, %207 : f32
    %210 = arith.addf %179, %209 : f32
    %c0_89 = arith.constant 0 : index
    %211 = memref.load %arg21[%c0_89] : memref<1xf32, #tpu.memory_space<smem>>
    memref.store %210, %arg21[%c0_89] : memref<1xf32, #tpu.memory_space<smem>>
    %c0_90 = arith.constant 0 : index
    %c0_91 = arith.constant 0 : index
    %212 = vector.load %arg11[%c0_90, %c0_91] : memref<6x44xf32, #tpu.memory_space<vmem>>, vector<6x44xf32>
    %c0_92 = arith.constant 0 : index
    %c0_93 = arith.constant 0 : index
    %213 = vector.load %arg12[%c0_92, %c0_93] : memref<44x168xf32, #tpu.memory_space<vmem>>, vector<44x168xf32>
    %cst_94 = arith.constant dense<0.000000e+00> : vector<6x168xf32>
    %214 = tpu.matmul %212, %213, %cst_94 {dimension_numbers = #tpu.dot_dimension_numbers<[1], [0], [0], [1], [0, 0, 1, 1], [], []>} : vector<6x44xf32>, vector<44x168xf32>, vector<6x168xf32> -> vector<6x168xf32>
    %c0_95 = arith.constant 0 : index
    %c0_96 = arith.constant 0 : index
    %215 = vector.load %arg14[%c0_95, %c0_96] : memref<1x168xf32, #tpu.memory_space<vmem>>, vector<1x168xf32>
    %216 = vector.broadcast %215 : vector<1x168xf32> to vector<6x168xf32>
    %217 = arith.addf %214, %216 : vector<6x168xf32>
    %c0_97 = arith.constant 0 : index
    %c0_98 = arith.constant 0 : index
    %c0_99 = arith.constant 0 : index
    %218 = vector.load %arg13[%c0_97, %c0_98, %c0_99] : memref<3x8x168xf32, #tpu.memory_space<vmem>>, vector<1x8x168xf32>
    %219 = vector.shape_cast %218 : vector<1x8x168xf32> to vector<8x168xf32>
    %cst_100 = arith.constant dense<0.000000e+00> : vector<6x168xf32>
    %220 = tpu.matmul %74, %219, %cst_100 {dimension_numbers = #tpu.dot_dimension_numbers<[1], [0], [0], [1], [0, 0, 1, 1], [], []>} : vector<6x8xf32>, vector<8x168xf32>, vector<6x168xf32> -> vector<6x168xf32>
    %221 = arith.addf %217, %220 : vector<6x168xf32>
    %c1_101 = arith.constant 1 : index
    %c0_102 = arith.constant 0 : index
    %c0_103 = arith.constant 0 : index
    %222 = vector.load %arg13[%c1_101, %c0_102, %c0_103] : memref<3x8x168xf32, #tpu.memory_space<vmem>>, vector<1x8x168xf32>
    %223 = vector.shape_cast %222 : vector<1x8x168xf32> to vector<8x168xf32>
    %cst_104 = arith.constant dense<0.000000e+00> : vector<6x168xf32>
    %224 = tpu.matmul %86, %223, %cst_104 {dimension_numbers = #tpu.dot_dimension_numbers<[1], [0], [0], [1], [0, 0, 1, 1], [], []>} : vector<6x8xf32>, vector<8x168xf32>, vector<6x168xf32> -> vector<6x168xf32>
    %225 = arith.addf %221, %224 : vector<6x168xf32>
    %c2_105 = arith.constant 2 : index
    %c0_106 = arith.constant 0 : index
    %c0_107 = arith.constant 0 : index
    %226 = vector.load %arg13[%c2_105, %c0_106, %c0_107] : memref<3x8x168xf32, #tpu.memory_space<vmem>>, vector<1x8x168xf32>
    %227 = vector.shape_cast %226 : vector<1x8x168xf32> to vector<8x168xf32>
    %cst_108 = arith.constant dense<0.000000e+00> : vector<6x168xf32>
    %228 = tpu.matmul %98, %227, %cst_108 {dimension_numbers = #tpu.dot_dimension_numbers<[1], [0], [0], [1], [0, 0, 1, 1], [], []>} : vector<6x8xf32>, vector<8x168xf32>, vector<6x168xf32> -> vector<6x168xf32>
    %229 = arith.addf %225, %228 : vector<6x168xf32>
    %cst_109 = arith.constant 0.000000e+00 : f32
    %230 = vector.broadcast %cst_109 : f32 to vector<6x168xf32>
    %231 = arith.maximumf %229, %230 : vector<6x168xf32>
    %c0_110 = arith.constant 0 : index
    %c0_111 = arith.constant 0 : index
    %232 = vector.load %arg15[%c0_110, %c0_111] : memref<168x168xf32, #tpu.memory_space<vmem>>, vector<168x168xf32>
    %cst_112 = arith.constant dense<0.000000e+00> : vector<6x168xf32>
    %233 = tpu.matmul %231, %232, %cst_112 {dimension_numbers = #tpu.dot_dimension_numbers<[1], [0], [0], [1], [0, 0, 1, 1], [], []>} : vector<6x168xf32>, vector<168x168xf32>, vector<6x168xf32> -> vector<6x168xf32>
    %c0_113 = arith.constant 0 : index
    %c0_114 = arith.constant 0 : index
    %234 = vector.load %arg16[%c0_113, %c0_114] : memref<1x168xf32, #tpu.memory_space<vmem>>, vector<1x168xf32>
    %235 = vector.broadcast %234 : vector<1x168xf32> to vector<6x168xf32>
    %236 = arith.addf %233, %235 : vector<6x168xf32>
    %c0_115 = arith.constant 0 : index
    %c0_116 = arith.constant 0 : index
    %237 = vector.load %arg17[%c0_115, %c0_116] : memref<6x32xf32, #tpu.memory_space<vmem>>, vector<6x32xf32>
    %238 = vector.extract_strided_slice %236 {offsets = [0, 0], sizes = [6, 32], strides = [1, 1]} : vector<6x168xf32> to vector<6x32xf32>
    %239 = math.absf %238 : vector<6x32xf32>
    %240 = vector.extract_strided_slice %236 {offsets = [0, 32], sizes = [6, 8], strides = [1, 1]} : vector<6x168xf32> to vector<6x8xf32>
    %241 = vector.extract_strided_slice %236 {offsets = [0, 40], sizes = [6, 8], strides = [1, 1]} : vector<6x168xf32> to vector<6x8xf32>
    %242 = math.absf %241 : vector<6x8xf32>
    %243 = vector.extract_strided_slice %236 {offsets = [0, 48], sizes = [6, 1], strides = [1, 1]} : vector<6x168xf32> to vector<6x1xf32>
    %c0_117 = arith.constant 0 : index
    %c0_118 = arith.constant 0 : index
    %c0_119 = arith.constant 0 : index
    %244 = vector.load %arg18[%c0_117, %c0_118, %c0_119] : memref<3x6x32xf32, #tpu.memory_space<vmem>>, vector<1x6x32xf32>
    %245 = vector.shape_cast %244 : vector<1x6x32xf32> to vector<6x32xf32>
    %246 = arith.mulf %237, %245 : vector<6x32xf32>
    %247 = arith.mulf %239, %246 : vector<6x32xf32>
    %248 = vector.extract_strided_slice %247 {offsets = [0, 0], sizes = [6, 8], strides = [1, 1]} : vector<6x32xf32> to vector<6x8xf32>
    %249 = arith.addf %240, %248 : vector<6x8xf32>
    %250 = vector.extract_strided_slice %247 {offsets = [0, 8], sizes = [6, 8], strides = [1, 1]} : vector<6x32xf32> to vector<6x8xf32>
    %251 = arith.addf %249, %250 : vector<6x8xf32>
    %252 = vector.extract_strided_slice %247 {offsets = [0, 16], sizes = [6, 8], strides = [1, 1]} : vector<6x32xf32> to vector<6x8xf32>
    %253 = arith.addf %251, %252 : vector<6x8xf32>
    %254 = vector.extract_strided_slice %247 {offsets = [0, 24], sizes = [6, 8], strides = [1, 1]} : vector<6x32xf32> to vector<6x8xf32>
    %255 = arith.addf %253, %254 : vector<6x8xf32>
    %cst_120 = arith.constant 0.000000e+00 : f32
    %256 = vector.broadcast %cst_120 : f32 to vector<6x8xf32>
    %257 = arith.cmpf ogt, %255, %256 : vector<6x8xf32>
    %258 = math.exp %255 : vector<6x8xf32>
    %cst_121 = arith.constant 1.000000e+00 : f32
    %259 = vector.broadcast %cst_121 : f32 to vector<6x8xf32>
    %260 = arith.subf %258, %259 : vector<6x8xf32>
    %261 = arith.select %257, %255, %260 : vector<6x8xi1>, vector<6x8xf32>
    %262 = arith.mulf %261, %242 : vector<6x8xf32>
    %cst_122 = arith.constant dense<0.000000e+00> : vector<6xf32>
    %263 = vector.multi_reduction <add>, %262, %cst_122 [1] : vector<6x8xf32> to vector<6xf32>
    %264 = vector.shape_cast %263 : vector<6xf32> to vector<6x1xf32>
    %265 = arith.addf %264, %243 : vector<6x1xf32>
    %266 = vector.extract_strided_slice %236 {offsets = [0, 56], sizes = [6, 32], strides = [1, 1]} : vector<6x168xf32> to vector<6x32xf32>
    %267 = math.absf %266 : vector<6x32xf32>
    %268 = vector.extract_strided_slice %236 {offsets = [0, 88], sizes = [6, 8], strides = [1, 1]} : vector<6x168xf32> to vector<6x8xf32>
    %269 = vector.extract_strided_slice %236 {offsets = [0, 96], sizes = [6, 8], strides = [1, 1]} : vector<6x168xf32> to vector<6x8xf32>
    %270 = math.absf %269 : vector<6x8xf32>
    %271 = vector.extract_strided_slice %236 {offsets = [0, 104], sizes = [6, 1], strides = [1, 1]} : vector<6x168xf32> to vector<6x1xf32>
    %c1_123 = arith.constant 1 : index
    %c0_124 = arith.constant 0 : index
    %c0_125 = arith.constant 0 : index
    %272 = vector.load %arg18[%c1_123, %c0_124, %c0_125] : memref<3x6x32xf32, #tpu.memory_space<vmem>>, vector<1x6x32xf32>
    %273 = vector.shape_cast %272 : vector<1x6x32xf32> to vector<6x32xf32>
    %274 = arith.mulf %237, %273 : vector<6x32xf32>
    %275 = arith.mulf %267, %274 : vector<6x32xf32>
    %276 = vector.extract_strided_slice %275 {offsets = [0, 0], sizes = [6, 8], strides = [1, 1]} : vector<6x32xf32> to vector<6x8xf32>
    %277 = arith.addf %268, %276 : vector<6x8xf32>
    %278 = vector.extract_strided_slice %275 {offsets = [0, 8], sizes = [6, 8], strides = [1, 1]} : vector<6x32xf32> to vector<6x8xf32>
    %279 = arith.addf %277, %278 : vector<6x8xf32>
    %280 = vector.extract_strided_slice %275 {offsets = [0, 16], sizes = [6, 8], strides = [1, 1]} : vector<6x32xf32> to vector<6x8xf32>
    %281 = arith.addf %279, %280 : vector<6x8xf32>
    %282 = vector.extract_strided_slice %275 {offsets = [0, 24], sizes = [6, 8], strides = [1, 1]} : vector<6x32xf32> to vector<6x8xf32>
    %283 = arith.addf %281, %282 : vector<6x8xf32>
    %cst_126 = arith.constant 0.000000e+00 : f32
    %284 = vector.broadcast %cst_126 : f32 to vector<6x8xf32>
    %285 = arith.cmpf ogt, %283, %284 : vector<6x8xf32>
    %286 = math.exp %283 : vector<6x8xf32>
    %cst_127 = arith.constant 1.000000e+00 : f32
    %287 = vector.broadcast %cst_127 : f32 to vector<6x8xf32>
    %288 = arith.subf %286, %287 : vector<6x8xf32>
    %289 = arith.select %285, %283, %288 : vector<6x8xi1>, vector<6x8xf32>
    %290 = arith.mulf %289, %270 : vector<6x8xf32>
    %cst_128 = arith.constant dense<0.000000e+00> : vector<6xf32>
    %291 = vector.multi_reduction <add>, %290, %cst_128 [1] : vector<6x8xf32> to vector<6xf32>
    %292 = vector.shape_cast %291 : vector<6xf32> to vector<6x1xf32>
    %293 = arith.addf %292, %271 : vector<6x1xf32>
    %294 = vector.extract_strided_slice %236 {offsets = [0, 112], sizes = [6, 32], strides = [1, 1]} : vector<6x168xf32> to vector<6x32xf32>
    %295 = math.absf %294 : vector<6x32xf32>
    %296 = vector.extract_strided_slice %236 {offsets = [0, 144], sizes = [6, 8], strides = [1, 1]} : vector<6x168xf32> to vector<6x8xf32>
    %297 = vector.extract_strided_slice %236 {offsets = [0, 152], sizes = [6, 8], strides = [1, 1]} : vector<6x168xf32> to vector<6x8xf32>
    %298 = math.absf %297 : vector<6x8xf32>
    %299 = vector.extract_strided_slice %236 {offsets = [0, 160], sizes = [6, 1], strides = [1, 1]} : vector<6x168xf32> to vector<6x1xf32>
    %c2_129 = arith.constant 2 : index
    %c0_130 = arith.constant 0 : index
    %c0_131 = arith.constant 0 : index
    %300 = vector.load %arg18[%c2_129, %c0_130, %c0_131] : memref<3x6x32xf32, #tpu.memory_space<vmem>>, vector<1x6x32xf32>
    %301 = vector.shape_cast %300 : vector<1x6x32xf32> to vector<6x32xf32>
    %302 = arith.mulf %237, %301 : vector<6x32xf32>
    %303 = arith.mulf %295, %302 : vector<6x32xf32>
    %304 = vector.extract_strided_slice %303 {offsets = [0, 0], sizes = [6, 8], strides = [1, 1]} : vector<6x32xf32> to vector<6x8xf32>
    %305 = arith.addf %296, %304 : vector<6x8xf32>
    %306 = vector.extract_strided_slice %303 {offsets = [0, 8], sizes = [6, 8], strides = [1, 1]} : vector<6x32xf32> to vector<6x8xf32>
    %307 = arith.addf %305, %306 : vector<6x8xf32>
    %308 = vector.extract_strided_slice %303 {offsets = [0, 16], sizes = [6, 8], strides = [1, 1]} : vector<6x32xf32> to vector<6x8xf32>
    %309 = arith.addf %307, %308 : vector<6x8xf32>
    %310 = vector.extract_strided_slice %303 {offsets = [0, 24], sizes = [6, 8], strides = [1, 1]} : vector<6x32xf32> to vector<6x8xf32>
    %311 = arith.addf %309, %310 : vector<6x8xf32>
    %cst_132 = arith.constant 0.000000e+00 : f32
    %312 = vector.broadcast %cst_132 : f32 to vector<6x8xf32>
    %313 = arith.cmpf ogt, %311, %312 : vector<6x8xf32>
    %314 = math.exp %311 : vector<6x8xf32>
    %cst_133 = arith.constant 1.000000e+00 : f32
    %315 = vector.broadcast %cst_133 : f32 to vector<6x8xf32>
    %316 = arith.subf %314, %315 : vector<6x8xf32>
    %317 = arith.select %313, %311, %316 : vector<6x8xi1>, vector<6x8xf32>
    %318 = arith.mulf %317, %298 : vector<6x8xf32>
    %cst_134 = arith.constant dense<0.000000e+00> : vector<6xf32>
    %319 = vector.multi_reduction <add>, %318, %cst_134 [1] : vector<6x8xf32> to vector<6xf32>
    %320 = vector.shape_cast %319 : vector<6xf32> to vector<6x1xf32>
    %321 = arith.addf %320, %299 : vector<6x1xf32>
    %c0_135 = arith.constant 0 : index
    %c0_136 = arith.constant 0 : index
    %322 = vector.load %arg19[%c0_135, %c0_136] : memref<6x41xf32, #tpu.memory_space<vmem>>, vector<6x41xf32>
    %323 = vector.extract_strided_slice %322 {offsets = [0, 0], sizes = [6, 24], strides = [1, 1]} : vector<6x41xf32> to vector<6x24xf32>
    %324 = math.absf %323 : vector<6x24xf32>
    %325 = vector.extract_strided_slice %322 {offsets = [0, 24], sizes = [6, 8], strides = [1, 1]} : vector<6x41xf32> to vector<6x8xf32>
    %326 = vector.extract_strided_slice %322 {offsets = [0, 32], sizes = [6, 8], strides = [1, 1]} : vector<6x41xf32> to vector<6x8xf32>
    %327 = math.absf %326 : vector<6x8xf32>
    %328 = vector.extract_strided_slice %322 {offsets = [0, 40], sizes = [6, 1], strides = [1, 1]} : vector<6x41xf32> to vector<6x1xf32>
    %329 = vector.extract_strided_slice %324 {offsets = [0, 0], sizes = [6, 8], strides = [1, 1]} : vector<6x24xf32> to vector<6x8xf32>
    %330 = vector.broadcast %265 : vector<6x1xf32> to vector<6x8xf32>
    %331 = arith.mulf %330, %329 : vector<6x8xf32>
    %332 = arith.addf %325, %331 : vector<6x8xf32>
    %333 = vector.extract_strided_slice %324 {offsets = [0, 8], sizes = [6, 8], strides = [1, 1]} : vector<6x24xf32> to vector<6x8xf32>
    %334 = vector.broadcast %293 : vector<6x1xf32> to vector<6x8xf32>
    %335 = arith.mulf %334, %333 : vector<6x8xf32>
    %336 = arith.addf %332, %335 : vector<6x8xf32>
    %337 = vector.extract_strided_slice %324 {offsets = [0, 16], sizes = [6, 8], strides = [1, 1]} : vector<6x24xf32> to vector<6x8xf32>
    %338 = vector.broadcast %321 : vector<6x1xf32> to vector<6x8xf32>
    %339 = arith.mulf %338, %337 : vector<6x8xf32>
    %340 = arith.addf %336, %339 : vector<6x8xf32>
    %cst_137 = arith.constant 0.000000e+00 : f32
    %341 = vector.broadcast %cst_137 : f32 to vector<6x8xf32>
    %342 = arith.cmpf ogt, %340, %341 : vector<6x8xf32>
    %343 = math.exp %340 : vector<6x8xf32>
    %cst_138 = arith.constant 1.000000e+00 : f32
    %344 = vector.broadcast %cst_138 : f32 to vector<6x8xf32>
    %345 = arith.subf %343, %344 : vector<6x8xf32>
    %346 = arith.select %342, %340, %345 : vector<6x8xi1>, vector<6x8xf32>
    %347 = arith.mulf %346, %327 : vector<6x8xf32>
    %cst_139 = arith.constant dense<0.000000e+00> : vector<6xf32>
    %348 = vector.multi_reduction <add>, %347, %cst_139 [1] : vector<6x8xf32> to vector<6xf32>
    %349 = vector.shape_cast %348 : vector<6xf32> to vector<6x1xf32>
    %350 = arith.addf %349, %328 : vector<6x1xf32>
    %c0_140 = arith.constant 0 : index
    %c0_141 = arith.constant 0 : index
    %351 = vector.load %arg20[%c0_140, %c0_141] : memref<6x1xf32, #tpu.memory_space<vmem>>, vector<6x1xf32>
    tpu.vector_store %arg20[%c0_140, %c0_141], %350 {strides = array<i32>} : memref<6x1xf32, #tpu.memory_space<vmem>>, vector<6x1xf32>,
    return
  }
}

</mosaic_0001>

<llo_original>
// kernel: ghypermixer_forward.2
$region0: #{ghypermixer_forward.2}
  #allocation0 [shape = 'u32[]', space=smem, size = 0x4, offset = 0x4, fixed_abs, tag = 'smem constant byte address 0x4 - core index']
  #allocation1 [shape = 'u32[144,128]{1,0:T(1,128)}', space=vmem, size = 0x12000, scoped, tag = 'internal scratch']
  %s0 = inlined_call_operand.vmem [shape: f32[6,44], index: 0, kind: input, shape index: {}]
  %s1 = inlined_call_operand.vmem [shape: f32[44,120], index: 1, kind: input, shape index: {}]
  %s2 = inlined_call_operand.vmem [shape: f32[1,120], index: 2, kind: input, shape index: {}]
  %s3 = inlined_call_operand.vmem [shape: f32[120,313], index: 3, kind: input, shape index: {}]
  %s4 = inlined_call_operand.vmem [shape: f32[1,313], index: 4, kind: input, shape index: {}]
  %s5 = inlined_call_operand.vmem [shape: f32[6,313], index: 5, kind: output, shape index: {}]
  %s6 = sld [smem:[#allocation0]]
  $region30: #{ghypermixer_forward.2} parent=0
    _
  %s8 = ssub.s32 1, %s6
  %s9 = scalar_select 0, %s8, %s6
  // Predicated region
  $region2: #{ghypermixer_forward.2} parent=0 // pred_check
    _
  $region3: #{ghypermixer_forward.2} parent=0 // pred_check_branch
    %11 = sbr.rel (0) target = $region5
  $region4: #{ghypermixer_forward.2} parent=0 // pred_region
    _
  $region5: #{ghypermixer_forward.2} parent=0 // pred_fallthru
    _
  // Predicated region
  $region6: #{ghypermixer_forward.2} parent=0 // pred_check
    _
  $region7: #{ghypermixer_forward.2} parent=0 // pred_check_branch
    %13 = sbr.rel (0) target = $region9
  $region8: #{ghypermixer_forward.2} parent=0 // pred_region
    _
  $region9: #{ghypermixer_forward.2} parent=0 // pred_fallthru
    _
  // Predicated region
  $region10: #{ghypermixer_forward.2} parent=0 // pred_check
    _
  $region11: #{ghypermixer_forward.2} parent=0 // pred_check_branch
    %15 = sbr.rel (0) target = $region13
  $region12: #{ghypermixer_forward.2} parent=0 // pred_region
    _
  $region13: #{ghypermixer_forward.2} parent=0 // pred_fallthru
    _
  // Predicated region
  $region14: #{ghypermixer_forward.2} parent=0 // pred_check
    _
  $region15: #{ghypermixer_forward.2} parent=0 // pred_check_branch
    %17 = sbr.rel (0) target = $region17
  $region16: #{ghypermixer_forward.2} parent=0 // pred_region
    _
  $region17: #{ghypermixer_forward.2} parent=0 // pred_fallthru
    _
  // Predicated region
  $region18: #{ghypermixer_forward.2} parent=0 // pred_check
    _
  $region19: #{ghypermixer_forward.2} parent=0 // pred_check_branch
    %19 = sbr.rel (0) target = $region21
  $region20: #{ghypermixer_forward.2} parent=0 // pred_region
    _
  $region21: #{ghypermixer_forward.2} parent=0 // pred_fallthru
    _
  %v20 = vld [vmem:[%s0] sm:$0x3f]
  %v21 = vld [vmem:[%s1] sm:$0xff]
  %v22 = vld [vmem:[%s1 + $0x8] sm:$0xff]
  %v23 = vld [vmem:[%s1 + $0x10] sm:$0xff]
  %v24 = vld [vmem:[%s1 + $0x18] sm:$0xff]
  %v25 = vld [vmem:[%s1 + $0x20] sm:$0xff]
  %v26 = vld [vmem:[%s1 + $0x28] sm:$0xf]
  %v27 = vld [vmem:[%s2] sm:$0x1]
  %v29 = vlaneseq
  %v30 = vshrl.u32 %v29, 7
  %v31 = vsub.s32 0, %v30
  %v32 = vrot.slane %v27, %v31
  %vm34 = vcmask 359424
  %v36 = vsel %vm34, %v20, 0
  %vm38 = vcmask 1043456
  %v40 = vsel %vm38, %v26, 0
  %42 = vmatprep.subr.mxu0 0.0
  %43 = vmatpush1.msra.mxu0 %v21
  %44 = vmatprep.subr.mxu0 0.0
  %45 = vmatpush1.msra.mxu0 %v22
  %46 = vmatprep.subr.mxu0 0.0
  %47 = vmatpush1.msra.mxu0 %v23
  %48 = vmatprep.subr.mxu0 0.0
  %49 = vmatpush1.msra.mxu0 %v24
  %50 = vmatprep.subr.mxu0 0.0
  %51 = vmatpush1.msra.mxu0 %v25
  %52 = vmatprep.subr.mxu0 0.0
  %53 = vmatpush1.msra.mxu0 %v40
  %54 = vmatprep.subr.mxu0 0.0
  %55 = vmatpush1.msra.mxu0 0.0
  %56 = vmatprep.subr.mxu0 0.0
  %57 = vmatpush1.msra.mxu0 0.0
  %58 = vmatprep.subr.mxu0 0.0
  %59 = vmatpush1.msra.mxu0 0.0
  %60 = vmatprep.subr.mxu0 0.0
  %61 = vmatpush1.msra.mxu0 0.0
  %62 = vmatprep.subr.mxu0 0.0
  %63 = vmatpush1.msra.mxu0 0.0
  %64 = vmatprep.subr.mxu0 0.0
  %65 = vmatpush1.msra.mxu0 0.0
  %66 = vmatprep.subr.mxu0 0.0
  %67 = vmatpush1.msra.mxu0 0.0
  %68 = vmatprep.subr.mxu0 0.0
  %69 = vmatpush1.msra.mxu0 0.0
  %70 = vmatprep.subr.mxu0 0.0
  %71 = vmatpush1.msra.mxu0 0.0
  %72 = vmatprep.subr.mxu0 0.0
  %73 = vmatpush1.msra.mxu0 0.0
  %74 = vmatprep.subr.mxu0 0.0
  %75 = vmatpush1.msra.mxu0 0.0
  %76 = vmatprep.subr.mxu0 0.0
  %77 = vmatpush1.msra.mxu0 0.0
  %78 = vmatprep.subr.mxu0 0.0
  %79 = vmatpush1.msra.mxu0 0.0
  %80 = vmatprep.subr.mxu0 0.0
  %81 = vmatpush1.msra.mxu0 0.0
  %82 = vmatprep.subr.mxu0 0.0
  %83 = vmatpush1.msra.mxu0 0.0
  %84 = vmatprep.subr.mxu0 0.0
  %85 = vmatpush1.msra.mxu0 0.0
  %86 = vmatprep.subr.mxu0 0.0
  %87 = vmatpush1.msra.mxu0 0.0
  %88 = vmatprep.subr.mxu0 0.0
  %89 = vmatpush1.msra.mxu0 0.0
  %90 = vmatprep.subr.mxu0 0.0
  %91 = vmatpush1.msra.mxu0 0.0
  %92 = vmatprep.subr.mxu0 0.0
  %93 = vmatpush1.msra.mxu0 0.0
  %94 = vmatprep.subr.mxu0 0.0
  %95 = vmatpush1.msra.mxu0 0.0
  %96 = vmatprep.subr.mxu0 0.0
  %97 = vmatpush1.msra.mxu0 0.0
  %98 = vmatprep.subr.mxu0 0.0
  %99 = vmatpush1.msra.mxu0 0.0
  %100 = vmatprep.subr.mxu0 0.0
  %101 = vmatpush1.msra.mxu0 0.0
  %102 = vmatprep.subr.mxu0 0.0
  %103 = vmatpush1.msra.mxu0 0.0
  %104 = vmatprep.subr.mxu0 0.0
  %105 = vmatpush1.msra.mxu0 0.0
  %106 = vmatprep.mubr.f32.mxu0 0.0
  %107 = vmatmul.mubr.f32.gmra.mrb[0].mxu0 %v36
  %v108 = vpop.f32.mrb[0].mxu0
  %v109 = vadd.f32 %v32, %v108
  %v110 = vpop.f32.mrb[0].mxu0
  %111 = vdwg.mxu0
  %v112 = vmax.f32 %v109, 0.0
  %v113 = vld [vmem:[%s3] sm:$0xff]
  %v114 = vld [vmem:[%s3 + $0x8] sm:$0xff]
  %v115 = vld [vmem:[%s3 + $0x10] sm:$0xff]
  %v116 = vld [vmem:[%s3 + $0x18] sm:$0xff]
  %v117 = vld [vmem:[%s3 + $0x20] sm:$0xff]
  %v118 = vld [vmem:[%s3 + $0x28] sm:$0xff]
  %v119 = vld [vmem:[%s3 + $0x30] sm:$0xff]
  %v120 = vld [vmem:[%s3 + $0x38] sm:$0xff]
  %v121 = vld [vmem:[%s3 + $0x40] sm:$0xff]
  %v122 = vld [vmem:[%s3 + $0x48] sm:$0xff]
  %v123 = vld [vmem:[%s3 + $0x50] sm:$0xff]
  %v124 = vld [vmem:[%s3 + $0x58] sm:$0xff]
  %v125 = vld [vmem:[%s3 + $0x60] sm:$0xff]
  %v126 = vld [vmem:[%s3 + $0x68] sm:$0xff]
  %v127 = vld [vmem:[%s3 + $0x70] sm:$0xff]
  %v128 = vld [vmem:[%s3 + $0x78] sm:$0xff]
  %v129 = vld [vmem:[%s3 + $0x80] sm:$0xff]
  %v130 = vld [vmem:[%s3 + $0x88] sm:$0xff]
  %v131 = vld [vmem:[%s3 + $0x90] sm:$0xff]
  %v132 = vld [vmem:[%s3 + $0x98] sm:$0xff]
  %v133 = vld [vmem:[%s3 + $0xa0] sm:$0xff]
  %v134 = vld [vmem:[%s3 + $0xa8] sm:$0xff]
  %v135 = vld [vmem:[%s3 + $0xb0] sm:$0xff]
  %v136 = vld [vmem:[%s3 + $0xb8] sm:$0xff]
  %v137 = vld [vmem:[%s3 + $0xc0] sm:$0xff]
  %v138 = vld [vmem:[%s3 + $0xc8] sm:$0xff]
  %v139 = vld [vmem:[%s3 + $0xd0] sm:$0xff]
  %v140 = vld [vmem:[%s3 + $0xd8] sm:$0xff]
  %v141 = vld [vmem:[%s3 + $0xe0] sm:$0xff]
  %v142 = vld [vmem:[%s3 + $0xe8] sm:$0xff]
  %v143 = vld [vmem:[%s3 + $0xf0] sm:$0xff]
  %v144 = vld [vmem:[%s3 + $0xf8] sm:$0xff]
  %v145 = vld [vmem:[%s3 + $0x100] sm:$0xff]
  %v146 = vld [vmem:[%s3 + $0x108] sm:$0xff]
  %v147 = vld [vmem:[%s3 + $0x110] sm:$0xff]
  %v148 = vld [vmem:[%s3 + $0x118] sm:$0xff]
  %v149 = vld [vmem:[%s3 + $0x120] sm:$0xff]
  %v150 = vld [vmem:[%s3 + $0x128] sm:$0xff]
  %v151 = vld [vmem:[%s3 + $0x130] sm:$0xff]
  %v152 = vld [vmem:[%s3 + $0x138] sm:$0xff]
  %v153 = vld [vmem:[%s3 + $0x140] sm:$0xff]
  %v154 = vld [vmem:[%s3 + $0x148] sm:$0xff]
  %v155 = vld [vmem:[%s3 + $0x150] sm:$0xff]
  %v156 = vld [vmem:[%s3 + $0x158] sm:$0xff]
  %v157 = vld [vmem:[%s3 + $0x160] sm:$0xff]
  %v158 = vld [vmem:[%s4] sm:$0x7]
  %v160 = vlaneseq
  %v161 = vshrl.u32 %v160, 7
  %v162 = vsub.s32 0, %v161
  %v163 = vrot.slane %v158, %v162
  %v164 = vlaneseq
  %v165 = vshrl.u32 %v164, 7
  %v166 = vsub.s32 1, %v165
  %v167 = vrot.slane %v158, %v166
  %v168 = vlaneseq
  %v169 = vshrl.u32 %v168, 7
  %v170 = vsub.s32 2, %v169
  %v171 = vrot.slane %v158, %v170
  %vm175 = vcmask 982016
  %v177 = vsel %vm175, %v112, 0
  %179 = vmatprep.subr.mxu0 %v114
  %180 = vmatpush1.msra.mxu0 %v113
  %181 = vmatprep.subr.mxu0 %v117
  %182 = vmatpush1.msra.mxu0 %v116
  %183 = vmatprep.subr.mxu0 %v120
  %184 = vmatpush1.msra.mxu0 %v119
  %185 = vmatprep.subr.mxu0 %v123
  %186 = vmatpush1.msra.mxu0 %v122
  %187 = vmatprep.subr.mxu0 %v126
  %188 = vmatpush1.msra.mxu0 %v125
  %189 = vmatprep.subr.mxu0 %v129
  %190 = vmatpush1.msra.mxu0 %v128
  %191 = vmatprep.subr.mxu0 %v132
  %192 = vmatpush1.msra.mxu0 %v131
  %193 = vmatprep.subr.mxu0 %v135
  %194 = vmatpush1.msra.mxu0 %v134
  %195 = vmatprep.subr.mxu0 %v138
  %196 = vmatpush1.msra.mxu0 %v137
  %197 = vmatprep.subr.mxu0 %v141
  %198 = vmatpush1.msra.mxu0 %v140
  %199 = vmatprep.subr.mxu0 %v144
  %200 = vmatpush1.msra.mxu0 %v143
  %201 = vmatprep.subr.mxu0 %v147
  %202 = vmatpush1.msra.mxu0 %v146
  %203 = vmatprep.subr.mxu0 %v150
  %204 = vmatpush1.msra.mxu0 %v149
  %205 = vmatprep.subr.mxu0 %v153
  %206 = vmatpush1.msra.mxu0 %v152
  %207 = vmatprep.subr.mxu0 %v156
  %208 = vmatpush1.msra.mxu0 %v155
  %209 = vmatprep.subr.mxu0 0.0
  %210 = vmatpush1.msra.mxu0 0.0
  %211 = vmatprep.subr.mxu0 0.0
  %212 = vmatpush1.msra.mxu0 0.0
  %213 = vmatprep.subr.mxu0 0.0
  %214 = vmatpush1.msra.mxu0 0.0
  %215 = vmatprep.subr.mxu0 0.0
  %216 = vmatpush1.msra.mxu0 0.0
  %217 = vmatprep.subr.mxu0 0.0
  %218 = vmatpush1.msra.mxu0 0.0
  %219 = vmatprep.subr.mxu0 0.0
  %220 = vmatpush1.msra.mxu0 0.0
  %221 = vmatprep.subr.mxu0 0.0
  %222 = vmatpush1.msra.mxu0 0.0
  %223 = vmatprep.subr.mxu0 0.0
  %224 = vmatpush1.msra.mxu0 0.0
  %225 = vmatprep.subr.mxu0 0.0
  %226 = vmatpush1.msra.mxu0 0.0
  %227 = vmatprep.subr.mxu0 0.0
  %228 = vmatpush1.msra.mxu0 0.0
  %229 = vmatprep.subr.mxu0 0.0
  %230 = vmatpush1.msra.mxu0 0.0
  %231 = vmatprep.subr.mxu0 0.0
  %232 = vmatpush1.msra.mxu0 0.0
  %233 = vmatprep.subr.mxu0 0.0
  %234 = vmatpush1.msra.mxu0 0.0
  %235 = vmatprep.subr.mxu0 0.0
  %236 = vmatpush1.msra.mxu0 0.0
  %237 = vmatprep.subr.mxu0 0.0
  %238 = vmatpush1.msra.mxu0 0.0
  %239 = vmatprep.subr.mxu0 0.0
  %240 = vmatpush1.msra.mxu0 0.0
  %241 = vmatprep.subr.mxu0 0.0
  %242 = vmatpush1.msra.mxu0 0.0
  %243 = vmatprep.mubr.f32.mxu0 0.0
  %244 = vmatmul.mubr.f32.gmra.mrb[0].mxu0 %v177
  %v245 = vpop.f32.mrb[0].mxu0
  %v246 = vadd.f32 %v163, %v245
  %v247 = vpop.f32.mrb[0].mxu0
  %v248 = vadd.f32 %v167, %v247
  %249 = vdwg.mxu0
  %250 = vmatprep.subr.mxu0 0.0
  %251 = vmatpush1.msra.mxu0 %v115
  %252 = vmatprep.subr.mxu0 0.0
  %253 = vmatpush1.msra.mxu0 %v118
  %254 = vmatprep.subr.mxu0 0.0
  %255 = vmatpush1.msra.mxu0 %v121
  %256 = vmatprep.subr.mxu0 0.0
  %257 = vmatpush1.msra.mxu0 %v124
  %258 = vmatprep.subr.mxu0 0.0
  %259 = vmatpush1.msra.mxu0 %v127
  %260 = vmatprep.subr.mxu0 0.0
  %261 = vmatpush1.msra.mxu0 %v130
  %262 = vmatprep.subr.mxu0 0.0
  %263 = vmatpush1.msra.mxu0 %v133
  %264 = vmatprep.subr.mxu0 0.0
  %265 = vmatpush1.msra.mxu0 %v136
  %266 = vmatprep.subr.mxu0 0.0
  %267 = vmatpush1.msra.mxu0 %v139
  %268 = vmatprep.subr.mxu0 0.0
  %269 = vmatpush1.msra.mxu0 %v142
  %270 = vmatprep.subr.mxu0 0.0
  %271 = vmatpush1.msra.mxu0 %v145
  %272 = vmatprep.subr.mxu0 0.0
  %273 = vmatpush1.msra.mxu0 %v148
  %274 = vmatprep.subr.mxu0 0.0
  %275 = vmatpush1.msra.mxu0 %v151
  %276 = vmatprep.subr.mxu0 0.0
  %277 = vmatpush1.msra.mxu0 %v154
  %278 = vmatprep.subr.mxu0 0.0
  %279 = vmatpush1.msra.mxu0 %v157
  %280 = vmatprep.subr.mxu0 0.0
  %281 = vmatpush1.msra.mxu0 0.0
  %282 = vmatprep.subr.mxu0 0.0
  %283 = vmatpush1.msra.mxu0 0.0
  %284 = vmatprep.subr.mxu0 0.0
  %285 = vmatpush1.msra.mxu0 0.0
  %286 = vmatprep.subr.mxu0 0.0
  %287 = vmatpush1.msra.mxu0 0.0
  %288 = vmatprep.subr.mxu0 0.0
  %289 = vmatpush1.msra.mxu0 0.0
  %290 = vmatprep.subr.mxu0 0.0
  %291 = vmatpush1.msra.mxu0 0.0
  %292 = vmatprep.subr.mxu0 0.0
  %293 = vmatpush1.msra.mxu0 0.0
  %294 = vmatprep.subr.mxu0 0.0
  %295 = vmatpush1.msra.mxu0 0.0
  %296 = vmatprep.subr.mxu0 0.0
  %297 = vmatpush1.msra.mxu0 0.0
  %298 = vmatprep.subr.mxu0 0.0
  %299 = vmatpush1.msra.mxu0 0.0
  %300 = vmatprep.subr.mxu0 0.0
  %301 = vmatpush1.msra.mxu0 0.0
  %302 = vmatprep.subr.mxu0 0.0
  %303 = vmatpush1.msra.mxu0 0.0
  %304 = vmatprep.subr.mxu0 0.0
  %305 = vmatpush1.msra.mxu0 0.0
  %306 = vmatprep.subr.mxu0 0.0
  %307 = vmatpush1.msra.mxu0 0.0
  %308 = vmatprep.subr.mxu0 0.0
  %309 = vmatpush1.msra.mxu0 0.0
  %310 = vmatprep.subr.mxu0 0.0
  %311 = vmatpush1.msra.mxu0 0.0
  %312 = vmatprep.subr.mxu0 0.0
  %313 = vmatpush1.msra.mxu0 0.0
  %314 = vmatprep.mubr.f32.mxu0 0.0
  %315 = vmatmul.mubr.f32.gmra.mrb[0].mxu0 %v177
  %v316 = vpop.f32.mrb[0].mxu0
  %v317 = vadd.f32 %v171, %v316
  %v318 = vpop.f32.mrb[0].mxu0
  %319 = vdwg.mxu0
  %320 = vst [vmem:[%s5] sm:$0x3f] %v246
  %321 = vst [vmem:[%s5 + $0x8] sm:$0x3f] %v248
  %vm322 = vcmask 463872
  %323 = vst.msk [vmem:[%s5 + $0x10] sm:$0x3f] %vm322, %v317
  // Predicated region
  $region22: #{ghypermixer_forward.2} parent=0 // pred_check
    _
  $region23: #{ghypermixer_forward.2} parent=0 // pred_check_branch
    %325 = sbr.rel (0) target = $region25
  $region24: #{ghypermixer_forward.2} parent=0 // pred_region
    _
  $region25: #{ghypermixer_forward.2} parent=0 // pred_fallthru
    _
  // Predicated region
  $region26: #{ghypermixer_forward.2} parent=0 // pred_check
    _
  $region27: #{ghypermixer_forward.2} parent=0 // pred_check_branch
    %327 = sbr.rel (0) target = $region29
  $region28: #{ghypermixer_forward.2} parent=0 // pred_region
    _
  $region29: #{ghypermixer_forward.2} parent=0 // pred_fallthru
    _

// kernel: ghypermixer_forward.3
$region0: #{ghypermixer_forward.3}
  #allocation0 [shape = 'u32[]', space=smem, size = 0x4, offset = 0x4, fixed_abs, tag = 'smem constant byte address 0x4 - core index']
  #allocation1 [shape = 'u32[144,128]{1,0:T(1,128)}', space=vmem, size = 0x12000, scoped, tag = 'internal scratch']
  %s0 = inlined_call_operand.vmem [shape: f32[6,4,10], index: 0, kind: input, shape index: {}]
  %s1 = inlined_call_operand.vmem [shape: f32[6,10,8], index: 1, kind: input, shape index: {}]
  %s2 = inlined_call_operand.vmem [shape: f32[6,4,8], index: 2, kind: input, shape index: {}]
  %s3 = inlined_call_operand.vmem [shape: f32[6,16,8], index: 3, kind: input, shape index: {}]
  %s4 = inlined_call_operand.vmem [shape: f32[6,4,8], index: 4, kind: input, shape index: {}]
  %s5 = inlined_call_operand.vmem [shape: f32[6,4,16], index: 5, kind: input, shape index: {}]
  %s6 = inlined_call_operand.vmem [shape: f32[6,8,48], index: 6, kind: input, shape index: {}]
  %s7 = inlined_call_operand.vmem [shape: f32[6,16,48], index: 7, kind: input, shape index: {}]
  %s8 = inlined_call_operand.vmem [shape: f32[1,1,48], index: 8, kind: input, shape index: {}]
  %s9 = inlined_call_operand.vmem [shape: f32[1,1,48], index: 9, kind: input, shape index: {}]
  %s10 = inlined_call_operand.vmem [shape: f32[3,6,4], index: 10, kind: input, shape index: {}]
  %s11 = inlined_call_operand.vmem [shape: f32[6,44], index: 11, kind: input, shape index: {}]
  %s12 = inlined_call_operand.vmem [shape: f32[44,168], index: 12, kind: input, shape index: {}]
  %s13 = inlined_call_operand.vmem [shape: f32[3,8,168], index: 13, kind: input, shape index: {}]
  %s14 = inlined_call_operand.vmem [shape: f32[1,168], index: 14, kind: input, shape index: {}]
  %s15 = inlined_call_operand.vmem [shape: f32[168,168], index: 15, kind: input, shape index: {}]
  %s16 = inlined_call_operand.vmem [shape: f32[1,168], index: 16, kind: input, shape index: {}]
  %s17 = inlined_call_operand.vmem [shape: f32[6,32], index: 17, kind: input, shape index: {}]
  %s18 = inlined_call_operand.vmem [shape: f32[3,6,32], index: 18, kind: input, shape index: {}]
  %s19 = inlined_call_operand.vmem [shape: f32[6,41], index: 19, kind: input, shape index: {}]
  %s20 = inlined_call_operand.vmem [shape: f32[6,1], index: 20, kind: output, shape index: {0}]
  %s21 = inlined_call_operand.hbm [shape: f32[1], index: 21, kind: output, shape index: {1}]
  %s22 = inlined_call_operand.hbm [shape: f32[6,4,16], index: 22, kind: output, shape index: {2}]
  %23 = xla_tuple %s20, %s21, %s22
  %s24 = sld [smem:[#allocation0]]
  $region106: #{ghypermixer_forward.3} parent=0
    _
  %s26 = ssub.s32 1, %s24
  %s27 = scalar_select 0, %s26, %s24
  $region1: #{ghypermixer_forward.3} parent=0
    #allocation2 [shape = 'u8[512]{0}', space=smem, size = 0x200, scoped, tag = 'output window, operand 1, single buffered']
    #allocation3 [shape = 's32[1]{0}', space=sflag, size = 0x4, scoped, tag = 'scoped memory for ghypermixer_forward.3']
    #allocation4 [shape = 's32[1]{0}', space=sflag, size = 0x4, scoped, tag = 'scoped memory for ghypermixer_forward.3']
    #allocation5 [shape = 'u8[12288]{0}', space=vmem, size = 0x3000, scoped, tag = 'output window, operand 2, single buffered']
    %28 = vsyncpa [#allocation4], 0
    %29 = vsyncpa [#allocation3], 0
    // Predicated region
    $region2: #{ghypermixer_forward.3} parent=1 // pred_check
      _
    $region3: #{ghypermixer_forward.3} parent=1 // pred_check_branch
      %31 = sbr.rel (0) target = $region5
    $region4: #{ghypermixer_forward.3} parent=1 // pred_region
      _
    $region5: #{ghypermixer_forward.3} parent=1 // pred_fallthru
      _
    // Predicated region
    $region6: #{ghypermixer_forward.3} parent=1 // pred_check
      _
    $region7: #{ghypermixer_forward.3} parent=1 // pred_check_branch
      %33 = sbr.rel (0) target = $region9
    $region8: #{ghypermixer_forward.3} parent=1 // pred_region
      _
    $region9: #{ghypermixer_forward.3} parent=1 // pred_fallthru
      _
    // Predicated region
    $region10: #{ghypermixer_forward.3} parent=1 // pred_check
      _
    $region11: #{ghypermixer_forward.3} parent=1 // pred_check_branch
      %35 = sbr.rel (0) target = $region13
    $region12: #{ghypermixer_forward.3} parent=1 // pred_region
      _
    $region13: #{ghypermixer_forward.3} parent=1 // pred_fallthru
      _
    // Predicated region
    $region14: #{ghypermixer_forward.3} parent=1 // pred_check
      _
    $region15: #{ghypermixer_forward.3} parent=1 // pred_check_branch
      %37 = sbr.rel (0) target = $region17
    $region16: #{ghypermixer_forward.3} parent=1 // pred_region
      _
    $region17: #{ghypermixer_forward.3} parent=1 // pred_fallthru
      _
    // Predicated region
    $region18: #{ghypermixer_forward.3} parent=1 // pred_check
      _
    $region19: #{ghypermixer_forward.3} parent=1 // pred_check_branch
      %39 = sbr.rel (0) target = $region21
    $region20: #{ghypermixer_forward.3} parent=1 // pred_region
      _
    $region21: #{ghypermixer_forward.3} parent=1 // pred_fallthru
      _
    // Predicated region
    $region22: #{ghypermixer_forward.3} parent=1 // pred_check
      _
    $region23: #{ghypermixer_forward.3} parent=1 // pred_check_branch
      %41 = sbr.rel (0) target = $region25
    $region24: #{ghypermixer_forward.3} parent=1 // pred_region
      _
    $region25: #{ghypermixer_forward.3} parent=1 // pred_fallthru
      _
    // Predicated region
    $region26: #{ghypermixer_forward.3} parent=1 // pred_check
      _
    $region27: #{ghypermixer_forward.3} parent=1 // pred_check_branch
      %43 = sbr.rel (0) target = $region29
    $region28: #{ghypermixer_forward.3} parent=1 // pred_region
      _
    $region29: #{ghypermixer_forward.3} parent=1 // pred_fallthru
      _
    // Predicated region
    $region30: #{ghypermixer_forward.3} parent=1 // pred_check
      _
    $region31: #{ghypermixer_forward.3} parent=1 // pred_check_branch
      %45 = sbr.rel (0) target = $region33
    $region32: #{ghypermixer_forward.3} parent=1 // pred_region
      _
    $region33: #{ghypermixer_forward.3} parent=1 // pred_fallthru
      _
    // Predicated region
    $region34: #{ghypermixer_forward.3} parent=1 // pred_check
      _
    $region35: #{ghypermixer_forward.3} parent=1 // pred_check_branch
      %47 = sbr.rel (0) target = $region37
    $region36: #{ghypermixer_forward.3} parent=1 // pred_region
      _
    $region37: #{ghypermixer_forward.3} parent=1 // pred_fallthru
      _
    // Predicated region
    $region38: #{ghypermixer_forward.3} parent=1 // pred_check
      _
    $region39: #{ghypermixer_forward.3} parent=1 // pred_check_branch
      %49 = sbr.rel (0) target = $region41
    $region40: #{ghypermixer_forward.3} parent=1 // pred_region
      _
    $region41: #{ghypermixer_forward.3} parent=1 // pred_fallthru
      _
    // Predicated region
    $region42: #{ghypermixer_forward.3} parent=1 // pred_check
      _
    $region43: #{ghypermixer_forward.3} parent=1 // pred_check_branch
      %51 = sbr.rel (0) target = $region45
    $region44: #{ghypermixer_forward.3} parent=1 // pred_region
      _
    $region45: #{ghypermixer_forward.3} parent=1 // pred_fallthru
      _
    // Predicated region
    $region46: #{ghypermixer_forward.3} parent=1 // pred_check
      _
    $region47: #{ghypermixer_forward.3} parent=1 // pred_check_branch
      %53 = sbr.rel (0) target = $region49
    $region48: #{ghypermixer_forward.3} parent=1 // pred_region
      _
    $region49: #{ghypermixer_forward.3} parent=1 // pred_fallthru
      _
    // Predicated region
    $region50: #{ghypermixer_forward.3} parent=1 // pred_check
      _
    $region51: #{ghypermixer_forward.3} parent=1 // pred_check_branch
      %55 = sbr.rel (0) target = $region53
    $region52: #{ghypermixer_forward.3} parent=1 // pred_region
      _
    $region53: #{ghypermixer_forward.3} parent=1 // pred_fallthru
      _
    // Predicated region
    $region54: #{ghypermixer_forward.3} parent=1 // pred_check
      _
    $region55: #{ghypermixer_forward.3} parent=1 // pred_check_branch
      %57 = sbr.rel (0) target = $region57
    $region56: #{ghypermixer_forward.3} parent=1 // pred_region
      _
    $region57: #{ghypermixer_forward.3} parent=1 // pred_fallthru
      _
    // Predicated region
    $region58: #{ghypermixer_forward.3} parent=1 // pred_check
      _
    $region59: #{ghypermixer_forward.3} parent=1 // pred_check_branch
      %59 = sbr.rel (0) target = $region61
    $region60: #{ghypermixer_forward.3} parent=1 // pred_region
      _
    $region61: #{ghypermixer_forward.3} parent=1 // pred_fallthru
      _
    // Predicated region
    $region62: #{ghypermixer_forward.3} parent=1 // pred_check
      _
    $region63: #{ghypermixer_forward.3} parent=1 // pred_check_branch
      %61 = sbr.rel (0) target = $region65
    $region64: #{ghypermixer_forward.3} parent=1 // pred_region
      _
    $region65: #{ghypermixer_forward.3} parent=1 // pred_fallthru
      _
    // Predicated region
    $region66: #{ghypermixer_forward.3} parent=1 // pred_check
      _
    $region67: #{ghypermixer_forward.3} parent=1 // pred_check_branch
      %63 = sbr.rel (0) target = $region69
    $region68: #{ghypermixer_forward.3} parent=1 // pred_region
      _
    $region69: #{ghypermixer_forward.3} parent=1 // pred_fallthru
      _
    // Predicated region
    $region70: #{ghypermixer_forward.3} parent=1 // pred_check
      _
    $region71: #{ghypermixer_forward.3} parent=1 // pred_check_branch
      %65 = sbr.rel (0) target = $region73
    $region72: #{ghypermixer_forward.3} parent=1 // pred_region
      _
    $region73: #{ghypermixer_forward.3} parent=1 // pred_fallthru
      _
    // Predicated region
    $region74: #{ghypermixer_forward.3} parent=1 // pred_check
      _
    $region75: #{ghypermixer_forward.3} parent=1 // pred_check_branch
      %67 = sbr.rel (0) target = $region77
    $region76: #{ghypermixer_forward.3} parent=1 // pred_region
      _
    $region77: #{ghypermixer_forward.3} parent=1 // pred_fallthru
      _
    // Predicated region
    $region78: #{ghypermixer_forward.3} parent=1 // pred_check
      _
    $region79: #{ghypermixer_forward.3} parent=1 // pred_check_branch
      %69 = sbr.rel (0) target = $region81
    $region80: #{ghypermixer_forward.3} parent=1 // pred_region
      _
    $region81: #{ghypermixer_forward.3} parent=1 // pred_fallthru
      _
    %v70 = vld [vmem:[%s0] sm:$0xf]
    %v71 = vld [vmem:[%s0 + $0x4] sm:$0xf]
    %v72 = vld [vmem:[%s0 + $0x8] sm:$0xf]
    %v73 = vld [vmem:[%s0 + $0xc] sm:$0xf]
    %v74 = vld [vmem:[%s0 + $0x10] sm:$0xf]
    %v75 = vld [vmem:[%s0 + $0x14] sm:$0xf]
    %v76 = vld [vmem:[%s1] sm:$0xff]
    %v77 = vld [vmem:[%s1 + $0x8] sm:$0x3]
    %v78 = vld [vmem:[%s1 + $0x10] sm:$0xff]
    %v79 = vld [vmem:[%s1 + $0x18] sm:$0x3]
    %v80 = vld [vmem:[%s1 + $0x20] sm:$0xff]
    %v81 = vld [vmem:[%s1 + $0x28] sm:$0x3]
    %v82 = vld [vmem:[%s1 + $0x30] sm:$0xff]
    %v83 = vld [vmem:[%s1 + $0x38] sm:$0x3]
    %v84 = vld [vmem:[%s1 + $0x40] sm:$0xff]
    %v85 = vld [vmem:[%s1 + $0x48] sm:$0x3]
    %v86 = vld [vmem:[%s1 + $0x50] sm:$0xff]
    %v87 = vld [vmem:[%s1 + $0x58] sm:$0x3]
    %v88 = vld [vmem:[%s2] sm:$0xf]
    %v89 = vld [vmem:[%s2 + $0x4] sm:$0xf]
    %v90 = vld [vmem:[%s2 + $0x8] sm:$0xf]
    %v91 = vld [vmem:[%s2 + $0xc] sm:$0xf]
    %v92 = vld [vmem:[%s2 + $0x10] sm:$0xf]
    %v93 = vld [vmem:[%s2 + $0x14] sm:$0xf]
    %vm94 = vcmask 80896
    %v96 = vsel %vm94, %v70, 0
    %vm98 = vcmask 1041408
    %v100 = vsel %vm98, %v77, 0
    %102 = vmatprep.subr.mxu0 0.0
    %103 = vmatpush1.msra.mxu0 %v76
    %104 = vmatprep.subr.mxu0 0.0
    %105 = vmatpush1.msra.mxu0 %v100
    %106 = vmatprep.subr.mxu0 0.0
    %107 = vmatpush1.msra.mxu0 0.0
    %108 = vmatprep.subr.mxu0 0.0
    %109 = vmatpush1.msra.mxu0 0.0
    %110 = vmatprep.subr.mxu0 0.0
    %111 = vmatpush1.msra.mxu0 0.0
    %112 = vmatprep.subr.mxu0 0.0
    %113 = vmatpush1.msra.mxu0 0.0
    %114 = vmatprep.subr.mxu0 0.0
    %115 = vmatpush1.msra.mxu0 0.0
    %116 = vmatprep.subr.mxu0 0.0
    %117 = vmatpush1.msra.mxu0 0.0
    %118 = vmatprep.subr.mxu0 0.0
    %119 = vmatpush1.msra.mxu0 0.0
    %120 = vmatprep.subr.mxu0 0.0
    %121 = vmatpush1.msra.mxu0 0.0
    %122 = vmatprep.subr.mxu0 0.0
    %123 = vmatpush1.msra.mxu0 0.0
    %124 = vmatprep.subr.mxu0 0.0
    %125 = vmatpush1.msra.mxu0 0.0
    %126 = vmatprep.subr.mxu0 0.0
    %127 = vmatpush1.msra.mxu0 0.0
    %128 = vmatprep.subr.mxu0 0.0
    %129 = vmatpush1.msra.mxu0 0.0
    %130 = vmatprep.subr.mxu0 0.0
    %131 = vmatpush1.msra.mxu0 0.0
    %132 = vmatprep.subr.mxu0 0.0
    %133 = vmatpush1.msra.mxu0 0.0
    %134 = vmatprep.subr.mxu0 0.0
    %135 = vmatpush1.msra.mxu0 0.0
    %136 = vmatprep.subr.mxu0 0.0
    %137 = vmatpush1.msra.mxu0 0.0
    %138 = vmatprep.subr.mxu0 0.0
    %139 = vmatpush1.msra.mxu0 0.0
    %140 = vmatprep.subr.mxu0 0.0
    %141 = vmatpush1.msra.mxu0 0.0
    %142 = vmatprep.subr.mxu0 0.0
    %143 = vmatpush1.msra.mxu0 0.0
    %144 = vmatprep.subr.mxu0 0.0
    %145 = vmatpush1.msra.mxu0 0.0
    %146 = vmatprep.subr.mxu0 0.0
    %147 = vmatpush1.msra.mxu0 0.0
    %148 = vmatprep.subr.mxu0 0.0
    %149 = vmatpush1.msra.mxu0 0.0
    %150 = vmatprep.subr.mxu0 0.0
    %151 = vmatpush1.msra.mxu0 0.0
    %152 = vmatprep.subr.mxu0 0.0
    %153 = vmatpush1.msra.mxu0 0.0
    %154 = vmatprep.subr.mxu0 0.0
    %155 = vmatpush1.msra.mxu0 0.0
    %156 = vmatprep.subr.mxu0 0.0
    %157 = vmatpush1.msra.mxu0 0.0
    %158 = vmatprep.subr.mxu0 0.0
    %159 = vmatpush1.msra.mxu0 0.0
    %160 = vmatprep.subr.mxu0 0.0
    %161 = vmatpush1.msra.mxu0 0.0
    %162 = vmatprep.subr.mxu0 0.0
    %163 = vmatpush1.msra.mxu0 0.0
    %164 = vmatprep.subr.mxu0 0.0
    %165 = vmatpush1.msra.mxu0 0.0
    %166 = vmatprep.mubr.f32.mxu0 0.0
    %167 = vmatmul.mubr.f32.gmra.mrb[0].mxu0 %v96
    %v168 = vpop.f32.mrb[0].mxu0
    %v169 = vadd.f32 %v88, %v168
    %v170 = vpop.f32.mrb[0].mxu0
    %171 = vdwg.mxu0
    %v173 = vsel %vm94, %v71, 0
    %v176 = vsel %vm98, %v79, 0
    %178 = vmatprep.subr.mxu0 0.0
    %179 = vmatpush1.msra.mxu0 %v78
    %180 = vmatprep.subr.mxu0 0.0
    %181 = vmatpush1.msra.mxu0 %v176
    %182 = vmatprep.subr.mxu0 0.0
    %183 = vmatpush1.msra.mxu0 0.0
    %184 = vmatprep.subr.mxu0 0.0
    %185 = vmatpush1.msra.mxu0 0.0
    %186 = vmatprep.subr.mxu0 0.0
    %187 = vmatpush1.msra.mxu0 0.0
    %188 = vmatprep.subr.mxu0 0.0
    %189 = vmatpush1.msra.mxu0 0.0
    %190 = vmatprep.subr.mxu0 0.0
    %191 = vmatpush1.msra.mxu0 0.0
    %192 = vmatprep.subr.mxu0 0.0
    %193 = vmatpush1.msra.mxu0 0.0
    %194 = vmatprep.subr.mxu0 0.0
    %195 = vmatpush1.msra.mxu0 0.0
    %196 = vmatprep.subr.mxu0 0.0
    %197 = vmatpush1.msra.mxu0 0.0
    %198 = vmatprep.subr.mxu0 0.0
    %199 = vmatpush1.msra.mxu0 0.0
    %200 = vmatprep.subr.mxu0 0.0
    %201 = vmatpush1.msra.mxu0 0.0
    %202 = vmatprep.subr.mxu0 0.0
    %203 = vmatpush1.msra.mxu0 0.0
    %204 = vmatprep.subr.mxu0 0.0
    %205 = vmatpush1.msra.mxu0 0.0
    %206 = vmatprep.subr.mxu0 0.0
    %207 = vmatpush1.msra.mxu0 0.0
    %208 = vmatprep.subr.mxu0 0.0
    %209 = vmatpush1.msra.mxu0 0.0
    %210 = vmatprep.subr.mxu0 0.0
    %211 = vmatpush1.msra.mxu0 0.0
    %212 = vmatprep.subr.mxu0 0.0
    %213 = vmatpush1.msra.mxu0 0.0
    %214 = vmatprep.subr.mxu0 0.0
    %215 = vmatpush1.msra.mxu0 0.0
    %216 = vmatprep.subr.mxu0 0.0
    %217 = vmatpush1.msra.mxu0 0.0
    %218 = vmatprep.subr.mxu0 0.0
    %219 = vmatpush1.msra.mxu0 0.0
    %220 = vmatprep.subr.mxu0 0.0
    %221 = vmatpush1.msra.mxu0 0.0
    %222 = vmatprep.subr.mxu0 0.0
    %223 = vmatpush1.msra.mxu0 0.0
    %224 = vmatprep.subr.mxu0 0.0
    %225 = vmatpush1.msra.mxu0 0.0
    %226 = vmatprep.subr.mxu0 0.0
    %227 = vmatpush1.msra.mxu0 0.0
    %228 = vmatprep.subr.mxu0 0.0
    %229 = vmatpush1.msra.mxu0 0.0
    %230 = vmatprep.subr.mxu0 0.0
    %231 = vmatpush1.msra.mxu0 0.0
    %232 = vmatprep.subr.mxu0 0.0
    %233 = vmatpush1.msra.mxu0 0.0
    %234 = vmatprep.subr.mxu0 0.0
    %235 = vmatpush1.msra.mxu0 0.0
    %236 = vmatprep.subr.mxu0 0.0
    %237 = vmatpush1.msra.mxu0 0.0
    %238 = vmatprep.subr.mxu0 0.0
    %239 = vmatpush1.msra.mxu0 0.0
    %240 = vmatprep.subr.mxu0 0.0
    %241 = vmatpush1.msra.mxu0 0.0
    %242 = vmatprep.mubr.f32.mxu0 0.0
    %243 = vmatmul.mubr.f32.gmra.mrb[0].mxu0 %v173
    %v244 = vpop.f32.mrb[0].mxu0
    %v245 = vadd.f32 %v89, %v244
    %v246 = vpop.f32.mrb[0].mxu0
    %247 = vdwg.mxu0
    %v249 = vsel %vm94, %v72, 0
    %v252 = vsel %vm98, %v81, 0
    %254 = vmatprep.subr.mxu0 0.0
    %255 = vmatpush1.msra.mxu0 %v80
    %256 = vmatprep.subr.mxu0 0.0
    %257 = vmatpush1.msra.mxu0 %v252
    %258 = vmatprep.subr.mxu0 0.0
    %259 = vmatpush1.msra.mxu0 0.0
    %260 = vmatprep.subr.mxu0 0.0
    %261 = vmatpush1.msra.mxu0 0.0
    %262 = vmatprep.subr.mxu0 0.0
    %263 = vmatpush1.msra.mxu0 0.0
    %264 = vmatprep.subr.mxu0 0.0
    %265 = vmatpush1.msra.mxu0 0.0
    %266 = vmatprep.subr.mxu0 0.0
    %267 = vmatpush1.msra.mxu0 0.0
    %268 = vmatprep.subr.mxu0 0.0
    %269 = vmatpush1.msra.mxu0 0.0
    %270 = vmatprep.subr.mxu0 0.0
    %271 = vmatpush1.msra.mxu0 0.0
    %272 = vmatprep.subr.mxu0 0.0
    %273 = vmatpush1.msra.mxu0 0.0
    %274 = vmatprep.subr.mxu0 0.0
    %275 = vmatpush1.msra.mxu0 0.0
    %276 = vmatprep.subr.mxu0 0.0
    %277 = vmatpush1.msra.mxu0 0.0
    %278 = vmatprep.subr.mxu0 0.0
    %279 = vmatpush1.msra.mxu0 0.0
    %280 = vmatprep.subr.mxu0 0.0
    %281 = vmatpush1.msra.mxu0 0.0
    %282 = vmatprep.subr.mxu0 0.0
    %283 = vmatpush1.msra.mxu0 0.0
    %284 = vmatprep.subr.mxu0 0.0
    %285 = vmatpush1.msra.mxu0 0.0
    %286 = vmatprep.subr.mxu0 0.0
    %287 = vmatpush1.msra.mxu0 0.0
    %288 = vmatprep.subr.mxu0 0.0
    %289 = vmatpush1.msra.mxu0 0.0
    %290 = vmatprep.subr.mxu0 0.0
    %291 = vmatpush1.msra.mxu0 0.0
    %292 = vmatprep.subr.mxu0 0.0
    %293 = vmatpush1.msra.mxu0 0.0
    %294 = vmatprep.subr.mxu0 0.0
    %295 = vmatpush1.msra.mxu0 0.0
    %296 = vmatprep.subr.mxu0 0.0
    %297 = vmatpush1.msra.mxu0 0.0
    %298 = vmatprep.subr.mxu0 0.0
    %299 = vmatpush1.msra.mxu0 0.0
    %300 = vmatprep.subr.mxu0 0.0
    %301 = vmatpush1.msra.mxu0 0.0
    %302 = vmatprep.subr.mxu0 0.0
    %303 = vmatpush1.msra.mxu0 0.0
    %304 = vmatprep.subr.mxu0 0.0
    %305 = vmatpush1.msra.mxu0 0.0
    %306 = vmatprep.subr.mxu0 0.0
    %307 = vmatpush1.msra.mxu0 0.0
    %308 = vmatprep.subr.mxu0 0.0
    %309 = vmatpush1.msra.mxu0 0.0
    %310 = vmatprep.subr.mxu0 0.0
    %311 = vmatpush1.msra.mxu0 0.0
    %312 = vmatprep.subr.mxu0 0.0
    %313 = vmatpush1.msra.mxu0 0.0
    %314 = vmatprep.subr.mxu0 0.0
    %315 = vmatpush1.msra.mxu0 0.0
    %316 = vmatprep.subr.mxu0 0.0
    %317 = vmatpush1.msra.mxu0 0.0
    %318 = vmatprep.mubr.f32.mxu0 0.0
    %319 = vmatmul.mubr.f32.gmra.mrb[0].mxu0 %v249
    %v320 = vpop.f32.mrb[0].mxu0
    %v321 = vadd.f32 %v90, %v320
    %v322 = vpop.f32.mrb[0].mxu0
    %323 = vdwg.mxu0
    %v325 = vsel %vm94, %v73, 0
    %v328 = vsel %vm98, %v83, 0
    %330 = vmatprep.subr.mxu0 0.0
    %331 = vmatpush1.msra.mxu0 %v82
    %332 = vmatprep.subr.mxu0 0.0
    %333 = vmatpush1.msra.mxu0 %v328
    %334 = vmatprep.subr.mxu0 0.0
    %335 = vmatpush1.msra.mxu0 0.0
    %336 = vmatprep.subr.mxu0 0.0
    %337 = vmatpush1.msra.mxu0 0.0
    %338 = vmatprep.subr.mxu0 0.0
    %339 = vmatpush1.msra.mxu0 0.0
    %340 = vmatprep.subr.mxu0 0.0
    %341 = vmatpush1.msra.mxu0 0.0
    %342 = vmatprep.subr.mxu0 0.0
    %343 = vmatpush1.msra.mxu0 0.0
    %344 = vmatprep.subr.mxu0 0.0
    %345 = vmatpush1.msra.mxu0 0.0
    %346 = vmatprep.subr.mxu0 0.0
    %347 = vmatpush1.msra.mxu0 0.0
    %348 = vmatprep.subr.mxu0 0.0
    %349 = vmatpush1.msra.mxu0 0.0
    %350 = vmatprep.subr.mxu0 0.0
    %351 = vmatpush1.msra.mxu0 0.0
    %352 = vmatprep.subr.mxu0 0.0
    %353 = vmatpush1.msra.mxu0 0.0
    %354 = vmatprep.subr.mxu0 0.0
    %355 = vmatpush1.msra.mxu0 0.0
    %356 = vmatprep.subr.mxu0 0.0
    %357 = vmatpush1.msra.mxu0 0.0
    %358 = vmatprep.subr.mxu0 0.0
    %359 = vmatpush1.msra.mxu0 0.0
    %360 = vmatprep.subr.mxu0 0.0
    %361 = vmatpush1.msra.mxu0 0.0
    %362 = vmatprep.subr.mxu0 0.0
    %363 = vmatpush1.msra.mxu0 0.0
    %364 = vmatprep.subr.mxu0 0.0
    %365 = vmatpush1.msra.mxu0 0.0
    %366 = vmatprep.subr.mxu0 0.0
    %367 = vmatpush1.msra.mxu0 0.0
    %368 = vmatprep.subr.mxu0 0.0
    %369 = vmatpush1.msra.mxu0 0.0
    %370 = vmatprep.subr.mxu0 0.0
    %371 = vmatpush1.msra.mxu0 0.0
    %372 = vmatprep.subr.mxu0 0.0
    %373 = vmatpush1.msra.mxu0 0.0
    %374 = vmatprep.subr.mxu0 0.0
    %375 = vmatpush1.msra.mxu0 0.0
    %376 = vmatprep.subr.mxu0 0.0
    %377 = vmatpush1.msra.mxu0 0.0
    %378 = vmatprep.subr.mxu0 0.0
    %379 = vmatpush1.msra.mxu0 0.0
    %380 = vmatprep.subr.mxu0 0.0
    %381 = vmatpush1.msra.mxu0 0.0
    %382 = vmatprep.subr.mxu0 0.0
    %383 = vmatpush1.msra.mxu0 0.0
    %384 = vmatprep.subr.mxu0 0.0
    %385 = vmatpush1.msra.mxu0 0.0
    %386 = vmatprep.subr.mxu0 0.0
    %387 = vmatpush1.msra.mxu0 0.0
    %388 = vmatprep.subr.mxu0 0.0
    %389 = vmatpush1.msra.mxu0 0.0
    %390 = vmatprep.subr.mxu0 0.0
    %391 = vmatpush1.msra.mxu0 0.0
    %392 = vmatprep.subr.mxu0 0.0
    %393 = vmatpush1.msra.mxu0 0.0
    %394 = vmatprep.mubr.f32.mxu0 0.0
    %395 = vmatmul.mubr.f32.gmra.mrb[0].mxu0 %v325
    %v396 = vpop.f32.mrb[0].mxu0
    %v397 = vadd.f32 %v91, %v396
    %v398 = vpop.f32.mrb[0].mxu0
    %399 = vdwg.mxu0
    %v401 = vsel %vm94, %v74, 0
    %v404 = vsel %vm98, %v85, 0
    %406 = vmatprep.subr.mxu0 0.0
    %407 = vmatpush1.msra.mxu0 %v84
    %408 = vmatprep.subr.mxu0 0.0
    %409 = vmatpush1.msra.mxu0 %v404
    %410 = vmatprep.subr.mxu0 0.0
    %411 = vmatpush1.msra.mxu0 0.0
    %412 = vmatprep.subr.mxu0 0.0
    %413 = vmatpush1.msra.mxu0 0.0
    %414 = vmatprep.subr.mxu0 0.0
    %415 = vmatpush1.msra.mxu0 0.0
    %416 = vmatprep.subr.mxu0 0.0
    %417 = vmatpush1.msra.mxu0 0.0
    %418 = vmatprep.subr.mxu0 0.0
    %419 = vmatpush1.msra.mxu0 0.0
    %420 = vmatprep.subr.mxu0 0.0
    %421 = vmatpush1.msra.mxu0 0.0
    %422 = vmatprep.subr.mxu0 0.0
    %423 = vmatpush1.msra.mxu0 0.0
    %424 = vmatprep.subr.mxu0 0.0
    %425 = vmatpush1.msra.mxu0 0.0
    %426 = vmatprep.subr.mxu0 0.0
    %427 = vmatpush1.msra.mxu0 0.0
    %428 = vmatprep.subr.mxu0 0.0
    %429 = vmatpush1.msra.mxu0 0.0
    %430 = vmatprep.subr.mxu0 0.0
    %431 = vmatpush1.msra.mxu0 0.0
    %432 = vmatprep.subr.mxu0 0.0
    %433 = vmatpush1.msra.mxu0 0.0
    %434 = vmatprep.subr.mxu0 0.0
    %435 = vmatpush1.msra.mxu0 0.0
    %436 = vmatprep.subr.mxu0 0.0
    %437 = vmatpush1.msra.mxu0 0.0
    %438 = vmatprep.subr.mxu0 0.0
    %439 = vmatpush1.msra.mxu0 0.0
    %440 = vmatprep.subr.mxu0 0.0
    %441 = vmatpush1.msra.mxu0 0.0
    %442 = vmatprep.subr.mxu0 0.0
    %443 = vmatpush1.msra.mxu0 0.0
    %444 = vmatprep.subr.mxu0 0.0
    %445 = vmatpush1.msra.mxu0 0.0
    %446 = vmatprep.subr.mxu0 0.0
    %447 = vmatpush1.msra.mxu0 0.0
    %448 = vmatprep.subr.mxu0 0.0
    %449 = vmatpush1.msra.mxu0 0.0
    %450 = vmatprep.subr.mxu0 0.0
    %451 = vmatpush1.msra.mxu0 0.0
    %452 = vmatprep.subr.mxu0 0.0
    %453 = vmatpush1.msra.mxu0 0.0
    %454 = vmatprep.subr.mxu0 0.0
    %455 = vmatpush1.msra.mxu0 0.0
    %456 = vmatprep.subr.mxu0 0.0
    %457 = vmatpush1.msra.mxu0 0.0
    %458 = vmatprep.subr.mxu0 0.0
    %459 = vmatpush1.msra.mxu0 0.0
    %460 = vmatprep.subr.mxu0 0.0
    %461 = vmatpush1.msra.mxu0 0.0
    %462 = vmatprep.subr.mxu0 0.0
    %463 = vmatpush1.msra.mxu0 0.0
    %464 = vmatprep.subr.mxu0 0.0
    %465 = vmatpush1.msra.mxu0 0.0
    %466 = vmatprep.subr.mxu0 0.0
    %467 = vmatpush1.msra.mxu0 0.0
    %468 = vmatprep.subr.mxu0 0.0
    %469 = vmatpush1.msra.mxu0 0.0
    %470 = vmatprep.mubr.f32.mxu0 0.0
    %471 = vmatmul.mubr.f32.gmra.mrb[0].mxu0 %v401
    %v472 = vpop.f32.mrb[0].mxu0
    %v473 = vadd.f32 %v92, %v472
    %v474 = vpop.f32.mrb[0].mxu0
    %475 = vdwg.mxu0
    %v477 = vsel %vm94, %v75, 0
    %v480 = vsel %vm98, %v87, 0
    %482 = vmatprep.subr.mxu0 0.0
    %483 = vmatpush1.msra.mxu0 %v86
    %484 = vmatprep.subr.mxu0 0.0
    %485 = vmatpush1.msra.mxu0 %v480
    %486 = vmatprep.subr.mxu0 0.0
    %487 = vmatpush1.msra.mxu0 0.0
    %488 = vmatprep.subr.mxu0 0.0
    %489 = vmatpush1.msra.mxu0 0.0
    %490 = vmatprep.subr.mxu0 0.0
    %491 = vmatpush1.msra.mxu0 0.0
    %492 = vmatprep.subr.mxu0 0.0
    %493 = vmatpush1.msra.mxu0 0.0
    %494 = vmatprep.subr.mxu0 0.0
    %495 = vmatpush1.msra.mxu0 0.0
    %496 = vmatprep.subr.mxu0 0.0
    %497 = vmatpush1.msra.mxu0 0.0
    %498 = vmatprep.subr.mxu0 0.0
    %499 = vmatpush1.msra.mxu0 0.0
    %500 = vmatprep.subr.mxu0 0.0
    %501 = vmatpush1.msra.mxu0 0.0
    %502 = vmatprep.subr.mxu0 0.0
    %503 = vmatpush1.msra.mxu0 0.0
    %504 = vmatprep.subr.mxu0 0.0
    %505 = vmatpush1.msra.mxu0 0.0
    %506 = vmatprep.subr.mxu0 0.0
    %507 = vmatpush1.msra.mxu0 0.0
    %508 = vmatprep.subr.mxu0 0.0
    %509 = vmatpush1.msra.mxu0 0.0
    %510 = vmatprep.subr.mxu0 0.0
    %511 = vmatpush1.msra.mxu0 0.0
    %512 = vmatprep.subr.mxu0 0.0
    %513 = vmatpush1.msra.mxu0 0.0
    %514 = vmatprep.subr.mxu0 0.0
    %515 = vmatpush1.msra.mxu0 0.0
    %516 = vmatprep.subr.mxu0 0.0
    %517 = vmatpush1.msra.mxu0 0.0
    %518 = vmatprep.subr.mxu0 0.0
    %519 = vmatpush1.msra.mxu0 0.0
    %520 = vmatprep.subr.mxu0 0.0
    %521 = vmatpush1.msra.mxu0 0.0
    %522 = vmatprep.subr.mxu0 0.0
    %523 = vmatpush1.msra.mxu0 0.0
    %524 = vmatprep.subr.mxu0 0.0
    %525 = vmatpush1.msra.mxu0 0.0
    %526 = vmatprep.subr.mxu0 0.0
    %527 = vmatpush1.msra.mxu0 0.0
    %528 = vmatprep.subr.mxu0 0.0
    %529 = vmatpush1.msra.mxu0 0.0
    %530 = vmatprep.subr.mxu0 0.0
    %531 = vmatpush1.msra.mxu0 0.0
    %532 = vmatprep.subr.mxu0 0.0
    %533 = vmatpush1.msra.mxu0 0.0
    %534 = vmatprep.subr.mxu0 0.0
    %535 = vmatpush1.msra.mxu0 0.0
    %536 = vmatprep.subr.mxu0 0.0
    %537 = vmatpush1.msra.mxu0 0.0
    %538 = vmatprep.subr.mxu0 0.0
    %539 = vmatpush1.msra.mxu0 0.0
    %540 = vmatprep.subr.mxu0 0.0
    %541 = vmatpush1.msra.mxu0 0.0
    %542 = vmatprep.subr.mxu0 0.0
    %543 = vmatpush1.msra.mxu0 0.0
    %544 = vmatprep.subr.mxu0 0.0
    %545 = vmatpush1.msra.mxu0 0.0
    %546 = vmatprep.mubr.f32.mxu0 0.0
    %547 = vmatmul.mubr.f32.gmra.mrb[0].mxu0 %v477
    %v548 = vpop.f32.mrb[0].mxu0
    %v549 = vadd.f32 %v93, %v548
    %v550 = vpop.f32.mrb[0].mxu0
    %551 = vdwg.mxu0
    %vm552 = vcmp.gt.f32.partialorder %v169, 0.0
    %vm553 = vcmp.gt.f32.partialorder %v245, 0.0
    %vm554 = vcmp.gt.f32.partialorder %v321, 0.0
    %vm555 = vcmp.gt.f32.partialorder %v397, 0.0
    %vm556 = vcmp.gt.f32.partialorder %v473, 0.0
    %vm557 = vcmp.gt.f32.partialorder %v549, 0.0
    %v558 = vmul.f32 %v169, 1.442695
    %v559 = vpow.pop %v558
    %v560 = vmul.f32 %v245, 1.442695
    %v561 = vpow.pop %v560
    %v562 = vmul.f32 %v321, 1.442695
    %v563 = vpow.pop %v562
    %v564 = vmul.f32 %v397, 1.442695
    %v565 = vpow.pop %v564
    %v566 = vmul.f32 %v473, 1.442695
    %v567 = vpow.pop %v566
    %v568 = vmul.f32 %v549, 1.442695
    %v569 = vpow.pop %v568
    %v570 = vsub.f32 %v559, 1.0
    %v571 = vsub.f32 %v561, 1.0
    %v572 = vsub.f32 %v563, 1.0
    %v573 = vsub.f32 %v565, 1.0
    %v574 = vsub.f32 %v567, 1.0
    %v575 = vsub.f32 %v569, 1.0
    %v576 = vsel %vm552, %v169, %v570
    %v577 = vsel %vm553, %v245, %v571
    %v578 = vsel %vm554, %v321, %v572
    %v579 = vsel %vm555, %v397, %v573
    %v580 = vsel %vm556, %v473, %v574
    %v581 = vsel %vm557, %v549, %v575
    %v582 = vld [vmem:[%s5] sm:$0xf]
    %v583 = vld [vmem:[%s5 + $0x4] sm:$0xf]
    %v584 = vld [vmem:[%s5 + $0x8] sm:$0xf]
    %v585 = vld [vmem:[%s5 + $0xc] sm:$0xf]
    %v586 = vld [vmem:[%s5 + $0x10] sm:$0xf]
    %v587 = vld [vmem:[%s5 + $0x14] sm:$0xf]
    %v588 = vld [vmem:[%s6] sm:$0xff]
    %v589 = vld [vmem:[%s6 + $0x8] sm:$0xff]
    %v590 = vld [vmem:[%s6 + $0x10] sm:$0xff]
    %v591 = vld [vmem:[%s6 + $0x18] sm:$0xff]
    %v592 = vld [vmem:[%s6 + $0x20] sm:$0xff]
    %v593 = vld [vmem:[%s6 + $0x28] sm:$0xff]
    %v594 = vld [vmem:[%s8] sm:$0x1]
    %v596 = vlaneseq
    %v597 = vshrl.u32 %v596, 7
    %v598 = vsub.s32 0, %v597
    %v599 = vrot.slane %v594, %v598
    %vm601 = vcmask 64512
    %v603 = vsel %vm601, %v576, 0
    %605 = vmatprep.subr.mxu0 0.0
    %606 = vmatpush1.msra.mxu0 %v588
    %607 = vmatprep.subr.mxu0 0.0
    %608 = vmatpush1.msra.mxu0 0.0
    %609 = vmatprep.subr.mxu0 0.0
    %610 = vmatpush1.msra.mxu0 0.0
    %611 = vmatprep.subr.mxu0 0.0
    %612 = vmatpush1.msra.mxu0 0.0
    %613 = vmatprep.subr.mxu0 0.0
    %614 = vmatpush1.msra.mxu0 0.0
    %615 = vmatprep.subr.mxu0 0.0
    %616 = vmatpush1.msra.mxu0 0.0
    %617 = vmatprep.subr.mxu0 0.0
    %618 = vmatpush1.msra.mxu0 0.0
    %619 = vmatprep.subr.mxu0 0.0
    %620 = vmatpush1.msra.mxu0 0.0
    %621 = vmatprep.subr.mxu0 0.0
    %622 = vmatpush1.msra.mxu0 0.0
    %623 = vmatprep.subr.mxu0 0.0
    %624 = vmatpush1.msra.mxu0 0.0
    %625 = vmatprep.subr.mxu0 0.0
    %626 = vmatpush1.msra.mxu0 0.0
    %627 = vmatprep.subr.mxu0 0.0
    %628 = vmatpush1.msra.mxu0 0.0
    %629 = vmatprep.subr.mxu0 0.0
    %630 = vmatpush1.msra.mxu0 0.0
    %631 = vmatprep.subr.mxu0 0.0
    %632 = vmatpush1.msra.mxu0 0.0
    %633 = vmatprep.subr.mxu0 0.0
    %634 = vmatpush1.msra.mxu0 0.0
    %635 = vmatprep.subr.mxu0 0.0
    %636 = vmatpush1.msra.mxu0 0.0
    %637 = vmatprep.subr.mxu0 0.0
    %638 = vmatpush1.msra.mxu0 0.0
    %639 = vmatprep.subr.mxu0 0.0
    %640 = vmatpush1.msra.mxu0 0.0
    %641 = vmatprep.subr.mxu0 0.0
    %642 = vmatpush1.msra.mxu0 0.0
    %643 = vmatprep.subr.mxu0 0.0
    %644 = vmatpush1.msra.mxu0 0.0
    %645 = vmatprep.subr.mxu0 0.0
    %646 = vmatpush1.msra.mxu0 0.0
    %647 = vmatprep.subr.mxu0 0.0
    %648 = vmatpush1.msra.mxu0 0.0
    %649 = vmatprep.subr.mxu0 0.0
    %650 = vmatpush1.msra.mxu0 0.0
    %651 = vmatprep.subr.mxu0 0.0
    %652 = vmatpush1.msra.mxu0 0.0
    %653 = vmatprep.subr.mxu0 0.0
    %654 = vmatpush1.msra.mxu0 0.0
    %655 = vmatprep.subr.mxu0 0.0
    %656 = vmatpush1.msra.mxu0 0.0
    %657 = vmatprep.subr.mxu0 0.0
    %658 = vmatpush1.msra.mxu0 0.0
    %659 = vmatprep.subr.mxu0 0.0
    %660 = vmatpush1.msra.mxu0 0.0
    %661 = vmatprep.subr.mxu0 0.0
    %662 = vmatpush1.msra.mxu0 0.0
    %663 = vmatprep.subr.mxu0 0.0
    %664 = vmatpush1.msra.mxu0 0.0
    %665 = vmatprep.subr.mxu0 0.0
    %666 = vmatpush1.msra.mxu0 0.0
    %667 = vmatprep.subr.mxu0 0.0
    %668 = vmatpush1.msra.mxu0 0.0
    %669 = vmatprep.mubr.f32.mxu0 0.0
    %670 = vmatmul.mubr.f32.gmra.mrb[0].mxu0 %v603
    %v671 = vpop.f32.mrb[0].mxu0
    %v672 = vadd.f32 %v599, %v671
    %v673 = vpop.f32.mrb[0].mxu0
    %674 = vdwg.mxu0
    %v676 = vsel %vm601, %v577, 0
    %678 = vmatprep.subr.mxu0 0.0
    %679 = vmatpush1.msra.mxu0 %v589
    %680 = vmatprep.subr.mxu0 0.0
    %681 = vmatpush1.msra.mxu0 0.0
    %682 = vmatprep.subr.mxu0 0.0
    %683 = vmatpush1.msra.mxu0 0.0
    %684 = vmatprep.subr.mxu0 0.0
    %685 = vmatpush1.msra.mxu0 0.0
    %686 = vmatprep.subr.mxu0 0.0
    %687 = vmatpush1.msra.mxu0 0.0
    %688 = vmatprep.subr.mxu0 0.0
    %689 = vmatpush1.msra.mxu0 0.0
    %690 = vmatprep.subr.mxu0 0.0
    %691 = vmatpush1.msra.mxu0 0.0
    %692 = vmatprep.subr.mxu0 0.0
    %693 = vmatpush1.msra.mxu0 0.0
    %694 = vmatprep.subr.mxu0 0.0
    %695 = vmatpush1.msra.mxu0 0.0
    %696 = vmatprep.subr.mxu0 0.0
    %697 = vmatpush1.msra.mxu0 0.0
    %698 = vmatprep.subr.mxu0 0.0
    %699 = vmatpush1.msra.mxu0 0.0
    %700 = vmatprep.subr.mxu0 0.0
    %701 = vmatpush1.msra.mxu0 0.0
    %702 = vmatprep.subr.mxu0 0.0
    %703 = vmatpush1.msra.mxu0 0.0
    %704 = vmatprep.subr.mxu0 0.0
    %705 = vmatpush1.msra.mxu0 0.0
    %706 = vmatprep.subr.mxu0 0.0
    %707 = vmatpush1.msra.mxu0 0.0
    %708 = vmatprep.subr.mxu0 0.0
    %709 = vmatpush1.msra.mxu0 0.0
    %710 = vmatprep.subr.mxu0 0.0
    %711 = vmatpush1.msra.mxu0 0.0
    %712 = vmatprep.subr.mxu0 0.0
    %713 = vmatpush1.msra.mxu0 0.0
    %714 = vmatprep.subr.mxu0 0.0
    %715 = vmatpush1.msra.mxu0 0.0
    %716 = vmatprep.subr.mxu0 0.0
    %717 = vmatpush1.msra.mxu0 0.0
    %718 = vmatprep.subr.mxu0 0.0
    %719 = vmatpush1.msra.mxu0 0.0
    %720 = vmatprep.subr.mxu0 0.0
    %721 = vmatpush1.msra.mxu0 0.0
    %722 = vmatprep.subr.mxu0 0.0
    %723 = vmatpush1.msra.mxu0 0.0
    %724 = vmatprep.subr.mxu0 0.0
    %725 = vmatpush1.msra.mxu0 0.0
    %726 = vmatprep.subr.mxu0 0.0
    %727 = vmatpush1.msra.mxu0 0.0
    %728 = vmatprep.subr.mxu0 0.0
    %729 = vmatpush1.msra.mxu0 0.0
    %730 = vmatprep.subr.mxu0 0.0
    %731 = vmatpush1.msra.mxu0 0.0
    %732 = vmatprep.subr.mxu0 0.0
    %733 = vmatpush1.msra.mxu0 0.0
    %734 = vmatprep.subr.mxu0 0.0
    %735 = vmatpush1.msra.mxu0 0.0
    %736 = vmatprep.subr.mxu0 0.0
    %737 = vmatpush1.msra.mxu0 0.0
    %738 = vmatprep.subr.mxu0 0.0
    %739 = vmatpush1.msra.mxu0 0.0
    %740 = vmatprep.subr.mxu0 0.0
    %741 = vmatpush1.msra.mxu0 0.0
    %742 = vmatprep.mubr.f32.mxu0 0.0
    %743 = vmatmul.mubr.f32.gmra.mrb[0].mxu0 %v676
    %v744 = vpop.f32.mrb[0].mxu0
    %v745 = vadd.f32 %v599, %v744
    %v746 = vpop.f32.mrb[0].mxu0
    %747 = vdwg.mxu0
    %v749 = vsel %vm601, %v578, 0
    %751 = vmatprep.subr.mxu0 0.0
    %752 = vmatpush1.msra.mxu0 %v590
    %753 = vmatprep.subr.mxu0 0.0
    %754 = vmatpush1.msra.mxu0 0.0
    %755 = vmatprep.subr.mxu0 0.0
    %756 = vmatpush1.msra.mxu0 0.0
    %757 = vmatprep.subr.mxu0 0.0
    %758 = vmatpush1.msra.mxu0 0.0
    %759 = vmatprep.subr.mxu0 0.0
    %760 = vmatpush1.msra.mxu0 0.0
    %761 = vmatprep.subr.mxu0 0.0
    %762 = vmatpush1.msra.mxu0 0.0
    %763 = vmatprep.subr.mxu0 0.0
    %764 = vmatpush1.msra.mxu0 0.0
    %765 = vmatprep.subr.mxu0 0.0
    %766 = vmatpush1.msra.mxu0 0.0
    %767 = vmatprep.subr.mxu0 0.0
    %768 = vmatpush1.msra.mxu0 0.0
    %769 = vmatprep.subr.mxu0 0.0
    %770 = vmatpush1.msra.mxu0 0.0
    %771 = vmatprep.subr.mxu0 0.0
    %772 = vmatpush1.msra.mxu0 0.0
    %773 = vmatprep.subr.mxu0 0.0
    %774 = vmatpush1.msra.mxu0 0.0
    %775 = vmatprep.subr.mxu0 0.0
    %776 = vmatpush1.msra.mxu0 0.0
    %777 = vmatprep.subr.mxu0 0.0
    %778 = vmatpush1.msra.mxu0 0.0
    %779 = vmatprep.subr.mxu0 0.0
    %780 = vmatpush1.msra.mxu0 0.0
    %781 = vmatprep.subr.mxu0 0.0
    %782 = vmatpush1.msra.mxu0 0.0
    %783 = vmatprep.subr.mxu0 0.0
    %784 = vmatpush1.msra.mxu0 0.0
    %785 = vmatprep.subr.mxu0 0.0
    %786 = vmatpush1.msra.mxu0 0.0
    %787 = vmatprep.subr.mxu0 0.0
    %788 = vmatpush1.msra.mxu0 0.0
    %789 = vmatprep.subr.mxu0 0.0
    %790 = vmatpush1.msra.mxu0 0.0
    %791 = vmatprep.subr.mxu0 0.0
    %792 = vmatpush1.msra.mxu0 0.0
    %793 = vmatprep.subr.mxu0 0.0
    %794 = vmatpush1.msra.mxu0 0.0
    %795 = vmatprep.subr.mxu0 0.0
    %796 = vmatpush1.msra.mxu0 0.0
    %797 = vmatprep.subr.mxu0 0.0
    %798 = vmatpush1.msra.mxu0 0.0
    %799 = vmatprep.subr.mxu0 0.0
    %800 = vmatpush1.msra.mxu0 0.0
    %801 = vmatprep.subr.mxu0 0.0
    %802 = vmatpush1.msra.mxu0 0.0
    %803 = vmatprep.subr.mxu0 0.0
    %804 = vmatpush1.msra.mxu0 0.0
    %805 = vmatprep.subr.mxu0 0.0
    %806 = vmatpush1.msra.mxu0 0.0
    %807 = vmatprep.subr.mxu0 0.0
    %808 = vmatpush1.msra.mxu0 0.0
    %809 = vmatprep.subr.mxu0 0.0
    %810 = vmatpush1.msra.mxu0 0.0
    %811 = vmatprep.subr.mxu0 0.0
    %812 = vmatpush1.msra.mxu0 0.0
    %813 = vmatprep.subr.mxu0 0.0
    %814 = vmatpush1.msra.mxu0 0.0
    %815 = vmatprep.mubr.f32.mxu0 0.0
    %816 = vmatmul.mubr.f32.gmra.mrb[0].mxu0 %v749
    %v817 = vpop.f32.mrb[0].mxu0
    %v818 = vadd.f32 %v599, %v817
    %v819 = vpop.f32.mrb[0].mxu0
    %820 = vdwg.mxu0
    %v822 = vsel %vm601, %v579, 0
    %824 = vmatprep.subr.mxu0 0.0
    %825 = vmatpush1.msra.mxu0 %v591
    %826 = vmatprep.subr.mxu0 0.0
    %827 = vmatpush1.msra.mxu0 0.0
    %828 = vmatprep.subr.mxu0 0.0
    %829 = vmatpush1.msra.mxu0 0.0
    %830 = vmatprep.subr.mxu0 0.0
    %831 = vmatpush1.msra.mxu0 0.0
    %832 = vmatprep.subr.mxu0 0.0
    %833 = vmatpush1.msra.mxu0 0.0
    %834 = vmatprep.subr.mxu0 0.0
    %835 = vmatpush1.msra.mxu0 0.0
    %836 = vmatprep.subr.mxu0 0.0
    %837 = vmatpush1.msra.mxu0 0.0
    %838 = vmatprep.subr.mxu0 0.0
    %839 = vmatpush1.msra.mxu0 0.0
    %840 = vmatprep.subr.mxu0 0.0
    %841 = vmatpush1.msra.mxu0 0.0
    %842 = vmatprep.subr.mxu0 0.0
    %843 = vmatpush1.msra.mxu0 0.0
    %844 = vmatprep.subr.mxu0 0.0
    %845 = vmatpush1.msra.mxu0 0.0
    %846 = vmatprep.subr.mxu0 0.0
    %847 = vmatpush1.msra.mxu0 0.0
    %848 = vmatprep.subr.mxu0 0.0
    %849 = vmatpush1.msra.mxu0 0.0
    %850 = vmatprep.subr.mxu0 0.0
    %851 = vmatpush1.msra.mxu0 0.0
    %852 = vmatprep.subr.mxu0 0.0
    %853 = vmatpush1.msra.mxu0 0.0
    %854 = vmatprep.subr.mxu0 0.0
    %855 = vmatpush1.msra.mxu0 0.0
    %856 = vmatprep.subr.mxu0 0.0
    %857 = vmatpush1.msra.mxu0 0.0
    %858 = vmatprep.subr.mxu0 0.0
    %859 = vmatpush1.msra.mxu0 0.0
    %860 = vmatprep.subr.mxu0 0.0
    %861 = vmatpush1.msra.mxu0 0.0
    %862 = vmatprep.subr.mxu0 0.0
    %863 = vmatpush1.msra.mxu0 0.0
    %864 = vmatprep.subr.mxu0 0.0
    %865 = vmatpush1.msra.mxu0 0.0
    %866 = vmatprep.subr.mxu0 0.0
    %867 = vmatpush1.msra.mxu0 0.0
    %868 = vmatprep.subr.mxu0 0.0
    %869 = vmatpush1.msra.mxu0 0.0
    %870 = vmatprep.subr.mxu0 0.0
    %871 = vmatpush1.msra.mxu0 0.0
    %872 = vmatprep.subr.mxu0 0.0
    %873 = vmatpush1.msra.mxu0 0.0
    %874 = vmatprep.subr.mxu0 0.0
    %875 = vmatpush1.msra.mxu0 0.0
    %876 = vmatprep.subr.mxu0 0.0
    %877 = vmatpush1.msra.mxu0 0.0
    %878 = vmatprep.subr.mxu0 0.0
    %879 = vmatpush1.msra.mxu0 0.0
    %880 = vmatprep.subr.mxu0 0.0
    %881 = vmatpush1.msra.mxu0 0.0
    %882 = vmatprep.subr.mxu0 0.0
    %883 = vmatpush1.msra.mxu0 0.0
    %884 = vmatprep.subr.mxu0 0.0
    %885 = vmatpush1.msra.mxu0 0.0
    %886 = vmatprep.subr.mxu0 0.0
    %887 = vmatpush1.msra.mxu0 0.0
    %888 = vmatprep.mubr.f32.mxu0 0.0
    %889 = vmatmul.mubr.f32.gmra.mrb[0].mxu0 %v822
    %v890 = vpop.f32.mrb[0].mxu0
    %v891 = vadd.f32 %v599, %v890
    %v892 = vpop.f32.mrb[0].mxu0
    %893 = vdwg.mxu0
    %v895 = vsel %vm601, %v580, 0
    %897 = vmatprep.subr.mxu0 0.0
    %898 = vmatpush1.msra.mxu0 %v592
    %899 = vmatprep.subr.mxu0 0.0
    %900 = vmatpush1.msra.mxu0 0.0
    %901 = vmatprep.subr.mxu0 0.0
    %902 = vmatpush1.msra.mxu0 0.0
    %903 = vmatprep.subr.mxu0 0.0
    %904 = vmatpush1.msra.mxu0 0.0
    %905 = vmatprep.subr.mxu0 0.0
    %906 = vmatpush1.msra.mxu0 0.0
    %907 = vmatprep.subr.mxu0 0.0
    %908 = vmatpush1.msra.mxu0 0.0
    %909 = vmatprep.subr.mxu0 0.0
    %910 = vmatpush1.msra.mxu0 0.0
    %911 = vmatprep.subr.mxu0 0.0
    %912 = vmatpush1.msra.mxu0 0.0
    %913 = vmatprep.subr.mxu0 0.0
    %914 = vmatpush1.msra.mxu0 0.0
    %915 = vmatprep.subr.mxu0 0.0
    %916 = vmatpush1.msra.mxu0 0.0
    %917 = vmatprep.subr.mxu0 0.0
    %918 = vmatpush1.msra.mxu0 0.0
    %919 = vmatprep.subr.mxu0 0.0
    %920 = vmatpush1.msra.mxu0 0.0
    %921 = vmatprep.subr.mxu0 0.0
    %922 = vmatpush1.msra.mxu0 0.0
    %923 = vmatprep.subr.mxu0 0.0
    %924 = vmatpush1.msra.mxu0 0.0
    %925 = vmatprep.subr.mxu0 0.0
    %926 = vmatpush1.msra.mxu0 0.0
    %927 = vmatprep.subr.mxu0 0.0
    %928 = vmatpush1.msra.mxu0 0.0
    %929 = vmatprep.subr.mxu0 0.0
    %930 = vmatpush1.msra.mxu0 0.0
    %931 = vmatprep.subr.mxu0 0.0
    %932 = vmatpush1.msra.mxu0 0.0
    %933 = vmatprep.subr.mxu0 0.0
    %934 = vmatpush1.msra.mxu0 0.0
    %935 = vmatprep.subr.mxu0 0.0
    %936 = vmatpush1.msra.mxu0 0.0
    %937 = vmatprep.subr.mxu0 0.0
    %938 = vmatpush1.msra.mxu0 0.0
    %939 = vmatprep.subr.mxu0 0.0
    %940 = vmatpush1.msra.mxu0 0.0
    %941 = vmatprep.subr.mxu0 0.0
    %942 = vmatpush1.msra.mxu0 0.0
    %943 = vmatprep.subr.mxu0 0.0
    %944 = vmatpush1.msra.mxu0 0.0
    %945 = vmatprep.subr.mxu0 0.0
    %946 = vmatpush1.msra.mxu0 0.0
    %947 = vmatprep.subr.mxu0 0.0
    %948 = vmatpush1.msra.mxu0 0.0
    %949 = vmatprep.subr.mxu0 0.0
    %950 = vmatpush1.msra.mxu0 0.0
    %951 = vmatprep.subr.mxu0 0.0
    %952 = vmatpush1.msra.mxu0 0.0
    %953 = vmatprep.subr.mxu0 0.0
    %954 = vmatpush1.msra.mxu0 0.0
    %955 = vmatprep.subr.mxu0 0.0
    %956 = vmatpush1.msra.mxu0 0.0
    %957 = vmatprep.subr.mxu0 0.0
    %958 = vmatpush1.msra.mxu0 0.0
    %959 = vmatprep.subr.mxu0 0.0
    %960 = vmatpush1.msra.mxu0 0.0
    %961 = vmatprep.mubr.f32.mxu0 0.0
    %962 = vmatmul.mubr.f32.gmra.mrb[0].mxu0 %v895
    %v963 = vpop.f32.mrb[0].mxu0
    %v964 = vadd.f32 %v599, %v963
    %v965 = vpop.f32.mrb[0].mxu0
    %966 = vdwg.mxu0
    %v968 = vsel %vm601, %v581, 0
    %970 = vmatprep.subr.mxu0 0.0
    %971 = vmatpush1.msra.mxu0 %v593
    %972 = vmatprep.subr.mxu0 0.0
    %973 = vmatpush1.msra.mxu0 0.0
    %974 = vmatprep.subr.mxu0 0.0
    %975 = vmatpush1.msra.mxu0 0.0
    %976 = vmatprep.subr.mxu0 0.0
    %977 = vmatpush1.msra.mxu0 0.0
    %978 = vmatprep.subr.mxu0 0.0
    %979 = vmatpush1.msra.mxu0 0.0
    %980 = vmatprep.subr.mxu0 0.0
    %981 = vmatpush1.msra.mxu0 0.0
    %982 = vmatprep.subr.mxu0 0.0
    %983 = vmatpush1.msra.mxu0 0.0
    %984 = vmatprep.subr.mxu0 0.0
    %985 = vmatpush1.msra.mxu0 0.0
    %986 = vmatprep.subr.mxu0 0.0
    %987 = vmatpush1.msra.mxu0 0.0
    %988 = vmatprep.subr.mxu0 0.0
    %989 = vmatpush1.msra.mxu0 0.0
    %990 = vmatprep.subr.mxu0 0.0
    %991 = vmatpush1.msra.mxu0 0.0
    %992 = vmatprep.subr.mxu0 0.0
    %993 = vmatpush1.msra.mxu0 0.0
    %994 = vmatprep.subr.mxu0 0.0
    %995 = vmatpush1.msra.mxu0 0.0
    %996 = vmatprep.subr.mxu0 0.0
    %997 = vmatpush1.msra.mxu0 0.0
    %998 = vmatprep.subr.mxu0 0.0
    %999 = vmatpush1.msra.mxu0 0.0
    %1000 = vmatprep.subr.mxu0 0.0
    %1001 = vmatpush1.msra.mxu0 0.0
    %1002 = vmatprep.subr.mxu0 0.0
    %1003 = vmatpush1.msra.mxu0 0.0
    %1004 = vmatprep.subr.mxu0 0.0
    %1005 = vmatpush1.msra.mxu0 0.0
    %1006 = vmatprep.subr.mxu0 0.0
    %1007 = vmatpush1.msra.mxu0 0.0
    %1008 = vmatprep.subr.mxu0 0.0
    %1009 = vmatpush1.msra.mxu0 0.0
    %1010 = vmatprep.subr.mxu0 0.0
    %1011 = vmatpush1.msra.mxu0 0.0
    %1012 = vmatprep.subr.mxu0 0.0
    %1013 = vmatpush1.msra.mxu0 0.0
    %1014 = vmatprep.subr.mxu0 0.0
    %1015 = vmatpush1.msra.mxu0 0.0
    %1016 = vmatprep.subr.mxu0 0.0
    %1017 = vmatpush1.msra.mxu0 0.0
    %1018 = vmatprep.subr.mxu0 0.0
    %1019 = vmatpush1.msra.mxu0 0.0
    %1020 = vmatprep.subr.mxu0 0.0
    %1021 = vmatpush1.msra.mxu0 0.0
    %1022 = vmatprep.subr.mxu0 0.0
    %1023 = vmatpush1.msra.mxu0 0.0
    %1024 = vmatprep.subr.mxu0 0.0
    %1025 = vmatpush1.msra.mxu0 0.0
    %1026 = vmatprep.subr.mxu0 0.0
    %1027 = vmatpush1.msra.mxu0 0.0
    %1028 = vmatprep.subr.mxu0 0.0
    %1029 = vmatpush1.msra.mxu0 0.0
    %1030 = vmatprep.subr.mxu0 0.0
    %1031 = vmatpush1.msra.mxu0 0.0
    %1032 = vmatprep.subr.mxu0 0.0
    %1033 = vmatpush1.msra.mxu0 0.0
    %1034 = vmatprep.mubr.f32.mxu0 0.0
    %1035 = vmatmul.mubr.f32.gmra.mrb[0].mxu0 %v968
    %v1036 = vpop.f32.mrb[0].mxu0
    %v1037 = vadd.f32 %v599, %v1036
    %v1038 = vpop.f32.mrb[0].mxu0
    %1039 = vdwg.mxu0
    %v1040 = vld [vmem:[%s7] sm:$0xff]
    %v1041 = vld [vmem:[%s7 + $0x8] sm:$0xff]
    %v1042 = vld [vmem:[%s7 + $0x10] sm:$0xff]
    %v1043 = vld [vmem:[%s7 + $0x18] sm:$0xff]
    %v1044 = vld [vmem:[%s7 + $0x20] sm:$0xff]
    %v1045 = vld [vmem:[%s7 + $0x28] sm:$0xff]
    %v1046 = vld [vmem:[%s7 + $0x30] sm:$0xff]
    %v1047 = vld [vmem:[%s7 + $0x38] sm:$0xff]
    %v1048 = vld [vmem:[%s7 + $0x40] sm:$0xff]
    %v1049 = vld [vmem:[%s7 + $0x48] sm:$0xff]
    %v1050 = vld [vmem:[%s7 + $0x50] sm:$0xff]
    %v1051 = vld [vmem:[%s7 + $0x58] sm:$0xff]
    %v1052 = vld [vmem:[%s9] sm:$0x1]
    %v1054 = vlaneseq
    %v1055 = vshrl.u32 %v1054, 7
    %v1056 = vsub.s32 0, %v1055
    %v1057 = vrot.slane %v1052, %v1056
    %vm1059 = vcmask 130048
    %v1061 = vsel %vm1059, %v582, 0
    %1063 = vmatprep.subr.mxu0 0.0
    %1064 = vmatpush1.msra.mxu0 %v1040
    %1065 = vmatprep.subr.mxu0 0.0
    %1066 = vmatpush1.msra.mxu0 %v1041
    %1067 = vmatprep.subr.mxu0 0.0
    %1068 = vmatpush1.msra.mxu0 0.0
    %1069 = vmatprep.subr.mxu0 0.0
    %1070 = vmatpush1.msra.mxu0 0.0
    %1071 = vmatprep.subr.mxu0 0.0
    %1072 = vmatpush1.msra.mxu0 0.0
    %1073 = vmatprep.subr.mxu0 0.0
    %1074 = vmatpush1.msra.mxu0 0.0
    %1075 = vmatprep.subr.mxu0 0.0
    %1076 = vmatpush1.msra.mxu0 0.0
    %1077 = vmatprep.subr.mxu0 0.0
    %1078 = vmatpush1.msra.mxu0 0.0
    %1079 = vmatprep.subr.mxu0 0.0
    %1080 = vmatpush1.msra.mxu0 0.0
    %1081 = vmatprep.subr.mxu0 0.0
    %1082 = vmatpush1.msra.mxu0 0.0
    %1083 = vmatprep.subr.mxu0 0.0
    %1084 = vmatpush1.msra.mxu0 0.0
    %1085 = vmatprep.subr.mxu0 0.0
    %1086 = vmatpush1.msra.mxu0 0.0
    %1087 = vmatprep.subr.mxu0 0.0
    %1088 = vmatpush1.msra.mxu0 0.0
    %1089 = vmatprep.subr.mxu0 0.0
    %1090 = vmatpush1.msra.mxu0 0.0
    %1091 = vmatprep.subr.mxu0 0.0
    %1092 = vmatpush1.msra.mxu0 0.0
    %1093 = vmatprep.subr.mxu0 0.0
    %1094 = vmatpush1.msra.mxu0 0.0
    %1095 = vmatprep.subr.mxu0 0.0
    %1096 = vmatpush1.msra.mxu0 0.0
    %1097 = vmatprep.subr.mxu0 0.0
    %1098 = vmatpush1.msra.mxu0 0.0
    %1099 = vmatprep.subr.mxu0 0.0
    %1100 = vmatpush1.msra.mxu0 0.0
    %1101 = vmatprep.subr.mxu0 0.0
    %1102 = vmatpush1.msra.mxu0 0.0
    %1103 = vmatprep.subr.mxu0 0.0
    %1104 = vmatpush1.msra.mxu0 0.0
    %1105 = vmatprep.subr.mxu0 0.0
    %1106 = vmatpush1.msra.mxu0 0.0
    %1107 = vmatprep.subr.mxu0 0.0
    %1108 = vmatpush1.msra.mxu0 0.0
    %1109 = vmatprep.subr.mxu0 0.0
    %1110 = vmatpush1.msra.mxu0 0.0
    %1111 = vmatprep.subr.mxu0 0.0
    %1112 = vmatpush1.msra.mxu0 0.0
    %1113 = vmatprep.subr.mxu0 0.0
    %1114 = vmatpush1.msra.mxu0 0.0
    %1115 = vmatprep.subr.mxu0 0.0
    %1116 = vmatpush1.msra.mxu0 0.0
    %1117 = vmatprep.subr.mxu0 0.0
    %1118 = vmatpush1.msra.mxu0 0.0
    %1119 = vmatprep.subr.mxu0 0.0
    %1120 = vmatpush1.msra.mxu0 0.0
    %1121 = vmatprep.subr.mxu0 0.0
    %1122 = vmatpush1.msra.mxu0 0.0
    %1123 = vmatprep.subr.mxu0 0.0
    %1124 = vmatpush1.msra.mxu0 0.0
    %1125 = vmatprep.subr.mxu0 0.0
    %1126 = vmatpush1.msra.mxu0 0.0
    %1127 = vmatprep.mubr.f32.mxu0 0.0
    %1128 = vmatmul.mubr.f32.gmra.mrb[0].mxu0 %v1061
    %v1129 = vpop.f32.mrb[0].mxu0
    %v1130 = vadd.f32 %v1057, %v1129
    %v1131 = vpop.f32.mrb[0].mxu0
    %1132 = vdwg.mxu0
    %v1134 = vsel %vm1059, %v583, 0
    %1136 = vmatprep.subr.mxu0 0.0
    %1137 = vmatpush1.msra.mxu0 %v1042
    %1138 = vmatprep.subr.mxu0 0.0
    %1139 = vmatpush1.msra.mxu0 %v1043
    %1140 = vmatprep.subr.mxu0 0.0
    %1141 = vmatpush1.msra.mxu0 0.0
    %1142 = vmatprep.subr.mxu0 0.0
    %1143 = vmatpush1.msra.mxu0 0.0
    %1144 = vmatprep.subr.mxu0 0.0
    %1145 = vmatpush1.msra.mxu0 0.0
    %1146 = vmatprep.subr.mxu0 0.0
    %1147 = vmatpush1.msra.mxu0 0.0
    %1148 = vmatprep.subr.mxu0 0.0
    %1149 = vmatpush1.msra.mxu0 0.0
    %1150 = vmatprep.subr.mxu0 0.0
    %1151 = vmatpush1.msra.mxu0 0.0
    %1152 = vmatprep.subr.mxu0 0.0
    %1153 = vmatpush1.msra.mxu0 0.0
    %1154 = vmatprep.subr.mxu0 0.0
    %1155 = vmatpush1.msra.mxu0 0.0
    %1156 = vmatprep.subr.mxu0 0.0
    %1157 = vmatpush1.msra.mxu0 0.0
    %1158 = vmatprep.subr.mxu0 0.0
    %1159 = vmatpush1.msra.mxu0 0.0
    %1160 = vmatprep.subr.mxu0 0.0
    %1161 = vmatpush1.msra.mxu0 0.0
    %1162 = vmatprep.subr.mxu0 0.0
    %1163 = vmatpush1.msra.mxu0 0.0
    %1164 = vmatprep.subr.mxu0 0.0
    %1165 = vmatpush1.msra.mxu0 0.0
    %1166 = vmatprep.subr.mxu0 0.0
    %1167 = vmatpush1.msra.mxu0 0.0
    %1168 = vmatprep.subr.mxu0 0.0
    %1169 = vmatpush1.msra.mxu0 0.0
    %1170 = vmatprep.subr.mxu0 0.0
    %1171 = vmatpush1.msra.mxu0 0.0
    %1172 = vmatprep.subr.mxu0 0.0
    %1173 = vmatpush1.msra.mxu0 0.0
    %1174 = vmatprep.subr.mxu0 0.0
    %1175 = vmatpush1.msra.mxu0 0.0
    %1176 = vmatprep.subr.mxu0 0.0
    %1177 = vmatpush1.msra.mxu0 0.0
    %1178 = vmatprep.subr.mxu0 0.0
    %1179 = vmatpush1.msra.mxu0 0.0
    %1180 = vmatprep.subr.mxu0 0.0
    %1181 = vmatpush1.msra.mxu0 0.0
    %1182 = vmatprep.subr.mxu0 0.0
    %1183 = vmatpush1.msra.mxu0 0.0
    %1184 = vmatprep.subr.mxu0 0.0
    %1185 = vmatpush1.msra.mxu0 0.0
    %1186 = vmatprep.subr.mxu0 0.0
    %1187 = vmatpush1.msra.mxu0 0.0
    %1188 = vmatprep.subr.mxu0 0.0
    %1189 = vmatpush1.msra.mxu0 0.0
    %1190 = vmatprep.subr.mxu0 0.0
    %1191 = vmatpush1.msra.mxu0 0.0
    %1192 = vmatprep.subr.mxu0 0.0
    %1193 = vmatpush1.msra.mxu0 0.0
    %1194 = vmatprep.subr.mxu0 0.0
    %1195 = vmatpush1.msra.mxu0 0.0
    %1196 = vmatprep.subr.mxu0 0.0
    %1197 = vmatpush1.msra.mxu0 0.0
    %1198 = vmatprep.subr.mxu0 0.0
    %1199 = vmatpush1.msra.mxu0 0.0
    %1200 = vmatprep.mubr.f32.mxu0 0.0
    %1201 = vmatmul.mubr.f32.gmra.mrb[0].mxu0 %v1134
    %v1202 = vpop.f32.mrb[0].mxu0
    %v1203 = vadd.f32 %v1057, %v1202
    %v1204 = vpop.f32.mrb[0].mxu0
    %1205 = vdwg.mxu0
    %v1207 = vsel %vm1059, %v584, 0
    %1209 = vmatprep.subr.mxu0 0.0
    %1210 = vmatpush1.msra.mxu0 %v1044
    %1211 = vmatprep.subr.mxu0 0.0
    %1212 = vmatpush1.msra.mxu0 %v1045
    %1213 = vmatprep.subr.mxu0 0.0
    %1214 = vmatpush1.msra.mxu0 0.0
    %1215 = vmatprep.subr.mxu0 0.0
    %1216 = vmatpush1.msra.mxu0 0.0
    %1217 = vmatprep.subr.mxu0 0.0
    %1218 = vmatpush1.msra.mxu0 0.0
    %1219 = vmatprep.subr.mxu0 0.0
    %1220 = vmatpush1.msra.mxu0 0.0
    %1221 = vmatprep.subr.mxu0 0.0
    %1222 = vmatpush1.msra.mxu0 0.0
    %1223 = vmatprep.subr.mxu0 0.0
    %1224 = vmatpush1.msra.mxu0 0.0
    %1225 = vmatprep.subr.mxu0 0.0
    %1226 = vmatpush1.msra.mxu0 0.0
    %1227 = vmatprep.subr.mxu0 0.0
    %1228 = vmatpush1.msra.mxu0 0.0
    %1229 = vmatprep.subr.mxu0 0.0
    %1230 = vmatpush1.msra.mxu0 0.0
    %1231 = vmatprep.subr.mxu0 0.0
    %1232 = vmatpush1.msra.mxu0 0.0
    %1233 = vmatprep.subr.mxu0 0.0
    %1234 = vmatpush1.msra.mxu0 0.0
    %1235 = vmatprep.subr.mxu0 0.0
    %1236 = vmatpush1.msra.mxu0 0.0
    %1237 = vmatprep.subr.mxu0 0.0
    %1238 = vmatpush1.msra.mxu0 0.0
    %1239 = vmatprep.subr.mxu0 0.0
    %1240 = vmatpush1.msra.mxu0 0.0
    %1241 = vmatprep.subr.mxu0 0.0
    %1242 = vmatpush1.msra.mxu0 0.0
    %1243 = vmatprep.subr.mxu0 0.0
    %1244 = vmatpush1.msra.mxu0 0.0
    %1245 = vmatprep.subr.mxu0 0.0
    %1246 = vmatpush1.msra.mxu0 0.0
    %1247 = vmatprep.subr.mxu0 0.0
    %1248 = vmatpush1.msra.mxu0 0.0
    %1249 = vmatprep.subr.mxu0 0.0
    %1250 = vmatpush1.msra.mxu0 0.0
    %1251 = vmatprep.subr.mxu0 0.0
    %1252 = vmatpush1.msra.mxu0 0.0
    %1253 = vmatprep.subr.mxu0 0.0
    %1254 = vmatpush1.msra.mxu0 0.0
    %1255 = vmatprep.subr.mxu0 0.0
    %1256 = vmatpush1.msra.mxu0 0.0
    %1257 = vmatprep.subr.mxu0 0.0
    %1258 = vmatpush1.msra.mxu0 0.0
    %1259 = vmatprep.subr.mxu0 0.0
    %1260 = vmatpush1.msra.mxu0 0.0
    %1261 = vmatprep.subr.mxu0 0.0
    %1262 = vmatpush1.msra.mxu0 0.0
    %1263 = vmatprep.subr.mxu0 0.0
    %1264 = vmatpush1.msra.mxu0 0.0
    %1265 = vmatprep.subr.mxu0 0.0
    %1266 = vmatpush1.msra.mxu0 0.0
    %1267 = vmatprep.subr.mxu0 0.0
    %1268 = vmatpush1.msra.mxu0 0.0
    %1269 = vmatprep.subr.mxu0 0.0
    %1270 = vmatpush1.msra.mxu0 0.0
    %1271 = vmatprep.subr.mxu0 0.0
    %1272 = vmatpush1.msra.mxu0 0.0
    %1273 = vmatprep.mubr.f32.mxu0 0.0
    %1274 = vmatmul.mubr.f32.gmra.mrb[0].mxu0 %v1207
    %v1275 = vpop.f32.mrb[0].mxu0
    %v1276 = vadd.f32 %v1057, %v1275
    %v1277 = vpop.f32.mrb[0].mxu0
    %1278 = vdwg.mxu0
    %v1280 = vsel %vm1059, %v585, 0
    %1282 = vmatprep.subr.mxu0 0.0
    %1283 = vmatpush1.msra.mxu0 %v1046
    %1284 = vmatprep.subr.mxu0 0.0
    %1285 = vmatpush1.msra.mxu0 %v1047
    %1286 = vmatprep.subr.mxu0 0.0
    %1287 = vmatpush1.msra.mxu0 0.0
    %1288 = vmatprep.subr.mxu0 0.0
    %1289 = vmatpush1.msra.mxu0 0.0
    %1290 = vmatprep.subr.mxu0 0.0
    %1291 = vmatpush1.msra.mxu0 0.0
    %1292 = vmatprep.subr.mxu0 0.0
    %1293 = vmatpush1.msra.mxu0 0.0
    %1294 = vmatprep.subr.mxu0 0.0
    %1295 = vmatpush1.msra.mxu0 0.0
    %1296 = vmatprep.subr.mxu0 0.0
    %1297 = vmatpush1.msra.mxu0 0.0
    %1298 = vmatprep.subr.mxu0 0.0
    %1299 = vmatpush1.msra.mxu0 0.0
    %1300 = vmatprep.subr.mxu0 0.0
    %1301 = vmatpush1.msra.mxu0 0.0
    %1302 = vmatprep.subr.mxu0 0.0
    %1303 = vmatpush1.msra.mxu0 0.0
    %1304 = vmatprep.subr.mxu0 0.0
    %1305 = vmatpush1.msra.mxu0 0.0
    %1306 = vmatprep.subr.mxu0 0.0
    %1307 = vmatpush1.msra.mxu0 0.0
    %1308 = vmatprep.subr.mxu0 0.0
    %1309 = vmatpush1.msra.mxu0 0.0
    %1310 = vmatprep.subr.mxu0 0.0
    %1311 = vmatpush1.msra.mxu0 0.0
    %1312 = vmatprep.subr.mxu0 0.0
    %1313 = vmatpush1.msra.mxu0 0.0
    %1314 = vmatprep.subr.mxu0 0.0
    %1315 = vmatpush1.msra.mxu0 0.0
    %1316 = vmatprep.subr.mxu0 0.0
    %1317 = vmatpush1.msra.mxu0 0.0
    %1318 = vmatprep.subr.mxu0 0.0
    %1319 = vmatpush1.msra.mxu0 0.0
    %1320 = vmatprep.subr.mxu0 0.0
    %1321 = vmatpush1.msra.mxu0 0.0
    %1322 = vmatprep.subr.mxu0 0.0
    %1323 = vmatpush1.msra.mxu0 0.0
    %1324 = vmatprep.subr.mxu0 0.0
    %1325 = vmatpush1.msra.mxu0 0.0
    %1326 = vmatprep.subr.mxu0 0.0
    %1327 = vmatpush1.msra.mxu0 0.0
    %1328 = vmatprep.subr.mxu0 0.0
    %1329 = vmatpush1.msra.mxu0 0.0
    %1330 = vmatprep.subr.mxu0 0.0
    %1331 = vmatpush1.msra.mxu0 0.0
    %1332 = vmatprep.subr.mxu0 0.0
    %1333 = vmatpush1.msra.mxu0 0.0
    %1334 = vmatprep.subr.mxu0 0.0
    %1335 = vmatpush1.msra.mxu0 0.0
    %1336 = vmatprep.subr.mxu0 0.0
    %1337 = vmatpush1.msra.mxu0 0.0
    %1338 = vmatprep.subr.mxu0 0.0
    %1339 = vmatpush1.msra.mxu0 0.0
    %1340 = vmatprep.subr.mxu0 0.0
    %1341 = vmatpush1.msra.mxu0 0.0
    %1342 = vmatprep.subr.mxu0 0.0
    %1343 = vmatpush1.msra.mxu0 0.0
    %1344 = vmatprep.subr.mxu0 0.0
    %1345 = vmatpush1.msra.mxu0 0.0
    %1346 = vmatprep.mubr.f32.mxu0 0.0
    %1347 = vmatmul.mubr.f32.gmra.mrb[0].mxu0 %v1280
    %v1348 = vpop.f32.mrb[0].mxu0
    %v1349 = vadd.f32 %v1057, %v1348
    %v1350 = vpop.f32.mrb[0].mxu0
    %1351 = vdwg.mxu0
    %v1353 = vsel %vm1059, %v586, 0
    %1355 = vmatprep.subr.mxu0 0.0
    %1356 = vmatpush1.msra.mxu0 %v1048
    %1357 = vmatprep.subr.mxu0 0.0
    %1358 = vmatpush1.msra.mxu0 %v1049
    %1359 = vmatprep.subr.mxu0 0.0
    %1360 = vmatpush1.msra.mxu0 0.0
    %1361 = vmatprep.subr.mxu0 0.0
    %1362 = vmatpush1.msra.mxu0 0.0
    %1363 = vmatprep.subr.mxu0 0.0
    %1364 = vmatpush1.msra.mxu0 0.0
    %1365 = vmatprep.subr.mxu0 0.0
    %1366 = vmatpush1.msra.mxu0 0.0
    %1367 = vmatprep.subr.mxu0 0.0
    %1368 = vmatpush1.msra.mxu0 0.0
    %1369 = vmatprep.subr.mxu0 0.0
    %1370 = vmatpush1.msra.mxu0 0.0
    %1371 = vmatprep.subr.mxu0 0.0
    %1372 = vmatpush1.msra.mxu0 0.0
    %1373 = vmatprep.subr.mxu0 0.0
    %1374 = vmatpush1.msra.mxu0 0.0
    %1375 = vmatprep.subr.mxu0 0.0
    %1376 = vmatpush1.msra.mxu0 0.0
    %1377 = vmatprep.subr.mxu0 0.0
    %1378 = vmatpush1.msra.mxu0 0.0
    %1379 = vmatprep.subr.mxu0 0.0
    %1380 = vmatpush1.msra.mxu0 0.0
    %1381 = vmatprep.subr.mxu0 0.0
    %1382 = vmatpush1.msra.mxu0 0.0
    %1383 = vmatprep.subr.mxu0 0.0
    %1384 = vmatpush1.msra.mxu0 0.0
    %1385 = vmatprep.subr.mxu0 0.0
    %1386 = vmatpush1.msra.mxu0 0.0
    %1387 = vmatprep.subr.mxu0 0.0
    %1388 = vmatpush1.msra.mxu0 0.0
    %1389 = vmatprep.subr.mxu0 0.0
    %1390 = vmatpush1.msra.mxu0 0.0
    %1391 = vmatprep.subr.mxu0 0.0
    %1392 = vmatpush1.msra.mxu0 0.0
    %1393 = vmatprep.subr.mxu0 0.0
    %1394 = vmatpush1.msra.mxu0 0.0
    %1395 = vmatprep.subr.mxu0 0.0
    %1396 = vmatpush1.msra.mxu0 0.0
    %1397 = vmatprep.subr.mxu0 0.0
    %1398 = vmatpush1.msra.mxu0 0.0
    %1399 = vmatprep.subr.mxu0 0.0
    %1400 = vmatpush1.msra.mxu0 0.0
    %1401 = vmatprep.subr.mxu0 0.0
    %1402 = vmatpush1.msra.mxu0 0.0
    %1403 = vmatprep.subr.mxu0 0.0
    %1404 = vmatpush1.msra.mxu0 0.0
    %1405 = vmatprep.subr.mxu0 0.0
    %1406 = vmatpush1.msra.mxu0 0.0
    %1407 = vmatprep.subr.mxu0 0.0
    %1408 = vmatpush1.msra.mxu0 0.0
    %1409 = vmatprep.subr.mxu0 0.0
    %1410 = vmatpush1.msra.mxu0 0.0
    %1411 = vmatprep.subr.mxu0 0.0
    %1412 = vmatpush1.msra.mxu0 0.0
    %1413 = vmatprep.subr.mxu0 0.0
    %1414 = vmatpush1.msra.mxu0 0.0
    %1415 = vmatprep.subr.mxu0 0.0
    %1416 = vmatpush1.msra.mxu0 0.0
    %1417 = vmatprep.subr.mxu0 0.0
    %1418 = vmatpush1.msra.mxu0 0.0
    %1419 = vmatprep.mubr.f32.mxu0 0.0
    %1420 = vmatmul.mubr.f32.gmra.mrb[0].mxu0 %v1353
    %v1421 = vpop.f32.mrb[0].mxu0
    %v1422 = vadd.f32 %v1057, %v1421
    %v1423 = vpop.f32.mrb[0].mxu0
    %1424 = vdwg.mxu0
    %v1426 = vsel %vm1059, %v587, 0
    %1428 = vmatprep.subr.mxu0 0.0
    %1429 = vmatpush1.msra.mxu0 %v1050
    %1430 = vmatprep.subr.mxu0 0.0
    %1431 = vmatpush1.msra.mxu0 %v1051
    %1432 = vmatprep.subr.mxu0 0.0
    %1433 = vmatpush1.msra.mxu0 0.0
    %1434 = vmatprep.subr.mxu0 0.0
    %1435 = vmatpush1.msra.mxu0 0.0
    %1436 = vmatprep.subr.mxu0 0.0
    %1437 = vmatpush1.msra.mxu0 0.0
    %1438 = vmatprep.subr.mxu0 0.0
    %1439 = vmatpush1.msra.mxu0 0.0
    %1440 = vmatprep.subr.mxu0 0.0
    %1441 = vmatpush1.msra.mxu0 0.0
    %1442 = vmatprep.subr.mxu0 0.0
    %1443 = vmatpush1.msra.mxu0 0.0
    %1444 = vmatprep.subr.mxu0 0.0
    %1445 = vmatpush1.msra.mxu0 0.0
    %1446 = vmatprep.subr.mxu0 0.0
    %1447 = vmatpush1.msra.mxu0 0.0
    %1448 = vmatprep.subr.mxu0 0.0
    %1449 = vmatpush1.msra.mxu0 0.0
    %1450 = vmatprep.subr.mxu0 0.0
    %1451 = vmatpush1.msra.mxu0 0.0
    %1452 = vmatprep.subr.mxu0 0.0
    %1453 = vmatpush1.msra.mxu0 0.0
    %1454 = vmatprep.subr.mxu0 0.0
    %1455 = vmatpush1.msra.mxu0 0.0
    %1456 = vmatprep.subr.mxu0 0.0
    %1457 = vmatpush1.msra.mxu0 0.0
    %1458 = vmatprep.subr.mxu0 0.0
    %1459 = vmatpush1.msra.mxu0 0.0
    %1460 = vmatprep.subr.mxu0 0.0
    %1461 = vmatpush1.msra.mxu0 0.0
    %1462 = vmatprep.subr.mxu0 0.0
    %1463 = vmatpush1.msra.mxu0 0.0
    %1464 = vmatprep.subr.mxu0 0.0
    %1465 = vmatpush1.msra.mxu0 0.0
    %1466 = vmatprep.subr.mxu0 0.0
    %1467 = vmatpush1.msra.mxu0 0.0
    %1468 = vmatprep.subr.mxu0 0.0
    %1469 = vmatpush1.msra.mxu0 0.0
    %1470 = vmatprep.subr.mxu0 0.0
    %1471 = vmatpush1.msra.mxu0 0.0
    %1472 = vmatprep.subr.mxu0 0.0
    %1473 = vmatpush1.msra.mxu0 0.0
    %1474 = vmatprep.subr.mxu0 0.0
    %1475 = vmatpush1.msra.mxu0 0.0
    %1476 = vmatprep.subr.mxu0 0.0
    %1477 = vmatpush1.msra.mxu0 0.0
    %1478 = vmatprep.subr.mxu0 0.0
    %1479 = vmatpush1.msra.mxu0 0.0
    %1480 = vmatprep.subr.mxu0 0.0
    %1481 = vmatpush1.msra.mxu0 0.0
    %1482 = vmatprep.subr.mxu0 0.0
    %1483 = vmatpush1.msra.mxu0 0.0
    %1484 = vmatprep.subr.mxu0 0.0
    %1485 = vmatpush1.msra.mxu0 0.0
    %1486 = vmatprep.subr.mxu0 0.0
    %1487 = vmatpush1.msra.mxu0 0.0
    %1488 = vmatprep.subr.mxu0 0.0
    %1489 = vmatpush1.msra.mxu0 0.0
    %1490 = vmatprep.subr.mxu0 0.0
    %1491 = vmatpush1.msra.mxu0 0.0
    %1492 = vmatprep.mubr.f32.mxu0 0.0
    %1493 = vmatmul.mubr.f32.gmra.mrb[0].mxu0 %v1426
    %v1494 = vpop.f32.mrb[0].mxu0
    %v1495 = vadd.f32 %v1057, %v1494
    %v1496 = vpop.f32.mrb[0].mxu0
    %1497 = vdwg.mxu0
    %v1498 = vadd.f32 %v672, %v1130
    %v1499 = vadd.f32 %v745, %v1203
    %v1500 = vadd.f32 %v818, %v1276
    %v1501 = vadd.f32 %v891, %v1349
    %v1502 = vadd.f32 %v964, %v1422
    %v1503 = vadd.f32 %v1037, %v1495
    %v1504 = vsub.f32 0.0, %v1498
    %v1505 = vsub.f32 0.0, %v1499
    %v1506 = vsub.f32 0.0, %v1500
    %v1507 = vsub.f32 0.0, %v1501
    %v1508 = vsub.f32 0.0, %v1502
    %v1509 = vsub.f32 0.0, %v1503
    %v1510 = vmul.f32 %v1504, 1.442695
    %v1511 = vpow.pop %v1510
    %v1512 = vmul.f32 %v1505, 1.442695
    %v1513 = vpow.pop %v1512
    %v1514 = vmul.f32 %v1506, 1.442695
    %v1515 = vpow.pop %v1514
    %v1516 = vmul.f32 %v1507, 1.442695
    %v1517 = vpow.pop %v1516
    %v1518 = vmul.f32 %v1508, 1.442695
    %v1519 = vpow.pop %v1518
    %v1520 = vmul.f32 %v1509, 1.442695
    %v1521 = vpow.pop %v1520
    %v1522 = vadd.f32 %v1511, 1.0
    %v1523 = vadd.f32 %v1513, 1.0
    %v1524 = vadd.f32 %v1515, 1.0
    %v1525 = vadd.f32 %v1517, 1.0
    %v1526 = vadd.f32 %v1519, 1.0
    %v1527 = vadd.f32 %v1521, 1.0
    %v1528 = vrcp.pop %v1522
    %v1529 = vmul.f32 1.0, %v1528
    %v1530 = vrcp.pop %v1523
    %v1531 = vmul.f32 1.0, %v1530
    %v1532 = vrcp.pop %v1524
    %v1533 = vmul.f32 1.0, %v1532
    %v1534 = vrcp.pop %v1525
    %v1535 = vmul.f32 1.0, %v1534
    %v1536 = vrcp.pop %v1526
    %v1537 = vmul.f32 1.0, %v1536
    %v1538 = vrcp.pop %v1527
    %v1539 = vmul.f32 1.0, %v1538
    %1546 = vrot.lane.b32.xlu0 %v1130, 96
    %v1547 = vpop.permute.xlu0 %1546
    %1548 = vrot.lane.b32.xlu0 %v1203, 96
    %v1549 = vpop.permute.xlu0 %1548
    %1550 = vrot.lane.b32.xlu0 %v1276, 96
    %v1551 = vpop.permute.xlu0 %1550
    %1552 = vrot.lane.b32.xlu0 %v1349, 96
    %v1553 = vpop.permute.xlu0 %1552
    %1554 = vrot.lane.b32.xlu0 %v1422, 96
    %v1555 = vpop.permute.xlu0 %1554
    %1556 = vrot.lane.b32.xlu0 %v1495, 96
    %v1557 = vpop.permute.xlu0 %1556
    %v1564 = vmul.f32 %v1529, %v1547
    %v1565 = vmul.f32 %v1531, %v1549
    %v1566 = vmul.f32 %v1533, %v1551
    %v1567 = vmul.f32 %v1535, %v1553
    %v1568 = vmul.f32 %v1537, %v1555
    %v1569 = vmul.f32 %v1539, %v1557
    %1576 = vrot.lane.b32.xlu0 %v1564, 32
    %v1577 = vpop.permute.xlu0 %1576
    %1578 = vrot.lane.b32.xlu0 %v1565, 32
    %v1579 = vpop.permute.xlu0 %1578
    %1580 = vrot.lane.b32.xlu0 %v1566, 32
    %v1581 = vpop.permute.xlu0 %1580
    %1582 = vrot.lane.b32.xlu0 %v1567, 32
    %v1583 = vpop.permute.xlu0 %1582
    %1584 = vrot.lane.b32.xlu0 %v1568, 32
    %v1585 = vpop.permute.xlu0 %1584
    %1586 = vrot.lane.b32.xlu0 %v1569, 32
    %v1587 = vpop.permute.xlu0 %1586
    %v1594 = vadd.f32 %v672, %v1577
    %v1595 = vadd.f32 %v745, %v1579
    %v1596 = vadd.f32 %v818, %v1581
    %v1597 = vadd.f32 %v891, %v1583
    %v1598 = vadd.f32 %v964, %v1585
    %v1599 = vadd.f32 %v1037, %v1587
    %v1600 = vtanh.pop %v1594
    %v1601 = vtanh.pop %v1595
    %v1602 = vtanh.pop %v1596
    %v1603 = vtanh.pop %v1597
    %v1604 = vtanh.pop %v1598
    %v1605 = vtanh.pop %v1599
    %v1606 = vsub.f32 1.0, %v1529
    %v1607 = vsub.f32 1.0, %v1531
    %v1608 = vsub.f32 1.0, %v1533
    %v1609 = vsub.f32 1.0, %v1535
    %v1610 = vsub.f32 1.0, %v1537
    %v1611 = vsub.f32 1.0, %v1539
    %1618 = vrot.lane.b32.xlu0 %v1600, 112
    %v1619 = vpop.permute.xlu0 %1618
    %1620 = vrot.lane.b32.xlu0 %v1601, 112
    %v1621 = vpop.permute.xlu0 %1620
    %1622 = vrot.lane.b32.xlu0 %v1602, 112
    %v1623 = vpop.permute.xlu0 %1622
    %1624 = vrot.lane.b32.xlu0 %v1603, 112
    %v1625 = vpop.permute.xlu0 %1624
    %1626 = vrot.lane.b32.xlu0 %v1604, 112
    %v1627 = vpop.permute.xlu0 %1626
    %1628 = vrot.lane.b32.xlu0 %v1605, 112
    %v1629 = vpop.permute.xlu0 %1628
    %v1636 = vmul.f32 %v1606, %v1619
    %v1637 = vmul.f32 %v1607, %v1621
    %v1638 = vmul.f32 %v1608, %v1623
    %v1639 = vmul.f32 %v1609, %v1625
    %v1640 = vmul.f32 %v1610, %v1627
    %v1641 = vmul.f32 %v1611, %v1629
    %1642 = vrot.lane.b32.xlu0 %v582, 16
    %v1643 = vpop.permute.xlu0 %1642
    %1644 = vrot.lane.b32.xlu0 %v583, 16
    %v1645 = vpop.permute.xlu0 %1644
    %1646 = vrot.lane.b32.xlu0 %v584, 16
    %v1647 = vpop.permute.xlu0 %1646
    %1648 = vrot.lane.b32.xlu0 %v585, 16
    %v1649 = vpop.permute.xlu0 %1648
    %1650 = vrot.lane.b32.xlu0 %v586, 16
    %v1651 = vpop.permute.xlu0 %1650
    %1652 = vrot.lane.b32.xlu0 %v587, 16
    %v1653 = vpop.permute.xlu0 %1652
    %v1660 = vmul.f32 %v1529, %v1643
    %v1661 = vmul.f32 %v1531, %v1645
    %v1662 = vmul.f32 %v1533, %v1647
    %v1663 = vmul.f32 %v1535, %v1649
    %v1664 = vmul.f32 %v1537, %v1651
    %v1665 = vmul.f32 %v1539, %v1653
    %v1666 = vadd.f32 %v1636, %v1660
    %v1667 = vadd.f32 %v1637, %v1661
    %v1668 = vadd.f32 %v1638, %v1662
    %v1669 = vadd.f32 %v1639, %v1663
    %v1670 = vadd.f32 %v1640, %v1664
    %v1671 = vadd.f32 %v1641, %v1665
    %1678 = vrot.lane.b32.xlu0 %v1666, 112
    %v1679 = vpop.permute.xlu0 %1678
    %1680 = vrot.lane.b32.xlu0 %v1667, 112
    %v1681 = vpop.permute.xlu0 %1680
    %1682 = vrot.lane.b32.xlu0 %v1668, 112
    %v1683 = vpop.permute.xlu0 %1682
    %1684 = vrot.lane.b32.xlu0 %v1669, 112
    %v1685 = vpop.permute.xlu0 %1684
    %1686 = vrot.lane.b32.xlu0 %v1670, 112
    %v1687 = vpop.permute.xlu0 %1686
    %1688 = vrot.lane.b32.xlu0 %v1671, 112
    %v1689 = vpop.permute.xlu0 %1688
    %vm1696 = vcmask 125952
    %1697 = vst.msk [vmem:[#allocation5] sm:$0xf] %vm1696, %v1679
    %1698 = vst.msk [vmem:[#allocation5 + $0x4] sm:$0xf] %vm1696, %v1681
    %1699 = vst.msk [vmem:[#allocation5 + $0x8] sm:$0xf] %vm1696, %v1683
    %1700 = vst.msk [vmem:[#allocation5 + $0xc] sm:$0xf] %vm1696, %v1685
    %1701 = vst.msk [vmem:[#allocation5 + $0x10] sm:$0xf] %vm1696, %v1687
    %1702 = vst.msk [vmem:[#allocation5 + $0x14] sm:$0xf] %vm1696, %v1689
    %v1703 = vld [vmem:[%s3] sm:$0xff]
    %v1704 = vld [vmem:[%s3 + $0x8] sm:$0xff]
    %v1705 = vld [vmem:[%s3 + $0x10] sm:$0xff]
    %v1706 = vld [vmem:[%s3 + $0x18] sm:$0xff]
    %v1707 = vld [vmem:[%s3 + $0x20] sm:$0xff]
    %v1708 = vld [vmem:[%s3 + $0x28] sm:$0xff]
    %v1709 = vld [vmem:[%s3 + $0x30] sm:$0xff]
    %v1710 = vld [vmem:[%s3 + $0x38] sm:$0xff]
    %v1711 = vld [vmem:[%s3 + $0x40] sm:$0xff]
    %v1712 = vld [vmem:[%s3 + $0x48] sm:$0xff]
    %v1713 = vld [vmem:[%s3 + $0x50] sm:$0xff]
    %v1714 = vld [vmem:[%s3 + $0x58] sm:$0xff]
    %v1715 = vld [vmem:[%s4] sm:$0xf]
    %v1716 = vld [vmem:[%s4 + $0x4] sm:$0xf]
    %v1717 = vld [vmem:[%s4 + $0x8] sm:$0xf]
    %v1718 = vld [vmem:[%s4 + $0xc] sm:$0xf]
    %v1719 = vld [vmem:[%s4 + $0x10] sm:$0xf]
    %v1720 = vld [vmem:[%s4 + $0x14] sm:$0xf]
    %v1721 = vsel %vm1059, %v1679, 0
    %1723 = vmatprep.subr.mxu0 0.0
    %1724 = vmatpush1.msra.mxu0 %v1703
    %1725 = vmatprep.subr.mxu0 0.0
    %1726 = vmatpush1.msra.mxu0 %v1704
    %1727 = vmatprep.subr.mxu0 0.0
    %1728 = vmatpush1.msra.mxu0 0.0
    %1729 = vmatprep.subr.mxu0 0.0
    %1730 = vmatpush1.msra.mxu0 0.0
    %1731 = vmatprep.subr.mxu0 0.0
    %1732 = vmatpush1.msra.mxu0 0.0
    %1733 = vmatprep.subr.mxu0 0.0
    %1734 = vmatpush1.msra.mxu0 0.0
    %1735 = vmatprep.subr.mxu0 0.0
    %1736 = vmatpush1.msra.mxu0 0.0
    %1737 = vmatprep.subr.mxu0 0.0
    %1738 = vmatpush1.msra.mxu0 0.0
    %1739 = vmatprep.subr.mxu0 0.0
    %1740 = vmatpush1.msra.mxu0 0.0
    %1741 = vmatprep.subr.mxu0 0.0
    %1742 = vmatpush1.msra.mxu0 0.0
    %1743 = vmatprep.subr.mxu0 0.0
    %1744 = vmatpush1.msra.mxu0 0.0
    %1745 = vmatprep.subr.mxu0 0.0
    %1746 = vmatpush1.msra.mxu0 0.0
    %1747 = vmatprep.subr.mxu0 0.0
    %1748 = vmatpush1.msra.mxu0 0.0
    %1749 = vmatprep.subr.mxu0 0.0
    %1750 = vmatpush1.msra.mxu0 0.0
    %1751 = vmatprep.subr.mxu0 0.0
    %1752 = vmatpush1.msra.mxu0 0.0
    %1753 = vmatprep.subr.mxu0 0.0
    %1754 = vmatpush1.msra.mxu0 0.0
    %1755 = vmatprep.subr.mxu0 0.0
    %1756 = vmatpush1.msra.mxu0 0.0
    %1757 = vmatprep.subr.mxu0 0.0
    %1758 = vmatpush1.msra.mxu0 0.0
    %1759 = vmatprep.subr.mxu0 0.0
    %1760 = vmatpush1.msra.mxu0 0.0
    %1761 = vmatprep.subr.mxu0 0.0
    %1762 = vmatpush1.msra.mxu0 0.0
    %1763 = vmatprep.subr.mxu0 0.0
    %1764 = vmatpush1.msra.mxu0 0.0
    %1765 = vmatprep.subr.mxu0 0.0
    %1766 = vmatpush1.msra.mxu0 0.0
    %1767 = vmatprep.subr.mxu0 0.0
    %1768 = vmatpush1.msra.mxu0 0.0
    %1769 = vmatprep.subr.mxu0 0.0
    %1770 = vmatpush1.msra.mxu0 0.0
    %1771 = vmatprep.subr.mxu0 0.0
    %1772 = vmatpush1.msra.mxu0 0.0
    %1773 = vmatprep.subr.mxu0 0.0
    %1774 = vmatpush1.msra.mxu0 0.0
    %1775 = vmatprep.subr.mxu0 0.0
    %1776 = vmatpush1.msra.mxu0 0.0
    %1777 = vmatprep.subr.mxu0 0.0
    %1778 = vmatpush1.msra.mxu0 0.0
    %1779 = vmatprep.subr.mxu0 0.0
    %1780 = vmatpush1.msra.mxu0 0.0
    %1781 = vmatprep.subr.mxu0 0.0
    %1782 = vmatpush1.msra.mxu0 0.0
    %1783 = vmatprep.subr.mxu0 0.0
    %1784 = vmatpush1.msra.mxu0 0.0
    %1785 = vmatprep.subr.mxu0 0.0
    %1786 = vmatpush1.msra.mxu0 0.0
    %1787 = vmatprep.mubr.f32.mxu0 0.0
    %1788 = vmatmul.mubr.f32.gmra.mrb[0].mxu0 %v1721
    %v1789 = vpop.f32.mrb[0].mxu0
    %v1790 = vadd.f32 %v1715, %v1789
    %v1791 = vpop.f32.mrb[0].mxu0
    %1792 = vdwg.mxu0
    %v1793 = vsel %vm1059, %v1681, 0
    %1795 = vmatprep.subr.mxu0 0.0
    %1796 = vmatpush1.msra.mxu0 %v1705
    %1797 = vmatprep.subr.mxu0 0.0
    %1798 = vmatpush1.msra.mxu0 %v1706
    %1799 = vmatprep.subr.mxu0 0.0
    %1800 = vmatpush1.msra.mxu0 0.0
    %1801 = vmatprep.subr.mxu0 0.0
    %1802 = vmatpush1.msra.mxu0 0.0
    %1803 = vmatprep.subr.mxu0 0.0
    %1804 = vmatpush1.msra.mxu0 0.0
    %1805 = vmatprep.subr.mxu0 0.0
    %1806 = vmatpush1.msra.mxu0 0.0
    %1807 = vmatprep.subr.mxu0 0.0
    %1808 = vmatpush1.msra.mxu0 0.0
    %1809 = vmatprep.subr.mxu0 0.0
    %1810 = vmatpush1.msra.mxu0 0.0
    %1811 = vmatprep.subr.mxu0 0.0
    %1812 = vmatpush1.msra.mxu0 0.0
    %1813 = vmatprep.subr.mxu0 0.0
    %1814 = vmatpush1.msra.mxu0 0.0
    %1815 = vmatprep.subr.mxu0 0.0
    %1816 = vmatpush1.msra.mxu0 0.0
    %1817 = vmatprep.subr.mxu0 0.0
    %1818 = vmatpush1.msra.mxu0 0.0
    %1819 = vmatprep.subr.mxu0 0.0
    %1820 = vmatpush1.msra.mxu0 0.0
    %1821 = vmatprep.subr.mxu0 0.0
    %1822 = vmatpush1.msra.mxu0 0.0
    %1823 = vmatprep.subr.mxu0 0.0
    %1824 = vmatpush1.msra.mxu0 0.0
    %1825 = vmatprep.subr.mxu0 0.0
    %1826 = vmatpush1.msra.mxu0 0.0
    %1827 = vmatprep.subr.mxu0 0.0
    %1828 = vmatpush1.msra.mxu0 0.0
    %1829 = vmatprep.subr.mxu0 0.0
    %1830 = vmatpush1.msra.mxu0 0.0
    %1831 = vmatprep.subr.mxu0 0.0
    %1832 = vmatpush1.msra.mxu0 0.0
    %1833 = vmatprep.subr.mxu0 0.0
    %1834 = vmatpush1.msra.mxu0 0.0
    %1835 = vmatprep.subr.mxu0 0.0
    %1836 = vmatpush1.msra.mxu0 0.0
    %1837 = vmatprep.subr.mxu0 0.0
    %1838 = vmatpush1.msra.mxu0 0.0
    %1839 = vmatprep.subr.mxu0 0.0
    %1840 = vmatpush1.msra.mxu0 0.0
    %1841 = vmatprep.subr.mxu0 0.0
    %1842 = vmatpush1.msra.mxu0 0.0
    %1843 = vmatprep.subr.mxu0 0.0
    %1844 = vmatpush1.msra.mxu0 0.0
    %1845 = vmatprep.subr.mxu0 0.0
    %1846 = vmatpush1.msra.mxu0 0.0
    %1847 = vmatprep.subr.mxu0 0.0
    %1848 = vmatpush1.msra.mxu0 0.0
    %1849 = vmatprep.subr.mxu0 0.0
    %1850 = vmatpush1.msra.mxu0 0.0
    %1851 = vmatprep.subr.mxu0 0.0
    %1852 = vmatpush1.msra.mxu0 0.0
    %1853 = vmatprep.subr.mxu0 0.0
    %1854 = vmatpush1.msra.mxu0 0.0
    %1855 = vmatprep.subr.mxu0 0.0
    %1856 = vmatpush1.msra.mxu0 0.0
    %1857 = vmatprep.subr.mxu0 0.0
    %1858 = vmatpush1.msra.mxu0 0.0
    %1859 = vmatprep.mubr.f32.mxu0 0.0
    %1860 = vmatmul.mubr.f32.gmra.mrb[0].mxu0 %v1793
    %v1861 = vpop.f32.mrb[0].mxu0
    %v1862 = vadd.f32 %v1716, %v1861
    %v1863 = vpop.f32.mrb[0].mxu0
    %1864 = vdwg.mxu0
    %v1865 = vsel %vm1059, %v1683, 0
    %1867 = vmatprep.subr.mxu0 0.0
    %1868 = vmatpush1.msra.mxu0 %v1707
    %1869 = vmatprep.subr.mxu0 0.0
    %1870 = vmatpush1.msra.mxu0 %v1708
    %1871 = vmatprep.subr.mxu0 0.0
    %1872 = vmatpush1.msra.mxu0 0.0
    %1873 = vmatprep.subr.mxu0 0.0
    %1874 = vmatpush1.msra.mxu0 0.0
    %1875 = vmatprep.subr.mxu0 0.0
    %1876 = vmatpush1.msra.mxu0 0.0
    %1877 = vmatprep.subr.mxu0 0.0
    %1878 = vmatpush1.msra.mxu0 0.0
    %1879 = vmatprep.subr.mxu0 0.0
    %1880 = vmatpush1.msra.mxu0 0.0
    %1881 = vmatprep.subr.mxu0 0.0
    %1882 = vmatpush1.msra.mxu0 0.0
    %1883 = vmatprep.subr.mxu0 0.0
    %1884 = vmatpush1.msra.mxu0 0.0
    %1885 = vmatprep.subr.mxu0 0.0
    %1886 = vmatpush1.msra.mxu0 0.0
    %1887 = vmatprep.subr.mxu0 0.0
    %1888 = vmatpush1.msra.mxu0 0.0
    %1889 = vmatprep.subr.mxu0 0.0
    %1890 = vmatpush1.msra.mxu0 0.0
    %1891 = vmatprep.subr.mxu0 0.0
    %1892 = vmatpush1.msra.mxu0 0.0
    %1893 = vmatprep.subr.mxu0 0.0
    %1894 = vmatpush1.msra.mxu0 0.0
    %1895 = vmatprep.subr.mxu0 0.0
    %1896 = vmatpush1.msra.mxu0 0.0
    %1897 = vmatprep.subr.mxu0 0.0
    %1898 = vmatpush1.msra.mxu0 0.0
    %1899 = vmatprep.subr.mxu0 0.0
    %1900 = vmatpush1.msra.mxu0 0.0
    %1901 = vmatprep.subr.mxu0 0.0
    %1902 = vmatpush1.msra.mxu0 0.0
    %1903 = vmatprep.subr.mxu0 0.0
    %1904 = vmatpush1.msra.mxu0 0.0
    %1905 = vmatprep.subr.mxu0 0.0
    %1906 = vmatpush1.msra.mxu0 0.0
    %1907 = vmatprep.subr.mxu0 0.0
    %1908 = vmatpush1.msra.mxu0 0.0
    %1909 = vmatprep.subr.mxu0 0.0
    %1910 = vmatpush1.msra.mxu0 0.0
    %1911 = vmatprep.subr.mxu0 0.0
    %1912 = vmatpush1.msra.mxu0 0.0
    %1913 = vmatprep.subr.mxu0 0.0
    %1914 = vmatpush1.msra.mxu0 0.0
    %1915 = vmatprep.subr.mxu0 0.0
    %1916 = vmatpush1.msra.mxu0 0.0
    %1917 = vmatprep.subr.mxu0 0.0
    %1918 = vmatpush1.msra.mxu0 0.0
    %1919 = vmatprep.subr.mxu0 0.0
    %1920 = vmatpush1.msra.mxu0 0.0
    %1921 = vmatprep.subr.mxu0 0.0
    %1922 = vmatpush1.msra.mxu0 0.0
    %1923 = vmatprep.subr.mxu0 0.0
    %1924 = vmatpush1.msra.mxu0 0.0
    %1925 = vmatprep.subr.mxu0 0.0
    %1926 = vmatpush1.msra.mxu0 0.0
    %1927 = vmatprep.subr.mxu0 0.0
    %1928 = vmatpush1.msra.mxu0 0.0
    %1929 = vmatprep.subr.mxu0 0.0
    %1930 = vmatpush1.msra.mxu0 0.0
    %1931 = vmatprep.mubr.f32.mxu0 0.0
    %1932 = vmatmul.mubr.f32.gmra.mrb[0].mxu0 %v1865
    %v1933 = vpop.f32.mrb[0].mxu0
    %v1934 = vadd.f32 %v1717, %v1933
    %v1935 = vpop.f32.mrb[0].mxu0
    %1936 = vdwg.mxu0
    %v1937 = vsel %vm1059, %v1685, 0
    %1939 = vmatprep.subr.mxu0 0.0
    %1940 = vmatpush1.msra.mxu0 %v1709
    %1941 = vmatprep.subr.mxu0 0.0
    %1942 = vmatpush1.msra.mxu0 %v1710
    %1943 = vmatprep.subr.mxu0 0.0
    %1944 = vmatpush1.msra.mxu0 0.0
    %1945 = vmatprep.subr.mxu0 0.0
    %1946 = vmatpush1.msra.mxu0 0.0
    %1947 = vmatprep.subr.mxu0 0.0
    %1948 = vmatpush1.msra.mxu0 0.0
    %1949 = vmatprep.subr.mxu0 0.0
    %1950 = vmatpush1.msra.mxu0 0.0
    %1951 = vmatprep.subr.mxu0 0.0
    %1952 = vmatpush1.msra.mxu0 0.0
    %1953 = vmatprep.subr.mxu0 0.0
    %1954 = vmatpush1.msra.mxu0 0.0
    %1955 = vmatprep.subr.mxu0 0.0
    %1956 = vmatpush1.msra.mxu0 0.0
    %1957 = vmatprep.subr.mxu0 0.0
    %1958 = vmatpush1.msra.mxu0 0.0
    %1959 = vmatprep.subr.mxu0 0.0
    %1960 = vmatpush1.msra.mxu0 0.0
    %1961 = vmatprep.subr.mxu0 0.0
    %1962 = vmatpush1.msra.mxu0 0.0
    %1963 = vmatprep.subr.mxu0 0.0
    %1964 = vmatpush1.msra.mxu0 0.0
    %1965 = vmatprep.subr.mxu0 0.0
    %1966 = vmatpush1.msra.mxu0 0.0
    %1967 = vmatprep.subr.mxu0 0.0
    %1968 = vmatpush1.msra.mxu0 0.0
    %1969 = vmatprep.subr.mxu0 0.0
    %1970 = vmatpush1.msra.mxu0 0.0
    %1971 = vmatprep.subr.mxu0 0.0
    %1972 = vmatpush1.msra.mxu0 0.0
    %1973 = vmatprep.subr.mxu0 0.0
    %1974 = vmatpush1.msra.mxu0 0.0
    %1975 = vmatprep.subr.mxu0 0.0
    %1976 = vmatpush1.msra.mxu0 0.0
    %1977 = vmatprep.subr.mxu0 0.0
    %1978 = vmatpush1.msra.mxu0 0.0
    %1979 = vmatprep.subr.mxu0 0.0
    %1980 = vmatpush1.msra.mxu0 0.0
    %1981 = vmatprep.subr.mxu0 0.0
    %1982 = vmatpush1.msra.mxu0 0.0
    %1983 = vmatprep.subr.mxu0 0.0
    %1984 = vmatpush1.msra.mxu0 0.0
    %1985 = vmatprep.subr.mxu0 0.0
    %1986 = vmatpush1.msra.mxu0 0.0
    %1987 = vmatprep.subr.mxu0 0.0
    %1988 = vmatpush1.msra.mxu0 0.0
    %1989 = vmatprep.subr.mxu0 0.0
    %1990 = vmatpush1.msra.mxu0 0.0
    %1991 = vmatprep.subr.mxu0 0.0
    %1992 = vmatpush1.msra.mxu0 0.0
    %1993 = vmatprep.subr.mxu0 0.0
    %1994 = vmatpush1.msra.mxu0 0.0
    %1995 = vmatprep.subr.mxu0 0.0
    %1996 = vmatpush1.msra.mxu0 0.0
    %1997 = vmatprep.subr.mxu0 0.0
    %1998 = vmatpush1.msra.mxu0 0.0
    %1999 = vmatprep.subr.mxu0 0.0
    %2000 = vmatpush1.msra.mxu0 0.0
    %2001 = vmatprep.subr.mxu0 0.0
    %2002 = vmatpush1.msra.mxu0 0.0
    %2003 = vmatprep.mubr.f32.mxu0 0.0
    %2004 = vmatmul.mubr.f32.gmra.mrb[0].mxu0 %v1937
    %v2005 = vpop.f32.mrb[0].mxu0
    %v2006 = vadd.f32 %v1718, %v2005
    %v2007 = vpop.f32.mrb[0].mxu0
    %2008 = vdwg.mxu0
    %v2009 = vsel %vm1059, %v1687, 0
    %2011 = vmatprep.subr.mxu0 0.0
    %2012 = vmatpush1.msra.mxu0 %v1711
    %2013 = vmatprep.subr.mxu0 0.0
    %2014 = vmatpush1.msra.mxu0 %v1712
    %2015 = vmatprep.subr.mxu0 0.0
    %2016 = vmatpush1.msra.mxu0 0.0
    %2017 = vmatprep.subr.mxu0 0.0
    %2018 = vmatpush1.msra.mxu0 0.0
    %2019 = vmatprep.subr.mxu0 0.0
    %2020 = vmatpush1.msra.mxu0 0.0
    %2021 = vmatprep.subr.mxu0 0.0
    %2022 = vmatpush1.msra.mxu0 0.0
    %2023 = vmatprep.subr.mxu0 0.0
    %2024 = vmatpush1.msra.mxu0 0.0
    %2025 = vmatprep.subr.mxu0 0.0
    %2026 = vmatpush1.msra.mxu0 0.0
    %2027 = vmatprep.subr.mxu0 0.0
    %2028 = vmatpush1.msra.mxu0 0.0
    %2029 = vmatprep.subr.mxu0 0.0
    %2030 = vmatpush1.msra.mxu0 0.0
    %2031 = vmatprep.subr.mxu0 0.0
    %2032 = vmatpush1.msra.mxu0 0.0
    %2033 = vmatprep.subr.mxu0 0.0
    %2034 = vmatpush1.msra.mxu0 0.0
    %2035 = vmatprep.subr.mxu0 0.0
    %2036 = vmatpush1.msra.mxu0 0.0
    %2037 = vmatprep.subr.mxu0 0.0
    %2038 = vmatpush1.msra.mxu0 0.0
    %2039 = vmatprep.subr.mxu0 0.0
    %2040 = vmatpush1.msra.mxu0 0.0
    %2041 = vmatprep.subr.mxu0 0.0
    %2042 = vmatpush1.msra.mxu0 0.0
    %2043 = vmatprep.subr.mxu0 0.0
    %2044 = vmatpush1.msra.mxu0 0.0
    %2045 = vmatprep.subr.mxu0 0.0
    %2046 = vmatpush1.msra.mxu0 0.0
    %2047 = vmatprep.subr.mxu0 0.0
    %2048 = vmatpush1.msra.mxu0 0.0
    %2049 = vmatprep.subr.mxu0 0.0
    %2050 = vmatpush1.msra.mxu0 0.0
    %2051 = vmatprep.subr.mxu0 0.0
    %2052 = vmatpush1.msra.mxu0 0.0
    %2053 = vmatprep.subr.mxu0 0.0
    %2054 = vmatpush1.msra.mxu0 0.0
    %2055 = vmatprep.subr.mxu0 0.0
    %2056 = vmatpush1.msra.mxu0 0.0
    %2057 = vmatprep.subr.mxu0 0.0
    %2058 = vmatpush1.msra.mxu0 0.0
    %2059 = vmatprep.subr.mxu0 0.0
    %2060 = vmatpush1.msra.mxu0 0.0
    %2061 = vmatprep.subr.mxu0 0.0
    %2062 = vmatpush1.msra.mxu0 0.0
    %2063 = vmatprep.subr.mxu0 0.0
    %2064 = vmatpush1.msra.mxu0 0.0
    %2065 = vmatprep.subr.mxu0 0.0
    %2066 = vmatpush1.msra.mxu0 0.0
    %2067 = vmatprep.subr.mxu0 0.0
    %2068 = vmatpush1.msra.mxu0 0.0
    %2069 = vmatprep.subr.mxu0 0.0
    %2070 = vmatpush1.msra.mxu0 0.0
    %2071 = vmatprep.subr.mxu0 0.0
    %2072 = vmatpush1.msra.mxu0 0.0
    %2073 = vmatprep.subr.mxu0 0.0
    %2074 = vmatpush1.msra.mxu0 0.0
    %2075 = vmatprep.mubr.f32.mxu0 0.0
    %2076 = vmatmul.mubr.f32.gmra.mrb[0].mxu0 %v2009
    %v2077 = vpop.f32.mrb[0].mxu0
    %v2078 = vadd.f32 %v1719, %v2077
    %v2079 = vpop.f32.mrb[0].mxu0
    %2080 = vdwg.mxu0
    %v2081 = vsel %vm1059, %v1689, 0
    %2083 = vmatprep.subr.mxu0 0.0
    %2084 = vmatpush1.msra.mxu0 %v1713
    %2085 = vmatprep.subr.mxu0 0.0
    %2086 = vmatpush1.msra.mxu0 %v1714
    %2087 = vmatprep.subr.mxu0 0.0
    %2088 = vmatpush1.msra.mxu0 0.0
    %2089 = vmatprep.subr.mxu0 0.0
    %2090 = vmatpush1.msra.mxu0 0.0
    %2091 = vmatprep.subr.mxu0 0.0
    %2092 = vmatpush1.msra.mxu0 0.0
    %2093 = vmatprep.subr.mxu0 0.0
    %2094 = vmatpush1.msra.mxu0 0.0
    %2095 = vmatprep.subr.mxu0 0.0
    %2096 = vmatpush1.msra.mxu0 0.0
    %2097 = vmatprep.subr.mxu0 0.0
    %2098 = vmatpush1.msra.mxu0 0.0
    %2099 = vmatprep.subr.mxu0 0.0
    %2100 = vmatpush1.msra.mxu0 0.0
    %2101 = vmatprep.subr.mxu0 0.0
    %2102 = vmatpush1.msra.mxu0 0.0
    %2103 = vmatprep.subr.mxu0 0.0
    %2104 = vmatpush1.msra.mxu0 0.0
    %2105 = vmatprep.subr.mxu0 0.0
    %2106 = vmatpush1.msra.mxu0 0.0
    %2107 = vmatprep.subr.mxu0 0.0
    %2108 = vmatpush1.msra.mxu0 0.0
    %2109 = vmatprep.subr.mxu0 0.0
    %2110 = vmatpush1.msra.mxu0 0.0
    %2111 = vmatprep.subr.mxu0 0.0
    %2112 = vmatpush1.msra.mxu0 0.0
    %2113 = vmatprep.subr.mxu0 0.0
    %2114 = vmatpush1.msra.mxu0 0.0
    %2115 = vmatprep.subr.mxu0 0.0
    %2116 = vmatpush1.msra.mxu0 0.0
    %2117 = vmatprep.subr.mxu0 0.0
    %2118 = vmatpush1.msra.mxu0 0.0
    %2119 = vmatprep.subr.mxu0 0.0
    %2120 = vmatpush1.msra.mxu0 0.0
    %2121 = vmatprep.subr.mxu0 0.0
    %2122 = vmatpush1.msra.mxu0 0.0
    %2123 = vmatprep.subr.mxu0 0.0
    %2124 = vmatpush1.msra.mxu0 0.0
    %2125 = vmatprep.subr.mxu0 0.0
    %2126 = vmatpush1.msra.mxu0 0.0
    %2127 = vmatprep.subr.mxu0 0.0
    %2128 = vmatpush1.msra.mxu0 0.0
    %2129 = vmatprep.subr.mxu0 0.0
    %2130 = vmatpush1.msra.mxu0 0.0
    %2131 = vmatprep.subr.mxu0 0.0
    %2132 = vmatpush1.msra.mxu0 0.0
    %2133 = vmatprep.subr.mxu0 0.0
    %2134 = vmatpush1.msra.mxu0 0.0
    %2135 = vmatprep.subr.mxu0 0.0
    %2136 = vmatpush1.msra.mxu0 0.0
    %2137 = vmatprep.subr.mxu0 0.0
    %2138 = vmatpush1.msra.mxu0 0.0
    %2139 = vmatprep.subr.mxu0 0.0
    %2140 = vmatpush1.msra.mxu0 0.0
    %2141 = vmatprep.subr.mxu0 0.0
    %2142 = vmatpush1.msra.mxu0 0.0
    %2143 = vmatprep.subr.mxu0 0.0
    %2144 = vmatpush1.msra.mxu0 0.0
    %2145 = vmatprep.subr.mxu0 0.0
    %2146 = vmatpush1.msra.mxu0 0.0
    %2147 = vmatprep.mubr.f32.mxu0 0.0
    %2148 = vmatmul.mubr.f32.gmra.mrb[0].mxu0 %v2081
    %v2149 = vpop.f32.mrb[0].mxu0
    %v2150 = vadd.f32 %v1720, %v2149
    %v2151 = vpop.f32.mrb[0].mxu0
    %2152 = vdwg.mxu0
    %vm2153 = vcmp.gt.f32.partialorder %v1790, 0.0
    %vm2154 = vcmp.gt.f32.partialorder %v1862, 0.0
    %vm2155 = vcmp.gt.f32.partialorder %v1934, 0.0
    %vm2156 = vcmp.gt.f32.partialorder %v2006, 0.0
    %vm2157 = vcmp.gt.f32.partialorder %v2078, 0.0
    %vm2158 = vcmp.gt.f32.partialorder %v2150, 0.0
    %v2159 = vmul.f32 %v1790, 1.442695
    %v2160 = vpow.pop %v2159
    %v2161 = vmul.f32 %v1862, 1.442695
    %v2162 = vpow.pop %v2161
    %v2163 = vmul.f32 %v1934, 1.442695
    %v2164 = vpow.pop %v2163
    %v2165 = vmul.f32 %v2006, 1.442695
    %v2166 = vpow.pop %v2165
    %v2167 = vmul.f32 %v2078, 1.442695
    %v2168 = vpow.pop %v2167
    %v2169 = vmul.f32 %v2150, 1.442695
    %v2170 = vpow.pop %v2169
    %v2171 = vsub.f32 %v2160, 1.0
    %v2172 = vsub.f32 %v2162, 1.0
    %v2173 = vsub.f32 %v2164, 1.0
    %v2174 = vsub.f32 %v2166, 1.0
    %v2175 = vsub.f32 %v2168, 1.0
    %v2176 = vsub.f32 %v2170, 1.0
    %v2177 = vsel %vm2153, %v1790, %v2171
    %v2178 = vsel %vm2154, %v1862, %v2172
    %v2179 = vsel %vm2155, %v1934, %v2173
    %v2180 = vsel %vm2156, %v2006, %v2174
    %v2181 = vsel %vm2157, %v2078, %v2175
    %v2182 = vsel %vm2158, %v2150, %v2176
    %v2183 = vld [vmem:[%s10] sm:$0x3f]
    %v2184 = vlaneseq
    %v2185 = vshrl.u32 %v2184, 7
    %v2186 = vsub.s32 0, %v2185
    %v2187 = vrot.slane %v2183, %v2186
    %2189 = vbcast.lane.b32.xlu0 %v2187, 256
    %v2190 = vpop.permute.xlu0 %2189
    %v2191 = vlaneseq
    %v2192 = vshrl.u32 %v2191, 7
    %v2193 = vsub.s32 1, %v2192
    %v2194 = vrot.slane %v2183, %v2193
    %2196 = vbcast.lane.b32.xlu0 %v2194, 256
    %v2197 = vpop.permute.xlu0 %2196
    %v2198 = vlaneseq
    %v2199 = vshrl.u32 %v2198, 7
    %v2200 = vsub.s32 2, %v2199
    %v2201 = vrot.slane %v2183, %v2200
    %2203 = vbcast.lane.b32.xlu0 %v2201, 256
    %v2204 = vpop.permute.xlu0 %2203
    %v2205 = vlaneseq
    %v2206 = vshrl.u32 %v2205, 7
    %v2207 = vsub.s32 3, %v2206
    %v2208 = vrot.slane %v2183, %v2207
    %2210 = vbcast.lane.b32.xlu0 %v2208, 256
    %v2211 = vpop.permute.xlu0 %2210
    %v2212 = vlaneseq
    %v2213 = vshrl.u32 %v2212, 7
    %v2214 = vsub.s32 4, %v2213
    %v2215 = vrot.slane %v2183, %v2214
    %2217 = vbcast.lane.b32.xlu0 %v2215, 256
    %v2218 = vpop.permute.xlu0 %2217
    %v2219 = vlaneseq
    %v2220 = vshrl.u32 %v2219, 7
    %v2221 = vsub.s32 5, %v2220
    %v2222 = vrot.slane %v2183, %v2221
    %2224 = vbcast.lane.b32.xlu0 %v2222, 256
    %v2225 = vpop.permute.xlu0 %2224
    %v2226 = vmul.f32 %v2177, %v2190
    %v2227 = vmul.f32 %v2178, %v2197
    %v2228 = vmul.f32 %v2179, %v2204
    %v2229 = vmul.f32 %v2180, %v2211
    %v2230 = vmul.f32 %v2181, %v2218
    %v2231 = vmul.f32 %v2182, %v2225
    %vm2232 = vcmask 29696
    %v2233 = vsel %vm2232, %v2183, 0.0
    %2234 = vadd.xlane.f32.xlu0 %v2233
    %v2235 = vpop.xlane.xlu0 %2234
    %vm2236 = vcmask 60416
    %v2237 = vsel %vm2236, %v2226, 0.0
    %v2238 = vrot.slane %v2237, 4
    %v2239 = vadd.f32 %v2237, %v2238
    %v2240 = vrot.slane %v2239, 2
    %v2241 = vadd.f32 %v2239, %v2240
    %v2242 = vrot.slane %v2241, 1
    %v2243 = vadd.f32 %v2241, %v2242
    %v2244 = vsel %vm2236, %v2227, 0.0
    %v2245 = vrot.slane %v2244, 4
    %v2246 = vadd.f32 %v2244, %v2245
    %v2247 = vrot.slane %v2246, 2
    %v2248 = vadd.f32 %v2246, %v2247
    %v2249 = vrot.slane %v2248, 1
    %v2250 = vadd.f32 %v2248, %v2249
    %v2251 = vsel %vm2236, %v2228, 0.0
    %v2252 = vrot.slane %v2251, 4
    %v2253 = vadd.f32 %v2251, %v2252
    %v2254 = vrot.slane %v2253, 2
    %v2255 = vadd.f32 %v2253, %v2254
    %v2256 = vrot.slane %v2255, 1
    %v2257 = vadd.f32 %v2255, %v2256
    %v2258 = vsel %vm2236, %v2229, 0.0
    %v2259 = vrot.slane %v2258, 4
    %v2260 = vadd.f32 %v2258, %v2259
    %v2261 = vrot.slane %v2260, 2
    %v2262 = vadd.f32 %v2260, %v2261
    %v2263 = vrot.slane %v2262, 1
    %v2264 = vadd.f32 %v2262, %v2263
    %v2265 = vsel %vm2236, %v2230, 0.0
    %v2266 = vrot.slane %v2265, 4
    %v2267 = vadd.f32 %v2265, %v2266
    %v2268 = vrot.slane %v2267, 2
    %v2269 = vadd.f32 %v2267, %v2268
    %v2270 = vrot.slane %v2269, 1
    %v2271 = vadd.f32 %v2269, %v2270
    %v2272 = vsel %vm2236, %v2231, 0.0
    %v2273 = vrot.slane %v2272, 4
    %v2274 = vadd.f32 %v2272, %v2273
    %v2275 = vrot.slane %v2274, 2
    %v2276 = vadd.f32 %v2274, %v2275
    %v2277 = vrot.slane %v2276, 1
    %v2278 = vadd.f32 %v2276, %v2277
    %v2279 = vadd.f32 %v2235, 1e-08
    %v2281 = vrot.slane %v2279, 1
    %v2282 = vrot.slane %v2279, 2
    %v2283 = vrot.slane %v2279, 3
    %v2284 = vrot.slane %v2279, 4
    %v2285 = vrot.slane %v2279, 5
    %v2292 = vrcp.pop %v2279
    %v2293 = vmul.f32 %v2243, %v2292
    %v2294 = vrcp.pop %v2281
    %v2295 = vmul.f32 %v2250, %v2294
    %v2296 = vrcp.pop %v2282
    %v2297 = vmul.f32 %v2257, %v2296
    %v2298 = vrcp.pop %v2283
    %v2299 = vmul.f32 %v2264, %v2298
    %v2300 = vrcp.pop %v2284
    %v2301 = vmul.f32 %v2271, %v2300
    %v2302 = vrcp.pop %v2285
    %v2303 = vmul.f32 %v2278, %v2302
    %s2304 = scalar_lea.vmem %s10, 8
    %v2305 = vld [vmem:[%s2304] sm:$0x3f]
    %v2306 = vlaneseq
    %v2307 = vshrl.u32 %v2306, 7
    %v2308 = vsub.s32 0, %v2307
    %v2309 = vrot.slane %v2305, %v2308
    %2311 = vbcast.lane.b32.xlu0 %v2309, 256
    %v2312 = vpop.permute.xlu0 %2311
    %v2313 = vlaneseq
    %v2314 = vshrl.u32 %v2313, 7
    %v2315 = vsub.s32 1, %v2314
    %v2316 = vrot.slane %v2305, %v2315
    %2318 = vbcast.lane.b32.xlu0 %v2316, 256
    %v2319 = vpop.permute.xlu0 %2318
    %v2320 = vlaneseq
    %v2321 = vshrl.u32 %v2320, 7
    %v2322 = vsub.s32 2, %v2321
    %v2323 = vrot.slane %v2305, %v2322
    %2325 = vbcast.lane.b32.xlu0 %v2323, 256
    %v2326 = vpop.permute.xlu0 %2325
    %v2327 = vlaneseq
    %v2328 = vshrl.u32 %v2327, 7
    %v2329 = vsub.s32 3, %v2328
    %v2330 = vrot.slane %v2305, %v2329
    %2332 = vbcast.lane.b32.xlu0 %v2330, 256
    %v2333 = vpop.permute.xlu0 %2332
    %v2334 = vlaneseq
    %v2335 = vshrl.u32 %v2334, 7
    %v2336 = vsub.s32 4, %v2335
    %v2337 = vrot.slane %v2305, %v2336
    %2339 = vbcast.lane.b32.xlu0 %v2337, 256
    %v2340 = vpop.permute.xlu0 %2339
    %v2341 = vlaneseq
    %v2342 = vshrl.u32 %v2341, 7
    %v2343 = vsub.s32 5, %v2342
    %v2344 = vrot.slane %v2305, %v2343
    %2346 = vbcast.lane.b32.xlu0 %v2344, 256
    %v2347 = vpop.permute.xlu0 %2346
    %v2348 = vmul.f32 %v2177, %v2312
    %v2349 = vmul.f32 %v2178, %v2319
    %v2350 = vmul.f32 %v2179, %v2326
    %v2351 = vmul.f32 %v2180, %v2333
    %v2352 = vmul.f32 %v2181, %v2340
    %v2353 = vmul.f32 %v2182, %v2347
    %v2354 = vsel %vm2232, %v2305, 0.0
    %2355 = vadd.xlane.f32.xlu0 %v2354
    %v2356 = vpop.xlane.xlu0 %2355
    %v2357 = vsel %vm2236, %v2348, 0.0
    %v2358 = vrot.slane %v2357, 4
    %v2359 = vadd.f32 %v2357, %v2358
    %v2360 = vrot.slane %v2359, 2
    %v2361 = vadd.f32 %v2359, %v2360
    %v2362 = vrot.slane %v2361, 1
    %v2363 = vadd.f32 %v2361, %v2362
    %v2364 = vsel %vm2236, %v2349, 0.0
    %v2365 = vrot.slane %v2364, 4
    %v2366 = vadd.f32 %v2364, %v2365
    %v2367 = vrot.slane %v2366, 2
    %v2368 = vadd.f32 %v2366, %v2367
    %v2369 = vrot.slane %v2368, 1
    %v2370 = vadd.f32 %v2368, %v2369
    %v2371 = vsel %vm2236, %v2350, 0.0
    %v2372 = vrot.slane %v2371, 4
    %v2373 = vadd.f32 %v2371, %v2372
    %v2374 = vrot.slane %v2373, 2
    %v2375 = vadd.f32 %v2373, %v2374
    %v2376 = vrot.slane %v2375, 1
    %v2377 = vadd.f32 %v2375, %v2376
    %v2378 = vsel %vm2236, %v2351, 0.0
    %v2379 = vrot.slane %v2378, 4
    %v2380 = vadd.f32 %v2378, %v2379
    %v2381 = vrot.slane %v2380, 2
    %v2382 = vadd.f32 %v2380, %v2381
    %v2383 = vrot.slane %v2382, 1
    %v2384 = vadd.f32 %v2382, %v2383
    %v2385 = vsel %vm2236, %v2352, 0.0
    %v2386 = vrot.slane %v2385, 4
    %v2387 = vadd.f32 %v2385, %v2386
    %v2388 = vrot.slane %v2387, 2
    %v2389 = vadd.f32 %v2387, %v2388
    %v2390 = vrot.slane %v2389, 1
    %v2391 = vadd.f32 %v2389, %v2390
    %v2392 = vsel %vm2236, %v2353, 0.0
    %v2393 = vrot.slane %v2392, 4
    %v2394 = vadd.f32 %v2392, %v2393
    %v2395 = vrot.slane %v2394, 2
    %v2396 = vadd.f32 %v2394, %v2395
    %v2397 = vrot.slane %v2396, 1
    %v2398 = vadd.f32 %v2396, %v2397
    %v2399 = vadd.f32 %v2356, 1e-08
    %v2401 = vrot.slane %v2399, 1
    %v2402 = vrot.slane %v2399, 2
    %v2403 = vrot.slane %v2399, 3
    %v2404 = vrot.slane %v2399, 4
    %v2405 = vrot.slane %v2399, 5
    %v2412 = vrcp.pop %v2399
    %v2413 = vmul.f32 %v2363, %v2412
    %v2414 = vrcp.pop %v2401
    %v2415 = vmul.f32 %v2370, %v2414
    %v2416 = vrcp.pop %v2402
    %v2417 = vmul.f32 %v2377, %v2416
    %v2418 = vrcp.pop %v2403
    %v2419 = vmul.f32 %v2384, %v2418
    %v2420 = vrcp.pop %v2404
    %v2421 = vmul.f32 %v2391, %v2420
    %v2422 = vrcp.pop %v2405
    %v2423 = vmul.f32 %v2398, %v2422
    %s2424 = scalar_lea.vmem %s10, 16
    %v2425 = vld [vmem:[%s2424] sm:$0x3f]
    %v2426 = vlaneseq
    %v2427 = vshrl.u32 %v2426, 7
    %v2428 = vsub.s32 0, %v2427
    %v2429 = vrot.slane %v2425, %v2428
    %2431 = vbcast.lane.b32.xlu0 %v2429, 256
    %v2432 = vpop.permute.xlu0 %2431
    %v2433 = vlaneseq
    %v2434 = vshrl.u32 %v2433, 7
    %v2435 = vsub.s32 1, %v2434
    %v2436 = vrot.slane %v2425, %v2435
    %2438 = vbcast.lane.b32.xlu0 %v2436, 256
    %v2439 = vpop.permute.xlu0 %2438
    %v2440 = vlaneseq
    %v2441 = vshrl.u32 %v2440, 7
    %v2442 = vsub.s32 2, %v2441
    %v2443 = vrot.slane %v2425, %v2442
    %2445 = vbcast.lane.b32.xlu0 %v2443, 256
    %v2446 = vpop.permute.xlu0 %2445
    %v2447 = vlaneseq
    %v2448 = vshrl.u32 %v2447, 7
    %v2449 = vsub.s32 3, %v2448
    %v2450 = vrot.slane %v2425, %v2449
    %2452 = vbcast.lane.b32.xlu0 %v2450, 256
    %v2453 = vpop.permute.xlu0 %2452
    %v2454 = vlaneseq
    %v2455 = vshrl.u32 %v2454, 7
    %v2456 = vsub.s32 4, %v2455
    %v2457 = vrot.slane %v2425, %v2456
    %2459 = vbcast.lane.b32.xlu0 %v2457, 256
    %v2460 = vpop.permute.xlu0 %2459
    %v2461 = vlaneseq
    %v2462 = vshrl.u32 %v2461, 7
    %v2463 = vsub.s32 5, %v2462
    %v2464 = vrot.slane %v2425, %v2463
    %2466 = vbcast.lane.b32.xlu0 %v2464, 256
    %v2467 = vpop.permute.xlu0 %2466
    %v2468 = vmul.f32 %v2177, %v2432
    %v2469 = vmul.f32 %v2178, %v2439
    %v2470 = vmul.f32 %v2179, %v2446
    %v2471 = vmul.f32 %v2180, %v2453
    %v2472 = vmul.f32 %v2181, %v2460
    %v2473 = vmul.f32 %v2182, %v2467
    %v2474 = vsel %vm2232, %v2425, 0.0
    %2475 = vadd.xlane.f32.xlu0 %v2474
    %v2476 = vpop.xlane.xlu0 %2475
    %v2477 = vsel %vm2236, %v2468, 0.0
    %v2478 = vrot.slane %v2477, 4
    %v2479 = vadd.f32 %v2477, %v2478
    %v2480 = vrot.slane %v2479, 2
    %v2481 = vadd.f32 %v2479, %v2480
    %v2482 = vrot.slane %v2481, 1
    %v2483 = vadd.f32 %v2481, %v2482
    %v2484 = vsel %vm2236, %v2469, 0.0
    %v2485 = vrot.slane %v2484, 4
    %v2486 = vadd.f32 %v2484, %v2485
    %v2487 = vrot.slane %v2486, 2
    %v2488 = vadd.f32 %v2486, %v2487
    %v2489 = vrot.slane %v2488, 1
    %v2490 = vadd.f32 %v2488, %v2489
    %v2491 = vsel %vm2236, %v2470, 0.0
    %v2492 = vrot.slane %v2491, 4
    %v2493 = vadd.f32 %v2491, %v2492
    %v2494 = vrot.slane %v2493, 2
    %v2495 = vadd.f32 %v2493, %v2494
    %v2496 = vrot.slane %v2495, 1
    %v2497 = vadd.f32 %v2495, %v2496
    %v2498 = vsel %vm2236, %v2471, 0.0
    %v2499 = vrot.slane %v2498, 4
    %v2500 = vadd.f32 %v2498, %v2499
    %v2501 = vrot.slane %v2500, 2
    %v2502 = vadd.f32 %v2500, %v2501
    %v2503 = vrot.slane %v2502, 1
    %v2504 = vadd.f32 %v2502, %v2503
    %v2505 = vsel %vm2236, %v2472, 0.0
    %v2506 = vrot.slane %v2505, 4
    %v2507 = vadd.f32 %v2505, %v2506
    %v2508 = vrot.slane %v2507, 2
    %v2509 = vadd.f32 %v2507, %v2508
    %v2510 = vrot.slane %v2509, 1
    %v2511 = vadd.f32 %v2509, %v2510
    %v2512 = vsel %vm2236, %v2473, 0.0
    %v2513 = vrot.slane %v2512, 4
    %v2514 = vadd.f32 %v2512, %v2513
    %v2515 = vrot.slane %v2514, 2
    %v2516 = vadd.f32 %v2514, %v2515
    %v2517 = vrot.slane %v2516, 1
    %v2518 = vadd.f32 %v2516, %v2517
    %v2519 = vadd.f32 %v2476, 1e-08
    %v2521 = vrot.slane %v2519, 1
    %v2522 = vrot.slane %v2519, 2
    %v2523 = vrot.slane %v2519, 3
    %v2524 = vrot.slane %v2519, 4
    %v2525 = vrot.slane %v2519, 5
    %v2532 = vrcp.pop %v2519
    %v2533 = vmul.f32 %v2483, %v2532
    %v2534 = vrcp.pop %v2521
    %v2535 = vmul.f32 %v2490, %v2534
    %v2536 = vrcp.pop %v2522
    %v2537 = vmul.f32 %v2497, %v2536
    %v2538 = vrcp.pop %v2523
    %v2539 = vmul.f32 %v2504, %v2538
    %v2540 = vrcp.pop %v2524
    %v2541 = vmul.f32 %v2511, %v2540
    %v2542 = vrcp.pop %v2525
    %v2543 = vmul.f32 %v2518, %v2542
    %v2544 = vmul.f32 %v2226, %v2226
    %v2545 = vmul.f32 %v2227, %v2227
    %v2546 = vmul.f32 %v2228, %v2228
    %v2547 = vmul.f32 %v2229, %v2229
    %v2548 = vmul.f32 %v2230, %v2230
    %v2549 = vmul.f32 %v2231, %v2231
    %v2550 = vmul.f32 %v2348, %v2348
    %v2551 = vmul.f32 %v2349, %v2349
    %v2552 = vmul.f32 %v2350, %v2350
    %v2553 = vmul.f32 %v2351, %v2351
    %v2554 = vmul.f32 %v2352, %v2352
    %v2555 = vmul.f32 %v2353, %v2353
    %v2556 = vmul.f32 %v2468, %v2468
    %v2557 = vmul.f32 %v2469, %v2469
    %v2558 = vmul.f32 %v2470, %v2470
    %v2559 = vmul.f32 %v2471, %v2471
    %v2560 = vmul.f32 %v2472, %v2472
    %v2561 = vmul.f32 %v2473, %v2473
    %v2562 = vsel %vm2236, %v2544, 0.0
    %2563 = vadd.xlane.f32.xlu0 %v2562
    %v2564 = vpop.xlane.xlu0 %2563
    %v2565 = vsel %vm2236, %v2545, 0.0
    %2566 = vadd.xlane.f32.xlu0 %v2565
    %v2567 = vpop.xlane.xlu0 %2566
    %v2568 = vsel %vm2236, %v2546, 0.0
    %2569 = vadd.xlane.f32.xlu0 %v2568
    %v2570 = vpop.xlane.xlu0 %2569
    %v2571 = vsel %vm2236, %v2547, 0.0
    %2572 = vadd.xlane.f32.xlu0 %v2571
    %v2573 = vpop.xlane.xlu0 %2572
    %v2574 = vsel %vm2236, %v2548, 0.0
    %2575 = vadd.xlane.f32.xlu0 %v2574
    %v2576 = vpop.xlane.xlu0 %2575
    %v2577 = vsel %vm2236, %v2549, 0.0
    %2578 = vadd.xlane.f32.xlu0 %v2577
    %v2579 = vpop.xlane.xlu0 %2578
    %v2580 = vsel %vm2236, %v2550, 0.0
    %2581 = vadd.xlane.f32.xlu0 %v2580
    %v2582 = vpop.xlane.xlu0 %2581
    %v2583 = vsel %vm2236, %v2551, 0.0
    %2584 = vadd.xlane.f32.xlu0 %v2583
    %v2585 = vpop.xlane.xlu0 %2584
    %v2586 = vsel %vm2236, %v2552, 0.0
    %2587 = vadd.xlane.f32.xlu0 %v2586
    %v2588 = vpop.xlane.xlu0 %2587
    %v2589 = vsel %vm2236, %v2553, 0.0
    %2590 = vadd.xlane.f32.xlu0 %v2589
    %v2591 = vpop.xlane.xlu0 %2590
    %v2592 = vsel %vm2236, %v2554, 0.0
    %2593 = vadd.xlane.f32.xlu0 %v2592
    %v2594 = vpop.xlane.xlu0 %2593
    %v2595 = vsel %vm2236, %v2555, 0.0
    %2596 = vadd.xlane.f32.xlu0 %v2595
    %v2597 = vpop.xlane.xlu0 %2596
    %v2598 = vsel %vm2236, %v2556, 0.0
    %2599 = vadd.xlane.f32.xlu0 %v2598
    %v2600 = vpop.xlane.xlu0 %2599
    %v2601 = vsel %vm2236, %v2557, 0.0
    %2602 = vadd.xlane.f32.xlu0 %v2601
    %v2603 = vpop.xlane.xlu0 %2602
    %v2604 = vsel %vm2236, %v2558, 0.0
    %2605 = vadd.xlane.f32.xlu0 %v2604
    %v2606 = vpop.xlane.xlu0 %2605
    %v2607 = vsel %vm2236, %v2559, 0.0
    %2608 = vadd.xlane.f32.xlu0 %v2607
    %v2609 = vpop.xlane.xlu0 %2608
    %v2610 = vsel %vm2236, %v2560, 0.0
    %2611 = vadd.xlane.f32.xlu0 %v2610
    %v2612 = vpop.xlane.xlu0 %2611
    %v2613 = vsel %vm2236, %v2561, 0.0
    %2614 = vadd.xlane.f32.xlu0 %v2613
    %v2615 = vpop.xlane.xlu0 %2614
    %v2616 = vrsqrt.pop %v2564
    %v2617 = vmul.f32 %v2564, %v2616
    %vm2618 = vcmp.eq.f32.partialorder %v2564, inf
    %v2619 = vsel %vm2618, %v2564, %v2617
    %vm2620 = vcmp.eq.f32.partialorder %v2564, 0.0
    %v2621 = vand.u32 %v2564, 2147483648
    %v2622 = vsel %vm2620, %v2621, %v2619
    %v2623 = vrsqrt.pop %v2567
    %v2624 = vmul.f32 %v2567, %v2623
    %vm2625 = vcmp.eq.f32.partialorder %v2567, inf
    %v2626 = vsel %vm2625, %v2567, %v2624
    %vm2627 = vcmp.eq.f32.partialorder %v2567, 0.0
    %v2628 = vand.u32 %v2567, 2147483648
    %v2629 = vsel %vm2627, %v2628, %v2626
    %v2630 = vrsqrt.pop %v2570
    %v2631 = vmul.f32 %v2570, %v2630
    %vm2632 = vcmp.eq.f32.partialorder %v2570, inf
    %v2633 = vsel %vm2632, %v2570, %v2631
    %vm2634 = vcmp.eq.f32.partialorder %v2570, 0.0
    %v2635 = vand.u32 %v2570, 2147483648
    %v2636 = vsel %vm2634, %v2635, %v2633
    %v2637 = vrsqrt.pop %v2573
    %v2638 = vmul.f32 %v2573, %v2637
    %vm2639 = vcmp.eq.f32.partialorder %v2573, inf
    %v2640 = vsel %vm2639, %v2573, %v2638
    %vm2641 = vcmp.eq.f32.partialorder %v2573, 0.0
    %v2642 = vand.u32 %v2573, 2147483648
    %v2643 = vsel %vm2641, %v2642, %v2640
    %v2644 = vrsqrt.pop %v2576
    %v2645 = vmul.f32 %v2576, %v2644
    %vm2646 = vcmp.eq.f32.partialorder %v2576, inf
    %v2647 = vsel %vm2646, %v2576, %v2645
    %vm2648 = vcmp.eq.f32.partialorder %v2576, 0.0
    %v2649 = vand.u32 %v2576, 2147483648
    %v2650 = vsel %vm2648, %v2649, %v2647
    %v2651 = vrsqrt.pop %v2579
    %v2652 = vmul.f32 %v2579, %v2651
    %vm2653 = vcmp.eq.f32.partialorder %v2579, inf
    %v2654 = vsel %vm2653, %v2579, %v2652
    %vm2655 = vcmp.eq.f32.partialorder %v2579, 0.0
    %v2656 = vand.u32 %v2579, 2147483648
    %v2657 = vsel %vm2655, %v2656, %v2654
    %v2658 = vrsqrt.pop %v2582
    %v2659 = vmul.f32 %v2582, %v2658
    %vm2660 = vcmp.eq.f32.partialorder %v2582, inf
    %v2661 = vsel %vm2660, %v2582, %v2659
    %vm2662 = vcmp.eq.f32.partialorder %v2582, 0.0
    %v2663 = vand.u32 %v2582, 2147483648
    %v2664 = vsel %vm2662, %v2663, %v2661
    %v2665 = vrsqrt.pop %v2585
    %v2666 = vmul.f32 %v2585, %v2665
    %vm2667 = vcmp.eq.f32.partialorder %v2585, inf
    %v2668 = vsel %vm2667, %v2585, %v2666
    %vm2669 = vcmp.eq.f32.partialorder %v2585, 0.0
    %v2670 = vand.u32 %v2585, 2147483648
    %v2671 = vsel %vm2669, %v2670, %v2668
    %v2672 = vrsqrt.pop %v2588
    %v2673 = vmul.f32 %v2588, %v2672
    %vm2674 = vcmp.eq.f32.partialorder %v2588, inf
    %v2675 = vsel %vm2674, %v2588, %v2673
    %vm2676 = vcmp.eq.f32.partialorder %v2588, 0.0
    %v2677 = vand.u32 %v2588, 2147483648
    %v2678 = vsel %vm2676, %v2677, %v2675
    %v2679 = vrsqrt.pop %v2591
    %v2680 = vmul.f32 %v2591, %v2679
    %vm2681 = vcmp.eq.f32.partialorder %v2591, inf
    %v2682 = vsel %vm2681, %v2591, %v2680
    %vm2683 = vcmp.eq.f32.partialorder %v2591, 0.0
    %v2684 = vand.u32 %v2591, 2147483648
    %v2685 = vsel %vm2683, %v2684, %v2682
    %v2686 = vrsqrt.pop %v2594
    %v2687 = vmul.f32 %v2594, %v2686
    %vm2688 = vcmp.eq.f32.partialorder %v2594, inf
    %v2689 = vsel %vm2688, %v2594, %v2687
    %vm2690 = vcmp.eq.f32.partialorder %v2594, 0.0
    %v2691 = vand.u32 %v2594, 2147483648
    %v2692 = vsel %vm2690, %v2691, %v2689
    %v2693 = vrsqrt.pop %v2597
    %v2694 = vmul.f32 %v2597, %v2693
    %vm2695 = vcmp.eq.f32.partialorder %v2597, inf
    %v2696 = vsel %vm2695, %v2597, %v2694
    %vm2697 = vcmp.eq.f32.partialorder %v2597, 0.0
    %v2698 = vand.u32 %v2597, 2147483648
    %v2699 = vsel %vm2697, %v2698, %v2696
    %v2700 = vrsqrt.pop %v2600
    %v2701 = vmul.f32 %v2600, %v2700
    %vm2702 = vcmp.eq.f32.partialorder %v2600, inf
    %v2703 = vsel %vm2702, %v2600, %v2701
    %vm2704 = vcmp.eq.f32.partialorder %v2600, 0.0
    %v2705 = vand.u32 %v2600, 2147483648
    %v2706 = vsel %vm2704, %v2705, %v2703
    %v2707 = vrsqrt.pop %v2603
    %v2708 = vmul.f32 %v2603, %v2707
    %vm2709 = vcmp.eq.f32.partialorder %v2603, inf
    %v2710 = vsel %vm2709, %v2603, %v2708
    %vm2711 = vcmp.eq.f32.partialorder %v2603, 0.0
    %v2712 = vand.u32 %v2603, 2147483648
    %v2713 = vsel %vm2711, %v2712, %v2710
    %v2714 = vrsqrt.pop %v2606
    %v2715 = vmul.f32 %v2606, %v2714
    %vm2716 = vcmp.eq.f32.partialorder %v2606, inf
    %v2717 = vsel %vm2716, %v2606, %v2715
    %vm2718 = vcmp.eq.f32.partialorder %v2606, 0.0
    %v2719 = vand.u32 %v2606, 2147483648
    %v2720 = vsel %vm2718, %v2719, %v2717
    %v2721 = vrsqrt.pop %v2609
    %v2722 = vmul.f32 %v2609, %v2721
    %vm2723 = vcmp.eq.f32.partialorder %v2609, inf
    %v2724 = vsel %vm2723, %v2609, %v2722
    %vm2725 = vcmp.eq.f32.partialorder %v2609, 0.0
    %v2726 = vand.u32 %v2609, 2147483648
    %v2727 = vsel %vm2725, %v2726, %v2724
    %v2728 = vrsqrt.pop %v2612
    %v2729 = vmul.f32 %v2612, %v2728
    %vm2730 = vcmp.eq.f32.partialorder %v2612, inf
    %v2731 = vsel %vm2730, %v2612, %v2729
    %vm2732 = vcmp.eq.f32.partialorder %v2612, 0.0
    %v2733 = vand.u32 %v2612, 2147483648
    %v2734 = vsel %vm2732, %v2733, %v2731
    %v2735 = vrsqrt.pop %v2615
    %v2736 = vmul.f32 %v2615, %v2735
    %vm2737 = vcmp.eq.f32.partialorder %v2615, inf
    %v2738 = vsel %vm2737, %v2615, %v2736
    %vm2739 = vcmp.eq.f32.partialorder %v2615, 0.0
    %v2740 = vand.u32 %v2615, 2147483648
    %v2741 = vsel %vm2739, %v2740, %v2738
    %v2742 = vmax.f32 %v2622, 1e-08
    %v2743 = vmax.f32 %v2629, 1e-08
    %v2744 = vmax.f32 %v2636, 1e-08
    %v2745 = vmax.f32 %v2643, 1e-08
    %v2746 = vmax.f32 %v2650, 1e-08
    %v2747 = vmax.f32 %v2657, 1e-08
    %v2748 = vmax.f32 %v2664, 1e-08
    %v2749 = vmax.f32 %v2671, 1e-08
    %v2750 = vmax.f32 %v2678, 1e-08
    %v2751 = vmax.f32 %v2685, 1e-08
    %v2752 = vmax.f32 %v2692, 1e-08
    %v2753 = vmax.f32 %v2699, 1e-08
    %v2754 = vmax.f32 %v2706, 1e-08
    %v2755 = vmax.f32 %v2713, 1e-08
    %v2756 = vmax.f32 %v2720, 1e-08
    %v2757 = vmax.f32 %v2727, 1e-08
    %v2758 = vmax.f32 %v2734, 1e-08
    %v2759 = vmax.f32 %v2741, 1e-08
    %v2760 = vrcp.pop %v2742
    %v2761 = vmul.f32 %v2226, %v2760
    %v2762 = vrcp.pop %v2743
    %v2763 = vmul.f32 %v2227, %v2762
    %v2764 = vrcp.pop %v2744
    %v2765 = vmul.f32 %v2228, %v2764
    %v2766 = vrcp.pop %v2745
    %v2767 = vmul.f32 %v2229, %v2766
    %v2768 = vrcp.pop %v2746
    %v2769 = vmul.f32 %v2230, %v2768
    %v2770 = vrcp.pop %v2747
    %v2771 = vmul.f32 %v2231, %v2770
    %v2772 = vrcp.pop %v2748
    %v2773 = vmul.f32 %v2348, %v2772
    %v2774 = vrcp.pop %v2749
    %v2775 = vmul.f32 %v2349, %v2774
    %v2776 = vrcp.pop %v2750
    %v2777 = vmul.f32 %v2350, %v2776
    %v2778 = vrcp.pop %v2751
    %v2779 = vmul.f32 %v2351, %v2778
    %v2780 = vrcp.pop %v2752
    %v2781 = vmul.f32 %v2352, %v2780
    %v2782 = vrcp.pop %v2753
    %v2783 = vmul.f32 %v2353, %v2782
    %v2784 = vrcp.pop %v2754
    %v2785 = vmul.f32 %v2468, %v2784
    %v2786 = vrcp.pop %v2755
    %v2787 = vmul.f32 %v2469, %v2786
    %v2788 = vrcp.pop %v2756
    %v2789 = vmul.f32 %v2470, %v2788
    %v2790 = vrcp.pop %v2757
    %v2791 = vmul.f32 %v2471, %v2790
    %v2792 = vrcp.pop %v2758
    %v2793 = vmul.f32 %v2472, %v2792
    %v2794 = vrcp.pop %v2759
    %v2795 = vmul.f32 %v2473, %v2794
    %v2797 = vsel %vm601, %v2761, 0
    %2799 = vmatprep.subr.mxu0 0.0
    %2800 = vmatpush1.xpose.msra.mxu0 %v2797
    %2801 = vmatprep.subr.mxu0 0.0
    %2802 = vmatpush1.xpose.msra.mxu0 0.0
    %2803 = vmatprep.subr.mxu0 0.0
    %2804 = vmatpush1.xpose.msra.mxu0 0.0
    %2805 = vmatprep.subr.mxu0 0.0
    %2806 = vmatpush1.xpose.msra.mxu0 0.0
    %2807 = vmatprep.subr.mxu0 0.0
    %2808 = vmatpush1.xpose.msra.mxu0 0.0
    %2809 = vmatprep.subr.mxu0 0.0
    %2810 = vmatpush1.xpose.msra.mxu0 0.0
    %2811 = vmatprep.subr.mxu0 0.0
    %2812 = vmatpush1.xpose.msra.mxu0 0.0
    %2813 = vmatprep.subr.mxu0 0.0
    %2814 = vmatpush1.xpose.msra.mxu0 0.0
    %2815 = vmatprep.subr.mxu0 0.0
    %2816 = vmatpush1.xpose.msra.mxu0 0.0
    %2817 = vmatprep.subr.mxu0 0.0
    %2818 = vmatpush1.xpose.msra.mxu0 0.0
    %2819 = vmatprep.subr.mxu0 0.0
    %2820 = vmatpush1.xpose.msra.mxu0 0.0
    %2821 = vmatprep.subr.mxu0 0.0
    %2822 = vmatpush1.xpose.msra.mxu0 0.0
    %2823 = vmatprep.subr.mxu0 0.0
    %2824 = vmatpush1.xpose.msra.mxu0 0.0
    %2825 = vmatprep.subr.mxu0 0.0
    %2826 = vmatpush1.xpose.msra.mxu0 0.0
    %2827 = vmatprep.subr.mxu0 0.0
    %2828 = vmatpush1.xpose.msra.mxu0 0.0
    %2829 = vmatprep.subr.mxu0 0.0
    %2830 = vmatpush1.xpose.msra.mxu0 0.0
    %2831 = vmatprep.subr.mxu0 0.0
    %2832 = vmatpush1.xpose.msra.mxu0 0.0
    %2833 = vmatprep.subr.mxu0 0.0
    %2834 = vmatpush1.xpose.msra.mxu0 0.0
    %2835 = vmatprep.subr.mxu0 0.0
    %2836 = vmatpush1.xpose.msra.mxu0 0.0
    %2837 = vmatprep.subr.mxu0 0.0
    %2838 = vmatpush1.xpose.msra.mxu0 0.0
    %2839 = vmatprep.subr.mxu0 0.0
    %2840 = vmatpush1.xpose.msra.mxu0 0.0
    %2841 = vmatprep.subr.mxu0 0.0
    %2842 = vmatpush1.xpose.msra.mxu0 0.0
    %2843 = vmatprep.subr.mxu0 0.0
    %2844 = vmatpush1.xpose.msra.mxu0 0.0
    %2845 = vmatprep.subr.mxu0 0.0
    %2846 = vmatpush1.xpose.msra.mxu0 0.0
    %2847 = vmatprep.subr.mxu0 0.0
    %2848 = vmatpush1.xpose.msra.mxu0 0.0
    %2849 = vmatprep.subr.mxu0 0.0
    %2850 = vmatpush1.xpose.msra.mxu0 0.0
    %2851 = vmatprep.subr.mxu0 0.0
    %2852 = vmatpush1.xpose.msra.mxu0 0.0
    %2853 = vmatprep.subr.mxu0 0.0
    %2854 = vmatpush1.xpose.msra.mxu0 0.0
    %2855 = vmatprep.subr.mxu0 0.0
    %2856 = vmatpush1.xpose.msra.mxu0 0.0
    %2857 = vmatprep.subr.mxu0 0.0
    %2858 = vmatpush1.xpose.msra.mxu0 0.0
    %2859 = vmatprep.subr.mxu0 0.0
    %2860 = vmatpush1.xpose.msra.mxu0 0.0
    %2861 = vmatprep.subr.mxu0 0.0
    %2862 = vmatpush1.xpose.msra.mxu0 0.0
    %2863 = vmatprep.mubr.f32.mxu0 0.0
    %2864 = vmatmul.mubr.f32.gmra.mrb[0].mxu0 %v2797
    %v2865 = vpop.f32.mrb[0].mxu0
    %v2866 = vadd.f32 0.0, %v2865
    %v2867 = vpop.f32.mrb[0].mxu0
    %2868 = vdwg.mxu0
    %v2870 = vsel %vm601, %v2763, 0
    %2872 = vmatprep.subr.mxu0 0.0
    %2873 = vmatpush1.xpose.msra.mxu0 %v2870
    %2874 = vmatprep.subr.mxu0 0.0
    %2875 = vmatpush1.xpose.msra.mxu0 0.0
    %2876 = vmatprep.subr.mxu0 0.0
    %2877 = vmatpush1.xpose.msra.mxu0 0.0
    %2878 = vmatprep.subr.mxu0 0.0
    %2879 = vmatpush1.xpose.msra.mxu0 0.0
    %2880 = vmatprep.subr.mxu0 0.0
    %2881 = vmatpush1.xpose.msra.mxu0 0.0
    %2882 = vmatprep.subr.mxu0 0.0
    %2883 = vmatpush1.xpose.msra.mxu0 0.0
    %2884 = vmatprep.subr.mxu0 0.0
    %2885 = vmatpush1.xpose.msra.mxu0 0.0
    %2886 = vmatprep.subr.mxu0 0.0
    %2887 = vmatpush1.xpose.msra.mxu0 0.0
    %2888 = vmatprep.subr.mxu0 0.0
    %2889 = vmatpush1.xpose.msra.mxu0 0.0
    %2890 = vmatprep.subr.mxu0 0.0
    %2891 = vmatpush1.xpose.msra.mxu0 0.0
    %2892 = vmatprep.subr.mxu0 0.0
    %2893 = vmatpush1.xpose.msra.mxu0 0.0
    %2894 = vmatprep.subr.mxu0 0.0
    %2895 = vmatpush1.xpose.msra.mxu0 0.0
    %2896 = vmatprep.subr.mxu0 0.0
    %2897 = vmatpush1.xpose.msra.mxu0 0.0
    %2898 = vmatprep.subr.mxu0 0.0
    %2899 = vmatpush1.xpose.msra.mxu0 0.0
    %2900 = vmatprep.subr.mxu0 0.0
    %2901 = vmatpush1.xpose.msra.mxu0 0.0
    %2902 = vmatprep.subr.mxu0 0.0
    %2903 = vmatpush1.xpose.msra.mxu0 0.0
    %2904 = vmatprep.subr.mxu0 0.0
    %2905 = vmatpush1.xpose.msra.mxu0 0.0
    %2906 = vmatprep.subr.mxu0 0.0
    %2907 = vmatpush1.xpose.msra.mxu0 0.0
    %2908 = vmatprep.subr.mxu0 0.0
    %2909 = vmatpush1.xpose.msra.mxu0 0.0
    %2910 = vmatprep.subr.mxu0 0.0
    %2911 = vmatpush1.xpose.msra.mxu0 0.0
    %2912 = vmatprep.subr.mxu0 0.0
    %2913 = vmatpush1.xpose.msra.mxu0 0.0
    %2914 = vmatprep.subr.mxu0 0.0
    %2915 = vmatpush1.xpose.msra.mxu0 0.0
    %2916 = vmatprep.subr.mxu0 0.0
    %2917 = vmatpush1.xpose.msra.mxu0 0.0
    %2918 = vmatprep.subr.mxu0 0.0
    %2919 = vmatpush1.xpose.msra.mxu0 0.0
    %2920 = vmatprep.subr.mxu0 0.0
    %2921 = vmatpush1.xpose.msra.mxu0 0.0
    %2922 = vmatprep.subr.mxu0 0.0
    %2923 = vmatpush1.xpose.msra.mxu0 0.0
    %2924 = vmatprep.subr.mxu0 0.0
    %2925 = vmatpush1.xpose.msra.mxu0 0.0
    %2926 = vmatprep.subr.mxu0 0.0
    %2927 = vmatpush1.xpose.msra.mxu0 0.0
    %2928 = vmatprep.subr.mxu0 0.0
    %2929 = vmatpush1.xpose.msra.mxu0 0.0
    %2930 = vmatprep.subr.mxu0 0.0
    %2931 = vmatpush1.xpose.msra.mxu0 0.0
    %2932 = vmatprep.subr.mxu0 0.0
    %2933 = vmatpush1.xpose.msra.mxu0 0.0
    %2934 = vmatprep.subr.mxu0 0.0
    %2935 = vmatpush1.xpose.msra.mxu0 0.0
    %2936 = vmatprep.mubr.f32.mxu0 0.0
    %2937 = vmatmul.mubr.f32.gmra.mrb[0].mxu0 %v2870
    %v2938 = vpop.f32.mrb[0].mxu0
    %v2939 = vadd.f32 0.0, %v2938
    %v2940 = vpop.f32.mrb[0].mxu0
    %2941 = vdwg.mxu0
    %v2943 = vsel %vm601, %v2765, 0
    %2945 = vmatprep.subr.mxu0 0.0
    %2946 = vmatpush1.xpose.msra.mxu0 %v2943
    %2947 = vmatprep.subr.mxu0 0.0
    %2948 = vmatpush1.xpose.msra.mxu0 0.0
    %2949 = vmatprep.subr.mxu0 0.0
    %2950 = vmatpush1.xpose.msra.mxu0 0.0
    %2951 = vmatprep.subr.mxu0 0.0
    %2952 = vmatpush1.xpose.msra.mxu0 0.0
    %2953 = vmatprep.subr.mxu0 0.0
    %2954 = vmatpush1.xpose.msra.mxu0 0.0
    %2955 = vmatprep.subr.mxu0 0.0
    %2956 = vmatpush1.xpose.msra.mxu0 0.0
    %2957 = vmatprep.subr.mxu0 0.0
    %2958 = vmatpush1.xpose.msra.mxu0 0.0
    %2959 = vmatprep.subr.mxu0 0.0
    %2960 = vmatpush1.xpose.msra.mxu0 0.0
    %2961 = vmatprep.subr.mxu0 0.0
    %2962 = vmatpush1.xpose.msra.mxu0 0.0
    %2963 = vmatprep.subr.mxu0 0.0
    %2964 = vmatpush1.xpose.msra.mxu0 0.0
    %2965 = vmatprep.subr.mxu0 0.0
    %2966 = vmatpush1.xpose.msra.mxu0 0.0
    %2967 = vmatprep.subr.mxu0 0.0
    %2968 = vmatpush1.xpose.msra.mxu0 0.0
    %2969 = vmatprep.subr.mxu0 0.0
    %2970 = vmatpush1.xpose.msra.mxu0 0.0
    %2971 = vmatprep.subr.mxu0 0.0
    %2972 = vmatpush1.xpose.msra.mxu0 0.0
    %2973 = vmatprep.subr.mxu0 0.0
    %2974 = vmatpush1.xpose.msra.mxu0 0.0
    %2975 = vmatprep.subr.mxu0 0.0
    %2976 = vmatpush1.xpose.msra.mxu0 0.0
    %2977 = vmatprep.subr.mxu0 0.0
    %2978 = vmatpush1.xpose.msra.mxu0 0.0
    %2979 = vmatprep.subr.mxu0 0.0
    %2980 = vmatpush1.xpose.msra.mxu0 0.0
    %2981 = vmatprep.subr.mxu0 0.0
    %2982 = vmatpush1.xpose.msra.mxu0 0.0
    %2983 = vmatprep.subr.mxu0 0.0
    %2984 = vmatpush1.xpose.msra.mxu0 0.0
    %2985 = vmatprep.subr.mxu0 0.0
    %2986 = vmatpush1.xpose.msra.mxu0 0.0
    %2987 = vmatprep.subr.mxu0 0.0
    %2988 = vmatpush1.xpose.msra.mxu0 0.0
    %2989 = vmatprep.subr.mxu0 0.0
    %2990 = vmatpush1.xpose.msra.mxu0 0.0
    %2991 = vmatprep.subr.mxu0 0.0
    %2992 = vmatpush1.xpose.msra.mxu0 0.0
    %2993 = vmatprep.subr.mxu0 0.0
    %2994 = vmatpush1.xpose.msra.mxu0 0.0
    %2995 = vmatprep.subr.mxu0 0.0
    %2996 = vmatpush1.xpose.msra.mxu0 0.0
    %2997 = vmatprep.subr.mxu0 0.0
    %2998 = vmatpush1.xpose.msra.mxu0 0.0
    %2999 = vmatprep.subr.mxu0 0.0
    %3000 = vmatpush1.xpose.msra.mxu0 0.0
    %3001 = vmatprep.subr.mxu0 0.0
    %3002 = vmatpush1.xpose.msra.mxu0 0.0
    %3003 = vmatprep.subr.mxu0 0.0
    %3004 = vmatpush1.xpose.msra.mxu0 0.0
    %3005 = vmatprep.subr.mxu0 0.0
    %3006 = vmatpush1.xpose.msra.mxu0 0.0
    %3007 = vmatprep.subr.mxu0 0.0
    %3008 = vmatpush1.xpose.msra.mxu0 0.0
    %3009 = vmatprep.mubr.f32.mxu0 0.0
    %3010 = vmatmul.mubr.f32.gmra.mrb[0].mxu0 %v2943
    %v3011 = vpop.f32.mrb[0].mxu0
    %v3012 = vadd.f32 0.0, %v3011
    %v3013 = vpop.f32.mrb[0].mxu0
    %3014 = vdwg.mxu0
    %v3016 = vsel %vm601, %v2767, 0
    %3018 = vmatprep.subr.mxu0 0.0
    %3019 = vmatpush1.xpose.msra.mxu0 %v3016
    %3020 = vmatprep.subr.mxu0 0.0
    %3021 = vmatpush1.xpose.msra.mxu0 0.0
    %3022 = vmatprep.subr.mxu0 0.0
    %3023 = vmatpush1.xpose.msra.mxu0 0.0
    %3024 = vmatprep.subr.mxu0 0.0
    %3025 = vmatpush1.xpose.msra.mxu0 0.0
    %3026 = vmatprep.subr.mxu0 0.0
    %3027 = vmatpush1.xpose.msra.mxu0 0.0
    %3028 = vmatprep.subr.mxu0 0.0
    %3029 = vmatpush1.xpose.msra.mxu0 0.0
    %3030 = vmatprep.subr.mxu0 0.0
    %3031 = vmatpush1.xpose.msra.mxu0 0.0
    %3032 = vmatprep.subr.mxu0 0.0
    %3033 = vmatpush1.xpose.msra.mxu0 0.0
    %3034 = vmatprep.subr.mxu0 0.0
    %3035 = vmatpush1.xpose.msra.mxu0 0.0
    %3036 = vmatprep.subr.mxu0 0.0
    %3037 = vmatpush1.xpose.msra.mxu0 0.0
    %3038 = vmatprep.subr.mxu0 0.0
    %3039 = vmatpush1.xpose.msra.mxu0 0.0
    %3040 = vmatprep.subr.mxu0 0.0
    %3041 = vmatpush1.xpose.msra.mxu0 0.0
    %3042 = vmatprep.subr.mxu0 0.0
    %3043 = vmatpush1.xpose.msra.mxu0 0.0
    %3044 = vmatprep.subr.mxu0 0.0
    %3045 = vmatpush1.xpose.msra.mxu0 0.0
    %3046 = vmatprep.subr.mxu0 0.0
    %3047 = vmatpush1.xpose.msra.mxu0 0.0
    %3048 = vmatprep.subr.mxu0 0.0
    %3049 = vmatpush1.xpose.msra.mxu0 0.0
    %3050 = vmatprep.subr.mxu0 0.0
    %3051 = vmatpush1.xpose.msra.mxu0 0.0
    %3052 = vmatprep.subr.mxu0 0.0
    %3053 = vmatpush1.xpose.msra.mxu0 0.0
    %3054 = vmatprep.subr.mxu0 0.0
    %3055 = vmatpush1.xpose.msra.mxu0 0.0
    %3056 = vmatprep.subr.mxu0 0.0
    %3057 = vmatpush1.xpose.msra.mxu0 0.0
    %3058 = vmatprep.subr.mxu0 0.0
    %3059 = vmatpush1.xpose.msra.mxu0 0.0
    %3060 = vmatprep.subr.mxu0 0.0
    %3061 = vmatpush1.xpose.msra.mxu0 0.0
    %3062 = vmatprep.subr.mxu0 0.0
    %3063 = vmatpush1.xpose.msra.mxu0 0.0
    %3064 = vmatprep.subr.mxu0 0.0
    %3065 = vmatpush1.xpose.msra.mxu0 0.0
    %3066 = vmatprep.subr.mxu0 0.0
    %3067 = vmatpush1.xpose.msra.mxu0 0.0
    %3068 = vmatprep.subr.mxu0 0.0
    %3069 = vmatpush1.xpose.msra.mxu0 0.0
    %3070 = vmatprep.subr.mxu0 0.0
    %3071 = vmatpush1.xpose.msra.mxu0 0.0
    %3072 = vmatprep.subr.mxu0 0.0
    %3073 = vmatpush1.xpose.msra.mxu0 0.0
    %3074 = vmatprep.subr.mxu0 0.0
    %3075 = vmatpush1.xpose.msra.mxu0 0.0
    %3076 = vmatprep.subr.mxu0 0.0
    %3077 = vmatpush1.xpose.msra.mxu0 0.0
    %3078 = vmatprep.subr.mxu0 0.0
    %3079 = vmatpush1.xpose.msra.mxu0 0.0
    %3080 = vmatprep.subr.mxu0 0.0
    %3081 = vmatpush1.xpose.msra.mxu0 0.0
    %3082 = vmatprep.mubr.f32.mxu0 0.0
    %3083 = vmatmul.mubr.f32.gmra.mrb[0].mxu0 %v3016
    %v3084 = vpop.f32.mrb[0].mxu0
    %v3085 = vadd.f32 0.0, %v3084
    %v3086 = vpop.f32.mrb[0].mxu0
    %3087 = vdwg.mxu0
    %v3089 = vsel %vm601, %v2769, 0
    %3091 = vmatprep.subr.mxu0 0.0
    %3092 = vmatpush1.xpose.msra.mxu0 %v3089
    %3093 = vmatprep.subr.mxu0 0.0
    %3094 = vmatpush1.xpose.msra.mxu0 0.0
    %3095 = vmatprep.subr.mxu0 0.0
    %3096 = vmatpush1.xpose.msra.mxu0 0.0
    %3097 = vmatprep.subr.mxu0 0.0
    %3098 = vmatpush1.xpose.msra.mxu0 0.0
    %3099 = vmatprep.subr.mxu0 0.0
    %3100 = vmatpush1.xpose.msra.mxu0 0.0
    %3101 = vmatprep.subr.mxu0 0.0
    %3102 = vmatpush1.xpose.msra.mxu0 0.0
    %3103 = vmatprep.subr.mxu0 0.0
    %3104 = vmatpush1.xpose.msra.mxu0 0.0
    %3105 = vmatprep.subr.mxu0 0.0
    %3106 = vmatpush1.xpose.msra.mxu0 0.0
    %3107 = vmatprep.subr.mxu0 0.0
    %3108 = vmatpush1.xpose.msra.mxu0 0.0
    %3109 = vmatprep.subr.mxu0 0.0
    %3110 = vmatpush1.xpose.msra.mxu0 0.0
    %3111 = vmatprep.subr.mxu0 0.0
    %3112 = vmatpush1.xpose.msra.mxu0 0.0
    %3113 = vmatprep.subr.mxu0 0.0
    %3114 = vmatpush1.xpose.msra.mxu0 0.0
    %3115 = vmatprep.subr.mxu0 0.0
    %3116 = vmatpush1.xpose.msra.mxu0 0.0
    %3117 = vmatprep.subr.mxu0 0.0
    %3118 = vmatpush1.xpose.msra.mxu0 0.0
    %3119 = vmatprep.subr.mxu0 0.0
    %3120 = vmatpush1.xpose.msra.mxu0 0.0
    %3121 = vmatprep.subr.mxu0 0.0
    %3122 = vmatpush1.xpose.msra.mxu0 0.0
    %3123 = vmatprep.subr.mxu0 0.0
    %3124 = vmatpush1.xpose.msra.mxu0 0.0
    %3125 = vmatprep.subr.mxu0 0.0
    %3126 = vmatpush1.xpose.msra.mxu0 0.0
    %3127 = vmatprep.subr.mxu0 0.0
    %3128 = vmatpush1.xpose.msra.mxu0 0.0
    %3129 = vmatprep.subr.mxu0 0.0
    %3130 = vmatpush1.xpose.msra.mxu0 0.0
    %3131 = vmatprep.subr.mxu0 0.0
    %3132 = vmatpush1.xpose.msra.mxu0 0.0
    %3133 = vmatprep.subr.mxu0 0.0
    %3134 = vmatpush1.xpose.msra.mxu0 0.0
    %3135 = vmatprep.subr.mxu0 0.0
    %3136 = vmatpush1.xpose.msra.mxu0 0.0
    %3137 = vmatprep.subr.mxu0 0.0
    %3138 = vmatpush1.xpose.msra.mxu0 0.0
    %3139 = vmatprep.subr.mxu0 0.0
    %3140 = vmatpush1.xpose.msra.mxu0 0.0
    %3141 = vmatprep.subr.mxu0 0.0
    %3142 = vmatpush1.xpose.msra.mxu0 0.0
    %3143 = vmatprep.subr.mxu0 0.0
    %3144 = vmatpush1.xpose.msra.mxu0 0.0
    %3145 = vmatprep.subr.mxu0 0.0
    %3146 = vmatpush1.xpose.msra.mxu0 0.0
    %3147 = vmatprep.subr.mxu0 0.0
    %3148 = vmatpush1.xpose.msra.mxu0 0.0
    %3149 = vmatprep.subr.mxu0 0.0
    %3150 = vmatpush1.xpose.msra.mxu0 0.0
    %3151 = vmatprep.subr.mxu0 0.0
    %3152 = vmatpush1.xpose.msra.mxu0 0.0
    %3153 = vmatprep.subr.mxu0 0.0
    %3154 = vmatpush1.xpose.msra.mxu0 0.0
    %3155 = vmatprep.mubr.f32.mxu0 0.0
    %3156 = vmatmul.mubr.f32.gmra.mrb[0].mxu0 %v3089
    %v3157 = vpop.f32.mrb[0].mxu0
    %v3158 = vadd.f32 0.0, %v3157
    %v3159 = vpop.f32.mrb[0].mxu0
    %3160 = vdwg.mxu0
    %v3162 = vsel %vm601, %v2771, 0
    %3164 = vmatprep.subr.mxu0 0.0
    %3165 = vmatpush1.xpose.msra.mxu0 %v3162
    %3166 = vmatprep.subr.mxu0 0.0
    %3167 = vmatpush1.xpose.msra.mxu0 0.0
    %3168 = vmatprep.subr.mxu0 0.0
    %3169 = vmatpush1.xpose.msra.mxu0 0.0
    %3170 = vmatprep.subr.mxu0 0.0
    %3171 = vmatpush1.xpose.msra.mxu0 0.0
    %3172 = vmatprep.subr.mxu0 0.0
    %3173 = vmatpush1.xpose.msra.mxu0 0.0
    %3174 = vmatprep.subr.mxu0 0.0
    %3175 = vmatpush1.xpose.msra.mxu0 0.0
    %3176 = vmatprep.subr.mxu0 0.0
    %3177 = vmatpush1.xpose.msra.mxu0 0.0
    %3178 = vmatprep.subr.mxu0 0.0
    %3179 = vmatpush1.xpose.msra.mxu0 0.0
    %3180 = vmatprep.subr.mxu0 0.0
    %3181 = vmatpush1.xpose.msra.mxu0 0.0
    %3182 = vmatprep.subr.mxu0 0.0
    %3183 = vmatpush1.xpose.msra.mxu0 0.0
    %3184 = vmatprep.subr.mxu0 0.0
    %3185 = vmatpush1.xpose.msra.mxu0 0.0
    %3186 = vmatprep.subr.mxu0 0.0
    %3187 = vmatpush1.xpose.msra.mxu0 0.0
    %3188 = vmatprep.subr.mxu0 0.0
    %3189 = vmatpush1.xpose.msra.mxu0 0.0
    %3190 = vmatprep.subr.mxu0 0.0
    %3191 = vmatpush1.xpose.msra.mxu0 0.0
    %3192 = vmatprep.subr.mxu0 0.0
    %3193 = vmatpush1.xpose.msra.mxu0 0.0
    %3194 = vmatprep.subr.mxu0 0.0
    %3195 = vmatpush1.xpose.msra.mxu0 0.0
    %3196 = vmatprep.subr.mxu0 0.0
    %3197 = vmatpush1.xpose.msra.mxu0 0.0
    %3198 = vmatprep.subr.mxu0 0.0
    %3199 = vmatpush1.xpose.msra.mxu0 0.0
    %3200 = vmatprep.subr.mxu0 0.0
    %3201 = vmatpush1.xpose.msra.mxu0 0.0
    %3202 = vmatprep.subr.mxu0 0.0
    %3203 = vmatpush1.xpose.msra.mxu0 0.0
    %3204 = vmatprep.subr.mxu0 0.0
    %3205 = vmatpush1.xpose.msra.mxu0 0.0
    %3206 = vmatprep.subr.mxu0 0.0
    %3207 = vmatpush1.xpose.msra.mxu0 0.0
    %3208 = vmatprep.subr.mxu0 0.0
    %3209 = vmatpush1.xpose.msra.mxu0 0.0
    %3210 = vmatprep.subr.mxu0 0.0
    %3211 = vmatpush1.xpose.msra.mxu0 0.0
    %3212 = vmatprep.subr.mxu0 0.0
    %3213 = vmatpush1.xpose.msra.mxu0 0.0
    %3214 = vmatprep.subr.mxu0 0.0
    %3215 = vmatpush1.xpose.msra.mxu0 0.0
    %3216 = vmatprep.subr.mxu0 0.0
    %3217 = vmatpush1.xpose.msra.mxu0 0.0
    %3218 = vmatprep.subr.mxu0 0.0
    %3219 = vmatpush1.xpose.msra.mxu0 0.0
    %3220 = vmatprep.subr.mxu0 0.0
    %3221 = vmatpush1.xpose.msra.mxu0 0.0
    %3222 = vmatprep.subr.mxu0 0.0
    %3223 = vmatpush1.xpose.msra.mxu0 0.0
    %3224 = vmatprep.subr.mxu0 0.0
    %3225 = vmatpush1.xpose.msra.mxu0 0.0
    %3226 = vmatprep.subr.mxu0 0.0
    %3227 = vmatpush1.xpose.msra.mxu0 0.0
    %3228 = vmatprep.mubr.f32.mxu0 0.0
    %3229 = vmatmul.mubr.f32.gmra.mrb[0].mxu0 %v3162
    %v3230 = vpop.f32.mrb[0].mxu0
    %v3231 = vadd.f32 0.0, %v3230
    %v3232 = vpop.f32.mrb[0].mxu0
    %3233 = vdwg.mxu0
    %v3235 = vsel %vm601, %v2773, 0
    %3237 = vmatprep.subr.mxu0 0.0
    %3238 = vmatpush1.xpose.msra.mxu0 %v3235
    %3239 = vmatprep.subr.mxu0 0.0
    %3240 = vmatpush1.xpose.msra.mxu0 0.0
    %3241 = vmatprep.subr.mxu0 0.0
    %3242 = vmatpush1.xpose.msra.mxu0 0.0
    %3243 = vmatprep.subr.mxu0 0.0
    %3244 = vmatpush1.xpose.msra.mxu0 0.0
    %3245 = vmatprep.subr.mxu0 0.0
    %3246 = vmatpush1.xpose.msra.mxu0 0.0
    %3247 = vmatprep.subr.mxu0 0.0
    %3248 = vmatpush1.xpose.msra.mxu0 0.0
    %3249 = vmatprep.subr.mxu0 0.0
    %3250 = vmatpush1.xpose.msra.mxu0 0.0
    %3251 = vmatprep.subr.mxu0 0.0
    %3252 = vmatpush1.xpose.msra.mxu0 0.0
    %3253 = vmatprep.subr.mxu0 0.0
    %3254 = vmatpush1.xpose.msra.mxu0 0.0
    %3255 = vmatprep.subr.mxu0 0.0
    %3256 = vmatpush1.xpose.msra.mxu0 0.0
    %3257 = vmatprep.subr.mxu0 0.0
    %3258 = vmatpush1.xpose.msra.mxu0 0.0
    %3259 = vmatprep.subr.mxu0 0.0
    %3260 = vmatpush1.xpose.msra.mxu0 0.0
    %3261 = vmatprep.subr.mxu0 0.0
    %3262 = vmatpush1.xpose.msra.mxu0 0.0
    %3263 = vmatprep.subr.mxu0 0.0
    %3264 = vmatpush1.xpose.msra.mxu0 0.0
    %3265 = vmatprep.subr.mxu0 0.0
    %3266 = vmatpush1.xpose.msra.mxu0 0.0
    %3267 = vmatprep.subr.mxu0 0.0
    %3268 = vmatpush1.xpose.msra.mxu0 0.0
    %3269 = vmatprep.subr.mxu0 0.0
    %3270 = vmatpush1.xpose.msra.mxu0 0.0
    %3271 = vmatprep.subr.mxu0 0.0
    %3272 = vmatpush1.xpose.msra.mxu0 0.0
    %3273 = vmatprep.subr.mxu0 0.0
    %3274 = vmatpush1.xpose.msra.mxu0 0.0
    %3275 = vmatprep.subr.mxu0 0.0
    %3276 = vmatpush1.xpose.msra.mxu0 0.0
    %3277 = vmatprep.subr.mxu0 0.0
    %3278 = vmatpush1.xpose.msra.mxu0 0.0
    %3279 = vmatprep.subr.mxu0 0.0
    %3280 = vmatpush1.xpose.msra.mxu0 0.0
    %3281 = vmatprep.subr.mxu0 0.0
    %3282 = vmatpush1.xpose.msra.mxu0 0.0
    %3283 = vmatprep.subr.mxu0 0.0
    %3284 = vmatpush1.xpose.msra.mxu0 0.0
    %3285 = vmatprep.subr.mxu0 0.0
    %3286 = vmatpush1.xpose.msra.mxu0 0.0
    %3287 = vmatprep.subr.mxu0 0.0
    %3288 = vmatpush1.xpose.msra.mxu0 0.0
    %3289 = vmatprep.subr.mxu0 0.0
    %3290 = vmatpush1.xpose.msra.mxu0 0.0
    %3291 = vmatprep.subr.mxu0 0.0
    %3292 = vmatpush1.xpose.msra.mxu0 0.0
    %3293 = vmatprep.subr.mxu0 0.0
    %3294 = vmatpush1.xpose.msra.mxu0 0.0
    %3295 = vmatprep.subr.mxu0 0.0
    %3296 = vmatpush1.xpose.msra.mxu0 0.0
    %3297 = vmatprep.subr.mxu0 0.0
    %3298 = vmatpush1.xpose.msra.mxu0 0.0
    %3299 = vmatprep.subr.mxu0 0.0
    %3300 = vmatpush1.xpose.msra.mxu0 0.0
    %3301 = vmatprep.mubr.f32.mxu0 0.0
    %3302 = vmatmul.mubr.f32.gmra.mrb[0].mxu0 %v3235
    %v3303 = vpop.f32.mrb[0].mxu0
    %v3304 = vadd.f32 0.0, %v3303
    %v3305 = vpop.f32.mrb[0].mxu0
    %3306 = vdwg.mxu0
    %v3308 = vsel %vm601, %v2775, 0
    %3310 = vmatprep.subr.mxu0 0.0
    %3311 = vmatpush1.xpose.msra.mxu0 %v3308
    %3312 = vmatprep.subr.mxu0 0.0
    %3313 = vmatpush1.xpose.msra.mxu0 0.0
    %3314 = vmatprep.subr.mxu0 0.0
    %3315 = vmatpush1.xpose.msra.mxu0 0.0
    %3316 = vmatprep.subr.mxu0 0.0
    %3317 = vmatpush1.xpose.msra.mxu0 0.0
    %3318 = vmatprep.subr.mxu0 0.0
    %3319 = vmatpush1.xpose.msra.mxu0 0.0
    %3320 = vmatprep.subr.mxu0 0.0
    %3321 = vmatpush1.xpose.msra.mxu0 0.0
    %3322 = vmatprep.subr.mxu0 0.0
    %3323 = vmatpush1.xpose.msra.mxu0 0.0
    %3324 = vmatprep.subr.mxu0 0.0
    %3325 = vmatpush1.xpose.msra.mxu0 0.0
    %3326 = vmatprep.subr.mxu0 0.0
    %3327 = vmatpush1.xpose.msra.mxu0 0.0
    %3328 = vmatprep.subr.mxu0 0.0
    %3329 = vmatpush1.xpose.msra.mxu0 0.0
    %3330 = vmatprep.subr.mxu0 0.0
    %3331 = vmatpush1.xpose.msra.mxu0 0.0
    %3332 = vmatprep.subr.mxu0 0.0
    %3333 = vmatpush1.xpose.msra.mxu0 0.0
    %3334 = vmatprep.subr.mxu0 0.0
    %3335 = vmatpush1.xpose.msra.mxu0 0.0
    %3336 = vmatprep.subr.mxu0 0.0
    %3337 = vmatpush1.xpose.msra.mxu0 0.0
    %3338 = vmatprep.subr.mxu0 0.0
    %3339 = vmatpush1.xpose.msra.mxu0 0.0
    %3340 = vmatprep.subr.mxu0 0.0
    %3341 = vmatpush1.xpose.msra.mxu0 0.0
    %3342 = vmatprep.subr.mxu0 0.0
    %3343 = vmatpush1.xpose.msra.mxu0 0.0
    %3344 = vmatprep.subr.mxu0 0.0
    %3345 = vmatpush1.xpose.msra.mxu0 0.0
    %3346 = vmatprep.subr.mxu0 0.0
    %3347 = vmatpush1.xpose.msra.mxu0 0.0
    %3348 = vmatprep.subr.mxu0 0.0
    %3349 = vmatpush1.xpose.msra.mxu0 0.0
    %3350 = vmatprep.subr.mxu0 0.0
    %3351 = vmatpush1.xpose.msra.mxu0 0.0
    %3352 = vmatprep.subr.mxu0 0.0
    %3353 = vmatpush1.xpose.msra.mxu0 0.0
    %3354 = vmatprep.subr.mxu0 0.0
    %3355 = vmatpush1.xpose.msra.mxu0 0.0
    %3356 = vmatprep.subr.mxu0 0.0
    %3357 = vmatpush1.xpose.msra.mxu0 0.0
    %3358 = vmatprep.subr.mxu0 0.0
    %3359 = vmatpush1.xpose.msra.mxu0 0.0
    %3360 = vmatprep.subr.mxu0 0.0
    %3361 = vmatpush1.xpose.msra.mxu0 0.0
    %3362 = vmatprep.subr.mxu0 0.0
    %3363 = vmatpush1.xpose.msra.mxu0 0.0
    %3364 = vmatprep.subr.mxu0 0.0
    %3365 = vmatpush1.xpose.msra.mxu0 0.0
    %3366 = vmatprep.subr.mxu0 0.0
    %3367 = vmatpush1.xpose.msra.mxu0 0.0
    %3368 = vmatprep.subr.mxu0 0.0
    %3369 = vmatpush1.xpose.msra.mxu0 0.0
    %3370 = vmatprep.subr.mxu0 0.0
    %3371 = vmatpush1.xpose.msra.mxu0 0.0
    %3372 = vmatprep.subr.mxu0 0.0
    %3373 = vmatpush1.xpose.msra.mxu0 0.0
    %3374 = vmatprep.mubr.f32.mxu0 0.0
    %3375 = vmatmul.mubr.f32.gmra.mrb[0].mxu0 %v3308
    %v3376 = vpop.f32.mrb[0].mxu0
    %v3377 = vadd.f32 0.0, %v3376
    %v3378 = vpop.f32.mrb[0].mxu0
    %3379 = vdwg.mxu0
    %v3381 = vsel %vm601, %v2777, 0
    %3383 = vmatprep.subr.mxu0 0.0
    %3384 = vmatpush1.xpose.msra.mxu0 %v3381
    %3385 = vmatprep.subr.mxu0 0.0
    %3386 = vmatpush1.xpose.msra.mxu0 0.0
    %3387 = vmatprep.subr.mxu0 0.0
    %3388 = vmatpush1.xpose.msra.mxu0 0.0
    %3389 = vmatprep.subr.mxu0 0.0
    %3390 = vmatpush1.xpose.msra.mxu0 0.0
    %3391 = vmatprep.subr.mxu0 0.0
    %3392 = vmatpush1.xpose.msra.mxu0 0.0
    %3393 = vmatprep.subr.mxu0 0.0
    %3394 = vmatpush1.xpose.msra.mxu0 0.0
    %3395 = vmatprep.subr.mxu0 0.0
    %3396 = vmatpush1.xpose.msra.mxu0 0.0
    %3397 = vmatprep.subr.mxu0 0.0
    %3398 = vmatpush1.xpose.msra.mxu0 0.0
    %3399 = vmatprep.subr.mxu0 0.0
    %3400 = vmatpush1.xpose.msra.mxu0 0.0
    %3401 = vmatprep.subr.mxu0 0.0
    %3402 = vmatpush1.xpose.msra.mxu0 0.0
    %3403 = vmatprep.subr.mxu0 0.0
    %3404 = vmatpush1.xpose.msra.mxu0 0.0
    %3405 = vmatprep.subr.mxu0 0.0
    %3406 = vmatpush1.xpose.msra.mxu0 0.0
    %3407 = vmatprep.subr.mxu0 0.0
    %3408 = vmatpush1.xpose.msra.mxu0 0.0
    %3409 = vmatprep.subr.mxu0 0.0
    %3410 = vmatpush1.xpose.msra.mxu0 0.0
    %3411 = vmatprep.subr.mxu0 0.0
    %3412 = vmatpush1.xpose.msra.mxu0 0.0
    %3413 = vmatprep.subr.mxu0 0.0
    %3414 = vmatpush1.xpose.msra.mxu0 0.0
    %3415 = vmatprep.subr.mxu0 0.0
    %3416 = vmatpush1.xpose.msra.mxu0 0.0
    %3417 = vmatprep.subr.mxu0 0.0
    %3418 = vmatpush1.xpose.msra.mxu0 0.0
    %3419 = vmatprep.subr.mxu0 0.0
    %3420 = vmatpush1.xpose.msra.mxu0 0.0
    %3421 = vmatprep.subr.mxu0 0.0
    %3422 = vmatpush1.xpose.msra.mxu0 0.0
    %3423 = vmatprep.subr.mxu0 0.0
    %3424 = vmatpush1.xpose.msra.mxu0 0.0
    %3425 = vmatprep.subr.mxu0 0.0
    %3426 = vmatpush1.xpose.msra.mxu0 0.0
    %3427 = vmatprep.subr.mxu0 0.0
    %3428 = vmatpush1.xpose.msra.mxu0 0.0
    %3429 = vmatprep.subr.mxu0 0.0
    %3430 = vmatpush1.xpose.msra.mxu0 0.0
    %3431 = vmatprep.subr.mxu0 0.0
    %3432 = vmatpush1.xpose.msra.mxu0 0.0
    %3433 = vmatprep.subr.mxu0 0.0
    %3434 = vmatpush1.xpose.msra.mxu0 0.0
    %3435 = vmatprep.subr.mxu0 0.0
    %3436 = vmatpush1.xpose.msra.mxu0 0.0
    %3437 = vmatprep.subr.mxu0 0.0
    %3438 = vmatpush1.xpose.msra.mxu0 0.0
    %3439 = vmatprep.subr.mxu0 0.0
    %3440 = vmatpush1.xpose.msra.mxu0 0.0
    %3441 = vmatprep.subr.mxu0 0.0
    %3442 = vmatpush1.xpose.msra.mxu0 0.0
    %3443 = vmatprep.subr.mxu0 0.0
    %3444 = vmatpush1.xpose.msra.mxu0 0.0
    %3445 = vmatprep.subr.mxu0 0.0
    %3446 = vmatpush1.xpose.msra.mxu0 0.0
    %3447 = vmatprep.mubr.f32.mxu0 0.0
    %3448 = vmatmul.mubr.f32.gmra.mrb[0].mxu0 %v3381
    %v3449 = vpop.f32.mrb[0].mxu0
    %v3450 = vadd.f32 0.0, %v3449
    %v3451 = vpop.f32.mrb[0].mxu0
    %3452 = vdwg.mxu0
    %v3454 = vsel %vm601, %v2779, 0
    %3456 = vmatprep.subr.mxu0 0.0
    %3457 = vmatpush1.xpose.msra.mxu0 %v3454
    %3458 = vmatprep.subr.mxu0 0.0
    %3459 = vmatpush1.xpose.msra.mxu0 0.0
    %3460 = vmatprep.subr.mxu0 0.0
    %3461 = vmatpush1.xpose.msra.mxu0 0.0
    %3462 = vmatprep.subr.mxu0 0.0
    %3463 = vmatpush1.xpose.msra.mxu0 0.0
    %3464 = vmatprep.subr.mxu0 0.0
    %3465 = vmatpush1.xpose.msra.mxu0 0.0
    %3466 = vmatprep.subr.mxu0 0.0
    %3467 = vmatpush1.xpose.msra.mxu0 0.0
    %3468 = vmatprep.subr.mxu0 0.0
    %3469 = vmatpush1.xpose.msra.mxu0 0.0
    %3470 = vmatprep.subr.mxu0 0.0
    %3471 = vmatpush1.xpose.msra.mxu0 0.0
    %3472 = vmatprep.subr.mxu0 0.0
    %3473 = vmatpush1.xpose.msra.mxu0 0.0
    %3474 = vmatprep.subr.mxu0 0.0
    %3475 = vmatpush1.xpose.msra.mxu0 0.0
    %3476 = vmatprep.subr.mxu0 0.0
    %3477 = vmatpush1.xpose.msra.mxu0 0.0
    %3478 = vmatprep.subr.mxu0 0.0
    %3479 = vmatpush1.xpose.msra.mxu0 0.0
    %3480 = vmatprep.subr.mxu0 0.0
    %3481 = vmatpush1.xpose.msra.mxu0 0.0
    %3482 = vmatprep.subr.mxu0 0.0
    %3483 = vmatpush1.xpose.msra.mxu0 0.0
    %3484 = vmatprep.subr.mxu0 0.0
    %3485 = vmatpush1.xpose.msra.mxu0 0.0
    %3486 = vmatprep.subr.mxu0 0.0
    %3487 = vmatpush1.xpose.msra.mxu0 0.0
    %3488 = vmatprep.subr.mxu0 0.0
    %3489 = vmatpush1.xpose.msra.mxu0 0.0
    %3490 = vmatprep.subr.mxu0 0.0
    %3491 = vmatpush1.xpose.msra.mxu0 0.0
    %3492 = vmatprep.subr.mxu0 0.0
    %3493 = vmatpush1.xpose.msra.mxu0 0.0
    %3494 = vmatprep.subr.mxu0 0.0
    %3495 = vmatpush1.xpose.msra.mxu0 0.0
    %3496 = vmatprep.subr.mxu0 0.0
    %3497 = vmatpush1.xpose.msra.mxu0 0.0
    %3498 = vmatprep.subr.mxu0 0.0
    %3499 = vmatpush1.xpose.msra.mxu0 0.0
    %3500 = vmatprep.subr.mxu0 0.0
    %3501 = vmatpush1.xpose.msra.mxu0 0.0
    %3502 = vmatprep.subr.mxu0 0.0
    %3503 = vmatpush1.xpose.msra.mxu0 0.0
    %3504 = vmatprep.subr.mxu0 0.0
    %3505 = vmatpush1.xpose.msra.mxu0 0.0
    %3506 = vmatprep.subr.mxu0 0.0
    %3507 = vmatpush1.xpose.msra.mxu0 0.0
    %3508 = vmatprep.subr.mxu0 0.0
    %3509 = vmatpush1.xpose.msra.mxu0 0.0
    %3510 = vmatprep.subr.mxu0 0.0
    %3511 = vmatpush1.xpose.msra.mxu0 0.0
    %3512 = vmatprep.subr.mxu0 0.0
    %3513 = vmatpush1.xpose.msra.mxu0 0.0
    %3514 = vmatprep.subr.mxu0 0.0
    %3515 = vmatpush1.xpose.msra.mxu0 0.0
    %3516 = vmatprep.subr.mxu0 0.0
    %3517 = vmatpush1.xpose.msra.mxu0 0.0
    %3518 = vmatprep.subr.mxu0 0.0
    %3519 = vmatpush1.xpose.msra.mxu0 0.0
    %3520 = vmatprep.mubr.f32.mxu0 0.0
    %3521 = vmatmul.mubr.f32.gmra.mrb[0].mxu0 %v3454
    %v3522 = vpop.f32.mrb[0].mxu0
    %v3523 = vadd.f32 0.0, %v3522
    %v3524 = vpop.f32.mrb[0].mxu0
    %3525 = vdwg.mxu0
    %v3527 = vsel %vm601, %v2781, 0
    %3529 = vmatprep.subr.mxu0 0.0
    %3530 = vmatpush1.xpose.msra.mxu0 %v3527
    %3531 = vmatprep.subr.mxu0 0.0
    %3532 = vmatpush1.xpose.msra.mxu0 0.0
    %3533 = vmatprep.subr.mxu0 0.0
    %3534 = vmatpush1.xpose.msra.mxu0 0.0
    %3535 = vmatprep.subr.mxu0 0.0
    %3536 = vmatpush1.xpose.msra.mxu0 0.0
    %3537 = vmatprep.subr.mxu0 0.0
    %3538 = vmatpush1.xpose.msra.mxu0 0.0
    %3539 = vmatprep.subr.mxu0 0.0
    %3540 = vmatpush1.xpose.msra.mxu0 0.0
    %3541 = vmatprep.subr.mxu0 0.0
    %3542 = vmatpush1.xpose.msra.mxu0 0.0
    %3543 = vmatprep.subr.mxu0 0.0
    %3544 = vmatpush1.xpose.msra.mxu0 0.0
    %3545 = vmatprep.subr.mxu0 0.0
    %3546 = vmatpush1.xpose.msra.mxu0 0.0
    %3547 = vmatprep.subr.mxu0 0.0
    %3548 = vmatpush1.xpose.msra.mxu0 0.0
    %3549 = vmatprep.subr.mxu0 0.0
    %3550 = vmatpush1.xpose.msra.mxu0 0.0
    %3551 = vmatprep.subr.mxu0 0.0
    %3552 = vmatpush1.xpose.msra.mxu0 0.0
    %3553 = vmatprep.subr.mxu0 0.0
    %3554 = vmatpush1.xpose.msra.mxu0 0.0
    %3555 = vmatprep.subr.mxu0 0.0
    %3556 = vmatpush1.xpose.msra.mxu0 0.0
    %3557 = vmatprep.subr.mxu0 0.0
    %3558 = vmatpush1.xpose.msra.mxu0 0.0
    %3559 = vmatprep.subr.mxu0 0.0
    %3560 = vmatpush1.xpose.msra.mxu0 0.0
    %3561 = vmatprep.subr.mxu0 0.0
    %3562 = vmatpush1.xpose.msra.mxu0 0.0
    %3563 = vmatprep.subr.mxu0 0.0
    %3564 = vmatpush1.xpose.msra.mxu0 0.0
    %3565 = vmatprep.subr.mxu0 0.0
    %3566 = vmatpush1.xpose.msra.mxu0 0.0
    %3567 = vmatprep.subr.mxu0 0.0
    %3568 = vmatpush1.xpose.msra.mxu0 0.0
    %3569 = vmatprep.subr.mxu0 0.0
    %3570 = vmatpush1.xpose.msra.mxu0 0.0
    %3571 = vmatprep.subr.mxu0 0.0
    %3572 = vmatpush1.xpose.msra.mxu0 0.0
    %3573 = vmatprep.subr.mxu0 0.0
    %3574 = vmatpush1.xpose.msra.mxu0 0.0
    %3575 = vmatprep.subr.mxu0 0.0
    %3576 = vmatpush1.xpose.msra.mxu0 0.0
    %3577 = vmatprep.subr.mxu0 0.0
    %3578 = vmatpush1.xpose.msra.mxu0 0.0
    %3579 = vmatprep.subr.mxu0 0.0
    %3580 = vmatpush1.xpose.msra.mxu0 0.0
    %3581 = vmatprep.subr.mxu0 0.0
    %3582 = vmatpush1.xpose.msra.mxu0 0.0
    %3583 = vmatprep.subr.mxu0 0.0
    %3584 = vmatpush1.xpose.msra.mxu0 0.0
    %3585 = vmatprep.subr.mxu0 0.0
    %3586 = vmatpush1.xpose.msra.mxu0 0.0
    %3587 = vmatprep.subr.mxu0 0.0
    %3588 = vmatpush1.xpose.msra.mxu0 0.0
    %3589 = vmatprep.subr.mxu0 0.0
    %3590 = vmatpush1.xpose.msra.mxu0 0.0
    %3591 = vmatprep.subr.mxu0 0.0
    %3592 = vmatpush1.xpose.msra.mxu0 0.0
    %3593 = vmatprep.mubr.f32.mxu0 0.0
    %3594 = vmatmul.mubr.f32.gmra.mrb[0].mxu0 %v3527
    %v3595 = vpop.f32.mrb[0].mxu0
    %v3596 = vadd.f32 0.0, %v3595
    %v3597 = vpop.f32.mrb[0].mxu0
    %3598 = vdwg.mxu0
    %v3600 = vsel %vm601, %v2783, 0
    %3602 = vmatprep.subr.mxu0 0.0
    %3603 = vmatpush1.xpose.msra.mxu0 %v3600
    %3604 = vmatprep.subr.mxu0 0.0
    %3605 = vmatpush1.xpose.msra.mxu0 0.0
    %3606 = vmatprep.subr.mxu0 0.0
    %3607 = vmatpush1.xpose.msra.mxu0 0.0
    %3608 = vmatprep.subr.mxu0 0.0
    %3609 = vmatpush1.xpose.msra.mxu0 0.0
    %3610 = vmatprep.subr.mxu0 0.0
    %3611 = vmatpush1.xpose.msra.mxu0 0.0
    %3612 = vmatprep.subr.mxu0 0.0
    %3613 = vmatpush1.xpose.msra.mxu0 0.0
    %3614 = vmatprep.subr.mxu0 0.0
    %3615 = vmatpush1.xpose.msra.mxu0 0.0
    %3616 = vmatprep.subr.mxu0 0.0
    %3617 = vmatpush1.xpose.msra.mxu0 0.0
    %3618 = vmatprep.subr.mxu0 0.0
    %3619 = vmatpush1.xpose.msra.mxu0 0.0
    %3620 = vmatprep.subr.mxu0 0.0
    %3621 = vmatpush1.xpose.msra.mxu0 0.0
    %3622 = vmatprep.subr.mxu0 0.0
    %3623 = vmatpush1.xpose.msra.mxu0 0.0
    %3624 = vmatprep.subr.mxu0 0.0
    %3625 = vmatpush1.xpose.msra.mxu0 0.0
    %3626 = vmatprep.subr.mxu0 0.0
    %3627 = vmatpush1.xpose.msra.mxu0 0.0
    %3628 = vmatprep.subr.mxu0 0.0
    %3629 = vmatpush1.xpose.msra.mxu0 0.0
    %3630 = vmatprep.subr.mxu0 0.0
    %3631 = vmatpush1.xpose.msra.mxu0 0.0
    %3632 = vmatprep.subr.mxu0 0.0
    %3633 = vmatpush1.xpose.msra.mxu0 0.0
    %3634 = vmatprep.subr.mxu0 0.0
    %3635 = vmatpush1.xpose.msra.mxu0 0.0
    %3636 = vmatprep.subr.mxu0 0.0
    %3637 = vmatpush1.xpose.msra.mxu0 0.0
    %3638 = vmatprep.subr.mxu0 0.0
    %3639 = vmatpush1.xpose.msra.mxu0 0.0
    %3640 = vmatprep.subr.mxu0 0.0
    %3641 = vmatpush1.xpose.msra.mxu0 0.0
    %3642 = vmatprep.subr.mxu0 0.0
    %3643 = vmatpush1.xpose.msra.mxu0 0.0
    %3644 = vmatprep.subr.mxu0 0.0
    %3645 = vmatpush1.xpose.msra.mxu0 0.0
    %3646 = vmatprep.subr.mxu0 0.0
    %3647 = vmatpush1.xpose.msra.mxu0 0.0
    %3648 = vmatprep.subr.mxu0 0.0
    %3649 = vmatpush1.xpose.msra.mxu0 0.0
    %3650 = vmatprep.subr.mxu0 0.0
    %3651 = vmatpush1.xpose.msra.mxu0 0.0
    %3652 = vmatprep.subr.mxu0 0.0
    %3653 = vmatpush1.xpose.msra.mxu0 0.0
    %3654 = vmatprep.subr.mxu0 0.0
    %3655 = vmatpush1.xpose.msra.mxu0 0.0
    %3656 = vmatprep.subr.mxu0 0.0
    %3657 = vmatpush1.xpose.msra.mxu0 0.0
    %3658 = vmatprep.subr.mxu0 0.0
    %3659 = vmatpush1.xpose.msra.mxu0 0.0
    %3660 = vmatprep.subr.mxu0 0.0
    %3661 = vmatpush1.xpose.msra.mxu0 0.0
    %3662 = vmatprep.subr.mxu0 0.0
    %3663 = vmatpush1.xpose.msra.mxu0 0.0
    %3664 = vmatprep.subr.mxu0 0.0
    %3665 = vmatpush1.xpose.msra.mxu0 0.0
    %3666 = vmatprep.mubr.f32.mxu0 0.0
    %3667 = vmatmul.mubr.f32.gmra.mrb[0].mxu0 %v3600
    %v3668 = vpop.f32.mrb[0].mxu0
    %v3669 = vadd.f32 0.0, %v3668
    %v3670 = vpop.f32.mrb[0].mxu0
    %3671 = vdwg.mxu0
    %v3673 = vsel %vm601, %v2785, 0
    %3675 = vmatprep.subr.mxu0 0.0
    %3676 = vmatpush1.xpose.msra.mxu0 %v3673
    %3677 = vmatprep.subr.mxu0 0.0
    %3678 = vmatpush1.xpose.msra.mxu0 0.0
    %3679 = vmatprep.subr.mxu0 0.0
    %3680 = vmatpush1.xpose.msra.mxu0 0.0
    %3681 = vmatprep.subr.mxu0 0.0
    %3682 = vmatpush1.xpose.msra.mxu0 0.0
    %3683 = vmatprep.subr.mxu0 0.0
    %3684 = vmatpush1.xpose.msra.mxu0 0.0
    %3685 = vmatprep.subr.mxu0 0.0
    %3686 = vmatpush1.xpose.msra.mxu0 0.0
    %3687 = vmatprep.subr.mxu0 0.0
    %3688 = vmatpush1.xpose.msra.mxu0 0.0
    %3689 = vmatprep.subr.mxu0 0.0
    %3690 = vmatpush1.xpose.msra.mxu0 0.0
    %3691 = vmatprep.subr.mxu0 0.0
    %3692 = vmatpush1.xpose.msra.mxu0 0.0
    %3693 = vmatprep.subr.mxu0 0.0
    %3694 = vmatpush1.xpose.msra.mxu0 0.0
    %3695 = vmatprep.subr.mxu0 0.0
    %3696 = vmatpush1.xpose.msra.mxu0 0.0
    %3697 = vmatprep.subr.mxu0 0.0
    %3698 = vmatpush1.xpose.msra.mxu0 0.0
    %3699 = vmatprep.subr.mxu0 0.0
    %3700 = vmatpush1.xpose.msra.mxu0 0.0
    %3701 = vmatprep.subr.mxu0 0.0
    %3702 = vmatpush1.xpose.msra.mxu0 0.0
    %3703 = vmatprep.subr.mxu0 0.0
    %3704 = vmatpush1.xpose.msra.mxu0 0.0
    %3705 = vmatprep.subr.mxu0 0.0
    %3706 = vmatpush1.xpose.msra.mxu0 0.0
    %3707 = vmatprep.subr.mxu0 0.0
    %3708 = vmatpush1.xpose.msra.mxu0 0.0
    %3709 = vmatprep.subr.mxu0 0.0
    %3710 = vmatpush1.xpose.msra.mxu0 0.0
    %3711 = vmatprep.subr.mxu0 0.0
    %3712 = vmatpush1.xpose.msra.mxu0 0.0
    %3713 = vmatprep.subr.mxu0 0.0
    %3714 = vmatpush1.xpose.msra.mxu0 0.0
    %3715 = vmatprep.subr.mxu0 0.0
    %3716 = vmatpush1.xpose.msra.mxu0 0.0
    %3717 = vmatprep.subr.mxu0 0.0
    %3718 = vmatpush1.xpose.msra.mxu0 0.0
    %3719 = vmatprep.subr.mxu0 0.0
    %3720 = vmatpush1.xpose.msra.mxu0 0.0
    %3721 = vmatprep.subr.mxu0 0.0
    %3722 = vmatpush1.xpose.msra.mxu0 0.0
    %3723 = vmatprep.subr.mxu0 0.0
    %3724 = vmatpush1.xpose.msra.mxu0 0.0
    %3725 = vmatprep.subr.mxu0 0.0
    %3726 = vmatpush1.xpose.msra.mxu0 0.0
    %3727 = vmatprep.subr.mxu0 0.0
    %3728 = vmatpush1.xpose.msra.mxu0 0.0
    %3729 = vmatprep.subr.mxu0 0.0
    %3730 = vmatpush1.xpose.msra.mxu0 0.0
    %3731 = vmatprep.subr.mxu0 0.0
    %3732 = vmatpush1.xpose.msra.mxu0 0.0
    %3733 = vmatprep.subr.mxu0 0.0
    %3734 = vmatpush1.xpose.msra.mxu0 0.0
    %3735 = vmatprep.subr.mxu0 0.0
    %3736 = vmatpush1.xpose.msra.mxu0 0.0
    %3737 = vmatprep.subr.mxu0 0.0
    %3738 = vmatpush1.xpose.msra.mxu0 0.0
    %3739 = vmatprep.mubr.f32.mxu0 0.0
    %3740 = vmatmul.mubr.f32.gmra.mrb[0].mxu0 %v3673
    %v3741 = vpop.f32.mrb[0].mxu0
    %v3742 = vadd.f32 0.0, %v3741
    %v3743 = vpop.f32.mrb[0].mxu0
    %3744 = vdwg.mxu0
    %v3746 = vsel %vm601, %v2787, 0
    %3748 = vmatprep.subr.mxu0 0.0
    %3749 = vmatpush1.xpose.msra.mxu0 %v3746
    %3750 = vmatprep.subr.mxu0 0.0
    %3751 = vmatpush1.xpose.msra.mxu0 0.0
    %3752 = vmatprep.subr.mxu0 0.0
    %3753 = vmatpush1.xpose.msra.mxu0 0.0
    %3754 = vmatprep.subr.mxu0 0.0
    %3755 = vmatpush1.xpose.msra.mxu0 0.0
    %3756 = vmatprep.subr.mxu0 0.0
    %3757 = vmatpush1.xpose.msra.mxu0 0.0
    %3758 = vmatprep.subr.mxu0 0.0
    %3759 = vmatpush1.xpose.msra.mxu0 0.0
    %3760 = vmatprep.subr.mxu0 0.0
    %3761 = vmatpush1.xpose.msra.mxu0 0.0
    %3762 = vmatprep.subr.mxu0 0.0
    %3763 = vmatpush1.xpose.msra.mxu0 0.0
    %3764 = vmatprep.subr.mxu0 0.0
    %3765 = vmatpush1.xpose.msra.mxu0 0.0
    %3766 = vmatprep.subr.mxu0 0.0
    %3767 = vmatpush1.xpose.msra.mxu0 0.0
    %3768 = vmatprep.subr.mxu0 0.0
    %3769 = vmatpush1.xpose.msra.mxu0 0.0
    %3770 = vmatprep.subr.mxu0 0.0
    %3771 = vmatpush1.xpose.msra.mxu0 0.0
    %3772 = vmatprep.subr.mxu0 0.0
    %3773 = vmatpush1.xpose.msra.mxu0 0.0
    %3774 = vmatprep.subr.mxu0 0.0
    %3775 = vmatpush1.xpose.msra.mxu0 0.0
    %3776 = vmatprep.subr.mxu0 0.0
    %3777 = vmatpush1.xpose.msra.mxu0 0.0
    %3778 = vmatprep.subr.mxu0 0.0
    %3779 = vmatpush1.xpose.msra.mxu0 0.0
    %3780 = vmatprep.subr.mxu0 0.0
    %3781 = vmatpush1.xpose.msra.mxu0 0.0
    %3782 = vmatprep.subr.mxu0 0.0
    %3783 = vmatpush1.xpose.msra.mxu0 0.0
    %3784 = vmatprep.subr.mxu0 0.0
    %3785 = vmatpush1.xpose.msra.mxu0 0.0
    %3786 = vmatprep.subr.mxu0 0.0
    %3787 = vmatpush1.xpose.msra.mxu0 0.0
    %3788 = vmatprep.subr.mxu0 0.0
    %3789 = vmatpush1.xpose.msra.mxu0 0.0
    %3790 = vmatprep.subr.mxu0 0.0
    %3791 = vmatpush1.xpose.msra.mxu0 0.0
    %3792 = vmatprep.subr.mxu0 0.0
    %3793 = vmatpush1.xpose.msra.mxu0 0.0
    %3794 = vmatprep.subr.mxu0 0.0
    %3795 = vmatpush1.xpose.msra.mxu0 0.0
    %3796 = vmatprep.subr.mxu0 0.0
    %3797 = vmatpush1.xpose.msra.mxu0 0.0
    %3798 = vmatprep.subr.mxu0 0.0
    %3799 = vmatpush1.xpose.msra.mxu0 0.0
    %3800 = vmatprep.subr.mxu0 0.0
    %3801 = vmatpush1.xpose.msra.mxu0 0.0
    %3802 = vmatprep.subr.mxu0 0.0
    %3803 = vmatpush1.xpose.msra.mxu0 0.0
    %3804 = vmatprep.subr.mxu0 0.0
    %3805 = vmatpush1.xpose.msra.mxu0 0.0
    %3806 = vmatprep.subr.mxu0 0.0
    %3807 = vmatpush1.xpose.msra.mxu0 0.0
    %3808 = vmatprep.subr.mxu0 0.0
    %3809 = vmatpush1.xpose.msra.mxu0 0.0
    %3810 = vmatprep.subr.mxu0 0.0
    %3811 = vmatpush1.xpose.msra.mxu0 0.0
    %3812 = vmatprep.mubr.f32.mxu0 0.0
    %3813 = vmatmul.mubr.f32.gmra.mrb[0].mxu0 %v3746
    %v3814 = vpop.f32.mrb[0].mxu0
    %v3815 = vadd.f32 0.0, %v3814
    %v3816 = vpop.f32.mrb[0].mxu0
    %3817 = vdwg.mxu0
    %v3819 = vsel %vm601, %v2789, 0
    %3821 = vmatprep.subr.mxu0 0.0
    %3822 = vmatpush1.xpose.msra.mxu0 %v3819
    %3823 = vmatprep.subr.mxu0 0.0
    %3824 = vmatpush1.xpose.msra.mxu0 0.0
    %3825 = vmatprep.subr.mxu0 0.0
    %3826 = vmatpush1.xpose.msra.mxu0 0.0
    %3827 = vmatprep.subr.mxu0 0.0
    %3828 = vmatpush1.xpose.msra.mxu0 0.0
    %3829 = vmatprep.subr.mxu0 0.0
    %3830 = vmatpush1.xpose.msra.mxu0 0.0
    %3831 = vmatprep.subr.mxu0 0.0
    %3832 = vmatpush1.xpose.msra.mxu0 0.0
    %3833 = vmatprep.subr.mxu0 0.0
    %3834 = vmatpush1.xpose.msra.mxu0 0.0
    %3835 = vmatprep.subr.mxu0 0.0
    %3836 = vmatpush1.xpose.msra.mxu0 0.0
    %3837 = vmatprep.subr.mxu0 0.0
    %3838 = vmatpush1.xpose.msra.mxu0 0.0
    %3839 = vmatprep.subr.mxu0 0.0
    %3840 = vmatpush1.xpose.msra.mxu0 0.0
    %3841 = vmatprep.subr.mxu0 0.0
    %3842 = vmatpush1.xpose.msra.mxu0 0.0
    %3843 = vmatprep.subr.mxu0 0.0
    %3844 = vmatpush1.xpose.msra.mxu0 0.0
    %3845 = vmatprep.subr.mxu0 0.0
    %3846 = vmatpush1.xpose.msra.mxu0 0.0
    %3847 = vmatprep.subr.mxu0 0.0
    %3848 = vmatpush1.xpose.msra.mxu0 0.0
    %3849 = vmatprep.subr.mxu0 0.0
    %3850 = vmatpush1.xpose.msra.mxu0 0.0
    %3851 = vmatprep.subr.mxu0 0.0
    %3852 = vmatpush1.xpose.msra.mxu0 0.0
    %3853 = vmatprep.subr.mxu0 0.0
    %3854 = vmatpush1.xpose.msra.mxu0 0.0
    %3855 = vmatprep.subr.mxu0 0.0
    %3856 = vmatpush1.xpose.msra.mxu0 0.0
    %3857 = vmatprep.subr.mxu0 0.0
    %3858 = vmatpush1.xpose.msra.mxu0 0.0
    %3859 = vmatprep.subr.mxu0 0.0
    %3860 = vmatpush1.xpose.msra.mxu0 0.0
    %3861 = vmatprep.subr.mxu0 0.0
    %3862 = vmatpush1.xpose.msra.mxu0 0.0
    %3863 = vmatprep.subr.mxu0 0.0
    %3864 = vmatpush1.xpose.msra.mxu0 0.0
    %3865 = vmatprep.subr.mxu0 0.0
    %3866 = vmatpush1.xpose.msra.mxu0 0.0
    %3867 = vmatprep.subr.mxu0 0.0
    %3868 = vmatpush1.xpose.msra.mxu0 0.0
    %3869 = vmatprep.subr.mxu0 0.0
    %3870 = vmatpush1.xpose.msra.mxu0 0.0
    %3871 = vmatprep.subr.mxu0 0.0
    %3872 = vmatpush1.xpose.msra.mxu0 0.0
    %3873 = vmatprep.subr.mxu0 0.0
    %3874 = vmatpush1.xpose.msra.mxu0 0.0
    %3875 = vmatprep.subr.mxu0 0.0
    %3876 = vmatpush1.xpose.msra.mxu0 0.0
    %3877 = vmatprep.subr.mxu0 0.0
    %3878 = vmatpush1.xpose.msra.mxu0 0.0
    %3879 = vmatprep.subr.mxu0 0.0
    %3880 = vmatpush1.xpose.msra.mxu0 0.0
    %3881 = vmatprep.subr.mxu0 0.0
    %3882 = vmatpush1.xpose.msra.mxu0 0.0
    %3883 = vmatprep.subr.mxu0 0.0
    %3884 = vmatpush1.xpose.msra.mxu0 0.0
    %3885 = vmatprep.mubr.f32.mxu0 0.0
    %3886 = vmatmul.mubr.f32.gmra.mrb[0].mxu0 %v3819
    %v3887 = vpop.f32.mrb[0].mxu0
    %v3888 = vadd.f32 0.0, %v3887
    %v3889 = vpop.f32.mrb[0].mxu0
    %3890 = vdwg.mxu0
    %v3892 = vsel %vm601, %v2791, 0
    %3894 = vmatprep.subr.mxu0 0.0
    %3895 = vmatpush1.xpose.msra.mxu0 %v3892
    %3896 = vmatprep.subr.mxu0 0.0
    %3897 = vmatpush1.xpose.msra.mxu0 0.0
    %3898 = vmatprep.subr.mxu0 0.0
    %3899 = vmatpush1.xpose.msra.mxu0 0.0
    %3900 = vmatprep.subr.mxu0 0.0
    %3901 = vmatpush1.xpose.msra.mxu0 0.0
    %3902 = vmatprep.subr.mxu0 0.0
    %3903 = vmatpush1.xpose.msra.mxu0 0.0
    %3904 = vmatprep.subr.mxu0 0.0
    %3905 = vmatpush1.xpose.msra.mxu0 0.0
    %3906 = vmatprep.subr.mxu0 0.0
    %3907 = vmatpush1.xpose.msra.mxu0 0.0
    %3908 = vmatprep.subr.mxu0 0.0
    %3909 = vmatpush1.xpose.msra.mxu0 0.0
    %3910 = vmatprep.subr.mxu0 0.0
    %3911 = vmatpush1.xpose.msra.mxu0 0.0
    %3912 = vmatprep.subr.mxu0 0.0
    %3913 = vmatpush1.xpose.msra.mxu0 0.0
    %3914 = vmatprep.subr.mxu0 0.0
    %3915 = vmatpush1.xpose.msra.mxu0 0.0
    %3916 = vmatprep.subr.mxu0 0.0
    %3917 = vmatpush1.xpose.msra.mxu0 0.0
    %3918 = vmatprep.subr.mxu0 0.0
    %3919 = vmatpush1.xpose.msra.mxu0 0.0
    %3920 = vmatprep.subr.mxu0 0.0
    %3921 = vmatpush1.xpose.msra.mxu0 0.0
    %3922 = vmatprep.subr.mxu0 0.0
    %3923 = vmatpush1.xpose.msra.mxu0 0.0
    %3924 = vmatprep.subr.mxu0 0.0
    %3925 = vmatpush1.xpose.msra.mxu0 0.0
    %3926 = vmatprep.subr.mxu0 0.0
    %3927 = vmatpush1.xpose.msra.mxu0 0.0
    %3928 = vmatprep.subr.mxu0 0.0
    %3929 = vmatpush1.xpose.msra.mxu0 0.0
    %3930 = vmatprep.subr.mxu0 0.0
    %3931 = vmatpush1.xpose.msra.mxu0 0.0
    %3932 = vmatprep.subr.mxu0 0.0
    %3933 = vmatpush1.xpose.msra.mxu0 0.0
    %3934 = vmatprep.subr.mxu0 0.0
    %3935 = vmatpush1.xpose.msra.mxu0 0.0
    %3936 = vmatprep.subr.mxu0 0.0
    %3937 = vmatpush1.xpose.msra.mxu0 0.0
    %3938 = vmatprep.subr.mxu0 0.0
    %3939 = vmatpush1.xpose.msra.mxu0 0.0
    %3940 = vmatprep.subr.mxu0 0.0
    %3941 = vmatpush1.xpose.msra.mxu0 0.0
    %3942 = vmatprep.subr.mxu0 0.0
    %3943 = vmatpush1.xpose.msra.mxu0 0.0
    %3944 = vmatprep.subr.mxu0 0.0
    %3945 = vmatpush1.xpose.msra.mxu0 0.0
    %3946 = vmatprep.subr.mxu0 0.0
    %3947 = vmatpush1.xpose.msra.mxu0 0.0
    %3948 = vmatprep.subr.mxu0 0.0
    %3949 = vmatpush1.xpose.msra.mxu0 0.0
    %3950 = vmatprep.subr.mxu0 0.0
    %3951 = vmatpush1.xpose.msra.mxu0 0.0
    %3952 = vmatprep.subr.mxu0 0.0
    %3953 = vmatpush1.xpose.msra.mxu0 0.0
    %3954 = vmatprep.subr.mxu0 0.0
    %3955 = vmatpush1.xpose.msra.mxu0 0.0
    %3956 = vmatprep.subr.mxu0 0.0
    %3957 = vmatpush1.xpose.msra.mxu0 0.0
    %3958 = vmatprep.mubr.f32.mxu0 0.0
    %3959 = vmatmul.mubr.f32.gmra.mrb[0].mxu0 %v3892
    %v3960 = vpop.f32.mrb[0].mxu0
    %v3961 = vadd.f32 0.0, %v3960
    %v3962 = vpop.f32.mrb[0].mxu0
    %3963 = vdwg.mxu0
    %v3965 = vsel %vm601, %v2793, 0
    %3967 = vmatprep.subr.mxu0 0.0
    %3968 = vmatpush1.xpose.msra.mxu0 %v3965
    %3969 = vmatprep.subr.mxu0 0.0
    %3970 = vmatpush1.xpose.msra.mxu0 0.0
    %3971 = vmatprep.subr.mxu0 0.0
    %3972 = vmatpush1.xpose.msra.mxu0 0.0
    %3973 = vmatprep.subr.mxu0 0.0
    %3974 = vmatpush1.xpose.msra.mxu0 0.0
    %3975 = vmatprep.subr.mxu0 0.0
    %3976 = vmatpush1.xpose.msra.mxu0 0.0
    %3977 = vmatprep.subr.mxu0 0.0
    %3978 = vmatpush1.xpose.msra.mxu0 0.0
    %3979 = vmatprep.subr.mxu0 0.0
    %3980 = vmatpush1.xpose.msra.mxu0 0.0
    %3981 = vmatprep.subr.mxu0 0.0
    %3982 = vmatpush1.xpose.msra.mxu0 0.0
    %3983 = vmatprep.subr.mxu0 0.0
    %3984 = vmatpush1.xpose.msra.mxu0 0.0
    %3985 = vmatprep.subr.mxu0 0.0
    %3986 = vmatpush1.xpose.msra.mxu0 0.0
    %3987 = vmatprep.subr.mxu0 0.0
    %3988 = vmatpush1.xpose.msra.mxu0 0.0
    %3989 = vmatprep.subr.mxu0 0.0
    %3990 = vmatpush1.xpose.msra.mxu0 0.0
    %3991 = vmatprep.subr.mxu0 0.0
    %3992 = vmatpush1.xpose.msra.mxu0 0.0
    %3993 = vmatprep.subr.mxu0 0.0
    %3994 = vmatpush1.xpose.msra.mxu0 0.0
    %3995 = vmatprep.subr.mxu0 0.0
    %3996 = vmatpush1.xpose.msra.mxu0 0.0
    %3997 = vmatprep.subr.mxu0 0.0
    %3998 = vmatpush1.xpose.msra.mxu0 0.0
    %3999 = vmatprep.subr.mxu0 0.0
    %4000 = vmatpush1.xpose.msra.mxu0 0.0
    %4001 = vmatprep.subr.mxu0 0.0
    %4002 = vmatpush1.xpose.msra.mxu0 0.0
    %4003 = vmatprep.subr.mxu0 0.0
    %4004 = vmatpush1.xpose.msra.mxu0 0.0
    %4005 = vmatprep.subr.mxu0 0.0
    %4006 = vmatpush1.xpose.msra.mxu0 0.0
    %4007 = vmatprep.subr.mxu0 0.0
    %4008 = vmatpush1.xpose.msra.mxu0 0.0
    %4009 = vmatprep.subr.mxu0 0.0
    %4010 = vmatpush1.xpose.msra.mxu0 0.0
    %4011 = vmatprep.subr.mxu0 0.0
    %4012 = vmatpush1.xpose.msra.mxu0 0.0
    %4013 = vmatprep.subr.mxu0 0.0
    %4014 = vmatpush1.xpose.msra.mxu0 0.0
    %4015 = vmatprep.subr.mxu0 0.0
    %4016 = vmatpush1.xpose.msra.mxu0 0.0
    %4017 = vmatprep.subr.mxu0 0.0
    %4018 = vmatpush1.xpose.msra.mxu0 0.0
    %4019 = vmatprep.subr.mxu0 0.0
    %4020 = vmatpush1.xpose.msra.mxu0 0.0
    %4021 = vmatprep.subr.mxu0 0.0
    %4022 = vmatpush1.xpose.msra.mxu0 0.0
    %4023 = vmatprep.subr.mxu0 0.0
    %4024 = vmatpush1.xpose.msra.mxu0 0.0
    %4025 = vmatprep.subr.mxu0 0.0
    %4026 = vmatpush1.xpose.msra.mxu0 0.0
    %4027 = vmatprep.subr.mxu0 0.0
    %4028 = vmatpush1.xpose.msra.mxu0 0.0
    %4029 = vmatprep.subr.mxu0 0.0
    %4030 = vmatpush1.xpose.msra.mxu0 0.0
    %4031 = vmatprep.mubr.f32.mxu0 0.0
    %4032 = vmatmul.mubr.f32.gmra.mrb[0].mxu0 %v3965
    %v4033 = vpop.f32.mrb[0].mxu0
    %v4034 = vadd.f32 0.0, %v4033
    %v4035 = vpop.f32.mrb[0].mxu0
    %4036 = vdwg.mxu0
    %v4038 = vsel %vm601, %v2795, 0
    %4040 = vmatprep.subr.mxu0 0.0
    %4041 = vmatpush1.xpose.msra.mxu0 %v4038
    %4042 = vmatprep.subr.mxu0 0.0
    %4043 = vmatpush1.xpose.msra.mxu0 0.0
    %4044 = vmatprep.subr.mxu0 0.0
    %4045 = vmatpush1.xpose.msra.mxu0 0.0
    %4046 = vmatprep.subr.mxu0 0.0
    %4047 = vmatpush1.xpose.msra.mxu0 0.0
    %4048 = vmatprep.subr.mxu0 0.0
    %4049 = vmatpush1.xpose.msra.mxu0 0.0
    %4050 = vmatprep.subr.mxu0 0.0
    %4051 = vmatpush1.xpose.msra.mxu0 0.0
    %4052 = vmatprep.subr.mxu0 0.0
    %4053 = vmatpush1.xpose.msra.mxu0 0.0
    %4054 = vmatprep.subr.mxu0 0.0
    %4055 = vmatpush1.xpose.msra.mxu0 0.0
    %4056 = vmatprep.subr.mxu0 0.0
    %4057 = vmatpush1.xpose.msra.mxu0 0.0
    %4058 = vmatprep.subr.mxu0 0.0
    %4059 = vmatpush1.xpose.msra.mxu0 0.0
    %4060 = vmatprep.subr.mxu0 0.0
    %4061 = vmatpush1.xpose.msra.mxu0 0.0
    %4062 = vmatprep.subr.mxu0 0.0
    %4063 = vmatpush1.xpose.msra.mxu0 0.0
    %4064 = vmatprep.subr.mxu0 0.0
    %4065 = vmatpush1.xpose.msra.mxu0 0.0
    %4066 = vmatprep.subr.mxu0 0.0
    %4067 = vmatpush1.xpose.msra.mxu0 0.0
    %4068 = vmatprep.subr.mxu0 0.0
    %4069 = vmatpush1.xpose.msra.mxu0 0.0
    %4070 = vmatprep.subr.mxu0 0.0
    %4071 = vmatpush1.xpose.msra.mxu0 0.0
    %4072 = vmatprep.subr.mxu0 0.0
    %4073 = vmatpush1.xpose.msra.mxu0 0.0
    %4074 = vmatprep.subr.mxu0 0.0
    %4075 = vmatpush1.xpose.msra.mxu0 0.0
    %4076 = vmatprep.subr.mxu0 0.0
    %4077 = vmatpush1.xpose.msra.mxu0 0.0
    %4078 = vmatprep.subr.mxu0 0.0
    %4079 = vmatpush1.xpose.msra.mxu0 0.0
    %4080 = vmatprep.subr.mxu0 0.0
    %4081 = vmatpush1.xpose.msra.mxu0 0.0
    %4082 = vmatprep.subr.mxu0 0.0
    %4083 = vmatpush1.xpose.msra.mxu0 0.0
    %4084 = vmatprep.subr.mxu0 0.0
    %4085 = vmatpush1.xpose.msra.mxu0 0.0
    %4086 = vmatprep.subr.mxu0 0.0
    %4087 = vmatpush1.xpose.msra.mxu0 0.0
    %4088 = vmatprep.subr.mxu0 0.0
    %4089 = vmatpush1.xpose.msra.mxu0 0.0
    %4090 = vmatprep.subr.mxu0 0.0
    %4091 = vmatpush1.xpose.msra.mxu0 0.0
    %4092 = vmatprep.subr.mxu0 0.0
    %4093 = vmatpush1.xpose.msra.mxu0 0.0
    %4094 = vmatprep.subr.mxu0 0.0
    %4095 = vmatpush1.xpose.msra.mxu0 0.0
    %4096 = vmatprep.subr.mxu0 0.0
    %4097 = vmatpush1.xpose.msra.mxu0 0.0
    %4098 = vmatprep.subr.mxu0 0.0
    %4099 = vmatpush1.xpose.msra.mxu0 0.0
    %4100 = vmatprep.subr.mxu0 0.0
    %4101 = vmatpush1.xpose.msra.mxu0 0.0
    %4102 = vmatprep.subr.mxu0 0.0
    %4103 = vmatpush1.xpose.msra.mxu0 0.0
    %4104 = vmatprep.mubr.f32.mxu0 0.0
    %4105 = vmatmul.mubr.f32.gmra.mrb[0].mxu0 %v4038
    %v4106 = vpop.f32.mrb[0].mxu0
    %v4107 = vadd.f32 0.0, %v4106
    %v4108 = vpop.f32.mrb[0].mxu0
    %4109 = vdwg.mxu0
    %4110 = vmatprep.subr.mxu0 0.0
    %4111 = vmatpush1.xpose.msra.mxu0 %v3235
    %4112 = vmatprep.subr.mxu0 0.0
    %4113 = vmatpush1.xpose.msra.mxu0 0.0
    %4114 = vmatprep.subr.mxu0 0.0
    %4115 = vmatpush1.xpose.msra.mxu0 0.0
    %4116 = vmatprep.subr.mxu0 0.0
    %4117 = vmatpush1.xpose.msra.mxu0 0.0
    %4118 = vmatprep.subr.mxu0 0.0
    %4119 = vmatpush1.xpose.msra.mxu0 0.0
    %4120 = vmatprep.subr.mxu0 0.0
    %4121 = vmatpush1.xpose.msra.mxu0 0.0
    %4122 = vmatprep.subr.mxu0 0.0
    %4123 = vmatpush1.xpose.msra.mxu0 0.0
    %4124 = vmatprep.subr.mxu0 0.0
    %4125 = vmatpush1.xpose.msra.mxu0 0.0
    %4126 = vmatprep.subr.mxu0 0.0
    %4127 = vmatpush1.xpose.msra.mxu0 0.0
    %4128 = vmatprep.subr.mxu0 0.0
    %4129 = vmatpush1.xpose.msra.mxu0 0.0
    %4130 = vmatprep.subr.mxu0 0.0
    %4131 = vmatpush1.xpose.msra.mxu0 0.0
    %4132 = vmatprep.subr.mxu0 0.0
    %4133 = vmatpush1.xpose.msra.mxu0 0.0
    %4134 = vmatprep.subr.mxu0 0.0
    %4135 = vmatpush1.xpose.msra.mxu0 0.0
    %4136 = vmatprep.subr.mxu0 0.0
    %4137 = vmatpush1.xpose.msra.mxu0 0.0
    %4138 = vmatprep.subr.mxu0 0.0
    %4139 = vmatpush1.xpose.msra.mxu0 0.0
    %4140 = vmatprep.subr.mxu0 0.0
    %4141 = vmatpush1.xpose.msra.mxu0 0.0
    %4142 = vmatprep.subr.mxu0 0.0
    %4143 = vmatpush1.xpose.msra.mxu0 0.0
    %4144 = vmatprep.subr.mxu0 0.0
    %4145 = vmatpush1.xpose.msra.mxu0 0.0
    %4146 = vmatprep.subr.mxu0 0.0
    %4147 = vmatpush1.xpose.msra.mxu0 0.0
    %4148 = vmatprep.subr.mxu0 0.0
    %4149 = vmatpush1.xpose.msra.mxu0 0.0
    %4150 = vmatprep.subr.mxu0 0.0
    %4151 = vmatpush1.xpose.msra.mxu0 0.0
    %4152 = vmatprep.subr.mxu0 0.0
    %4153 = vmatpush1.xpose.msra.mxu0 0.0
    %4154 = vmatprep.subr.mxu0 0.0
    %4155 = vmatpush1.xpose.msra.mxu0 0.0
    %4156 = vmatprep.subr.mxu0 0.0
    %4157 = vmatpush1.xpose.msra.mxu0 0.0
    %4158 = vmatprep.subr.mxu0 0.0
    %4159 = vmatpush1.xpose.msra.mxu0 0.0
    %4160 = vmatprep.subr.mxu0 0.0
    %4161 = vmatpush1.xpose.msra.mxu0 0.0
    %4162 = vmatprep.subr.mxu0 0.0
    %4163 = vmatpush1.xpose.msra.mxu0 0.0
    %4164 = vmatprep.subr.mxu0 0.0
    %4165 = vmatpush1.xpose.msra.mxu0 0.0
    %4166 = vmatprep.subr.mxu0 0.0
    %4167 = vmatpush1.xpose.msra.mxu0 0.0
    %4168 = vmatprep.subr.mxu0 0.0
    %4169 = vmatpush1.xpose.msra.mxu0 0.0
    %4170 = vmatprep.subr.mxu0 0.0
    %4171 = vmatpush1.xpose.msra.mxu0 0.0
    %4172 = vmatprep.subr.mxu0 0.0
    %4173 = vmatpush1.xpose.msra.mxu0 0.0
    %4174 = vmatprep.mubr.f32.mxu0 0.0
    %4175 = vmatmul.mubr.f32.gmra.mrb[0].mxu0 %v2797
    %v4176 = vpop.f32.mrb[0].mxu0
    %v4177 = vadd.f32 0.0, %v4176
    %v4178 = vpop.f32.mrb[0].mxu0
    %4179 = vdwg.mxu0
    %4180 = vmatprep.subr.mxu0 0.0
    %4181 = vmatpush1.xpose.msra.mxu0 %v3308
    %4182 = vmatprep.subr.mxu0 0.0
    %4183 = vmatpush1.xpose.msra.mxu0 0.0
    %4184 = vmatprep.subr.mxu0 0.0
    %4185 = vmatpush1.xpose.msra.mxu0 0.0
    %4186 = vmatprep.subr.mxu0 0.0
    %4187 = vmatpush1.xpose.msra.mxu0 0.0
    %4188 = vmatprep.subr.mxu0 0.0
    %4189 = vmatpush1.xpose.msra.mxu0 0.0
    %4190 = vmatprep.subr.mxu0 0.0
    %4191 = vmatpush1.xpose.msra.mxu0 0.0
    %4192 = vmatprep.subr.mxu0 0.0
    %4193 = vmatpush1.xpose.msra.mxu0 0.0
    %4194 = vmatprep.subr.mxu0 0.0
    %4195 = vmatpush1.xpose.msra.mxu0 0.0
    %4196 = vmatprep.subr.mxu0 0.0
    %4197 = vmatpush1.xpose.msra.mxu0 0.0
    %4198 = vmatprep.subr.mxu0 0.0
    %4199 = vmatpush1.xpose.msra.mxu0 0.0
    %4200 = vmatprep.subr.mxu0 0.0
    %4201 = vmatpush1.xpose.msra.mxu0 0.0
    %4202 = vmatprep.subr.mxu0 0.0
    %4203 = vmatpush1.xpose.msra.mxu0 0.0
    %4204 = vmatprep.subr.mxu0 0.0
    %4205 = vmatpush1.xpose.msra.mxu0 0.0
    %4206 = vmatprep.subr.mxu0 0.0
    %4207 = vmatpush1.xpose.msra.mxu0 0.0
    %4208 = vmatprep.subr.mxu0 0.0
    %4209 = vmatpush1.xpose.msra.mxu0 0.0
    %4210 = vmatprep.subr.mxu0 0.0
    %4211 = vmatpush1.xpose.msra.mxu0 0.0
    %4212 = vmatprep.subr.mxu0 0.0
    %4213 = vmatpush1.xpose.msra.mxu0 0.0
    %4214 = vmatprep.subr.mxu0 0.0
    %4215 = vmatpush1.xpose.msra.mxu0 0.0
    %4216 = vmatprep.subr.mxu0 0.0
    %4217 = vmatpush1.xpose.msra.mxu0 0.0
    %4218 = vmatprep.subr.mxu0 0.0
    %4219 = vmatpush1.xpose.msra.mxu0 0.0
    %4220 = vmatprep.subr.mxu0 0.0
    %4221 = vmatpush1.xpose.msra.mxu0 0.0
    %4222 = vmatprep.subr.mxu0 0.0
    %4223 = vmatpush1.xpose.msra.mxu0 0.0
    %4224 = vmatprep.subr.mxu0 0.0
    %4225 = vmatpush1.xpose.msra.mxu0 0.0
    %4226 = vmatprep.subr.mxu0 0.0
    %4227 = vmatpush1.xpose.msra.mxu0 0.0
    %4228 = vmatprep.subr.mxu0 0.0
    %4229 = vmatpush1.xpose.msra.mxu0 0.0
    %4230 = vmatprep.subr.mxu0 0.0
    %4231 = vmatpush1.xpose.msra.mxu0 0.0
    %4232 = vmatprep.subr.mxu0 0.0
    %4233 = vmatpush1.xpose.msra.mxu0 0.0
    %4234 = vmatprep.subr.mxu0 0.0
    %4235 = vmatpush1.xpose.msra.mxu0 0.0
    %4236 = vmatprep.subr.mxu0 0.0
    %4237 = vmatpush1.xpose.msra.mxu0 0.0
    %4238 = vmatprep.subr.mxu0 0.0
    %4239 = vmatpush1.xpose.msra.mxu0 0.0
    %4240 = vmatprep.subr.mxu0 0.0
    %4241 = vmatpush1.xpose.msra.mxu0 0.0
    %4242 = vmatprep.subr.mxu0 0.0
    %4243 = vmatpush1.xpose.msra.mxu0 0.0
    %4244 = vmatprep.mubr.f32.mxu0 0.0
    %4245 = vmatmul.mubr.f32.gmra.mrb[0].mxu0 %v2870
    %v4246 = vpop.f32.mrb[0].mxu0
    %v4247 = vadd.f32 0.0, %v4246
    %v4248 = vpop.f32.mrb[0].mxu0
    %4249 = vdwg.mxu0
    %4250 = vmatprep.subr.mxu0 0.0
    %4251 = vmatpush1.xpose.msra.mxu0 %v3381
    %4252 = vmatprep.subr.mxu0 0.0
    %4253 = vmatpush1.xpose.msra.mxu0 0.0
    %4254 = vmatprep.subr.mxu0 0.0
    %4255 = vmatpush1.xpose.msra.mxu0 0.0
    %4256 = vmatprep.subr.mxu0 0.0
    %4257 = vmatpush1.xpose.msra.mxu0 0.0
    %4258 = vmatprep.subr.mxu0 0.0
    %4259 = vmatpush1.xpose.msra.mxu0 0.0
    %4260 = vmatprep.subr.mxu0 0.0
    %4261 = vmatpush1.xpose.msra.mxu0 0.0
    %4262 = vmatprep.subr.mxu0 0.0
    %4263 = vmatpush1.xpose.msra.mxu0 0.0
    %4264 = vmatprep.subr.mxu0 0.0
    %4265 = vmatpush1.xpose.msra.mxu0 0.0
    %4266 = vmatprep.subr.mxu0 0.0
    %4267 = vmatpush1.xpose.msra.mxu0 0.0
    %4268 = vmatprep.subr.mxu0 0.0
    %4269 = vmatpush1.xpose.msra.mxu0 0.0
    %4270 = vmatprep.subr.mxu0 0.0
    %4271 = vmatpush1.xpose.msra.mxu0 0.0
    %4272 = vmatprep.subr.mxu0 0.0
    %4273 = vmatpush1.xpose.msra.mxu0 0.0
    %4274 = vmatprep.subr.mxu0 0.0
    %4275 = vmatpush1.xpose.msra.mxu0 0.0
    %4276 = vmatprep.subr.mxu0 0.0
    %4277 = vmatpush1.xpose.msra.mxu0 0.0
    %4278 = vmatprep.subr.mxu0 0.0
    %4279 = vmatpush1.xpose.msra.mxu0 0.0
    %4280 = vmatprep.subr.mxu0 0.0
    %4281 = vmatpush1.xpose.msra.mxu0 0.0
    %4282 = vmatprep.subr.mxu0 0.0
    %4283 = vmatpush1.xpose.msra.mxu0 0.0
    %4284 = vmatprep.subr.mxu0 0.0
    %4285 = vmatpush1.xpose.msra.mxu0 0.0
    %4286 = vmatprep.subr.mxu0 0.0
    %4287 = vmatpush1.xpose.msra.mxu0 0.0
    %4288 = vmatprep.subr.mxu0 0.0
    %4289 = vmatpush1.xpose.msra.mxu0 0.0
    %4290 = vmatprep.subr.mxu0 0.0
    %4291 = vmatpush1.xpose.msra.mxu0 0.0
    %4292 = vmatprep.subr.mxu0 0.0
    %4293 = vmatpush1.xpose.msra.mxu0 0.0
    %4294 = vmatprep.subr.mxu0 0.0
    %4295 = vmatpush1.xpose.msra.mxu0 0.0
    %4296 = vmatprep.subr.mxu0 0.0
    %4297 = vmatpush1.xpose.msra.mxu0 0.0
    %4298 = vmatprep.subr.mxu0 0.0
    %4299 = vmatpush1.xpose.msra.mxu0 0.0
    %4300 = vmatprep.subr.mxu0 0.0
    %4301 = vmatpush1.xpose.msra.mxu0 0.0
    %4302 = vmatprep.subr.mxu0 0.0
    %4303 = vmatpush1.xpose.msra.mxu0 0.0
    %4304 = vmatprep.subr.mxu0 0.0
    %4305 = vmatpush1.xpose.msra.mxu0 0.0
    %4306 = vmatprep.subr.mxu0 0.0
    %4307 = vmatpush1.xpose.msra.mxu0 0.0
    %4308 = vmatprep.subr.mxu0 0.0
    %4309 = vmatpush1.xpose.msra.mxu0 0.0
    %4310 = vmatprep.subr.mxu0 0.0
    %4311 = vmatpush1.xpose.msra.mxu0 0.0
    %4312 = vmatprep.subr.mxu0 0.0
    %4313 = vmatpush1.xpose.msra.mxu0 0.0
    %4314 = vmatprep.mubr.f32.mxu0 0.0
    %4315 = vmatmul.mubr.f32.gmra.mrb[0].mxu0 %v2943
    %v4316 = vpop.f32.mrb[0].mxu0
    %v4317 = vadd.f32 0.0, %v4316
    %v4318 = vpop.f32.mrb[0].mxu0
    %4319 = vdwg.mxu0
    %4320 = vmatprep.subr.mxu0 0.0
    %4321 = vmatpush1.xpose.msra.mxu0 %v3454
    %4322 = vmatprep.subr.mxu0 0.0
    %4323 = vmatpush1.xpose.msra.mxu0 0.0
    %4324 = vmatprep.subr.mxu0 0.0
    %4325 = vmatpush1.xpose.msra.mxu0 0.0
    %4326 = vmatprep.subr.mxu0 0.0
    %4327 = vmatpush1.xpose.msra.mxu0 0.0
    %4328 = vmatprep.subr.mxu0 0.0
    %4329 = vmatpush1.xpose.msra.mxu0 0.0
    %4330 = vmatprep.subr.mxu0 0.0
    %4331 = vmatpush1.xpose.msra.mxu0 0.0
    %4332 = vmatprep.subr.mxu0 0.0
    %4333 = vmatpush1.xpose.msra.mxu0 0.0
    %4334 = vmatprep.subr.mxu0 0.0
    %4335 = vmatpush1.xpose.msra.mxu0 0.0
    %4336 = vmatprep.subr.mxu0 0.0
    %4337 = vmatpush1.xpose.msra.mxu0 0.0
    %4338 = vmatprep.subr.mxu0 0.0
    %4339 = vmatpush1.xpose.msra.mxu0 0.0
    %4340 = vmatprep.subr.mxu0 0.0
    %4341 = vmatpush1.xpose.msra.mxu0 0.0
    %4342 = vmatprep.subr.mxu0 0.0
    %4343 = vmatpush1.xpose.msra.mxu0 0.0
    %4344 = vmatprep.subr.mxu0 0.0
    %4345 = vmatpush1.xpose.msra.mxu0 0.0
    %4346 = vmatprep.subr.mxu0 0.0
    %4347 = vmatpush1.xpose.msra.mxu0 0.0
    %4348 = vmatprep.subr.mxu0 0.0
    %4349 = vmatpush1.xpose.msra.mxu0 0.0
    %4350 = vmatprep.subr.mxu0 0.0
    %4351 = vmatpush1.xpose.msra.mxu0 0.0
    %4352 = vmatprep.subr.mxu0 0.0
    %4353 = vmatpush1.xpose.msra.mxu0 0.0
    %4354 = vmatprep.subr.mxu0 0.0
    %4355 = vmatpush1.xpose.msra.mxu0 0.0
    %4356 = vmatprep.subr.mxu0 0.0
    %4357 = vmatpush1.xpose.msra.mxu0 0.0
    %4358 = vmatprep.subr.mxu0 0.0
    %4359 = vmatpush1.xpose.msra.mxu0 0.0
    %4360 = vmatprep.subr.mxu0 0.0
    %4361 = vmatpush1.xpose.msra.mxu0 0.0
    %4362 = vmatprep.subr.mxu0 0.0
    %4363 = vmatpush1.xpose.msra.mxu0 0.0
    %4364 = vmatprep.subr.mxu0 0.0
    %4365 = vmatpush1.xpose.msra.mxu0 0.0
    %4366 = vmatprep.subr.mxu0 0.0
    %4367 = vmatpush1.xpose.msra.mxu0 0.0
    %4368 = vmatprep.subr.mxu0 0.0
    %4369 = vmatpush1.xpose.msra.mxu0 0.0
    %4370 = vmatprep.subr.mxu0 0.0
    %4371 = vmatpush1.xpose.msra.mxu0 0.0
    %4372 = vmatprep.subr.mxu0 0.0
    %4373 = vmatpush1.xpose.msra.mxu0 0.0
    %4374 = vmatprep.subr.mxu0 0.0
    %4375 = vmatpush1.xpose.msra.mxu0 0.0
    %4376 = vmatprep.subr.mxu0 0.0
    %4377 = vmatpush1.xpose.msra.mxu0 0.0
    %4378 = vmatprep.subr.mxu0 0.0
    %4379 = vmatpush1.xpose.msra.mxu0 0.0
    %4380 = vmatprep.subr.mxu0 0.0
    %4381 = vmatpush1.xpose.msra.mxu0 0.0
    %4382 = vmatprep.subr.mxu0 0.0
    %4383 = vmatpush1.xpose.msra.mxu0 0.0
    %4384 = vmatprep.mubr.f32.mxu0 0.0
    %4385 = vmatmul.mubr.f32.gmra.mrb[0].mxu0 %v3016
    %v4386 = vpop.f32.mrb[0].mxu0
    %v4387 = vadd.f32 0.0, %v4386
    %v4388 = vpop.f32.mrb[0].mxu0
    %4389 = vdwg.mxu0
    %4390 = vmatprep.subr.mxu0 0.0
    %4391 = vmatpush1.xpose.msra.mxu0 %v3527
    %4392 = vmatprep.subr.mxu0 0.0
    %4393 = vmatpush1.xpose.msra.mxu0 0.0
    %4394 = vmatprep.subr.mxu0 0.0
    %4395 = vmatpush1.xpose.msra.mxu0 0.0
    %4396 = vmatprep.subr.mxu0 0.0
    %4397 = vmatpush1.xpose.msra.mxu0 0.0
    %4398 = vmatprep.subr.mxu0 0.0
    %4399 = vmatpush1.xpose.msra.mxu0 0.0
    %4400 = vmatprep.subr.mxu0 0.0
    %4401 = vmatpush1.xpose.msra.mxu0 0.0
    %4402 = vmatprep.subr.mxu0 0.0
    %4403 = vmatpush1.xpose.msra.mxu0 0.0
    %4404 = vmatprep.subr.mxu0 0.0
    %4405 = vmatpush1.xpose.msra.mxu0 0.0
    %4406 = vmatprep.subr.mxu0 0.0
    %4407 = vmatpush1.xpose.msra.mxu0 0.0
    %4408 = vmatprep.subr.mxu0 0.0
    %4409 = vmatpush1.xpose.msra.mxu0 0.0
    %4410 = vmatprep.subr.mxu0 0.0
    %4411 = vmatpush1.xpose.msra.mxu0 0.0
    %4412 = vmatprep.subr.mxu0 0.0
    %4413 = vmatpush1.xpose.msra.mxu0 0.0
    %4414 = vmatprep.subr.mxu0 0.0
    %4415 = vmatpush1.xpose.msra.mxu0 0.0
    %4416 = vmatprep.subr.mxu0 0.0
    %4417 = vmatpush1.xpose.msra.mxu0 0.0
    %4418 = vmatprep.subr.mxu0 0.0
    %4419 = vmatpush1.xpose.msra.mxu0 0.0
    %4420 = vmatprep.subr.mxu0 0.0
    %4421 = vmatpush1.xpose.msra.mxu0 0.0
    %4422 = vmatprep.subr.mxu0 0.0
    %4423 = vmatpush1.xpose.msra.mxu0 0.0
    %4424 = vmatprep.subr.mxu0 0.0
    %4425 = vmatpush1.xpose.msra.mxu0 0.0
    %4426 = vmatprep.subr.mxu0 0.0
    %4427 = vmatpush1.xpose.msra.mxu0 0.0
    %4428 = vmatprep.subr.mxu0 0.0
    %4429 = vmatpush1.xpose.msra.mxu0 0.0
    %4430 = vmatprep.subr.mxu0 0.0
    %4431 = vmatpush1.xpose.msra.mxu0 0.0
    %4432 = vmatprep.subr.mxu0 0.0
    %4433 = vmatpush1.xpose.msra.mxu0 0.0
    %4434 = vmatprep.subr.mxu0 0.0
    %4435 = vmatpush1.xpose.msra.mxu0 0.0
    %4436 = vmatprep.subr.mxu0 0.0
    %4437 = vmatpush1.xpose.msra.mxu0 0.0
    %4438 = vmatprep.subr.mxu0 0.0
    %4439 = vmatpush1.xpose.msra.mxu0 0.0
    %4440 = vmatprep.subr.mxu0 0.0
    %4441 = vmatpush1.xpose.msra.mxu0 0.0
    %4442 = vmatprep.subr.mxu0 0.0
    %4443 = vmatpush1.xpose.msra.mxu0 0.0
    %4444 = vmatprep.subr.mxu0 0.0
    %4445 = vmatpush1.xpose.msra.mxu0 0.0
    %4446 = vmatprep.subr.mxu0 0.0
    %4447 = vmatpush1.xpose.msra.mxu0 0.0
    %4448 = vmatprep.subr.mxu0 0.0
    %4449 = vmatpush1.xpose.msra.mxu0 0.0
    %4450 = vmatprep.subr.mxu0 0.0
    %4451 = vmatpush1.xpose.msra.mxu0 0.0
    %4452 = vmatprep.subr.mxu0 0.0
    %4453 = vmatpush1.xpose.msra.mxu0 0.0
    %4454 = vmatprep.mubr.f32.mxu0 0.0
    %4455 = vmatmul.mubr.f32.gmra.mrb[0].mxu0 %v3089
    %v4456 = vpop.f32.mrb[0].mxu0
    %v4457 = vadd.f32 0.0, %v4456
    %v4458 = vpop.f32.mrb[0].mxu0
    %4459 = vdwg.mxu0
    %4460 = vmatprep.subr.mxu0 0.0
    %4461 = vmatpush1.xpose.msra.mxu0 %v3600
    %4462 = vmatprep.subr.mxu0 0.0
    %4463 = vmatpush1.xpose.msra.mxu0 0.0
    %4464 = vmatprep.subr.mxu0 0.0
    %4465 = vmatpush1.xpose.msra.mxu0 0.0
    %4466 = vmatprep.subr.mxu0 0.0
    %4467 = vmatpush1.xpose.msra.mxu0 0.0
    %4468 = vmatprep.subr.mxu0 0.0
    %4469 = vmatpush1.xpose.msra.mxu0 0.0
    %4470 = vmatprep.subr.mxu0 0.0
    %4471 = vmatpush1.xpose.msra.mxu0 0.0
    %4472 = vmatprep.subr.mxu0 0.0
    %4473 = vmatpush1.xpose.msra.mxu0 0.0
    %4474 = vmatprep.subr.mxu0 0.0
    %4475 = vmatpush1.xpose.msra.mxu0 0.0
    %4476 = vmatprep.subr.mxu0 0.0
    %4477 = vmatpush1.xpose.msra.mxu0 0.0
    %4478 = vmatprep.subr.mxu0 0.0
    %4479 = vmatpush1.xpose.msra.mxu0 0.0
    %4480 = vmatprep.subr.mxu0 0.0
    %4481 = vmatpush1.xpose.msra.mxu0 0.0
    %4482 = vmatprep.subr.mxu0 0.0
    %4483 = vmatpush1.xpose.msra.mxu0 0.0
    %4484 = vmatprep.subr.mxu0 0.0
    %4485 = vmatpush1.xpose.msra.mxu0 0.0
    %4486 = vmatprep.subr.mxu0 0.0
    %4487 = vmatpush1.xpose.msra.mxu0 0.0
    %4488 = vmatprep.subr.mxu0 0.0
    %4489 = vmatpush1.xpose.msra.mxu0 0.0
    %4490 = vmatprep.subr.mxu0 0.0
    %4491 = vmatpush1.xpose.msra.mxu0 0.0
    %4492 = vmatprep.subr.mxu0 0.0
    %4493 = vmatpush1.xpose.msra.mxu0 0.0
    %4494 = vmatprep.subr.mxu0 0.0
    %4495 = vmatpush1.xpose.msra.mxu0 0.0
    %4496 = vmatprep.subr.mxu0 0.0
    %4497 = vmatpush1.xpose.msra.mxu0 0.0
    %4498 = vmatprep.subr.mxu0 0.0
    %4499 = vmatpush1.xpose.msra.mxu0 0.0
    %4500 = vmatprep.subr.mxu0 0.0
    %4501 = vmatpush1.xpose.msra.mxu0 0.0
    %4502 = vmatprep.subr.mxu0 0.0
    %4503 = vmatpush1.xpose.msra.mxu0 0.0
    %4504 = vmatprep.subr.mxu0 0.0
    %4505 = vmatpush1.xpose.msra.mxu0 0.0
    %4506 = vmatprep.subr.mxu0 0.0
    %4507 = vmatpush1.xpose.msra.mxu0 0.0
    %4508 = vmatprep.subr.mxu0 0.0
    %4509 = vmatpush1.xpose.msra.mxu0 0.0
    %4510 = vmatprep.subr.mxu0 0.0
    %4511 = vmatpush1.xpose.msra.mxu0 0.0
    %4512 = vmatprep.subr.mxu0 0.0
    %4513 = vmatpush1.xpose.msra.mxu0 0.0
    %4514 = vmatprep.subr.mxu0 0.0
    %4515 = vmatpush1.xpose.msra.mxu0 0.0
    %4516 = vmatprep.subr.mxu0 0.0
    %4517 = vmatpush1.xpose.msra.mxu0 0.0
    %4518 = vmatprep.subr.mxu0 0.0
    %4519 = vmatpush1.xpose.msra.mxu0 0.0
    %4520 = vmatprep.subr.mxu0 0.0
    %4521 = vmatpush1.xpose.msra.mxu0 0.0
    %4522 = vmatprep.subr.mxu0 0.0
    %4523 = vmatpush1.xpose.msra.mxu0 0.0
    %4524 = vmatprep.mubr.f32.mxu0 0.0
    %4525 = vmatmul.mubr.f32.gmra.mrb[0].mxu0 %v3162
    %v4526 = vpop.f32.mrb[0].mxu0
    %v4527 = vadd.f32 0.0, %v4526
    %v4528 = vpop.f32.mrb[0].mxu0
    %4529 = vdwg.mxu0
    %4530 = vmatprep.subr.mxu0 0.0
    %4531 = vmatpush1.xpose.msra.mxu0 %v3673
    %4532 = vmatprep.subr.mxu0 0.0
    %4533 = vmatpush1.xpose.msra.mxu0 0.0
    %4534 = vmatprep.subr.mxu0 0.0
    %4535 = vmatpush1.xpose.msra.mxu0 0.0
    %4536 = vmatprep.subr.mxu0 0.0
    %4537 = vmatpush1.xpose.msra.mxu0 0.0
    %4538 = vmatprep.subr.mxu0 0.0
    %4539 = vmatpush1.xpose.msra.mxu0 0.0
    %4540 = vmatprep.subr.mxu0 0.0
    %4541 = vmatpush1.xpose.msra.mxu0 0.0
    %4542 = vmatprep.subr.mxu0 0.0
    %4543 = vmatpush1.xpose.msra.mxu0 0.0
    %4544 = vmatprep.subr.mxu0 0.0
    %4545 = vmatpush1.xpose.msra.mxu0 0.0
    %4546 = vmatprep.subr.mxu0 0.0
    %4547 = vmatpush1.xpose.msra.mxu0 0.0
    %4548 = vmatprep.subr.mxu0 0.0
    %4549 = vmatpush1.xpose.msra.mxu0 0.0
    %4550 = vmatprep.subr.mxu0 0.0
    %4551 = vmatpush1.xpose.msra.mxu0 0.0
    %4552 = vmatprep.subr.mxu0 0.0
    %4553 = vmatpush1.xpose.msra.mxu0 0.0
    %4554 = vmatprep.subr.mxu0 0.0
    %4555 = vmatpush1.xpose.msra.mxu0 0.0
    %4556 = vmatprep.subr.mxu0 0.0
    %4557 = vmatpush1.xpose.msra.mxu0 0.0
    %4558 = vmatprep.subr.mxu0 0.0
    %4559 = vmatpush1.xpose.msra.mxu0 0.0
    %4560 = vmatprep.subr.mxu0 0.0
    %4561 = vmatpush1.xpose.msra.mxu0 0.0
    %4562 = vmatprep.subr.mxu0 0.0
    %4563 = vmatpush1.xpose.msra.mxu0 0.0
    %4564 = vmatprep.subr.mxu0 0.0
    %4565 = vmatpush1.xpose.msra.mxu0 0.0
    %4566 = vmatprep.subr.mxu0 0.0
    %4567 = vmatpush1.xpose.msra.mxu0 0.0
    %4568 = vmatprep.subr.mxu0 0.0
    %4569 = vmatpush1.xpose.msra.mxu0 0.0
    %4570 = vmatprep.subr.mxu0 0.0
    %4571 = vmatpush1.xpose.msra.mxu0 0.0
    %4572 = vmatprep.subr.mxu0 0.0
    %4573 = vmatpush1.xpose.msra.mxu0 0.0
    %4574 = vmatprep.subr.mxu0 0.0
    %4575 = vmatpush1.xpose.msra.mxu0 0.0
    %4576 = vmatprep.subr.mxu0 0.0
    %4577 = vmatpush1.xpose.msra.mxu0 0.0
    %4578 = vmatprep.subr.mxu0 0.0
    %4579 = vmatpush1.xpose.msra.mxu0 0.0
    %4580 = vmatprep.subr.mxu0 0.0
    %4581 = vmatpush1.xpose.msra.mxu0 0.0
    %4582 = vmatprep.subr.mxu0 0.0
    %4583 = vmatpush1.xpose.msra.mxu0 0.0
    %4584 = vmatprep.subr.mxu0 0.0
    %4585 = vmatpush1.xpose.msra.mxu0 0.0
    %4586 = vmatprep.subr.mxu0 0.0
    %4587 = vmatpush1.xpose.msra.mxu0 0.0
    %4588 = vmatprep.subr.mxu0 0.0
    %4589 = vmatpush1.xpose.msra.mxu0 0.0
    %4590 = vmatprep.subr.mxu0 0.0
    %4591 = vmatpush1.xpose.msra.mxu0 0.0
    %4592 = vmatprep.subr.mxu0 0.0
    %4593 = vmatpush1.xpose.msra.mxu0 0.0
    %4594 = vmatprep.mubr.f32.mxu0 0.0
    %4595 = vmatmul.mubr.f32.gmra.mrb[0].mxu0 %v2797
    %v4596 = vpop.f32.mrb[0].mxu0
    %v4597 = vadd.f32 0.0, %v4596
    %v4598 = vpop.f32.mrb[0].mxu0
    %4599 = vdwg.mxu0
    %4600 = vmatprep.subr.mxu0 0.0
    %4601 = vmatpush1.xpose.msra.mxu0 %v3746
    %4602 = vmatprep.subr.mxu0 0.0
    %4603 = vmatpush1.xpose.msra.mxu0 0.0
    %4604 = vmatprep.subr.mxu0 0.0
    %4605 = vmatpush1.xpose.msra.mxu0 0.0
    %4606 = vmatprep.subr.mxu0 0.0
    %4607 = vmatpush1.xpose.msra.mxu0 0.0
    %4608 = vmatprep.subr.mxu0 0.0
    %4609 = vmatpush1.xpose.msra.mxu0 0.0
    %4610 = vmatprep.subr.mxu0 0.0
    %4611 = vmatpush1.xpose.msra.mxu0 0.0
    %4612 = vmatprep.subr.mxu0 0.0
    %4613 = vmatpush1.xpose.msra.mxu0 0.0
    %4614 = vmatprep.subr.mxu0 0.0
    %4615 = vmatpush1.xpose.msra.mxu0 0.0
    %4616 = vmatprep.subr.mxu0 0.0
    %4617 = vmatpush1.xpose.msra.mxu0 0.0
    %4618 = vmatprep.subr.mxu0 0.0
    %4619 = vmatpush1.xpose.msra.mxu0 0.0
    %4620 = vmatprep.subr.mxu0 0.0
    %4621 = vmatpush1.xpose.msra.mxu0 0.0
    %4622 = vmatprep.subr.mxu0 0.0
    %4623 = vmatpush1.xpose.msra.mxu0 0.0
    %4624 = vmatprep.subr.mxu0 0.0
    %4625 = vmatpush1.xpose.msra.mxu0 0.0
    %4626 = vmatprep.subr.mxu0 0.0
    %4627 = vmatpush1.xpose.msra.mxu0 0.0
    %4628 = vmatprep.subr.mxu0 0.0
    %4629 = vmatpush1.xpose.msra.mxu0 0.0
    %4630 = vmatprep.subr.mxu0 0.0
    %4631 = vmatpush1.xpose.msra.mxu0 0.0
    %4632 = vmatprep.subr.mxu0 0.0
    %4633 = vmatpush1.xpose.msra.mxu0 0.0
    %4634 = vmatprep.subr.mxu0 0.0
    %4635 = vmatpush1.xpose.msra.mxu0 0.0
    %4636 = vmatprep.subr.mxu0 0.0
    %4637 = vmatpush1.xpose.msra.mxu0 0.0
    %4638 = vmatprep.subr.mxu0 0.0
    %4639 = vmatpush1.xpose.msra.mxu0 0.0
    %4640 = vmatprep.subr.mxu0 0.0
    %4641 = vmatpush1.xpose.msra.mxu0 0.0
    %4642 = vmatprep.subr.mxu0 0.0
    %4643 = vmatpush1.xpose.msra.mxu0 0.0
    %4644 = vmatprep.subr.mxu0 0.0
    %4645 = vmatpush1.xpose.msra.mxu0 0.0
    %4646 = vmatprep.subr.mxu0 0.0
    %4647 = vmatpush1.xpose.msra.mxu0 0.0
    %4648 = vmatprep.subr.mxu0 0.0
    %4649 = vmatpush1.xpose.msra.mxu0 0.0
    %4650 = vmatprep.subr.mxu0 0.0
    %4651 = vmatpush1.xpose.msra.mxu0 0.0
    %4652 = vmatprep.subr.mxu0 0.0
    %4653 = vmatpush1.xpose.msra.mxu0 0.0
    %4654 = vmatprep.subr.mxu0 0.0
    %4655 = vmatpush1.xpose.msra.mxu0 0.0
    %4656 = vmatprep.subr.mxu0 0.0
    %4657 = vmatpush1.xpose.msra.mxu0 0.0
    %4658 = vmatprep.subr.mxu0 0.0
    %4659 = vmatpush1.xpose.msra.mxu0 0.0
    %4660 = vmatprep.subr.mxu0 0.0
    %4661 = vmatpush1.xpose.msra.mxu0 0.0
    %4662 = vmatprep.subr.mxu0 0.0
    %4663 = vmatpush1.xpose.msra.mxu0 0.0
    %4664 = vmatprep.mubr.f32.mxu0 0.0
    %4665 = vmatmul.mubr.f32.gmra.mrb[0].mxu0 %v2870
    %v4666 = vpop.f32.mrb[0].mxu0
    %v4667 = vadd.f32 0.0, %v4666
    %v4668 = vpop.f32.mrb[0].mxu0
    %4669 = vdwg.mxu0
    %4670 = vmatprep.subr.mxu0 0.0
    %4671 = vmatpush1.xpose.msra.mxu0 %v3819
    %4672 = vmatprep.subr.mxu0 0.0
    %4673 = vmatpush1.xpose.msra.mxu0 0.0
    %4674 = vmatprep.subr.mxu0 0.0
    %4675 = vmatpush1.xpose.msra.mxu0 0.0
    %4676 = vmatprep.subr.mxu0 0.0
    %4677 = vmatpush1.xpose.msra.mxu0 0.0
    %4678 = vmatprep.subr.mxu0 0.0
    %4679 = vmatpush1.xpose.msra.mxu0 0.0
    %4680 = vmatprep.subr.mxu0 0.0
    %4681 = vmatpush1.xpose.msra.mxu0 0.0
    %4682 = vmatprep.subr.mxu0 0.0
    %4683 = vmatpush1.xpose.msra.mxu0 0.0
    %4684 = vmatprep.subr.mxu0 0.0
    %4685 = vmatpush1.xpose.msra.mxu0 0.0
    %4686 = vmatprep.subr.mxu0 0.0
    %4687 = vmatpush1.xpose.msra.mxu0 0.0
    %4688 = vmatprep.subr.mxu0 0.0
    %4689 = vmatpush1.xpose.msra.mxu0 0.0
    %4690 = vmatprep.subr.mxu0 0.0
    %4691 = vmatpush1.xpose.msra.mxu0 0.0
    %4692 = vmatprep.subr.mxu0 0.0
    %4693 = vmatpush1.xpose.msra.mxu0 0.0
    %4694 = vmatprep.subr.mxu0 0.0
    %4695 = vmatpush1.xpose.msra.mxu0 0.0
    %4696 = vmatprep.subr.mxu0 0.0
    %4697 = vmatpush1.xpose.msra.mxu0 0.0
    %4698 = vmatprep.subr.mxu0 0.0
    %4699 = vmatpush1.xpose.msra.mxu0 0.0
    %4700 = vmatprep.subr.mxu0 0.0
    %4701 = vmatpush1.xpose.msra.mxu0 0.0
    %4702 = vmatprep.subr.mxu0 0.0
    %4703 = vmatpush1.xpose.msra.mxu0 0.0
    %4704 = vmatprep.subr.mxu0 0.0
    %4705 = vmatpush1.xpose.msra.mxu0 0.0
    %4706 = vmatprep.subr.mxu0 0.0
    %4707 = vmatpush1.xpose.msra.mxu0 0.0
    %4708 = vmatprep.subr.mxu0 0.0
    %4709 = vmatpush1.xpose.msra.mxu0 0.0
    %4710 = vmatprep.subr.mxu0 0.0
    %4711 = vmatpush1.xpose.msra.mxu0 0.0
    %4712 = vmatprep.subr.mxu0 0.0
    %4713 = vmatpush1.xpose.msra.mxu0 0.0
    %4714 = vmatprep.subr.mxu0 0.0
    %4715 = vmatpush1.xpose.msra.mxu0 0.0
    %4716 = vmatprep.subr.mxu0 0.0
    %4717 = vmatpush1.xpose.msra.mxu0 0.0
    %4718 = vmatprep.subr.mxu0 0.0
    %4719 = vmatpush1.xpose.msra.mxu0 0.0
    %4720 = vmatprep.subr.mxu0 0.0
    %4721 = vmatpush1.xpose.msra.mxu0 0.0
    %4722 = vmatprep.subr.mxu0 0.0
    %4723 = vmatpush1.xpose.msra.mxu0 0.0
    %4724 = vmatprep.subr.mxu0 0.0
    %4725 = vmatpush1.xpose.msra.mxu0 0.0
    %4726 = vmatprep.subr.mxu0 0.0
    %4727 = vmatpush1.xpose.msra.mxu0 0.0
    %4728 = vmatprep.subr.mxu0 0.0
    %4729 = vmatpush1.xpose.msra.mxu0 0.0
    %4730 = vmatprep.subr.mxu0 0.0
    %4731 = vmatpush1.xpose.msra.mxu0 0.0
    %4732 = vmatprep.subr.mxu0 0.0
    %4733 = vmatpush1.xpose.msra.mxu0 0.0
    %4734 = vmatprep.mubr.f32.mxu0 0.0
    %4735 = vmatmul.mubr.f32.gmra.mrb[0].mxu0 %v2943
    %v4736 = vpop.f32.mrb[0].mxu0
    %v4737 = vadd.f32 0.0, %v4736
    %v4738 = vpop.f32.mrb[0].mxu0
    %4739 = vdwg.mxu0
    %4740 = vmatprep.subr.mxu0 0.0
    %4741 = vmatpush1.xpose.msra.mxu0 %v3892
    %4742 = vmatprep.subr.mxu0 0.0
    %4743 = vmatpush1.xpose.msra.mxu0 0.0
    %4744 = vmatprep.subr.mxu0 0.0
    %4745 = vmatpush1.xpose.msra.mxu0 0.0
    %4746 = vmatprep.subr.mxu0 0.0
    %4747 = vmatpush1.xpose.msra.mxu0 0.0
    %4748 = vmatprep.subr.mxu0 0.0
    %4749 = vmatpush1.xpose.msra.mxu0 0.0
    %4750 = vmatprep.subr.mxu0 0.0
    %4751 = vmatpush1.xpose.msra.mxu0 0.0
    %4752 = vmatprep.subr.mxu0 0.0
    %4753 = vmatpush1.xpose.msra.mxu0 0.0
    %4754 = vmatprep.subr.mxu0 0.0
    %4755 = vmatpush1.xpose.msra.mxu0 0.0
    %4756 = vmatprep.subr.mxu0 0.0
    %4757 = vmatpush1.xpose.msra.mxu0 0.0
    %4758 = vmatprep.subr.mxu0 0.0
    %4759 = vmatpush1.xpose.msra.mxu0 0.0
    %4760 = vmatprep.subr.mxu0 0.0
    %4761 = vmatpush1.xpose.msra.mxu0 0.0
    %4762 = vmatprep.subr.mxu0 0.0
    %4763 = vmatpush1.xpose.msra.mxu0 0.0
    %4764 = vmatprep.subr.mxu0 0.0
    %4765 = vmatpush1.xpose.msra.mxu0 0.0
    %4766 = vmatprep.subr.mxu0 0.0
    %4767 = vmatpush1.xpose.msra.mxu0 0.0
    %4768 = vmatprep.subr.mxu0 0.0
    %4769 = vmatpush1.xpose.msra.mxu0 0.0
    %4770 = vmatprep.subr.mxu0 0.0
    %4771 = vmatpush1.xpose.msra.mxu0 0.0
    %4772 = vmatprep.subr.mxu0 0.0
    %4773 = vmatpush1.xpose.msra.mxu0 0.0
    %4774 = vmatprep.subr.mxu0 0.0
    %4775 = vmatpush1.xpose.msra.mxu0 0.0
    %4776 = vmatprep.subr.mxu0 0.0
    %4777 = vmatpush1.xpose.msra.mxu0 0.0
    %4778 = vmatprep.subr.mxu0 0.0
    %4779 = vmatpush1.xpose.msra.mxu0 0.0
    %4780 = vmatprep.subr.mxu0 0.0
    %4781 = vmatpush1.xpose.msra.mxu0 0.0
    %4782 = vmatprep.subr.mxu0 0.0
    %4783 = vmatpush1.xpose.msra.mxu0 0.0
    %4784 = vmatprep.subr.mxu0 0.0
    %4785 = vmatpush1.xpose.msra.mxu0 0.0
    %4786 = vmatprep.subr.mxu0 0.0
    %4787 = vmatpush1.xpose.msra.mxu0 0.0
    %4788 = vmatprep.subr.mxu0 0.0
    %4789 = vmatpush1.xpose.msra.mxu0 0.0
    %4790 = vmatprep.subr.mxu0 0.0
    %4791 = vmatpush1.xpose.msra.mxu0 0.0
    %4792 = vmatprep.subr.mxu0 0.0
    %4793 = vmatpush1.xpose.msra.mxu0 0.0
    %4794 = vmatprep.subr.mxu0 0.0
    %4795 = vmatpush1.xpose.msra.mxu0 0.0
    %4796 = vmatprep.subr.mxu0 0.0
    %4797 = vmatpush1.xpose.msra.mxu0 0.0
    %4798 = vmatprep.subr.mxu0 0.0
    %4799 = vmatpush1.xpose.msra.mxu0 0.0
    %4800 = vmatprep.subr.mxu0 0.0
    %4801 = vmatpush1.xpose.msra.mxu0 0.0
    %4802 = vmatprep.subr.mxu0 0.0
    %4803 = vmatpush1.xpose.msra.mxu0 0.0
    %4804 = vmatprep.mubr.f32.mxu0 0.0
    %4805 = vmatmul.mubr.f32.gmra.mrb[0].mxu0 %v3016
    %v4806 = vpop.f32.mrb[0].mxu0
    %v4807 = vadd.f32 0.0, %v4806
    %v4808 = vpop.f32.mrb[0].mxu0
    %4809 = vdwg.mxu0
    %4810 = vmatprep.subr.mxu0 0.0
    %4811 = vmatpush1.xpose.msra.mxu0 %v3965
    %4812 = vmatprep.subr.mxu0 0.0
    %4813 = vmatpush1.xpose.msra.mxu0 0.0
    %4814 = vmatprep.subr.mxu0 0.0
    %4815 = vmatpush1.xpose.msra.mxu0 0.0
    %4816 = vmatprep.subr.mxu0 0.0
    %4817 = vmatpush1.xpose.msra.mxu0 0.0
    %4818 = vmatprep.subr.mxu0 0.0
    %4819 = vmatpush1.xpose.msra.mxu0 0.0
    %4820 = vmatprep.subr.mxu0 0.0
    %4821 = vmatpush1.xpose.msra.mxu0 0.0
    %4822 = vmatprep.subr.mxu0 0.0
    %4823 = vmatpush1.xpose.msra.mxu0 0.0
    %4824 = vmatprep.subr.mxu0 0.0
    %4825 = vmatpush1.xpose.msra.mxu0 0.0
    %4826 = vmatprep.subr.mxu0 0.0
    %4827 = vmatpush1.xpose.msra.mxu0 0.0
    %4828 = vmatprep.subr.mxu0 0.0
    %4829 = vmatpush1.xpose.msra.mxu0 0.0
    %4830 = vmatprep.subr.mxu0 0.0
    %4831 = vmatpush1.xpose.msra.mxu0 0.0
    %4832 = vmatprep.subr.mxu0 0.0
    %4833 = vmatpush1.xpose.msra.mxu0 0.0
    %4834 = vmatprep.subr.mxu0 0.0
    %4835 = vmatpush1.xpose.msra.mxu0 0.0
    %4836 = vmatprep.subr.mxu0 0.0
    %4837 = vmatpush1.xpose.msra.mxu0 0.0
    %4838 = vmatprep.subr.mxu0 0.0
    %4839 = vmatpush1.xpose.msra.mxu0 0.0
    %4840 = vmatprep.subr.mxu0 0.0
    %4841 = vmatpush1.xpose.msra.mxu0 0.0
    %4842 = vmatprep.subr.mxu0 0.0
    %4843 = vmatpush1.xpose.msra.mxu0 0.0
    %4844 = vmatprep.subr.mxu0 0.0
    %4845 = vmatpush1.xpose.msra.mxu0 0.0
    %4846 = vmatprep.subr.mxu0 0.0
    %4847 = vmatpush1.xpose.msra.mxu0 0.0
    %4848 = vmatprep.subr.mxu0 0.0
    %4849 = vmatpush1.xpose.msra.mxu0 0.0
    %4850 = vmatprep.subr.mxu0 0.0
    %4851 = vmatpush1.xpose.msra.mxu0 0.0
    %4852 = vmatprep.subr.mxu0 0.0
    %4853 = vmatpush1.xpose.msra.mxu0 0.0
    %4854 = vmatprep.subr.mxu0 0.0
    %4855 = vmatpush1.xpose.msra.mxu0 0.0
    %4856 = vmatprep.subr.mxu0 0.0
    %4857 = vmatpush1.xpose.msra.mxu0 0.0
    %4858 = vmatprep.subr.mxu0 0.0
    %4859 = vmatpush1.xpose.msra.mxu0 0.0
    %4860 = vmatprep.subr.mxu0 0.0
    %4861 = vmatpush1.xpose.msra.mxu0 0.0
    %4862 = vmatprep.subr.mxu0 0.0
    %4863 = vmatpush1.xpose.msra.mxu0 0.0
    %4864 = vmatprep.subr.mxu0 0.0
    %4865 = vmatpush1.xpose.msra.mxu0 0.0
    %4866 = vmatprep.subr.mxu0 0.0
    %4867 = vmatpush1.xpose.msra.mxu0 0.0
    %4868 = vmatprep.subr.mxu0 0.0
    %4869 = vmatpush1.xpose.msra.mxu0 0.0
    %4870 = vmatprep.subr.mxu0 0.0
    %4871 = vmatpush1.xpose.msra.mxu0 0.0
    %4872 = vmatprep.subr.mxu0 0.0
    %4873 = vmatpush1.xpose.msra.mxu0 0.0
    %4874 = vmatprep.mubr.f32.mxu0 0.0
    %4875 = vmatmul.mubr.f32.gmra.mrb[0].mxu0 %v3089
    %v4876 = vpop.f32.mrb[0].mxu0
    %v4877 = vadd.f32 0.0, %v4876
    %v4878 = vpop.f32.mrb[0].mxu0
    %4879 = vdwg.mxu0
    %4880 = vmatprep.subr.mxu0 0.0
    %4881 = vmatpush1.xpose.msra.mxu0 %v4038
    %4882 = vmatprep.subr.mxu0 0.0
    %4883 = vmatpush1.xpose.msra.mxu0 0.0
    %4884 = vmatprep.subr.mxu0 0.0
    %4885 = vmatpush1.xpose.msra.mxu0 0.0
    %4886 = vmatprep.subr.mxu0 0.0
    %4887 = vmatpush1.xpose.msra.mxu0 0.0
    %4888 = vmatprep.subr.mxu0 0.0
    %4889 = vmatpush1.xpose.msra.mxu0 0.0
    %4890 = vmatprep.subr.mxu0 0.0
    %4891 = vmatpush1.xpose.msra.mxu0 0.0
    %4892 = vmatprep.subr.mxu0 0.0
    %4893 = vmatpush1.xpose.msra.mxu0 0.0
    %4894 = vmatprep.subr.mxu0 0.0
    %4895 = vmatpush1.xpose.msra.mxu0 0.0
    %4896 = vmatprep.subr.mxu0 0.0
    %4897 = vmatpush1.xpose.msra.mxu0 0.0
    %4898 = vmatprep.subr.mxu0 0.0
    %4899 = vmatpush1.xpose.msra.mxu0 0.0
    %4900 = vmatprep.subr.mxu0 0.0
    %4901 = vmatpush1.xpose.msra.mxu0 0.0
    %4902 = vmatprep.subr.mxu0 0.0
    %4903 = vmatpush1.xpose.msra.mxu0 0.0
    %4904 = vmatprep.subr.mxu0 0.0
    %4905 = vmatpush1.xpose.msra.mxu0 0.0
    %4906 = vmatprep.subr.mxu0 0.0
    %4907 = vmatpush1.xpose.msra.mxu0 0.0
    %4908 = vmatprep.subr.mxu0 0.0
    %4909 = vmatpush1.xpose.msra.mxu0 0.0
    %4910 = vmatprep.subr.mxu0 0.0
    %4911 = vmatpush1.xpose.msra.mxu0 0.0
    %4912 = vmatprep.subr.mxu0 0.0
    %4913 = vmatpush1.xpose.msra.mxu0 0.0
    %4914 = vmatprep.subr.mxu0 0.0
    %4915 = vmatpush1.xpose.msra.mxu0 0.0
    %4916 = vmatprep.subr.mxu0 0.0
    %4917 = vmatpush1.xpose.msra.mxu0 0.0
    %4918 = vmatprep.subr.mxu0 0.0
    %4919 = vmatpush1.xpose.msra.mxu0 0.0
    %4920 = vmatprep.subr.mxu0 0.0
    %4921 = vmatpush1.xpose.msra.mxu0 0.0
    %4922 = vmatprep.subr.mxu0 0.0
    %4923 = vmatpush1.xpose.msra.mxu0 0.0
    %4924 = vmatprep.subr.mxu0 0.0
    %4925 = vmatpush1.xpose.msra.mxu0 0.0
    %4926 = vmatprep.subr.mxu0 0.0
    %4927 = vmatpush1.xpose.msra.mxu0 0.0
    %4928 = vmatprep.subr.mxu0 0.0
    %4929 = vmatpush1.xpose.msra.mxu0 0.0
    %4930 = vmatprep.subr.mxu0 0.0
    %4931 = vmatpush1.xpose.msra.mxu0 0.0
    %4932 = vmatprep.subr.mxu0 0.0
    %4933 = vmatpush1.xpose.msra.mxu0 0.0
    %4934 = vmatprep.subr.mxu0 0.0
    %4935 = vmatpush1.xpose.msra.mxu0 0.0
    %4936 = vmatprep.subr.mxu0 0.0
    %4937 = vmatpush1.xpose.msra.mxu0 0.0
    %4938 = vmatprep.subr.mxu0 0.0
    %4939 = vmatpush1.xpose.msra.mxu0 0.0
    %4940 = vmatprep.subr.mxu0 0.0
    %4941 = vmatpush1.xpose.msra.mxu0 0.0
    %4942 = vmatprep.subr.mxu0 0.0
    %4943 = vmatpush1.xpose.msra.mxu0 0.0
    %4944 = vmatprep.mubr.f32.mxu0 0.0
    %4945 = vmatmul.mubr.f32.gmra.mrb[0].mxu0 %v3162
    %v4946 = vpop.f32.mrb[0].mxu0
    %v4947 = vadd.f32 0.0, %v4946
    %v4948 = vpop.f32.mrb[0].mxu0
    %4949 = vdwg.mxu0
    %4950 = vmatprep.subr.mxu0 0.0
    %4951 = vmatpush1.xpose.msra.mxu0 %v3673
    %4952 = vmatprep.subr.mxu0 0.0
    %4953 = vmatpush1.xpose.msra.mxu0 0.0
    %4954 = vmatprep.subr.mxu0 0.0
    %4955 = vmatpush1.xpose.msra.mxu0 0.0
    %4956 = vmatprep.subr.mxu0 0.0
    %4957 = vmatpush1.xpose.msra.mxu0 0.0
    %4958 = vmatprep.subr.mxu0 0.0
    %4959 = vmatpush1.xpose.msra.mxu0 0.0
    %4960 = vmatprep.subr.mxu0 0.0
    %4961 = vmatpush1.xpose.msra.mxu0 0.0
    %4962 = vmatprep.subr.mxu0 0.0
    %4963 = vmatpush1.xpose.msra.mxu0 0.0
    %4964 = vmatprep.subr.mxu0 0.0
    %4965 = vmatpush1.xpose.msra.mxu0 0.0
    %4966 = vmatprep.subr.mxu0 0.0
    %4967 = vmatpush1.xpose.msra.mxu0 0.0
    %4968 = vmatprep.subr.mxu0 0.0
    %4969 = vmatpush1.xpose.msra.mxu0 0.0
    %4970 = vmatprep.subr.mxu0 0.0
    %4971 = vmatpush1.xpose.msra.mxu0 0.0
    %4972 = vmatprep.subr.mxu0 0.0
    %4973 = vmatpush1.xpose.msra.mxu0 0.0
    %4974 = vmatprep.subr.mxu0 0.0
    %4975 = vmatpush1.xpose.msra.mxu0 0.0
    %4976 = vmatprep.subr.mxu0 0.0
    %4977 = vmatpush1.xpose.msra.mxu0 0.0
    %4978 = vmatprep.subr.mxu0 0.0
    %4979 = vmatpush1.xpose.msra.mxu0 0.0
    %4980 = vmatprep.subr.mxu0 0.0
    %4981 = vmatpush1.xpose.msra.mxu0 0.0
    %4982 = vmatprep.subr.mxu0 0.0
    %4983 = vmatpush1.xpose.msra.mxu0 0.0
    %4984 = vmatprep.subr.mxu0 0.0
    %4985 = vmatpush1.xpose.msra.mxu0 0.0
    %4986 = vmatprep.subr.mxu0 0.0
    %4987 = vmatpush1.xpose.msra.mxu0 0.0
    %4988 = vmatprep.subr.mxu0 0.0
    %4989 = vmatpush1.xpose.msra.mxu0 0.0
    %4990 = vmatprep.subr.mxu0 0.0
    %4991 = vmatpush1.xpose.msra.mxu0 0.0
    %4992 = vmatprep.subr.mxu0 0.0
    %4993 = vmatpush1.xpose.msra.mxu0 0.0
    %4994 = vmatprep.subr.mxu0 0.0
    %4995 = vmatpush1.xpose.msra.mxu0 0.0
    %4996 = vmatprep.subr.mxu0 0.0
    %4997 = vmatpush1.xpose.msra.mxu0 0.0
    %4998 = vmatprep.subr.mxu0 0.0
    %4999 = vmatpush1.xpose.msra.mxu0 0.0
    %5000 = vmatprep.subr.mxu0 0.0
    %5001 = vmatpush1.xpose.msra.mxu0 0.0
    %5002 = vmatprep.subr.mxu0 0.0
    %5003 = vmatpush1.xpose.msra.mxu0 0.0
    %5004 = vmatprep.subr.mxu0 0.0
    %5005 = vmatpush1.xpose.msra.mxu0 0.0
    %5006 = vmatprep.subr.mxu0 0.0
    %5007 = vmatpush1.xpose.msra.mxu0 0.0
    %5008 = vmatprep.subr.mxu0 0.0
    %5009 = vmatpush1.xpose.msra.mxu0 0.0
    %5010 = vmatprep.subr.mxu0 0.0
    %5011 = vmatpush1.xpose.msra.mxu0 0.0
    %5012 = vmatprep.subr.mxu0 0.0
    %5013 = vmatpush1.xpose.msra.mxu0 0.0
    %5014 = vmatprep.mubr.f32.mxu0 0.0
    %5015 = vmatmul.mubr.f32.gmra.mrb[0].mxu0 %v3235
    %v5016 = vpop.f32.mrb[0].mxu0
    %v5017 = vadd.f32 0.0, %v5016
    %v5018 = vpop.f32.mrb[0].mxu0
    %5019 = vdwg.mxu0
    %5020 = vmatprep.subr.mxu0 0.0
    %5021 = vmatpush1.xpose.msra.mxu0 %v3746
    %5022 = vmatprep.subr.mxu0 0.0
    %5023 = vmatpush1.xpose.msra.mxu0 0.0
    %5024 = vmatprep.subr.mxu0 0.0
    %5025 = vmatpush1.xpose.msra.mxu0 0.0
    %5026 = vmatprep.subr.mxu0 0.0
    %5027 = vmatpush1.xpose.msra.mxu0 0.0
    %5028 = vmatprep.subr.mxu0 0.0
    %5029 = vmatpush1.xpose.msra.mxu0 0.0
    %5030 = vmatprep.subr.mxu0 0.0
    %5031 = vmatpush1.xpose.msra.mxu0 0.0
    %5032 = vmatprep.subr.mxu0 0.0
    %5033 = vmatpush1.xpose.msra.mxu0 0.0
    %5034 = vmatprep.subr.mxu0 0.0
    %5035 = vmatpush1.xpose.msra.mxu0 0.0
    %5036 = vmatprep.subr.mxu0 0.0
    %5037 = vmatpush1.xpose.msra.mxu0 0.0
    %5038 = vmatprep.subr.mxu0 0.0
    %5039 = vmatpush1.xpose.msra.mxu0 0.0
    %5040 = vmatprep.subr.mxu0 0.0
    %5041 = vmatpush1.xpose.msra.mxu0 0.0
    %5042 = vmatprep.subr.mxu0 0.0
    %5043 = vmatpush1.xpose.msra.mxu0 0.0
    %5044 = vmatprep.subr.mxu0 0.0
    %5045 = vmatpush1.xpose.msra.mxu0 0.0
    %5046 = vmatprep.subr.mxu0 0.0
    %5047 = vmatpush1.xpose.msra.mxu0 0.0
    %5048 = vmatprep.subr.mxu0 0.0
    %5049 = vmatpush1.xpose.msra.mxu0 0.0
    %5050 = vmatprep.subr.mxu0 0.0
    %5051 = vmatpush1.xpose.msra.mxu0 0.0
    %5052 = vmatprep.subr.mxu0 0.0
    %5053 = vmatpush1.xpose.msra.mxu0 0.0
    %5054 = vmatprep.subr.mxu0 0.0
    %5055 = vmatpush1.xpose.msra.mxu0 0.0
    %5056 = vmatprep.subr.mxu0 0.0
    %5057 = vmatpush1.xpose.msra.mxu0 0.0
    %5058 = vmatprep.subr.mxu0 0.0
    %5059 = vmatpush1.xpose.msra.mxu0 0.0
    %5060 = vmatprep.subr.mxu0 0.0
    %5061 = vmatpush1.xpose.msra.mxu0 0.0
    %5062 = vmatprep.subr.mxu0 0.0
    %5063 = vmatpush1.xpose.msra.mxu0 0.0
    %5064 = vmatprep.subr.mxu0 0.0
    %5065 = vmatpush1.xpose.msra.mxu0 0.0
    %5066 = vmatprep.subr.mxu0 0.0
    %5067 = vmatpush1.xpose.msra.mxu0 0.0
    %5068 = vmatprep.subr.mxu0 0.0
    %5069 = vmatpush1.xpose.msra.mxu0 0.0
    %5070 = vmatprep.subr.mxu0 0.0
    %5071 = vmatpush1.xpose.msra.mxu0 0.0
    %5072 = vmatprep.subr.mxu0 0.0
    %5073 = vmatpush1.xpose.msra.mxu0 0.0
    %5074 = vmatprep.subr.mxu0 0.0
    %5075 = vmatpush1.xpose.msra.mxu0 0.0
    %5076 = vmatprep.subr.mxu0 0.0
    %5077 = vmatpush1.xpose.msra.mxu0 0.0
    %5078 = vmatprep.subr.mxu0 0.0
    %5079 = vmatpush1.xpose.msra.mxu0 0.0
    %5080 = vmatprep.subr.mxu0 0.0
    %5081 = vmatpush1.xpose.msra.mxu0 0.0
    %5082 = vmatprep.subr.mxu0 0.0
    %5083 = vmatpush1.xpose.msra.mxu0 0.0
    %5084 = vmatprep.mubr.f32.mxu0 0.0
    %5085 = vmatmul.mubr.f32.gmra.mrb[0].mxu0 %v3308
    %v5086 = vpop.f32.mrb[0].mxu0
    %v5087 = vadd.f32 0.0, %v5086
    %v5088 = vpop.f32.mrb[0].mxu0
    %5089 = vdwg.mxu0
    %5090 = vmatprep.subr.mxu0 0.0
    %5091 = vmatpush1.xpose.msra.mxu0 %v3819
    %5092 = vmatprep.subr.mxu0 0.0
    %5093 = vmatpush1.xpose.msra.mxu0 0.0
    %5094 = vmatprep.subr.mxu0 0.0
    %5095 = vmatpush1.xpose.msra.mxu0 0.0
    %5096 = vmatprep.subr.mxu0 0.0
    %5097 = vmatpush1.xpose.msra.mxu0 0.0
    %5098 = vmatprep.subr.mxu0 0.0
    %5099 = vmatpush1.xpose.msra.mxu0 0.0
    %5100 = vmatprep.subr.mxu0 0.0
    %5101 = vmatpush1.xpose.msra.mxu0 0.0
    %5102 = vmatprep.subr.mxu0 0.0
    %5103 = vmatpush1.xpose.msra.mxu0 0.0
    %5104 = vmatprep.subr.mxu0 0.0
    %5105 = vmatpush1.xpose.msra.mxu0 0.0
    %5106 = vmatprep.subr.mxu0 0.0
    %5107 = vmatpush1.xpose.msra.mxu0 0.0
    %5108 = vmatprep.subr.mxu0 0.0
    %5109 = vmatpush1.xpose.msra.mxu0 0.0
    %5110 = vmatprep.subr.mxu0 0.0
    %5111 = vmatpush1.xpose.msra.mxu0 0.0
    %5112 = vmatprep.subr.mxu0 0.0
    %5113 = vmatpush1.xpose.msra.mxu0 0.0
    %5114 = vmatprep.subr.mxu0 0.0
    %5115 = vmatpush1.xpose.msra.mxu0 0.0
    %5116 = vmatprep.subr.mxu0 0.0
    %5117 = vmatpush1.xpose.msra.mxu0 0.0
    %5118 = vmatprep.subr.mxu0 0.0
    %5119 = vmatpush1.xpose.msra.mxu0 0.0
    %5120 = vmatprep.subr.mxu0 0.0
    %5121 = vmatpush1.xpose.msra.mxu0 0.0
    %5122 = vmatprep.subr.mxu0 0.0
    %5123 = vmatpush1.xpose.msra.mxu0 0.0
    %5124 = vmatprep.subr.mxu0 0.0
    %5125 = vmatpush1.xpose.msra.mxu0 0.0
    %5126 = vmatprep.subr.mxu0 0.0
    %5127 = vmatpush1.xpose.msra.mxu0 0.0
    %5128 = vmatprep.subr.mxu0 0.0
    %5129 = vmatpush1.xpose.msra.mxu0 0.0
    %5130 = vmatprep.subr.mxu0 0.0
    %5131 = vmatpush1.xpose.msra.mxu0 0.0
    %5132 = vmatprep.subr.mxu0 0.0
    %5133 = vmatpush1.xpose.msra.mxu0 0.0
    %5134 = vmatprep.subr.mxu0 0.0
    %5135 = vmatpush1.xpose.msra.mxu0 0.0
    %5136 = vmatprep.subr.mxu0 0.0
    %5137 = vmatpush1.xpose.msra.mxu0 0.0
    %5138 = vmatprep.subr.mxu0 0.0
    %5139 = vmatpush1.xpose.msra.mxu0 0.0
    %5140 = vmatprep.subr.mxu0 0.0
    %5141 = vmatpush1.xpose.msra.mxu0 0.0
    %5142 = vmatprep.subr.mxu0 0.0
    %5143 = vmatpush1.xpose.msra.mxu0 0.0
    %5144 = vmatprep.subr.mxu0 0.0
    %5145 = vmatpush1.xpose.msra.mxu0 0.0
    %5146 = vmatprep.subr.mxu0 0.0
    %5147 = vmatpush1.xpose.msra.mxu0 0.0
    %5148 = vmatprep.subr.mxu0 0.0
    %5149 = vmatpush1.xpose.msra.mxu0 0.0
    %5150 = vmatprep.subr.mxu0 0.0
    %5151 = vmatpush1.xpose.msra.mxu0 0.0
    %5152 = vmatprep.subr.mxu0 0.0
    %5153 = vmatpush1.xpose.msra.mxu0 0.0
    %5154 = vmatprep.mubr.f32.mxu0 0.0
    %5155 = vmatmul.mubr.f32.gmra.mrb[0].mxu0 %v3381
    %v5156 = vpop.f32.mrb[0].mxu0
    %v5157 = vadd.f32 0.0, %v5156
    %v5158 = vpop.f32.mrb[0].mxu0
    %5159 = vdwg.mxu0
    %5160 = vmatprep.subr.mxu0 0.0
    %5161 = vmatpush1.xpose.msra.mxu0 %v3892
    %5162 = vmatprep.subr.mxu0 0.0
    %5163 = vmatpush1.xpose.msra.mxu0 0.0
    %5164 = vmatprep.subr.mxu0 0.0
    %5165 = vmatpush1.xpose.msra.mxu0 0.0
    %5166 = vmatprep.subr.mxu0 0.0
    %5167 = vmatpush1.xpose.msra.mxu0 0.0
    %5168 = vmatprep.subr.mxu0 0.0
    %5169 = vmatpush1.xpose.msra.mxu0 0.0
    %5170 = vmatprep.subr.mxu0 0.0
    %5171 = vmatpush1.xpose.msra.mxu0 0.0
    %5172 = vmatprep.subr.mxu0 0.0
    %5173 = vmatpush1.xpose.msra.mxu0 0.0
    %5174 = vmatprep.subr.mxu0 0.0
    %5175 = vmatpush1.xpose.msra.mxu0 0.0
    %5176 = vmatprep.subr.mxu0 0.0
    %5177 = vmatpush1.xpose.msra.mxu0 0.0
    %5178 = vmatprep.subr.mxu0 0.0
    %5179 = vmatpush1.xpose.msra.mxu0 0.0
    %5180 = vmatprep.subr.mxu0 0.0
    %5181 = vmatpush1.xpose.msra.mxu0 0.0
    %5182 = vmatprep.subr.mxu0 0.0
    %5183 = vmatpush1.xpose.msra.mxu0 0.0
    %5184 = vmatprep.subr.mxu0 0.0
    %5185 = vmatpush1.xpose.msra.mxu0 0.0
    %5186 = vmatprep.subr.mxu0 0.0
    %5187 = vmatpush1.xpose.msra.mxu0 0.0
    %5188 = vmatprep.subr.mxu0 0.0
    %5189 = vmatpush1.xpose.msra.mxu0 0.0
    %5190 = vmatprep.subr.mxu0 0.0
    %5191 = vmatpush1.xpose.msra.mxu0 0.0
    %5192 = vmatprep.subr.mxu0 0.0
    %5193 = vmatpush1.xpose.msra.mxu0 0.0
    %5194 = vmatprep.subr.mxu0 0.0
    %5195 = vmatpush1.xpose.msra.mxu0 0.0
    %5196 = vmatprep.subr.mxu0 0.0
    %5197 = vmatpush1.xpose.msra.mxu0 0.0
    %5198 = vmatprep.subr.mxu0 0.0
    %5199 = vmatpush1.xpose.msra.mxu0 0.0
    %5200 = vmatprep.subr.mxu0 0.0
    %5201 = vmatpush1.xpose.msra.mxu0 0.0
    %5202 = vmatprep.subr.mxu0 0.0
    %5203 = vmatpush1.xpose.msra.mxu0 0.0
    %5204 = vmatprep.subr.mxu0 0.0
    %5205 = vmatpush1.xpose.msra.mxu0 0.0
    %5206 = vmatprep.subr.mxu0 0.0
    %5207 = vmatpush1.xpose.msra.mxu0 0.0
    %5208 = vmatprep.subr.mxu0 0.0
    %5209 = vmatpush1.xpose.msra.mxu0 0.0
    %5210 = vmatprep.subr.mxu0 0.0
    %5211 = vmatpush1.xpose.msra.mxu0 0.0
    %5212 = vmatprep.subr.mxu0 0.0
    %5213 = vmatpush1.xpose.msra.mxu0 0.0
    %5214 = vmatprep.subr.mxu0 0.0
    %5215 = vmatpush1.xpose.msra.mxu0 0.0
    %5216 = vmatprep.subr.mxu0 0.0
    %5217 = vmatpush1.xpose.msra.mxu0 0.0
    %5218 = vmatprep.subr.mxu0 0.0
    %5219 = vmatpush1.xpose.msra.mxu0 0.0
    %5220 = vmatprep.subr.mxu0 0.0
    %5221 = vmatpush1.xpose.msra.mxu0 0.0
    %5222 = vmatprep.subr.mxu0 0.0
    %5223 = vmatpush1.xpose.msra.mxu0 0.0
    %5224 = vmatprep.mubr.f32.mxu0 0.0
    %5225 = vmatmul.mubr.f32.gmra.mrb[0].mxu0 %v3454
    %v5226 = vpop.f32.mrb[0].mxu0
    %v5227 = vadd.f32 0.0, %v5226
    %v5228 = vpop.f32.mrb[0].mxu0
    %5229 = vdwg.mxu0
    %5230 = vmatprep.subr.mxu0 0.0
    %5231 = vmatpush1.xpose.msra.mxu0 %v3965
    %5232 = vmatprep.subr.mxu0 0.0
    %5233 = vmatpush1.xpose.msra.mxu0 0.0
    %5234 = vmatprep.subr.mxu0 0.0
    %5235 = vmatpush1.xpose.msra.mxu0 0.0
    %5236 = vmatprep.subr.mxu0 0.0
    %5237 = vmatpush1.xpose.msra.mxu0 0.0
    %5238 = vmatprep.subr.mxu0 0.0
    %5239 = vmatpush1.xpose.msra.mxu0 0.0
    %5240 = vmatprep.subr.mxu0 0.0
    %5241 = vmatpush1.xpose.msra.mxu0 0.0
    %5242 = vmatprep.subr.mxu0 0.0
    %5243 = vmatpush1.xpose.msra.mxu0 0.0
    %5244 = vmatprep.subr.mxu0 0.0
    %5245 = vmatpush1.xpose.msra.mxu0 0.0
    %5246 = vmatprep.subr.mxu0 0.0
    %5247 = vmatpush1.xpose.msra.mxu0 0.0
    %5248 = vmatprep.subr.mxu0 0.0
    %5249 = vmatpush1.xpose.msra.mxu0 0.0
    %5250 = vmatprep.subr.mxu0 0.0
    %5251 = vmatpush1.xpose.msra.mxu0 0.0
    %5252 = vmatprep.subr.mxu0 0.0
    %5253 = vmatpush1.xpose.msra.mxu0 0.0
    %5254 = vmatprep.subr.mxu0 0.0
    %5255 = vmatpush1.xpose.msra.mxu0 0.0
    %5256 = vmatprep.subr.mxu0 0.0
    %5257 = vmatpush1.xpose.msra.mxu0 0.0
    %5258 = vmatprep.subr.mxu0 0.0
    %5259 = vmatpush1.xpose.msra.mxu0 0.0
    %5260 = vmatprep.subr.mxu0 0.0
    %5261 = vmatpush1.xpose.msra.mxu0 0.0
    %5262 = vmatprep.subr.mxu0 0.0
    %5263 = vmatpush1.xpose.msra.mxu0 0.0
    %5264 = vmatprep.subr.mxu0 0.0
    %5265 = vmatpush1.xpose.msra.mxu0 0.0
    %5266 = vmatprep.subr.mxu0 0.0
    %5267 = vmatpush1.xpose.msra.mxu0 0.0
    %5268 = vmatprep.subr.mxu0 0.0
    %5269 = vmatpush1.xpose.msra.mxu0 0.0
    %5270 = vmatprep.subr.mxu0 0.0
    %5271 = vmatpush1.xpose.msra.mxu0 0.0
    %5272 = vmatprep.subr.mxu0 0.0
    %5273 = vmatpush1.xpose.msra.mxu0 0.0
    %5274 = vmatprep.subr.mxu0 0.0
    %5275 = vmatpush1.xpose.msra.mxu0 0.0
    %5276 = vmatprep.subr.mxu0 0.0
    %5277 = vmatpush1.xpose.msra.mxu0 0.0
    %5278 = vmatprep.subr.mxu0 0.0
    %5279 = vmatpush1.xpose.msra.mxu0 0.0
    %5280 = vmatprep.subr.mxu0 0.0
    %5281 = vmatpush1.xpose.msra.mxu0 0.0
    %5282 = vmatprep.subr.mxu0 0.0
    %5283 = vmatpush1.xpose.msra.mxu0 0.0
    %5284 = vmatprep.subr.mxu0 0.0
    %5285 = vmatpush1.xpose.msra.mxu0 0.0
    %5286 = vmatprep.subr.mxu0 0.0
    %5287 = vmatpush1.xpose.msra.mxu0 0.0
    %5288 = vmatprep.subr.mxu0 0.0
    %5289 = vmatpush1.xpose.msra.mxu0 0.0
    %5290 = vmatprep.subr.mxu0 0.0
    %5291 = vmatpush1.xpose.msra.mxu0 0.0
    %5292 = vmatprep.subr.mxu0 0.0
    %5293 = vmatpush1.xpose.msra.mxu0 0.0
    %5294 = vmatprep.mubr.f32.mxu0 0.0
    %5295 = vmatmul.mubr.f32.gmra.mrb[0].mxu0 %v3527
    %v5296 = vpop.f32.mrb[0].mxu0
    %v5297 = vadd.f32 0.0, %v5296
    %v5298 = vpop.f32.mrb[0].mxu0
    %5299 = vdwg.mxu0
    %5300 = vmatprep.subr.mxu0 0.0
    %5301 = vmatpush1.xpose.msra.mxu0 %v4038
    %5302 = vmatprep.subr.mxu0 0.0
    %5303 = vmatpush1.xpose.msra.mxu0 0.0
    %5304 = vmatprep.subr.mxu0 0.0
    %5305 = vmatpush1.xpose.msra.mxu0 0.0
    %5306 = vmatprep.subr.mxu0 0.0
    %5307 = vmatpush1.xpose.msra.mxu0 0.0
    %5308 = vmatprep.subr.mxu0 0.0
    %5309 = vmatpush1.xpose.msra.mxu0 0.0
    %5310 = vmatprep.subr.mxu0 0.0
    %5311 = vmatpush1.xpose.msra.mxu0 0.0
    %5312 = vmatprep.subr.mxu0 0.0
    %5313 = vmatpush1.xpose.msra.mxu0 0.0
    %5314 = vmatprep.subr.mxu0 0.0
    %5315 = vmatpush1.xpose.msra.mxu0 0.0
    %5316 = vmatprep.subr.mxu0 0.0
    %5317 = vmatpush1.xpose.msra.mxu0 0.0
    %5318 = vmatprep.subr.mxu0 0.0
    %5319 = vmatpush1.xpose.msra.mxu0 0.0
    %5320 = vmatprep.subr.mxu0 0.0
    %5321 = vmatpush1.xpose.msra.mxu0 0.0
    %5322 = vmatprep.subr.mxu0 0.0
    %5323 = vmatpush1.xpose.msra.mxu0 0.0
    %5324 = vmatprep.subr.mxu0 0.0
    %5325 = vmatpush1.xpose.msra.mxu0 0.0
    %5326 = vmatprep.subr.mxu0 0.0
    %5327 = vmatpush1.xpose.msra.mxu0 0.0
    %5328 = vmatprep.subr.mxu0 0.0
    %5329 = vmatpush1.xpose.msra.mxu0 0.0
    %5330 = vmatprep.subr.mxu0 0.0
    %5331 = vmatpush1.xpose.msra.mxu0 0.0
    %5332 = vmatprep.subr.mxu0 0.0
    %5333 = vmatpush1.xpose.msra.mxu0 0.0
    %5334 = vmatprep.subr.mxu0 0.0
    %5335 = vmatpush1.xpose.msra.mxu0 0.0
    %5336 = vmatprep.subr.mxu0 0.0
    %5337 = vmatpush1.xpose.msra.mxu0 0.0
    %5338 = vmatprep.subr.mxu0 0.0
    %5339 = vmatpush1.xpose.msra.mxu0 0.0
    %5340 = vmatprep.subr.mxu0 0.0
    %5341 = vmatpush1.xpose.msra.mxu0 0.0
    %5342 = vmatprep.subr.mxu0 0.0
    %5343 = vmatpush1.xpose.msra.mxu0 0.0
    %5344 = vmatprep.subr.mxu0 0.0
    %5345 = vmatpush1.xpose.msra.mxu0 0.0
    %5346 = vmatprep.subr.mxu0 0.0
    %5347 = vmatpush1.xpose.msra.mxu0 0.0
    %5348 = vmatprep.subr.mxu0 0.0
    %5349 = vmatpush1.xpose.msra.mxu0 0.0
    %5350 = vmatprep.subr.mxu0 0.0
    %5351 = vmatpush1.xpose.msra.mxu0 0.0
    %5352 = vmatprep.subr.mxu0 0.0
    %5353 = vmatpush1.xpose.msra.mxu0 0.0
    %5354 = vmatprep.subr.mxu0 0.0
    %5355 = vmatpush1.xpose.msra.mxu0 0.0
    %5356 = vmatprep.subr.mxu0 0.0
    %5357 = vmatpush1.xpose.msra.mxu0 0.0
    %5358 = vmatprep.subr.mxu0 0.0
    %5359 = vmatpush1.xpose.msra.mxu0 0.0
    %5360 = vmatprep.subr.mxu0 0.0
    %5361 = vmatpush1.xpose.msra.mxu0 0.0
    %5362 = vmatprep.subr.mxu0 0.0
    %5363 = vmatpush1.xpose.msra.mxu0 0.0
    %5364 = vmatprep.mubr.f32.mxu0 0.0
    %5365 = vmatmul.mubr.f32.gmra.mrb[0].mxu0 %v3600
    %v5366 = vpop.f32.mrb[0].mxu0
    %v5367 = vadd.f32 0.0, %v5366
    %v5368 = vpop.f32.mrb[0].mxu0
    %5369 = vdwg.mxu0
    %vm5370 = vcmask 27648
    %v5371 = vsel %vm5370, %v2866, 0.0
    %v5372 = vsel %vm5370, %v2939, 0.0
    %v5373 = vadd.f32 %v5371, %v5372
    %v5374 = vsel %vm5370, %v3012, 0.0
    %v5375 = vadd.f32 %v5373, %v5374
    %v5376 = vsel %vm5370, %v3085, 0.0
    %v5377 = vadd.f32 %v5375, %v5376
    %v5378 = vsel %vm5370, %v3158, 0.0
    %v5379 = vadd.f32 %v5377, %v5378
    %v5380 = vsel %vm5370, %v3231, 0.0
    %v5381 = vadd.f32 %v5379, %v5380
    %5382 = vadd.xlane.f32.xlu0 %v5381
    %v5383 = vpop.xlane.xlu0 %5382
    %v5384 = vrot.slane %v5383, 4
    %v5385 = vadd.f32 %v5383, %v5384
    %v5386 = vrot.slane %v5385, 2
    %v5387 = vadd.f32 %v5385, %v5386
    %v5388 = vrot.slane %v5387, 1
    %v5389 = vadd.f32 %v5387, %v5388
    %s5390 = vtos %v5389
    %vm5391 = vcmp.ne.f32.partialorder %v2866, 0.0
    %vm5392 = vcmp.ne.f32.partialorder %v2939, 0.0
    %vm5393 = vcmp.ne.f32.partialorder %v3012, 0.0
    %vm5394 = vcmp.ne.f32.partialorder %v3085, 0.0
    %vm5395 = vcmp.ne.f32.partialorder %v3158, 0.0
    %vm5396 = vcmp.ne.f32.partialorder %v3231, 0.0
    %v5397 = vsel %vm5391, 1, 0
    %v5398 = vsel %vm5392, 1, 0
    %v5399 = vsel %vm5393, 1, 0
    %v5400 = vsel %vm5394, 1, 0
    %v5401 = vsel %vm5395, 1, 0
    %v5402 = vsel %vm5396, 1, 0
    %v5403 = vcvt.s32.f32 %v5397
    %v5404 = vcvt.s32.f32 %v5398
    %v5405 = vcvt.s32.f32 %v5399
    %v5406 = vcvt.s32.f32 %v5400
    %v5407 = vcvt.s32.f32 %v5401
    %v5408 = vcvt.s32.f32 %v5402
    %v5409 = vsel %vm5370, %v5403, 0.0
    %v5410 = vsel %vm5370, %v5404, 0.0
    %v5411 = vadd.f32 %v5409, %v5410
    %v5412 = vsel %vm5370, %v5405, 0.0
    %v5413 = vadd.f32 %v5411, %v5412
    %v5414 = vsel %vm5370, %v5406, 0.0
    %v5415 = vadd.f32 %v5413, %v5414
    %v5416 = vsel %vm5370, %v5407, 0.0
    %v5417 = vadd.f32 %v5415, %v5416
    %v5418 = vsel %vm5370, %v5408, 0.0
    %v5419 = vadd.f32 %v5417, %v5418
    %5420 = vadd.xlane.f32.xlu0 %v5419
    %v5421 = vpop.xlane.xlu0 %5420
    %v5422 = vrot.slane %v5421, 4
    %v5423 = vadd.f32 %v5421, %v5422
    %v5424 = vrot.slane %v5423, 2
    %v5425 = vadd.f32 %v5423, %v5424
    %v5426 = vrot.slane %v5425, 1
    %v5427 = vadd.f32 %v5425, %v5426
    %s5428 = vtos %v5427
    %v5429 = vstv %s5428
    %v5430 = vrcp.pop %v5429
    %s5431 = vtos %v5430
    %s5432 = smul.f32 %s5390, %s5431
    %v5433 = vsel %vm5370, %v4177, 0.0
    %v5434 = vsel %vm5370, %v4247, 0.0
    %v5435 = vadd.f32 %v5433, %v5434
    %v5436 = vsel %vm5370, %v4317, 0.0
    %v5437 = vadd.f32 %v5435, %v5436
    %v5438 = vsel %vm5370, %v4387, 0.0
    %v5439 = vadd.f32 %v5437, %v5438
    %v5440 = vsel %vm5370, %v4457, 0.0
    %v5441 = vadd.f32 %v5439, %v5440
    %v5442 = vsel %vm5370, %v4527, 0.0
    %v5443 = vadd.f32 %v5441, %v5442
    %5444 = vadd.xlane.f32.xlu0 %v5443
    %v5445 = vpop.xlane.xlu0 %5444
    %v5446 = vrot.slane %v5445, 4
    %v5447 = vadd.f32 %v5445, %v5446
    %v5448 = vrot.slane %v5447, 2
    %v5449 = vadd.f32 %v5447, %v5448
    %v5450 = vrot.slane %v5449, 1
    %v5451 = vadd.f32 %v5449, %v5450
    %s5452 = vtos %v5451
    %vm5453 = vcmp.ne.f32.partialorder %v4177, 0.0
    %vm5454 = vcmp.ne.f32.partialorder %v4247, 0.0
    %vm5455 = vcmp.ne.f32.partialorder %v4317, 0.0
    %vm5456 = vcmp.ne.f32.partialorder %v4387, 0.0
    %vm5457 = vcmp.ne.f32.partialorder %v4457, 0.0
    %vm5458 = vcmp.ne.f32.partialorder %v4527, 0.0
    %v5459 = vsel %vm5453, 1, 0
    %v5460 = vsel %vm5454, 1, 0
    %v5461 = vsel %vm5455, 1, 0
    %v5462 = vsel %vm5456, 1, 0
    %v5463 = vsel %vm5457, 1, 0
    %v5464 = vsel %vm5458, 1, 0
    %v5465 = vcvt.s32.f32 %v5459
    %v5466 = vcvt.s32.f32 %v5460
    %v5467 = vcvt.s32.f32 %v5461
    %v5468 = vcvt.s32.f32 %v5462
    %v5469 = vcvt.s32.f32 %v5463
    %v5470 = vcvt.s32.f32 %v5464
    %v5471 = vsel %vm5370, %v5465, 0.0
    %v5472 = vsel %vm5370, %v5466, 0.0
    %v5473 = vadd.f32 %v5471, %v5472
    %v5474 = vsel %vm5370, %v5467, 0.0
    %v5475 = vadd.f32 %v5473, %v5474
    %v5476 = vsel %vm5370, %v5468, 0.0
    %v5477 = vadd.f32 %v5475, %v5476
    %v5478 = vsel %vm5370, %v5469, 0.0
    %v5479 = vadd.f32 %v5477, %v5478
    %v5480 = vsel %vm5370, %v5470, 0.0
    %v5481 = vadd.f32 %v5479, %v5480
    %5482 = vadd.xlane.f32.xlu0 %v5481
    %v5483 = vpop.xlane.xlu0 %5482
    %v5484 = vrot.slane %v5483, 4
    %v5485 = vadd.f32 %v5483, %v5484
    %v5486 = vrot.slane %v5485, 2
    %v5487 = vadd.f32 %v5485, %v5486
    %v5488 = vrot.slane %v5487, 1
    %v5489 = vadd.f32 %v5487, %v5488
    %s5490 = vtos %v5489
    %v5491 = vstv %s5490
    %v5492 = vrcp.pop %v5491
    %s5493 = vtos %v5492
    %s5494 = smul.f32 %s5452, %s5493
    %s5495 = ssub.f32 0.0, %s5432
    %s5496 = sadd.f32 %s5495, %s5494
    %s5497 = sadd.f32 %s5496, 0.0
    %v5498 = vsel %vm5370, %v3304, 0.0
    %v5499 = vsel %vm5370, %v3377, 0.0
    %v5500 = vadd.f32 %v5498, %v5499
    %v5501 = vsel %vm5370, %v3450, 0.0
    %v5502 = vadd.f32 %v5500, %v5501
    %v5503 = vsel %vm5370, %v3523, 0.0
    %v5504 = vadd.f32 %v5502, %v5503
    %v5505 = vsel %vm5370, %v3596, 0.0
    %v5506 = vadd.f32 %v5504, %v5505
    %v5507 = vsel %vm5370, %v3669, 0.0
    %v5508 = vadd.f32 %v5506, %v5507
    %5509 = vadd.xlane.f32.xlu0 %v5508
    %v5510 = vpop.xlane.xlu0 %5509
    %v5511 = vrot.slane %v5510, 4
    %v5512 = vadd.f32 %v5510, %v5511
    %v5513 = vrot.slane %v5512, 2
    %v5514 = vadd.f32 %v5512, %v5513
    %v5515 = vrot.slane %v5514, 1
    %v5516 = vadd.f32 %v5514, %v5515
    %s5517 = vtos %v5516
    %vm5518 = vcmp.ne.f32.partialorder %v3304, 0.0
    %vm5519 = vcmp.ne.f32.partialorder %v3377, 0.0
    %vm5520 = vcmp.ne.f32.partialorder %v3450, 0.0
    %vm5521 = vcmp.ne.f32.partialorder %v3523, 0.0
    %vm5522 = vcmp.ne.f32.partialorder %v3596, 0.0
    %vm5523 = vcmp.ne.f32.partialorder %v3669, 0.0
    %v5524 = vsel %vm5518, 1, 0
    %v5525 = vsel %vm5519, 1, 0
    %v5526 = vsel %vm5520, 1, 0
    %v5527 = vsel %vm5521, 1, 0
    %v5528 = vsel %vm5522, 1, 0
    %v5529 = vsel %vm5523, 1, 0
    %v5530 = vcvt.s32.f32 %v5524
    %v5531 = vcvt.s32.f32 %v5525
    %v5532 = vcvt.s32.f32 %v5526
    %v5533 = vcvt.s32.f32 %v5527
    %v5534 = vcvt.s32.f32 %v5528
    %v5535 = vcvt.s32.f32 %v5529
    %v5536 = vsel %vm5370, %v5530, 0.0
    %v5537 = vsel %vm5370, %v5531, 0.0
    %v5538 = vadd.f32 %v5536, %v5537
    %v5539 = vsel %vm5370, %v5532, 0.0
    %v5540 = vadd.f32 %v5538, %v5539
    %v5541 = vsel %vm5370, %v5533, 0.0
    %v5542 = vadd.f32 %v5540, %v5541
    %v5543 = vsel %vm5370, %v5534, 0.0
    %v5544 = vadd.f32 %v5542, %v5543
    %v5545 = vsel %vm5370, %v5535, 0.0
    %v5546 = vadd.f32 %v5544, %v5545
    %5547 = vadd.xlane.f32.xlu0 %v5546
    %v5548 = vpop.xlane.xlu0 %5547
    %v5549 = vrot.slane %v5548, 4
    %v5550 = vadd.f32 %v5548, %v5549
    %v5551 = vrot.slane %v5550, 2
    %v5552 = vadd.f32 %v5550, %v5551
    %v5553 = vrot.slane %v5552, 1
    %v5554 = vadd.f32 %v5552, %v5553
    %s5555 = vtos %v5554
    %v5556 = vstv %s5555
    %v5557 = vrcp.pop %v5556
    %s5558 = vtos %v5557
    %s5559 = smul.f32 %s5517, %s5558
    %v5560 = vsel %vm5370, %v4597, 0.0
    %v5561 = vsel %vm5370, %v4667, 0.0
    %v5562 = vadd.f32 %v5560, %v5561
    %v5563 = vsel %vm5370, %v4737, 0.0
    %v5564 = vadd.f32 %v5562, %v5563
    %v5565 = vsel %vm5370, %v4807, 0.0
    %v5566 = vadd.f32 %v5564, %v5565
    %v5567 = vsel %vm5370, %v4877, 0.0
    %v5568 = vadd.f32 %v5566, %v5567
    %v5569 = vsel %vm5370, %v4947, 0.0
    %v5570 = vadd.f32 %v5568, %v5569
    %5571 = vadd.xlane.f32.xlu0 %v5570
    %v5572 = vpop.xlane.xlu0 %5571
    %v5573 = vrot.slane %v5572, 4
    %v5574 = vadd.f32 %v5572, %v5573
    %v5575 = vrot.slane %v5574, 2
    %v5576 = vadd.f32 %v5574, %v5575
    %v5577 = vrot.slane %v5576, 1
    %v5578 = vadd.f32 %v5576, %v5577
    %s5579 = vtos %v5578
    %vm5580 = vcmp.ne.f32.partialorder %v4597, 0.0
    %vm5581 = vcmp.ne.f32.partialorder %v4667, 0.0
    %vm5582 = vcmp.ne.f32.partialorder %v4737, 0.0
    %vm5583 = vcmp.ne.f32.partialorder %v4807, 0.0
    %vm5584 = vcmp.ne.f32.partialorder %v4877, 0.0
    %vm5585 = vcmp.ne.f32.partialorder %v4947, 0.0
    %v5586 = vsel %vm5580, 1, 0
    %v5587 = vsel %vm5581, 1, 0
    %v5588 = vsel %vm5582, 1, 0
    %v5589 = vsel %vm5583, 1, 0
    %v5590 = vsel %vm5584, 1, 0
    %v5591 = vsel %vm5585, 1, 0
    %v5592 = vcvt.s32.f32 %v5586
    %v5593 = vcvt.s32.f32 %v5587
    %v5594 = vcvt.s32.f32 %v5588
    %v5595 = vcvt.s32.f32 %v5589
    %v5596 = vcvt.s32.f32 %v5590
    %v5597 = vcvt.s32.f32 %v5591
    %v5598 = vsel %vm5370, %v5592, 0.0
    %v5599 = vsel %vm5370, %v5593, 0.0
    %v5600 = vadd.f32 %v5598, %v5599
    %v5601 = vsel %vm5370, %v5594, 0.0
    %v5602 = vadd.f32 %v5600, %v5601
    %v5603 = vsel %vm5370, %v5595, 0.0
    %v5604 = vadd.f32 %v5602, %v5603
    %v5605 = vsel %vm5370, %v5596, 0.0
    %v5606 = vadd.f32 %v5604, %v5605
    %v5607 = vsel %vm5370, %v5597, 0.0
    %v5608 = vadd.f32 %v5606, %v5607
    %5609 = vadd.xlane.f32.xlu0 %v5608
    %v5610 = vpop.xlane.xlu0 %5609
    %v5611 = vrot.slane %v5610, 4
    %v5612 = vadd.f32 %v5610, %v5611
    %v5613 = vrot.slane %v5612, 2
    %v5614 = vadd.f32 %v5612, %v5613
    %v5615 = vrot.slane %v5614, 1
    %v5616 = vadd.f32 %v5614, %v5615
    %s5617 = vtos %v5616
    %v5618 = vstv %s5617
    %v5619 = vrcp.pop %v5618
    %s5620 = vtos %v5619
    %s5621 = smul.f32 %s5579, %s5620
    %s5622 = ssub.f32 0.0, %s5559
    %s5623 = sadd.f32 %s5622, %s5621
    %s5624 = sadd.f32 %s5497, %s5623
    %v5625 = vsel %vm5370, %v3742, 0.0
    %v5626 = vsel %vm5370, %v3815, 0.0
    %v5627 = vadd.f32 %v5625, %v5626
    %v5628 = vsel %vm5370, %v3888, 0.0
    %v5629 = vadd.f32 %v5627, %v5628
    %v5630 = vsel %vm5370, %v3961, 0.0
    %v5631 = vadd.f32 %v5629, %v5630
    %v5632 = vsel %vm5370, %v4034, 0.0
    %v5633 = vadd.f32 %v5631, %v5632
    %v5634 = vsel %vm5370, %v4107, 0.0
    %v5635 = vadd.f32 %v5633, %v5634
    %5636 = vadd.xlane.f32.xlu0 %v5635
    %v5637 = vpop.xlane.xlu0 %5636
    %v5638 = vrot.slane %v5637, 4
    %v5639 = vadd.f32 %v5637, %v5638
    %v5640 = vrot.slane %v5639, 2
    %v5641 = vadd.f32 %v5639, %v5640
    %v5642 = vrot.slane %v5641, 1
    %v5643 = vadd.f32 %v5641, %v5642
    %s5644 = vtos %v5643
    %vm5645 = vcmp.ne.f32.partialorder %v3742, 0.0
    %vm5646 = vcmp.ne.f32.partialorder %v3815, 0.0
    %vm5647 = vcmp.ne.f32.partialorder %v3888, 0.0
    %vm5648 = vcmp.ne.f32.partialorder %v3961, 0.0
    %vm5649 = vcmp.ne.f32.partialorder %v4034, 0.0
    %vm5650 = vcmp.ne.f32.partialorder %v4107, 0.0
    %v5651 = vsel %vm5645, 1, 0
    %v5652 = vsel %vm5646, 1, 0
    %v5653 = vsel %vm5647, 1, 0
    %v5654 = vsel %vm5648, 1, 0
    %v5655 = vsel %vm5649, 1, 0
    %v5656 = vsel %vm5650, 1, 0
    %v5657 = vcvt.s32.f32 %v5651
    %v5658 = vcvt.s32.f32 %v5652
    %v5659 = vcvt.s32.f32 %v5653
    %v5660 = vcvt.s32.f32 %v5654
    %v5661 = vcvt.s32.f32 %v5655
    %v5662 = vcvt.s32.f32 %v5656
    %v5663 = vsel %vm5370, %v5657, 0.0
    %v5664 = vsel %vm5370, %v5658, 0.0
    %v5665 = vadd.f32 %v5663, %v5664
    %v5666 = vsel %vm5370, %v5659, 0.0
    %v5667 = vadd.f32 %v5665, %v5666
    %v5668 = vsel %vm5370, %v5660, 0.0
    %v5669 = vadd.f32 %v5667, %v5668
    %v5670 = vsel %vm5370, %v5661, 0.0
    %v5671 = vadd.f32 %v5669, %v5670
    %v5672 = vsel %vm5370, %v5662, 0.0
    %v5673 = vadd.f32 %v5671, %v5672
    %5674 = vadd.xlane.f32.xlu0 %v5673
    %v5675 = vpop.xlane.xlu0 %5674
    %v5676 = vrot.slane %v5675, 4
    %v5677 = vadd.f32 %v5675, %v5676
    %v5678 = vrot.slane %v5677, 2
    %v5679 = vadd.f32 %v5677, %v5678
    %v5680 = vrot.slane %v5679, 1
    %v5681 = vadd.f32 %v5679, %v5680
    %s5682 = vtos %v5681
    %v5683 = vstv %s5682
    %v5684 = vrcp.pop %v5683
    %s5685 = vtos %v5684
    %s5686 = smul.f32 %s5644, %s5685
    %v5687 = vsel %vm5370, %v5017, 0.0
    %v5688 = vsel %vm5370, %v5087, 0.0
    %v5689 = vadd.f32 %v5687, %v5688
    %v5690 = vsel %vm5370, %v5157, 0.0
    %v5691 = vadd.f32 %v5689, %v5690
    %v5692 = vsel %vm5370, %v5227, 0.0
    %v5693 = vadd.f32 %v5691, %v5692
    %v5694 = vsel %vm5370, %v5297, 0.0
    %v5695 = vadd.f32 %v5693, %v5694
    %v5696 = vsel %vm5370, %v5367, 0.0
    %v5697 = vadd.f32 %v5695, %v5696
    %5698 = vadd.xlane.f32.xlu0 %v5697
    %v5699 = vpop.xlane.xlu0 %5698
    %v5700 = vrot.slane %v5699, 4
    %v5701 = vadd.f32 %v5699, %v5700
    %v5702 = vrot.slane %v5701, 2
    %v5703 = vadd.f32 %v5701, %v5702
    %v5704 = vrot.slane %v5703, 1
    %v5705 = vadd.f32 %v5703, %v5704
    %s5706 = vtos %v5705
    %vm5707 = vcmp.ne.f32.partialorder %v5017, 0.0
    %vm5708 = vcmp.ne.f32.partialorder %v5087, 0.0
    %vm5709 = vcmp.ne.f32.partialorder %v5157, 0.0
    %vm5710 = vcmp.ne.f32.partialorder %v5227, 0.0
    %vm5711 = vcmp.ne.f32.partialorder %v5297, 0.0
    %vm5712 = vcmp.ne.f32.partialorder %v5367, 0.0
    %v5713 = vsel %vm5707, 1, 0
    %v5714 = vsel %vm5708, 1, 0
    %v5715 = vsel %vm5709, 1, 0
    %v5716 = vsel %vm5710, 1, 0
    %v5717 = vsel %vm5711, 1, 0
    %v5718 = vsel %vm5712, 1, 0
    %v5719 = vcvt.s32.f32 %v5713
    %v5720 = vcvt.s32.f32 %v5714
    %v5721 = vcvt.s32.f32 %v5715
    %v5722 = vcvt.s32.f32 %v5716
    %v5723 = vcvt.s32.f32 %v5717
    %v5724 = vcvt.s32.f32 %v5718
    %v5725 = vsel %vm5370, %v5719, 0.0
    %v5726 = vsel %vm5370, %v5720, 0.0
    %v5727 = vadd.f32 %v5725, %v5726
    %v5728 = vsel %vm5370, %v5721, 0.0
    %v5729 = vadd.f32 %v5727, %v5728
    %v5730 = vsel %vm5370, %v5722, 0.0
    %v5731 = vadd.f32 %v5729, %v5730
    %v5732 = vsel %vm5370, %v5723, 0.0
    %v5733 = vadd.f32 %v5731, %v5732
    %v5734 = vsel %vm5370, %v5724, 0.0
    %v5735 = vadd.f32 %v5733, %v5734
    %5736 = vadd.xlane.f32.xlu0 %v5735
    %v5737 = vpop.xlane.xlu0 %5736
    %v5738 = vrot.slane %v5737, 4
    %v5739 = vadd.f32 %v5737, %v5738
    %v5740 = vrot.slane %v5739, 2
    %v5741 = vadd.f32 %v5739, %v5740
    %v5742 = vrot.slane %v5741, 1
    %v5743 = vadd.f32 %v5741, %v5742
    %s5744 = vtos %v5743
    %v5745 = vstv %s5744
    %v5746 = vrcp.pop %v5745
    %s5747 = vtos %v5746
    %s5748 = smul.f32 %s5706, %s5747
    %s5749 = ssub.f32 0.0, %s5686
    %s5750 = sadd.f32 %s5749, %s5748
    %s5751 = sadd.f32 %s5624, %s5750
    %s5752 = scalar_lea.smem [#allocation2], 0
    %5753 = sst [smem:[%s5752]] %s5751
    %v5754 = vld [vmem:[%s11] sm:$0x3f]
    %v5755 = vld [vmem:[%s12] sm:$0xff]
    %v5756 = vld [vmem:[%s12 + $0x8] sm:$0xff]
    %v5757 = vld [vmem:[%s12 + $0x10] sm:$0xff]
    %v5758 = vld [vmem:[%s12 + $0x18] sm:$0xff]
    %v5759 = vld [vmem:[%s12 + $0x20] sm:$0xff]
    %v5760 = vld [vmem:[%s12 + $0x28] sm:$0xff]
    %v5761 = vld [vmem:[%s12 + $0x30] sm:$0xff]
    %v5762 = vld [vmem:[%s12 + $0x38] sm:$0xff]
    %v5763 = vld [vmem:[%s12 + $0x40] sm:$0xff]
    %v5764 = vld [vmem:[%s12 + $0x48] sm:$0xff]
    %v5765 = vld [vmem:[%s12 + $0x50] sm:$0xf]
    %v5766 = vld [vmem:[%s12 + $0x58] sm:$0xf]
    %v5767 = vld [vmem:[%s14] sm:$0x3]
    %v5769 = vlaneseq
    %v5770 = vshrl.u32 %v5769, 7
    %v5771 = vsub.s32 0, %v5770
    %v5772 = vrot.slane %v5767, %v5771
    %v5773 = vlaneseq
    %v5774 = vshrl.u32 %v5773, 7
    %v5775 = vsub.s32 1, %v5774
    %v5776 = vrot.slane %v5767, %v5775
    %vm5779 = vcmask 359424
    %v5781 = vsel %vm5779, %v5754, 0
    %vm5783 = vcmask 1043456
    %v5785 = vsel %vm5783, %v5765, 0
    %v5788 = vsel %vm5783, %v5766, 0
    %5790 = vmatprep.subr.mxu0 %v5756
    %5791 = vmatpush1.msra.mxu0 %v5755
    %5792 = vmatprep.subr.mxu0 %v5758
    %5793 = vmatpush1.msra.mxu0 %v5757
    %5794 = vmatprep.subr.mxu0 %v5760
    %5795 = vmatpush1.msra.mxu0 %v5759
    %5796 = vmatprep.subr.mxu0 %v5762
    %5797 = vmatpush1.msra.mxu0 %v5761
    %5798 = vmatprep.subr.mxu0 %v5764
    %5799 = vmatpush1.msra.mxu0 %v5763
    %5800 = vmatprep.subr.mxu0 %v5788
    %5801 = vmatpush1.msra.mxu0 %v5785
    %5802 = vmatprep.subr.mxu0 0.0
    %5803 = vmatpush1.msra.mxu0 0.0
    %5804 = vmatprep.subr.mxu0 0.0
    %5805 = vmatpush1.msra.mxu0 0.0
    %5806 = vmatprep.subr.mxu0 0.0
    %5807 = vmatpush1.msra.mxu0 0.0
    %5808 = vmatprep.subr.mxu0 0.0
    %5809 = vmatpush1.msra.mxu0 0.0
    %5810 = vmatprep.subr.mxu0 0.0
    %5811 = vmatpush1.msra.mxu0 0.0
    %5812 = vmatprep.subr.mxu0 0.0
    %5813 = vmatpush1.msra.mxu0 0.0
    %5814 = vmatprep.subr.mxu0 0.0
    %5815 = vmatpush1.msra.mxu0 0.0
    %5816 = vmatprep.subr.mxu0 0.0
    %5817 = vmatpush1.msra.mxu0 0.0
    %5818 = vmatprep.subr.mxu0 0.0
    %5819 = vmatpush1.msra.mxu0 0.0
    %5820 = vmatprep.subr.mxu0 0.0
    %5821 = vmatpush1.msra.mxu0 0.0
    %5822 = vmatprep.subr.mxu0 0.0
    %5823 = vmatpush1.msra.mxu0 0.0
    %5824 = vmatprep.subr.mxu0 0.0
    %5825 = vmatpush1.msra.mxu0 0.0
    %5826 = vmatprep.subr.mxu0 0.0
    %5827 = vmatpush1.msra.mxu0 0.0
    %5828 = vmatprep.subr.mxu0 0.0
    %5829 = vmatpush1.msra.mxu0 0.0
    %5830 = vmatprep.subr.mxu0 0.0
    %5831 = vmatpush1.msra.mxu0 0.0
    %5832 = vmatprep.subr.mxu0 0.0
    %5833 = vmatpush1.msra.mxu0 0.0
    %5834 = vmatprep.subr.mxu0 0.0
    %5835 = vmatpush1.msra.mxu0 0.0
    %5836 = vmatprep.subr.mxu0 0.0
    %5837 = vmatpush1.msra.mxu0 0.0
    %5838 = vmatprep.subr.mxu0 0.0
    %5839 = vmatpush1.msra.mxu0 0.0
    %5840 = vmatprep.subr.mxu0 0.0
    %5841 = vmatpush1.msra.mxu0 0.0
    %5842 = vmatprep.subr.mxu0 0.0
    %5843 = vmatpush1.msra.mxu0 0.0
    %5844 = vmatprep.subr.mxu0 0.0
    %5845 = vmatpush1.msra.mxu0 0.0
    %5846 = vmatprep.subr.mxu0 0.0
    %5847 = vmatpush1.msra.mxu0 0.0
    %5848 = vmatprep.subr.mxu0 0.0
    %5849 = vmatpush1.msra.mxu0 0.0
    %5850 = vmatprep.subr.mxu0 0.0
    %5851 = vmatpush1.msra.mxu0 0.0
    %5852 = vmatprep.subr.mxu0 0.0
    %5853 = vmatpush1.msra.mxu0 0.0
    %5854 = vmatprep.mubr.f32.mxu0 0.0
    %5855 = vmatmul.mubr.f32.gmra.mrb[0].mxu0 %v5781
    %v5856 = vpop.f32.mrb[0].mxu0
    %v5857 = vadd.f32 %v5772, %v5856
    %v5858 = vpop.f32.mrb[0].mxu0
    %v5859 = vadd.f32 %v5776, %v5858
    %5860 = vdwg.mxu0
    %v5861 = vld [vmem:[%s13] sm:$0xff]
    %v5862 = vld [vmem:[%s13 + $0x8] sm:$0xff]
    %v5869 = vrot.slane %v2295, 7
    %vm5870 = vcmask 1041409
    %v5871 = vsel %vm5870, %v5869, %v2293
    %v5872 = vrot.slane %v2297, 6
    %vm5873 = vcmask 1042434
    %v5874 = vsel %vm5873, %v5872, %v5871
    %v5875 = vrot.slane %v2299, 5
    %vm5876 = vcmask 1043459
    %v5877 = vsel %vm5876, %v5875, %v5874
    %v5878 = vrot.slane %v2301, 4
    %vm5879 = vcmask 1044484
    %v5880 = vsel %vm5879, %v5878, %v5877
    %v5881 = vrot.slane %v2303, 3
    %vm5882 = vcmask 1045509
    %v5883 = vsel %vm5882, %v5881, %v5880
    %v5884 = vsel %vm601, %v5883, 0
    %5886 = vmatprep.subr.mxu0 %v5862
    %5887 = vmatpush1.msra.mxu0 %v5861
    %5888 = vmatprep.subr.mxu0 0.0
    %5889 = vmatpush1.msra.mxu0 0.0
    %5890 = vmatprep.subr.mxu0 0.0
    %5891 = vmatpush1.msra.mxu0 0.0
    %5892 = vmatprep.subr.mxu0 0.0
    %5893 = vmatpush1.msra.mxu0 0.0
    %5894 = vmatprep.subr.mxu0 0.0
    %5895 = vmatpush1.msra.mxu0 0.0
    %5896 = vmatprep.subr.mxu0 0.0
    %5897 = vmatpush1.msra.mxu0 0.0
    %5898 = vmatprep.subr.mxu0 0.0
    %5899 = vmatpush1.msra.mxu0 0.0
    %5900 = vmatprep.subr.mxu0 0.0
    %5901 = vmatpush1.msra.mxu0 0.0
    %5902 = vmatprep.subr.mxu0 0.0
    %5903 = vmatpush1.msra.mxu0 0.0
    %5904 = vmatprep.subr.mxu0 0.0
    %5905 = vmatpush1.msra.mxu0 0.0
    %5906 = vmatprep.subr.mxu0 0.0
    %5907 = vmatpush1.msra.mxu0 0.0
    %5908 = vmatprep.subr.mxu0 0.0
    %5909 = vmatpush1.msra.mxu0 0.0
    %5910 = vmatprep.subr.mxu0 0.0
    %5911 = vmatpush1.msra.mxu0 0.0
    %5912 = vmatprep.subr.mxu0 0.0
    %5913 = vmatpush1.msra.mxu0 0.0
    %5914 = vmatprep.subr.mxu0 0.0
    %5915 = vmatpush1.msra.mxu0 0.0
    %5916 = vmatprep.subr.mxu0 0.0
    %5917 = vmatpush1.msra.mxu0 0.0
    %5918 = vmatprep.subr.mxu0 0.0
    %5919 = vmatpush1.msra.mxu0 0.0
    %5920 = vmatprep.subr.mxu0 0.0
    %5921 = vmatpush1.msra.mxu0 0.0
    %5922 = vmatprep.subr.mxu0 0.0
    %5923 = vmatpush1.msra.mxu0 0.0
    %5924 = vmatprep.subr.mxu0 0.0
    %5925 = vmatpush1.msra.mxu0 0.0
    %5926 = vmatprep.subr.mxu0 0.0
    %5927 = vmatpush1.msra.mxu0 0.0
    %5928 = vmatprep.subr.mxu0 0.0
    %5929 = vmatpush1.msra.mxu0 0.0
    %5930 = vmatprep.subr.mxu0 0.0
    %5931 = vmatpush1.msra.mxu0 0.0
    %5932 = vmatprep.subr.mxu0 0.0
    %5933 = vmatpush1.msra.mxu0 0.0
    %5934 = vmatprep.subr.mxu0 0.0
    %5935 = vmatpush1.msra.mxu0 0.0
    %5936 = vmatprep.subr.mxu0 0.0
    %5937 = vmatpush1.msra.mxu0 0.0
    %5938 = vmatprep.subr.mxu0 0.0
    %5939 = vmatpush1.msra.mxu0 0.0
    %5940 = vmatprep.subr.mxu0 0.0
    %5941 = vmatpush1.msra.mxu0 0.0
    %5942 = vmatprep.subr.mxu0 0.0
    %5943 = vmatpush1.msra.mxu0 0.0
    %5944 = vmatprep.subr.mxu0 0.0
    %5945 = vmatpush1.msra.mxu0 0.0
    %5946 = vmatprep.subr.mxu0 0.0
    %5947 = vmatpush1.msra.mxu0 0.0
    %5948 = vmatprep.subr.mxu0 0.0
    %5949 = vmatpush1.msra.mxu0 0.0
    %5950 = vmatprep.mubr.f32.mxu0 0.0
    %5951 = vmatmul.mubr.f32.gmra.mrb[0].mxu0 %v5884
    %v5952 = vpop.f32.mrb[0].mxu0
    %v5953 = vadd.f32 0.0, %v5952
    %v5954 = vpop.f32.mrb[0].mxu0
    %v5955 = vadd.f32 0.0, %v5954
    %5956 = vdwg.mxu0
    %v5957 = vadd.f32 %v5857, %v5953
    %v5958 = vadd.f32 %v5859, %v5955
    %s5959 = scalar_lea.vmem %s13, 16
    %v5960 = vld [vmem:[%s5959] sm:$0xff]
    %v5961 = vld [vmem:[%s5959 + $0x8] sm:$0xff]
    %v5968 = vrot.slane %v2415, 7
    %v5969 = vsel %vm5870, %v5968, %v2413
    %v5970 = vrot.slane %v2417, 6
    %v5971 = vsel %vm5873, %v5970, %v5969
    %v5972 = vrot.slane %v2419, 5
    %v5973 = vsel %vm5876, %v5972, %v5971
    %v5974 = vrot.slane %v2421, 4
    %v5975 = vsel %vm5879, %v5974, %v5973
    %v5976 = vrot.slane %v2423, 3
    %v5977 = vsel %vm5882, %v5976, %v5975
    %v5978 = vsel %vm601, %v5977, 0
    %5980 = vmatprep.subr.mxu0 %v5961
    %5981 = vmatpush1.msra.mxu0 %v5960
    %5982 = vmatprep.subr.mxu0 0.0
    %5983 = vmatpush1.msra.mxu0 0.0
    %5984 = vmatprep.subr.mxu0 0.0
    %5985 = vmatpush1.msra.mxu0 0.0
    %5986 = vmatprep.subr.mxu0 0.0
    %5987 = vmatpush1.msra.mxu0 0.0
    %5988 = vmatprep.subr.mxu0 0.0
    %5989 = vmatpush1.msra.mxu0 0.0
    %5990 = vmatprep.subr.mxu0 0.0
    %5991 = vmatpush1.msra.mxu0 0.0
    %5992 = vmatprep.subr.mxu0 0.0
    %5993 = vmatpush1.msra.mxu0 0.0
    %5994 = vmatprep.subr.mxu0 0.0
    %5995 = vmatpush1.msra.mxu0 0.0
    %5996 = vmatprep.subr.mxu0 0.0
    %5997 = vmatpush1.msra.mxu0 0.0
    %5998 = vmatprep.subr.mxu0 0.0
    %5999 = vmatpush1.msra.mxu0 0.0
    %6000 = vmatprep.subr.mxu0 0.0
    %6001 = vmatpush1.msra.mxu0 0.0
    %6002 = vmatprep.subr.mxu0 0.0
    %6003 = vmatpush1.msra.mxu0 0.0
    %6004 = vmatprep.subr.mxu0 0.0
    %6005 = vmatpush1.msra.mxu0 0.0
    %6006 = vmatprep.subr.mxu0 0.0
    %6007 = vmatpush1.msra.mxu0 0.0
    %6008 = vmatprep.subr.mxu0 0.0
    %6009 = vmatpush1.msra.mxu0 0.0
    %6010 = vmatprep.subr.mxu0 0.0
    %6011 = vmatpush1.msra.mxu0 0.0
    %6012 = vmatprep.subr.mxu0 0.0
    %6013 = vmatpush1.msra.mxu0 0.0
    %6014 = vmatprep.subr.mxu0 0.0
    %6015 = vmatpush1.msra.mxu0 0.0
    %6016 = vmatprep.subr.mxu0 0.0
    %6017 = vmatpush1.msra.mxu0 0.0
    %6018 = vmatprep.subr.mxu0 0.0
    %6019 = vmatpush1.msra.mxu0 0.0
    %6020 = vmatprep.subr.mxu0 0.0
    %6021 = vmatpush1.msra.mxu0 0.0
    %6022 = vmatprep.subr.mxu0 0.0
    %6023 = vmatpush1.msra.mxu0 0.0
    %6024 = vmatprep.subr.mxu0 0.0
    %6025 = vmatpush1.msra.mxu0 0.0
    %6026 = vmatprep.subr.mxu0 0.0
    %6027 = vmatpush1.msra.mxu0 0.0
    %6028 = vmatprep.subr.mxu0 0.0
    %6029 = vmatpush1.msra.mxu0 0.0
    %6030 = vmatprep.subr.mxu0 0.0
    %6031 = vmatpush1.msra.mxu0 0.0
    %6032 = vmatprep.subr.mxu0 0.0
    %6033 = vmatpush1.msra.mxu0 0.0
    %6034 = vmatprep.subr.mxu0 0.0
    %6035 = vmatpush1.msra.mxu0 0.0
    %6036 = vmatprep.subr.mxu0 0.0
    %6037 = vmatpush1.msra.mxu0 0.0
    %6038 = vmatprep.subr.mxu0 0.0
    %6039 = vmatpush1.msra.mxu0 0.0
    %6040 = vmatprep.subr.mxu0 0.0
    %6041 = vmatpush1.msra.mxu0 0.0
    %6042 = vmatprep.subr.mxu0 0.0
    %6043 = vmatpush1.msra.mxu0 0.0
    %6044 = vmatprep.mubr.f32.mxu0 0.0
    %6045 = vmatmul.mubr.f32.gmra.mrb[0].mxu0 %v5978
    %v6046 = vpop.f32.mrb[0].mxu0
    %v6047 = vadd.f32 0.0, %v6046
    %v6048 = vpop.f32.mrb[0].mxu0
    %v6049 = vadd.f32 0.0, %v6048
    %6050 = vdwg.mxu0
    %v6051 = vadd.f32 %v5957, %v6047
    %v6052 = vadd.f32 %v5958, %v6049
    %s6053 = scalar_lea.vmem %s13, 32
    %v6054 = vld [vmem:[%s6053] sm:$0xff]
    %v6055 = vld [vmem:[%s6053 + $0x8] sm:$0xff]
    %v6062 = vrot.slane %v2535, 7
    %v6063 = vsel %vm5870, %v6062, %v2533
    %v6064 = vrot.slane %v2537, 6
    %v6065 = vsel %vm5873, %v6064, %v6063
    %v6066 = vrot.slane %v2539, 5
    %v6067 = vsel %vm5876, %v6066, %v6065
    %v6068 = vrot.slane %v2541, 4
    %v6069 = vsel %vm5879, %v6068, %v6067
    %v6070 = vrot.slane %v2543, 3
    %v6071 = vsel %vm5882, %v6070, %v6069
    %v6072 = vsel %vm601, %v6071, 0
    %6074 = vmatprep.subr.mxu0 %v6055
    %6075 = vmatpush1.msra.mxu0 %v6054
    %6076 = vmatprep.subr.mxu0 0.0
    %6077 = vmatpush1.msra.mxu0 0.0
    %6078 = vmatprep.subr.mxu0 0.0
    %6079 = vmatpush1.msra.mxu0 0.0
    %6080 = vmatprep.subr.mxu0 0.0
    %6081 = vmatpush1.msra.mxu0 0.0
    %6082 = vmatprep.subr.mxu0 0.0
    %6083 = vmatpush1.msra.mxu0 0.0
    %6084 = vmatprep.subr.mxu0 0.0
    %6085 = vmatpush1.msra.mxu0 0.0
    %6086 = vmatprep.subr.mxu0 0.0
    %6087 = vmatpush1.msra.mxu0 0.0
    %6088 = vmatprep.subr.mxu0 0.0
    %6089 = vmatpush1.msra.mxu0 0.0
    %6090 = vmatprep.subr.mxu0 0.0
    %6091 = vmatpush1.msra.mxu0 0.0
    %6092 = vmatprep.subr.mxu0 0.0
    %6093 = vmatpush1.msra.mxu0 0.0
    %6094 = vmatprep.subr.mxu0 0.0
    %6095 = vmatpush1.msra.mxu0 0.0
    %6096 = vmatprep.subr.mxu0 0.0
    %6097 = vmatpush1.msra.mxu0 0.0
    %6098 = vmatprep.subr.mxu0 0.0
    %6099 = vmatpush1.msra.mxu0 0.0
    %6100 = vmatprep.subr.mxu0 0.0
    %6101 = vmatpush1.msra.mxu0 0.0
    %6102 = vmatprep.subr.mxu0 0.0
    %6103 = vmatpush1.msra.mxu0 0.0
    %6104 = vmatprep.subr.mxu0 0.0
    %6105 = vmatpush1.msra.mxu0 0.0
    %6106 = vmatprep.subr.mxu0 0.0
    %6107 = vmatpush1.msra.mxu0 0.0
    %6108 = vmatprep.subr.mxu0 0.0
    %6109 = vmatpush1.msra.mxu0 0.0
    %6110 = vmatprep.subr.mxu0 0.0
    %6111 = vmatpush1.msra.mxu0 0.0
    %6112 = vmatprep.subr.mxu0 0.0
    %6113 = vmatpush1.msra.mxu0 0.0
    %6114 = vmatprep.subr.mxu0 0.0
    %6115 = vmatpush1.msra.mxu0 0.0
    %6116 = vmatprep.subr.mxu0 0.0
    %6117 = vmatpush1.msra.mxu0 0.0
    %6118 = vmatprep.subr.mxu0 0.0
    %6119 = vmatpush1.msra.mxu0 0.0
    %6120 = vmatprep.subr.mxu0 0.0
    %6121 = vmatpush1.msra.mxu0 0.0
    %6122 = vmatprep.subr.mxu0 0.0
    %6123 = vmatpush1.msra.mxu0 0.0
    %6124 = vmatprep.subr.mxu0 0.0
    %6125 = vmatpush1.msra.mxu0 0.0
    %6126 = vmatprep.subr.mxu0 0.0
    %6127 = vmatpush1.msra.mxu0 0.0
    %6128 = vmatprep.subr.mxu0 0.0
    %6129 = vmatpush1.msra.mxu0 0.0
    %6130 = vmatprep.subr.mxu0 0.0
    %6131 = vmatpush1.msra.mxu0 0.0
    %6132 = vmatprep.subr.mxu0 0.0
    %6133 = vmatpush1.msra.mxu0 0.0
    %6134 = vmatprep.subr.mxu0 0.0
    %6135 = vmatpush1.msra.mxu0 0.0
    %6136 = vmatprep.subr.mxu0 0.0
    %6137 = vmatpush1.msra.mxu0 0.0
    %6138 = vmatprep.mubr.f32.mxu0 0.0
    %6139 = vmatmul.mubr.f32.gmra.mrb[0].mxu0 %v6072
    %v6140 = vpop.f32.mrb[0].mxu0
    %v6141 = vadd.f32 0.0, %v6140
    %v6142 = vpop.f32.mrb[0].mxu0
    %v6143 = vadd.f32 0.0, %v6142
    %6144 = vdwg.mxu0
    %v6145 = vadd.f32 %v6051, %v6141
    %v6146 = vadd.f32 %v6052, %v6143
    %v6147 = vmax.f32 %v6145, 0.0
    %v6148 = vmax.f32 %v6146, 0.0
    %v6149 = vld [vmem:[%s15] sm:$0xff]
    %v6150 = vld [vmem:[%s15 + $0x8] sm:$0xff]
    %v6151 = vld [vmem:[%s15 + $0x10] sm:$0xff]
    %v6152 = vld [vmem:[%s15 + $0x18] sm:$0xff]
    %v6153 = vld [vmem:[%s15 + $0x20] sm:$0xff]
    %v6154 = vld [vmem:[%s15 + $0x28] sm:$0xff]
    %v6155 = vld [vmem:[%s15 + $0x30] sm:$0xff]
    %v6156 = vld [vmem:[%s15 + $0x38] sm:$0xff]
    %v6157 = vld [vmem:[%s15 + $0x40] sm:$0xff]
    %v6158 = vld [vmem:[%s15 + $0x48] sm:$0xff]
    %v6159 = vld [vmem:[%s15 + $0x50] sm:$0xff]
    %v6160 = vld [vmem:[%s15 + $0x58] sm:$0xff]
    %v6161 = vld [vmem:[%s15 + $0x60] sm:$0xff]
    %v6162 = vld [vmem:[%s15 + $0x68] sm:$0xff]
    %v6163 = vld [vmem:[%s15 + $0x70] sm:$0xff]
    %v6164 = vld [vmem:[%s15 + $0x78] sm:$0xff]
    %v6165 = vld [vmem:[%s15 + $0x80] sm:$0xff]
    %v6166 = vld [vmem:[%s15 + $0x88] sm:$0xff]
    %v6167 = vld [vmem:[%s15 + $0x90] sm:$0xff]
    %v6168 = vld [vmem:[%s15 + $0x98] sm:$0xff]
    %v6169 = vld [vmem:[%s15 + $0xa0] sm:$0xff]
    %v6170 = vld [vmem:[%s15 + $0xa8] sm:$0xff]
    %v6171 = vld [vmem:[%s15 + $0xb0] sm:$0xff]
    %v6172 = vld [vmem:[%s15 + $0xb8] sm:$0xff]
    %v6173 = vld [vmem:[%s15 + $0xc0] sm:$0xff]
    %v6174 = vld [vmem:[%s15 + $0xc8] sm:$0xff]
    %v6175 = vld [vmem:[%s15 + $0xd0] sm:$0xff]
    %v6176 = vld [vmem:[%s15 + $0xd8] sm:$0xff]
    %v6177 = vld [vmem:[%s15 + $0xe0] sm:$0xff]
    %v6178 = vld [vmem:[%s15 + $0xe8] sm:$0xff]
    %v6179 = vld [vmem:[%s15 + $0xf0] sm:$0xff]
    %v6180 = vld [vmem:[%s15 + $0xf8] sm:$0xff]
    %v6181 = vld [vmem:[%s15 + $0x100] sm:$0xff]
    %v6182 = vld [vmem:[%s15 + $0x108] sm:$0xff]
    %v6183 = vld [vmem:[%s15 + $0x110] sm:$0xff]
    %v6184 = vld [vmem:[%s15 + $0x118] sm:$0xff]
    %v6185 = vld [vmem:[%s15 + $0x120] sm:$0xff]
    %v6186 = vld [vmem:[%s15 + $0x128] sm:$0xff]
    %v6187 = vld [vmem:[%s15 + $0x130] sm:$0xff]
    %v6188 = vld [vmem:[%s15 + $0x138] sm:$0xff]
    %v6189 = vld [vmem:[%s15 + $0x140] sm:$0xff]
    %v6190 = vld [vmem:[%s15 + $0x148] sm:$0xff]
    %v6191 = vld [vmem:[%s16] sm:$0x3]
    %v6193 = vlaneseq
    %v6194 = vshrl.u32 %v6193, 7
    %v6195 = vsub.s32 0, %v6194
    %v6196 = vrot.slane %v6191, %v6195
    %v6197 = vlaneseq
    %v6198 = vshrl.u32 %v6197, 7
    %v6199 = vsub.s32 1, %v6198
    %v6200 = vrot.slane %v6191, %v6199
    %vm6203 = vcmask 326656
    %v6205 = vsel %vm6203, %v6148, 0
    %6207 = vmatprep.subr.mxu0 %v6150
    %6208 = vmatpush1.msra.mxu0 %v6149
    %6209 = vmatprep.subr.mxu0 %v6152
    %6210 = vmatpush1.msra.mxu0 %v6151
    %6211 = vmatprep.subr.mxu0 %v6154
    %6212 = vmatpush1.msra.mxu0 %v6153
    %6213 = vmatprep.subr.mxu0 %v6156
    %6214 = vmatpush1.msra.mxu0 %v6155
    %6215 = vmatprep.subr.mxu0 %v6158
    %6216 = vmatpush1.msra.mxu0 %v6157
    %6217 = vmatprep.subr.mxu0 %v6160
    %6218 = vmatpush1.msra.mxu0 %v6159
    %6219 = vmatprep.subr.mxu0 %v6162
    %6220 = vmatpush1.msra.mxu0 %v6161
    %6221 = vmatprep.subr.mxu0 %v6164
    %6222 = vmatpush1.msra.mxu0 %v6163
    %6223 = vmatprep.subr.mxu0 %v6166
    %6224 = vmatpush1.msra.mxu0 %v6165
    %6225 = vmatprep.subr.mxu0 %v6168
    %6226 = vmatpush1.msra.mxu0 %v6167
    %6227 = vmatprep.subr.mxu0 %v6170
    %6228 = vmatpush1.msra.mxu0 %v6169
    %6229 = vmatprep.subr.mxu0 %v6172
    %6230 = vmatpush1.msra.mxu0 %v6171
    %6231 = vmatprep.subr.mxu0 %v6174
    %6232 = vmatpush1.msra.mxu0 %v6173
    %6233 = vmatprep.subr.mxu0 %v6176
    %6234 = vmatpush1.msra.mxu0 %v6175
    %6235 = vmatprep.subr.mxu0 %v6178
    %6236 = vmatpush1.msra.mxu0 %v6177
    %6237 = vmatprep.subr.mxu0 %v6180
    %6238 = vmatpush1.msra.mxu0 %v6179
    %6239 = vmatprep.subr.mxu0 %v6182
    %6240 = vmatpush1.msra.mxu0 %v6181
    %6241 = vmatprep.subr.mxu0 %v6184
    %6242 = vmatpush1.msra.mxu0 %v6183
    %6243 = vmatprep.subr.mxu0 %v6186
    %6244 = vmatpush1.msra.mxu0 %v6185
    %6245 = vmatprep.subr.mxu0 %v6188
    %6246 = vmatpush1.msra.mxu0 %v6187
    %6247 = vmatprep.subr.mxu0 %v6190
    %6248 = vmatpush1.msra.mxu0 %v6189
    %6249 = vmatprep.subr.mxu0 0.0
    %6250 = vmatpush1.msra.mxu0 0.0
    %6251 = vmatprep.subr.mxu0 0.0
    %6252 = vmatpush1.msra.mxu0 0.0
    %6253 = vmatprep.subr.mxu0 0.0
    %6254 = vmatpush1.msra.mxu0 0.0
    %6255 = vmatprep.subr.mxu0 0.0
    %6256 = vmatpush1.msra.mxu0 0.0
    %6257 = vmatprep.subr.mxu0 0.0
    %6258 = vmatpush1.msra.mxu0 0.0
    %6259 = vmatprep.subr.mxu0 0.0
    %6260 = vmatpush1.msra.mxu0 0.0
    %6261 = vmatprep.subr.mxu0 0.0
    %6262 = vmatpush1.msra.mxu0 0.0
    %6263 = vmatprep.subr.mxu0 0.0
    %6264 = vmatpush1.msra.mxu0 0.0
    %6265 = vmatprep.subr.mxu0 0.0
    %6266 = vmatpush1.msra.mxu0 0.0
    %6267 = vmatprep.subr.mxu0 0.0
    %6268 = vmatpush1.msra.mxu0 0.0
    %6269 = vmatprep.subr.mxu0 0.0
    %6270 = vmatpush1.msra.mxu0 0.0
    %6271 = vmatprep.mubr.f32.mxu0 %v6205
    %6272 = vmatmul.mubr.f32.gmra.mrb[0].mxu0 %v6147
    %v6273 = vpop.f32.mrb[0].mxu0
    %v6274 = vadd.f32 %v6196, %v6273
    %v6275 = vpop.f32.mrb[0].mxu0
    %v6276 = vadd.f32 %v6200, %v6275
    %6277 = vdwg.mxu0
    %v6278 = vld [vmem:[%s17] sm:$0x3f]
    %v6279 = vand.u32 2147483647, %v6274
    %v6280 = vld [vmem:[%s18] sm:$0x3f]
    %v6281 = vmul.f32 %v6278, %v6280
    %v6282 = vmul.f32 %v6279, %v6281
    %6284 = vrot.lane.b32.xlu0 %v6282, 32
    %v6285 = vpop.permute.xlu0 %6284
    %v6287 = vadd.f32 %v6274, %v6285
    %6288 = vrot.lane.b32.xlu0 %v6282, 24
    %v6289 = vpop.permute.xlu0 %6288
    %v6291 = vadd.f32 %v6287, %v6289
    %6292 = vrot.lane.b32.xlu0 %v6282, 16
    %v6293 = vpop.permute.xlu0 %6292
    %v6295 = vadd.f32 %v6291, %v6293
    %6296 = vrot.lane.b32.xlu0 %v6282, 8
    %v6297 = vpop.permute.xlu0 %6296
    %v6299 = vadd.f32 %v6295, %v6297
    %vm6300 = vcmp.gt.f32.partialorder %v6299, 0.0
    %v6301 = vmul.f32 %v6299, 1.442695
    %v6302 = vpow.pop %v6301
    %v6303 = vsub.f32 %v6302, 1.0
    %v6304 = vsel %vm6300, %v6299, %v6303
    %6306 = vrot.lane.b32.xlu0 %v6279, 120
    %v6307 = vpop.permute.xlu0 %6306
    %v6309 = vmul.f32 %v6304, %v6307
    %6311 = vrot.lane.b32.xlu0 %v6309, 96
    %v6312 = vpop.permute.xlu0 %6311
    %vm6314 = vcmask 62464
    %v6315 = vsel %vm6314, %v6312, 0.0
    %6316 = vadd.xlane.f32.xlu0 %v6315
    %v6317 = vpop.xlane.xlu0 %6316
    %v6318 = vadd.f32 %v6317, %v6274
    %s6319 = scalar_lea.vmem %s18, 8
    %v6320 = vld [vmem:[%s6319] sm:$0x3f]
    %v6321 = vmul.f32 %v6278, %v6320
    %6323 = vrot.lane.b32.xlu0 %v6321, 56
    %v6324 = vpop.permute.xlu0 %6323
    %v6326 = vmul.f32 %v6279, %v6324
    %6328 = vrot.lane.b32.xlu0 %v6326, 32
    %v6329 = vpop.permute.xlu0 %6328
    %v6331 = vadd.f32 %v6274, %v6329
    %6332 = vrot.lane.b32.xlu0 %v6326, 24
    %v6333 = vpop.permute.xlu0 %6332
    %v6335 = vadd.f32 %v6331, %v6333
    %6336 = vrot.lane.b32.xlu0 %v6326, 16
    %v6337 = vpop.permute.xlu0 %6336
    %v6339 = vadd.f32 %v6335, %v6337
    %6340 = vrot.lane.b32.xlu0 %v6326, 8
    %v6341 = vpop.permute.xlu0 %6340
    %v6343 = vadd.f32 %v6339, %v6341
    %vm6344 = vcmp.gt.f32.partialorder %v6343, 0.0
    %v6345 = vmul.f32 %v6343, 1.442695
    %v6346 = vpow.pop %v6345
    %v6347 = vsub.f32 %v6346, 1.0
    %v6348 = vsel %vm6344, %v6343, %v6347
    %v6349 = vmul.f32 %v6348, %v6307
    %6351 = vrot.lane.b32.xlu0 %v6349, 40
    %v6352 = vpop.permute.xlu0 %6351
    %v6354 = vsel %vm6314, %v6352, 0.0
    %6355 = vadd.xlane.f32.xlu0 %v6354
    %v6356 = vpop.xlane.xlu0 %6355
    %v6357 = vadd.f32 %v6356, %v6274
    %v6358 = vand.u32 2147483647, %v6276
    %s6359 = scalar_lea.vmem %s18, 16
    %v6360 = vld [vmem:[%s6359] sm:$0x3f]
    %v6361 = vmul.f32 %v6278, %v6360
    %6363 = vrot.lane.b32.xlu0 %v6361, 112
    %v6364 = vpop.permute.xlu0 %6363
    %v6366 = vmul.f32 %v6279, %v6364
    %v6367 = vmul.f32 %v6358, %v6364
    %6369 = vrot.lane.b32.xlu0 %v6366, 32
    %v6370 = vpop.permute.xlu0 %6369
    %v6372 = vadd.f32 %v6276, %v6370
    %6373 = vrot.lane.b32.xlu0 %v6366, 24
    %v6374 = vpop.permute.xlu0 %6373
    %v6376 = vadd.f32 %v6372, %v6374
    %6378 = vrot.lane.b32.xlu0 %v6367, 16
    %v6379 = vpop.permute.xlu0 %6378
    %v6381 = vadd.f32 %v6376, %v6379
    %6382 = vrot.lane.b32.xlu0 %v6367, 8
    %v6383 = vpop.permute.xlu0 %6382
    %v6385 = vadd.f32 %v6381, %v6383
    %vm6386 = vcmp.gt.f32.partialorder %v6385, 0.0
    %v6387 = vmul.f32 %v6385, 1.442695
    %v6388 = vpow.pop %v6387
    %v6389 = vsub.f32 %v6388, 1.0
    %v6390 = vsel %vm6386, %v6385, %v6389
    %6392 = vrot.lane.b32.xlu0 %v6358, 120
    %v6393 = vpop.permute.xlu0 %6392
    %v6395 = vmul.f32 %v6390, %v6393
    %6397 = vrot.lane.b32.xlu0 %v6395, 112
    %v6398 = vpop.permute.xlu0 %6397
    %v6400 = vsel %vm6314, %v6398, 0.0
    %6401 = vadd.xlane.f32.xlu0 %v6400
    %v6402 = vpop.xlane.xlu0 %6401
    %v6403 = vadd.f32 %v6402, %v6276
    %v6404 = vld [vmem:[%s19] sm:$0x3f]
    %v6405 = vand.u32 2147483647, %v6404
    %6407 = vset.pattern.permute.xlu0 48
    %6408 = vperm.xlu0 %6407, %v6318
    %v6409 = vpop.permute.xlu0 %6408
    %v6411 = vmul.f32 %v6409, %v6405
    %6413 = vrot.lane.b32.xlu0 %v6411, 24
    %v6414 = vpop.permute.xlu0 %6413
    %v6416 = vadd.f32 %v6404, %v6414
    %6418 = vset.pattern.permute.xlu0 104
    %6419 = vperm.xlu0 %6418, %v6357
    %v6420 = vpop.permute.xlu0 %6419
    %v6422 = vmul.f32 %v6420, %v6405
    %6424 = vrot.lane.b32.xlu0 %v6422, 16
    %v6425 = vpop.permute.xlu0 %6424
    %v6427 = vadd.f32 %v6416, %v6425
    %6429 = vset.pattern.permute.xlu0 32
    %6430 = vperm.xlu0 %6429, %v6403
    %v6431 = vpop.permute.xlu0 %6430
    %v6433 = vmul.f32 %v6431, %v6405
    %6435 = vrot.lane.b32.xlu0 %v6433, 8
    %v6436 = vpop.permute.xlu0 %6435
    %v6438 = vadd.f32 %v6427, %v6436
    %vm6439 = vcmp.gt.f32.partialorder %v6438, 0.0
    %v6440 = vmul.f32 %v6438, 1.442695
    %v6441 = vpow.pop %v6440
    %v6442 = vsub.f32 %v6441, 1.0
    %v6443 = vsel %vm6439, %v6438, %v6442
    %6445 = vrot.lane.b32.xlu0 %v6405, 120
    %v6446 = vpop.permute.xlu0 %6445
    %v6448 = vmul.f32 %v6443, %v6446
    %6450 = vrot.lane.b32.xlu0 %v6448, 104
    %v6451 = vpop.permute.xlu0 %6450
    %v6453 = vsel %vm6314, %v6451, 0.0
    %6454 = vadd.xlane.f32.xlu0 %v6453
    %v6455 = vpop.xlane.xlu0 %6454
    %v6456 = vadd.f32 %v6455, %v6404
    %6458 = vrot.lane.b32.xlu0 %v6456, 88
    %v6459 = vpop.permute.xlu0 %6458
    %vm6461 = vcmask 5120
    %6462 = vst.msk [vmem:[%s20] sm:$0x3f] %vm6461, %v6459
    // Predicated region
    $region82: #{ghypermixer_forward.3} parent=1 // pred_check
      _
    $region83: #{ghypermixer_forward.3} parent=1 // pred_check_branch
      %6464 = sbr.rel (0) target = $region85
    $region84: #{ghypermixer_forward.3} parent=1 // pred_region
      _
    $region85: #{ghypermixer_forward.3} parent=1 // pred_fallthru
      _
    // Predicated region
    $region86: #{ghypermixer_forward.3} parent=1 // pred_check
      _
    $region87: #{ghypermixer_forward.3} parent=1 // pred_check_branch
      %6466 = sbr.rel (0) target = $region89
    $region88: #{ghypermixer_forward.3} parent=1 // pred_region
      %s6468 = ssub.s32 16, 16
      %6469 = vsyncadd [#allocation4], %s6468
      %6472 = dma.smem_to_hbm [#allocation2], 16, %s21, [#allocation4]
    $region89: #{ghypermixer_forward.3} parent=1 // pred_fallthru
      _
    // Predicated region
    $region90: #{ghypermixer_forward.3} parent=1 // pred_check
      _
    $region91: #{ghypermixer_forward.3} parent=1 // pred_check_branch
      %6474 = sbr.rel (0) target = $region93
    $region92: #{ghypermixer_forward.3} parent=1 // pred_region
      %s6476 = ssub.s32 384, 384
      %6477 = vsyncadd [#allocation3], %s6476
      %s6478 = sshll.u32 [#allocation5], 4
      %s6479 = int_to_ptr.vmem [resolvable:$true] %s6478
      %6484 = dma.vmem_to_hbm [thread:$0]  %s6479, 384, %s22, [#allocation3], 64, 64, 4
    $region93: #{ghypermixer_forward.3} parent=1 // pred_fallthru
      _
    // Predicated region
    $region94: #{ghypermixer_forward.3} parent=1 // pred_check
      _
    $region95: #{ghypermixer_forward.3} parent=1 // pred_check_branch
      %6486 = sbr.rel (0) target = $region97
    $region96: #{ghypermixer_forward.3} parent=1 // pred_region
      _
    $region97: #{ghypermixer_forward.3} parent=1 // pred_fallthru
      _
    // Predicated region
    $region98: #{ghypermixer_forward.3} parent=1 // pred_check
      _
    $region99: #{ghypermixer_forward.3} parent=1 // pred_check_branch
      %6488 = sbr.rel (0) target = $region101
    $region100: #{ghypermixer_forward.3} parent=1 // pred_region
      %6489 = dma.done [#allocation4], 16
    $region101: #{ghypermixer_forward.3} parent=1 // pred_fallthru
      _
    // Predicated region
    $region102: #{ghypermixer_forward.3} parent=1 // pred_check
      _
    $region103: #{ghypermixer_forward.3} parent=1 // pred_check_branch
      %6491 = sbr.rel (0) target = $region105
    $region104: #{ghypermixer_forward.3} parent=1 // pred_region
      %6492 = dma.done [#allocation3], 384
    $region105: #{ghypermixer_forward.3} parent=1 // pred_fallthru
      _
    %6493 = sfence
    %6494 = vsyncpa [#allocation3], 1
    %6495 = vsyncpa [#allocation4], 1

</llo_original>
